<compile_context>
chip_gen: v7x
topology: tpu7x:2x2x1
jax: 0.10.0
libtpu: 0.0.40
codegen_flags: <defaults>
</compile_context>

<pallas_src>
import math
from functools import partial

import jax
import jax.numpy as jnp
from jax.experimental import pallas as pl
from jax.experimental.pallas import tpu as pltpu

NUM_HEADS = 16


def _mha_kernel(x_ref, wqkv_ref, bqkv_ref, wo_ref, bo_ref, o_ref, *,
                num_heads, batch, head_layout):
    # x_ref:    (R, E)    rows = flattened (seq, batch), seq-major (row r -> batch r % N)
    # wqkv_ref: (E, 3E)   fused q|k|v in-projection weight (q block pre-scaled by 1/sqrt(D))
    # bqkv_ref: (1, 3E)   fused in-projection bias (q block pre-scaled)
    # wo_ref:   (E, E)    out-projection weight, pre-transposed so out = ctx @ wo
    # bo_ref:   (1, E)    out-projection bias
    # o_ref:    (R, E)
    H = num_heads
    R, E = x_ref.shape
    D = E // H

    x = x_ref[...].astype(jnp.float32)

    # One fused (R,E) @ (E,3E) MXU matmul for all of q, k, v (full contraction depth).
    qkv = jnp.dot(x, wqkv_ref[...], preferred_element_type=jnp.float32) + bqkv_ref[...]

    if head_layout == "reshape":
        # Preferred: split/merge heads with a reshape + leading-axis swap.
        def split_heads(t):                          # (R, H*D) -> (H, R, D)
            return jnp.swapaxes(t.reshape(R, H, D), 0, 1)

        def merge_heads(t):                          # (H, R, D) -> (R, H*D)
            return jnp.swapaxes(t, 0, 1).reshape(R, H * D)
    else:
        # Fallback built only from static lane slices / leading-dim stack / concat.
        def split_heads(t):
            return jnp.stack([t[:, h * D:(h + 1) * D] for h in range(H)], axis=0)

        def merge_heads(t):
            return jnp.concatenate([t[h] for h in range(H)], axis=-1)

    qh = split_heads(qkv[:, 0:E])                    # (H, R, D); scale already folded in
    kh = split_heads(qkv[:, E:2 * E])
    vh = split_heads(qkv[:, 2 * E:3 * E])

    # All-head scores in one batched (leading head axis) einsum: (H, R, R).
    s = jnp.einsum('hqd,hkd->hqk', qh, kh, preferred_element_type=jnp.float32)

    # Cross-batch additive mask computed in-kernel (no (R,R) input DMA).
    ri = jax.lax.broadcasted_iota(jnp.int32, (R, R), 0)
    ci = jax.lax.broadcasted_iota(jnp.int32, (R, R), 1)
    mask = jnp.where((ri % batch) == (ci % batch), 0.0, -1e30).astype(jnp.float32)
    s = s + mask                                     # (H,R,R) + (R,R) broadcast

    # Numerically stable softmax; the reciprocal runs on the EUP slot.
    s = s - jnp.max(s, axis=-1, keepdims=True)
    p = jnp.exp(s)
    p = p * pl.reciprocal(jnp.sum(p, axis=-1, keepdims=True), approx=True)

    ctx = jnp.einsum('hqk,hkd->hqd', p, vh, preferred_element_type=jnp.float32)  # (H,R,D)

    # Head concat folded into a single full-depth (R,E) @ (E,E) output projection.
    out = jnp.dot(merge_heads(ctx), wo_ref[...],
                  preferred_element_type=jnp.float32) + bo_ref[...]
    o_ref[...] = out.astype(o_ref.dtype)


def pack_params(params, num_heads=NUM_HEADS):
    """One-time packing of nn.MultiheadAttention params (hoisted out of the forward)."""
    w_in, b_in, w_out, b_out = params                # (3E,E), (3E,), (E,E), (E,)
    E = w_out.shape[0]
    D = E // num_heads
    scale = 1.0 / math.sqrt(D)
    scale_vec = jnp.concatenate([jnp.full((E,), scale, w_in.dtype),
                                 jnp.ones((2 * E,), w_in.dtype)])
    w_qkv = w_in.T * scale_vec[None, :]              # (E, 3E); torch: qkv = x @ w_in.T
    b_qkv = (b_in * scale_vec).reshape(1, 3 * E)     # (1, 3E)
    wo = w_out.T                                     # (E, E);  torch Linear: y = x @ W.T
    bo = b_out.reshape(1, E)                         # (1, E)
    return w_qkv, b_qkv, wo, bo


@partial(jax.jit, static_argnames=("num_heads", "head_layout"))
def attention_forward(lstm_output, w_qkv, b_qkv, wo, bo,
                      num_heads=NUM_HEADS, head_layout="reshape"):
    """Equivalent of Attention.forward(lstm_output); lstm_output is (L, N, E)."""
    L, N, E = lstm_output.shape
    assert E % num_heads == 0
    R = L * N

    x2d = lstm_output.reshape(R, E)                  # row-major flatten: no transpose
    kernel = partial(_mha_kernel, num_heads=num_heads, batch=N, head_layout=head_layout)

    out2d = pl.pallas_call(
        kernel,
        out_shape=jax.ShapeDtypeStruct((R, E), lstm_output.dtype),
        grid_spec=pltpu.PrefetchScalarGridSpec(
            num_scalar_prefetch=0,
            grid=(1,),                               # whole problem is one VMEM-resident step
            in_specs=[
                pl.BlockSpec((R, E), lambda i: (0, 0)),
                pl.BlockSpec((E, 3 * E), lambda i: (0, 0)),
                pl.BlockSpec((1, 3 * E), lambda i: (0, 0)),
                pl.BlockSpec((E, E), lambda i: (0, 0)),
                pl.BlockSpec((1, E), lambda i: (0, 0)),
            ],
            out_specs=pl.BlockSpec((R, E), lambda i: (0, 0)),
        ),
        compiler_params=pltpu.CompilerParams(dimension_semantics=("arbitrary",)),
    )(x2d, w_qkv, b_qkv, wo, bo)
    return out2d.reshape(L, N, E)


def ref_attention(lstm_output, params, num_heads=NUM_HEADS):
    """Pure-JAX reference matching torch.nn.MultiheadAttention self-attention."""
    L, N, E = lstm_output.shape
    D = E // num_heads
    w_in, b_in, w_out, b_out = params
    qkv = jnp.einsum('lne,fe->lnf', lstm_output, w_in) + b_in
    q, k, v = jnp.split(qkv, 3, axis=-1)

    def to_heads(t):
        return t.reshape(L, N * num_heads, D).transpose(1, 0, 2)

    qh, kh, vh = to_heads(q), to_heads(k), to_heads(v)
    s = jnp.einsum('bld,bmd->blm', qh, kh) / math.sqrt(D)
    p = jax.nn.softmax(s, axis=-1)
    ctx = jnp.einsum('blm,bmd->bld', p, vh)
    ctx = ctx.transpose(1, 0, 2).reshape(L, N, E)
    return jnp.einsum('lne,oe->lno', ctx, w_out) + b_out


if __name__ == "__main__":
    # Small shapes consistent with the module: seq=8, batch=2, hidden=64 (16 heads * 4).
    L, N, E = 8, 2, 64
    key = jax.random.PRNGKey(0)
    kx, kw1, kb1, kw2, kb2 = jax.random.split(key, 5)

    x = jax.random.normal(kx, (L, N, E), dtype=jnp.float32)

    # Deterministic parameter init (shapes match nn.MultiheadAttention(E, 16)).
    bound = 1.0 / math.sqrt(E)
    w_in = jax.random.uniform(kw1, (3 * E, E), jnp.float32, -bound, bound)   # in_proj_weight
    b_in = jax.random.uniform(kb1, (3 * E,), jnp.float32, -bound, bound)     # in_proj_bias
    w_out = jax.random.uniform(kw2, (E, E), jnp.float32, -bound, bound)      # out_proj.weight
    b_out = jax.random.uniform(kb2, (E,), jnp.float32, -bound, bound)        # out_proj.bias
    params = (w_in, b_in, w_out, b_out)

    packed = pack_params(params)

    # Prefer the reshape/swapaxes head split (lane-dense layout with a single relayout);
    # if the Mosaic build in use cannot lower that shape-cast, fall back to an equivalent
    # split built only from static lane slices + leading-dim stack / lane concat.
    try:
        out = jax.block_until_ready(attention_forward(x, *packed, head_layout="reshape"))
    except Exception:
        out = jax.block_until_ready(attention_forward(x, *packed, head_layout="slice"))

    ref = ref_attention(x, params)
    assert out.shape == (L, N, E)
    max_err = float(jnp.max(jnp.abs(out - ref)))
    # Tolerance covers the EUP approximate reciprocal on the softmax denominator.
    assert jnp.allclose(out, ref, atol=2e-3, rtol=2e-3), max_err
    print("KERNEL_OK")
</pallas_src>

<mosaic_0001>
module attributes {stable_mosaic.version = 11 : i64} {
  func.func @_mha_kernel(%arg0: i32, %arg1: memref<16x64xf32, #tpu.memory_space<vmem>>, %arg2: memref<64x192xf32, #tpu.memory_space<vmem>>, %arg3: memref<1x192xf32, #tpu.memory_space<vmem>>, %arg4: memref<64x64xf32, #tpu.memory_space<vmem>>, %arg5: memref<1x64xf32, #tpu.memory_space<vmem>>, %arg6: memref<16x64xf32, #tpu.memory_space<vmem>>) attributes {dimension_semantics = [#tpu.dimension_semantics<arbitrary>], iteration_bounds = array<i64: 1>, scalar_prefetch = 0 : i64, scratch_operands = 0 : i64, tpu.core_type = #tpu.core_type<tc>, window_params = [{pipeline_mode = #tpu.pipeline_mode<synchronous>, transform_indices = @transform_0, window_bounds = array<i64: 16, 64>}, {pipeline_mode = #tpu.pipeline_mode<synchronous>, transform_indices = @transform_1, window_bounds = array<i64: 64, 192>}, {pipeline_mode = #tpu.pipeline_mode<synchronous>, transform_indices = @transform_2, window_bounds = array<i64: 1, 192>}, {pipeline_mode = #tpu.pipeline_mode<synchronous>, transform_indices = @transform_3, window_bounds = array<i64: 64, 64>}, {pipeline_mode = #tpu.pipeline_mode<synchronous>, transform_indices = @transform_4, window_bounds = array<i64: 1, 64>}, {pipeline_mode = #tpu.pipeline_mode<synchronous>, transform_indices = @transform_5, window_bounds = array<i64: 16, 64>}]} {
    %c0 = arith.constant 0 : index
    %c0_0 = arith.constant 0 : index
    %0 = vector.load %arg1[%c0, %c0_0] : memref<16x64xf32, #tpu.memory_space<vmem>>, vector<16x64xf32>
    %c0_1 = arith.constant 0 : index
    %c0_2 = arith.constant 0 : index
    %1 = vector.load %arg2[%c0_1, %c0_2] : memref<64x192xf32, #tpu.memory_space<vmem>>, vector<64x192xf32>
    %cst = arith.constant dense<0.000000e+00> : vector<16x192xf32>
    %2 = tpu.matmul %0, %1, %cst {dimension_numbers = #tpu.dot_dimension_numbers<[1], [0], [0], [1], [0, 0, 1, 1], [], []>} : vector<16x64xf32>, vector<64x192xf32>, vector<16x192xf32> -> vector<16x192xf32>
    %c0_3 = arith.constant 0 : index
    %c0_4 = arith.constant 0 : index
    %3 = vector.load %arg3[%c0_3, %c0_4] : memref<1x192xf32, #tpu.memory_space<vmem>>, vector<1x192xf32>
    %4 = vector.broadcast %3 : vector<1x192xf32> to vector<16x192xf32>
    %5 = arith.addf %2, %4 : vector<16x192xf32>
    %6 = vector.extract_strided_slice %5 {offsets = [0, 0], sizes = [16, 64], strides = [1, 1]} : vector<16x192xf32> to vector<16x64xf32>
    %7 = vector.shape_cast %6 : vector<16x64xf32> to vector<16x16x4xf32>
    %8 = tpu.transpose %7, [1, 0, 2] : vector<16x16x4xf32> -> vector<16x16x4xf32>
    %9 = vector.extract_strided_slice %5 {offsets = [0, 64], sizes = [16, 64], strides = [1, 1]} : vector<16x192xf32> to vector<16x64xf32>
    %10 = vector.shape_cast %9 : vector<16x64xf32> to vector<16x16x4xf32>
    %11 = tpu.transpose %10, [1, 0, 2] : vector<16x16x4xf32> -> vector<16x16x4xf32>
    %12 = vector.extract_strided_slice %5 {offsets = [0, 128], sizes = [16, 64], strides = [1, 1]} : vector<16x192xf32> to vector<16x64xf32>
    %13 = vector.shape_cast %12 : vector<16x64xf32> to vector<16x16x4xf32>
    %14 = tpu.transpose %13, [1, 0, 2] : vector<16x16x4xf32> -> vector<16x16x4xf32>
    "tpu.trace_start"() <{level = 10 : i32, message = "hqd,hkd->hqk"}> : () -> ()
    %cst_5 = arith.constant dense<0.000000e+00> : vector<16x16x16xf32>
    %15 = tpu.matmul %8, %11, %cst_5 {dimension_numbers = #tpu.dot_dimension_numbers<[2], [2], [1], [1], [0, 0, 0, 1, 1, 1], [0], [0]>} : vector<16x16x4xf32>, vector<16x16x4xf32>, vector<16x16x16xf32> -> vector<16x16x16xf32>
    "tpu.trace_stop"() : () -> ()
    %16 = tpu.iota {dimensions = array<i32: 0>} : vector<16x16xi32>
    %17 = tpu.iota {dimensions = array<i32: 1>} : vector<16x16xi32>
    %c2_i32 = arith.constant 2 : i32
    %c0_i32 = arith.constant 0 : i32
    %18 = arith.cmpi eq, %c2_i32, %c0_i32 : i32
    %c1_i32 = arith.constant 1 : i32
    %19 = arith.select %18, %c1_i32, %c2_i32 : i32
    %20 = vector.broadcast %19 : i32 to vector<16x16xi32>
    %21 = arith.remsi %16, %20 : vector<16x16xi32>
    %c0_i32_6 = arith.constant 0 : i32
    %22 = vector.broadcast %c0_i32_6 : i32 to vector<16x16xi32>
    %23 = arith.cmpi ne, %21, %22 : vector<16x16xi32>
    %c0_i32_7 = arith.constant 0 : i32
    %24 = vector.broadcast %c0_i32_7 : i32 to vector<16x16xi32>
    %25 = arith.cmpi slt, %21, %24 : vector<16x16xi32>
    %c0_i32_8 = arith.constant 0 : i32
    %26 = arith.cmpi slt, %19, %c0_i32_8 : i32
    %27 = vector.broadcast %26 : i1 to vector<16x16xi1>
    %28 = vector.broadcast %27 : vector<16x16xi1> to vector<16x16xi1>
    %29 = arith.xori %25, %28 : vector<16x16xi1>
    %30 = arith.andi %29, %23 : vector<16x16xi1>
    %31 = vector.broadcast %19 : i32 to vector<16x16xi32>
    %32 = arith.addi %21, %31 : vector<16x16xi32>
    %33 = arith.select %30, %32, %21 : vector<16x16xi1>, vector<16x16xi32>
    %c2_i32_9 = arith.constant 2 : i32
    %c0_i32_10 = arith.constant 0 : i32
    %34 = arith.cmpi eq, %c2_i32_9, %c0_i32_10 : i32
    %c1_i32_11 = arith.constant 1 : i32
    %35 = arith.select %34, %c1_i32_11, %c2_i32_9 : i32
    %36 = vector.broadcast %35 : i32 to vector<16x16xi32>
    %37 = arith.remsi %17, %36 : vector<16x16xi32>
    %c0_i32_12 = arith.constant 0 : i32
    %38 = vector.broadcast %c0_i32_12 : i32 to vector<16x16xi32>
    %39 = arith.cmpi ne, %37, %38 : vector<16x16xi32>
    %c0_i32_13 = arith.constant 0 : i32
    %40 = vector.broadcast %c0_i32_13 : i32 to vector<16x16xi32>
    %41 = arith.cmpi slt, %37, %40 : vector<16x16xi32>
    %c0_i32_14 = arith.constant 0 : i32
    %42 = arith.cmpi slt, %35, %c0_i32_14 : i32
    %43 = vector.broadcast %42 : i1 to vector<16x16xi1>
    %44 = vector.broadcast %43 : vector<16x16xi1> to vector<16x16xi1>
    %45 = arith.xori %41, %44 : vector<16x16xi1>
    %46 = arith.andi %45, %39 : vector<16x16xi1>
    %47 = vector.broadcast %35 : i32 to vector<16x16xi32>
    %48 = arith.addi %37, %47 : vector<16x16xi32>
    %49 = arith.select %46, %48, %37 : vector<16x16xi1>, vector<16x16xi32>
    %50 = arith.cmpi eq, %33, %49 : vector<16x16xi32>
    %cst_15 = arith.constant 0.000000e+00 : f32
    %cst_16 = arith.constant -1.000000e+30 : f32
    %51 = vector.broadcast %cst_15 : f32 to vector<16x16xf32>
    %52 = vector.broadcast %cst_16 : f32 to vector<16x16xf32>
    %53 = arith.select %50, %51, %52 : vector<16x16xi1>, vector<16x16xf32>
    %54 = vector.shape_cast %53 : vector<16x16xf32> to vector<1x16x16xf32>
    %55 = vector.broadcast %54 : vector<1x16x16xf32> to vector<16x16x16xf32>
    %56 = arith.addf %15, %55 : vector<16x16x16xf32>
    %cst_17 = arith.constant dense<0xFF800000> : vector<16x16xf32>
    %57 = vector.multi_reduction <maximumf>, %56, %cst_17 [2] : vector<16x16x16xf32> to vector<16x16xf32>
    %58 = vector.shape_cast %57 : vector<16x16xf32> to vector<16x16x1xf32>
    %59 = vector.broadcast %58 : vector<16x16x1xf32> to vector<16x16x16xf32>
    %60 = arith.subf %56, %59 : vector<16x16x16xf32>
    %61 = math.exp %60 : vector<16x16x16xf32>
    %cst_18 = arith.constant dense<0.000000e+00> : vector<16x16xf32>
    %62 = vector.multi_reduction <add>, %61, %cst_18 [2] : vector<16x16x16xf32> to vector<16x16xf32>
    %63 = vector.shape_cast %62 : vector<16x16xf32> to vector<16x16x1xf32>
    %64 = tpu.reciprocal %63 {approx = true} : vector<16x16x1xf32> -> vector<16x16x1xf32>
    %65 = vector.broadcast %64 : vector<16x16x1xf32> to vector<16x16x16xf32>
    %66 = arith.mulf %61, %65 : vector<16x16x16xf32>
    "tpu.trace_start"() <{level = 10 : i32, message = "hqk,hkd->hqd"}> : () -> ()
    %cst_19 = arith.constant dense<0.000000e+00> : vector<16x16x4xf32>
    %67 = tpu.matmul %66, %14, %cst_19 {dimension_numbers = #tpu.dot_dimension_numbers<[2], [1], [1], [2], [0, 0, 0, 1, 1, 2], [0], [0]>} : vector<16x16x16xf32>, vector<16x16x4xf32>, vector<16x16x4xf32> -> vector<16x16x4xf32>
    "tpu.trace_stop"() : () -> ()
    %68 = tpu.transpose %67, [1, 0, 2] : vector<16x16x4xf32> -> vector<16x16x4xf32>
    %69 = vector.shape_cast %68 : vector<16x16x4xf32> to vector<16x64xf32>
    %c0_20 = arith.constant 0 : index
    %c0_21 = arith.constant 0 : index
    %70 = vector.load %arg4[%c0_20, %c0_21] : memref<64x64xf32, #tpu.memory_space<vmem>>, vector<64x64xf32>
    %cst_22 = arith.constant dense<0.000000e+00> : vector<16x64xf32>
    %71 = tpu.matmul %69, %70, %cst_22 {dimension_numbers = #tpu.dot_dimension_numbers<[1], [0], [0], [1], [0, 0, 1, 1], [], []>} : vector<16x64xf32>, vector<64x64xf32>, vector<16x64xf32> -> vector<16x64xf32>
    %c0_23 = arith.constant 0 : index
    %c0_24 = arith.constant 0 : index
    %72 = vector.load %arg5[%c0_23, %c0_24] : memref<1x64xf32, #tpu.memory_space<vmem>>, vector<1x64xf32>
    %73 = vector.broadcast %72 : vector<1x64xf32> to vector<16x64xf32>
    %74 = arith.addf %71, %73 : vector<16x64xf32>
    %c0_25 = arith.constant 0 : index
    %c0_26 = arith.constant 0 : index
    %75 = vector.load %arg6[%c0_25, %c0_26] : memref<16x64xf32, #tpu.memory_space<vmem>>, vector<16x64xf32>
    tpu.vector_store %arg6[%c0_25, %c0_26], %74 {strides = array<i32>} : memref<16x64xf32, #tpu.memory_space<vmem>>, vector<16x64xf32>,
    return
  }
  func.func @transform_0(%arg0: i32) -> (i32, i32) {
    %c0_i32 = arith.constant 0 : i32
    %c0_i32_0 = arith.constant 0 : i32
    %c0_i32_1 = arith.constant 0 : i32
    return %c0_i32, %c0_i32_0 : i32, i32
  }
  func.func @transform_1(%arg0: i32) -> (i32, i32) {
    %c0_i32 = arith.constant 0 : i32
    %c0_i32_0 = arith.constant 0 : i32
    %c0_i32_1 = arith.constant 0 : i32
    return %c0_i32, %c0_i32_0 : i32, i32
  }
  func.func @transform_2(%arg0: i32) -> (i32, i32) {
    %c0_i32 = arith.constant 0 : i32
    %c0_i32_0 = arith.constant 0 : i32
    %c0_i32_1 = arith.constant 0 : i32
    return %c0_i32, %c0_i32_0 : i32, i32
  }
  func.func @transform_3(%arg0: i32) -> (i32, i32) {
    %c0_i32 = arith.constant 0 : i32
    %c0_i32_0 = arith.constant 0 : i32
    %c0_i32_1 = arith.constant 0 : i32
    return %c0_i32, %c0_i32_0 : i32, i32
  }
  func.func @transform_4(%arg0: i32) -> (i32, i32) {
    %c0_i32 = arith.constant 0 : i32
    %c0_i32_0 = arith.constant 0 : i32
    %c0_i32_1 = arith.constant 0 : i32
    return %c0_i32, %c0_i32_0 : i32, i32
  }
  func.func @transform_5(%arg0: i32) -> (i32, i32) {
    %c0_i32 = arith.constant 0 : i32
    %c0_i32_0 = arith.constant 0 : i32
    %c0_i32_1 = arith.constant 0 : i32
    return %c0_i32, %c0_i32_0 : i32, i32
  }
}

module attributes {stable_mosaic.version = 11 : i64} {
  func.func @_mha_kernel(%arg0: i32, %arg1: memref<16x64xf32, #tpu.memory_space<vmem>>, %arg2: memref<64x192xf32, #tpu.memory_space<vmem>>, %arg3: memref<1x192xf32, #tpu.memory_space<vmem>>, %arg4: memref<64x64xf32, #tpu.memory_space<vmem>>, %arg5: memref<1x64xf32, #tpu.memory_space<vmem>>, %arg6: memref<16x64xf32, #tpu.memory_space<vmem>>) attributes {dimension_semantics = [#tpu.dimension_semantics<arbitrary>], iteration_bounds = array<i64: 1>, scalar_prefetch = 0 : i64, scratch_operands = 0 : i64, tpu.core_type = #tpu.core_type<tc>, window_params = [{pipeline_mode = #tpu.pipeline_mode<synchronous>, transform_indices = @transform_0, window_bounds = array<i64: 16, 64>}, {pipeline_mode = #tpu.pipeline_mode<synchronous>, transform_indices = @transform_1, window_bounds = array<i64: 64, 192>}, {pipeline_mode = #tpu.pipeline_mode<synchronous>, transform_indices = @transform_2, window_bounds = array<i64: 1, 192>}, {pipeline_mode = #tpu.pipeline_mode<synchronous>, transform_indices = @transform_3, window_bounds = array<i64: 64, 64>}, {pipeline_mode = #tpu.pipeline_mode<synchronous>, transform_indices = @transform_4, window_bounds = array<i64: 1, 64>}, {pipeline_mode = #tpu.pipeline_mode<synchronous>, transform_indices = @transform_5, window_bounds = array<i64: 16, 64>}]} {
    %c0 = arith.constant 0 : index
    %c0_0 = arith.constant 0 : index
    %0 = vector.load %arg1[%c0, %c0_0] : memref<16x64xf32, #tpu.memory_space<vmem>>, vector<16x64xf32>
    %c0_1 = arith.constant 0 : index
    %c0_2 = arith.constant 0 : index
    %1 = vector.load %arg2[%c0_1, %c0_2] : memref<64x192xf32, #tpu.memory_space<vmem>>, vector<64x192xf32>
    %cst = arith.constant dense<0.000000e+00> : vector<16x192xf32>
    %2 = tpu.matmul %0, %1, %cst {dimension_numbers = #tpu.dot_dimension_numbers<[1], [0], [0], [1], [0, 0, 1, 1], [], []>} : vector<16x64xf32>, vector<64x192xf32>, vector<16x192xf32> -> vector<16x192xf32>
    %c0_3 = arith.constant 0 : index
    %c0_4 = arith.constant 0 : index
    %3 = vector.load %arg3[%c0_3, %c0_4] : memref<1x192xf32, #tpu.memory_space<vmem>>, vector<1x192xf32>
    %4 = vector.broadcast %3 : vector<1x192xf32> to vector<16x192xf32>
    %5 = arith.addf %2, %4 : vector<16x192xf32>
    %6 = vector.extract_strided_slice %5 {offsets = [0, 0], sizes = [16, 64], strides = [1, 1]} : vector<16x192xf32> to vector<16x64xf32>
    %7 = vector.extract_strided_slice %6 {offsets = [0, 0], sizes = [16, 4], strides = [1, 1]} : vector<16x64xf32> to vector<16x4xf32>
    %8 = vector.extract_strided_slice %6 {offsets = [0, 4], sizes = [16, 4], strides = [1, 1]} : vector<16x64xf32> to vector<16x4xf32>
    %9 = vector.extract_strided_slice %6 {offsets = [0, 8], sizes = [16, 4], strides = [1, 1]} : vector<16x64xf32> to vector<16x4xf32>
    %10 = vector.extract_strided_slice %6 {offsets = [0, 12], sizes = [16, 4], strides = [1, 1]} : vector<16x64xf32> to vector<16x4xf32>
    %11 = vector.extract_strided_slice %6 {offsets = [0, 16], sizes = [16, 4], strides = [1, 1]} : vector<16x64xf32> to vector<16x4xf32>
    %12 = vector.extract_strided_slice %6 {offsets = [0, 20], sizes = [16, 4], strides = [1, 1]} : vector<16x64xf32> to vector<16x4xf32>
    %13 = vector.extract_strided_slice %6 {offsets = [0, 24], sizes = [16, 4], strides = [1, 1]} : vector<16x64xf32> to vector<16x4xf32>
    %14 = vector.extract_strided_slice %6 {offsets = [0, 28], sizes = [16, 4], strides = [1, 1]} : vector<16x64xf32> to vector<16x4xf32>
    %15 = vector.extract_strided_slice %6 {offsets = [0, 32], sizes = [16, 4], strides = [1, 1]} : vector<16x64xf32> to vector<16x4xf32>
    %16 = vector.extract_strided_slice %6 {offsets = [0, 36], sizes = [16, 4], strides = [1, 1]} : vector<16x64xf32> to vector<16x4xf32>
    %17 = vector.extract_strided_slice %6 {offsets = [0, 40], sizes = [16, 4], strides = [1, 1]} : vector<16x64xf32> to vector<16x4xf32>
    %18 = vector.extract_strided_slice %6 {offsets = [0, 44], sizes = [16, 4], strides = [1, 1]} : vector<16x64xf32> to vector<16x4xf32>
    %19 = vector.extract_strided_slice %6 {offsets = [0, 48], sizes = [16, 4], strides = [1, 1]} : vector<16x64xf32> to vector<16x4xf32>
    %20 = vector.extract_strided_slice %6 {offsets = [0, 52], sizes = [16, 4], strides = [1, 1]} : vector<16x64xf32> to vector<16x4xf32>
    %21 = vector.extract_strided_slice %6 {offsets = [0, 56], sizes = [16, 4], strides = [1, 1]} : vector<16x64xf32> to vector<16x4xf32>
    %22 = vector.extract_strided_slice %6 {offsets = [0, 60], sizes = [16, 4], strides = [1, 1]} : vector<16x64xf32> to vector<16x4xf32>
    %23 = vector.shape_cast %7 : vector<16x4xf32> to vector<1x16x4xf32>
    %24 = vector.shape_cast %8 : vector<16x4xf32> to vector<1x16x4xf32>
    %25 = vector.shape_cast %9 : vector<16x4xf32> to vector<1x16x4xf32>
    %26 = vector.shape_cast %10 : vector<16x4xf32> to vector<1x16x4xf32>
    %27 = vector.shape_cast %11 : vector<16x4xf32> to vector<1x16x4xf32>
    %28 = vector.shape_cast %12 : vector<16x4xf32> to vector<1x16x4xf32>
    %29 = vector.shape_cast %13 : vector<16x4xf32> to vector<1x16x4xf32>
    %30 = vector.shape_cast %14 : vector<16x4xf32> to vector<1x16x4xf32>
    %31 = vector.shape_cast %15 : vector<16x4xf32> to vector<1x16x4xf32>
    %32 = vector.shape_cast %16 : vector<16x4xf32> to vector<1x16x4xf32>
    %33 = vector.shape_cast %17 : vector<16x4xf32> to vector<1x16x4xf32>
    %34 = vector.shape_cast %18 : vector<16x4xf32> to vector<1x16x4xf32>
    %35 = vector.shape_cast %19 : vector<16x4xf32> to vector<1x16x4xf32>
    %36 = vector.shape_cast %20 : vector<16x4xf32> to vector<1x16x4xf32>
    %37 = vector.shape_cast %21 : vector<16x4xf32> to vector<1x16x4xf32>
    %38 = vector.shape_cast %22 : vector<16x4xf32> to vector<1x16x4xf32>
    %39 = tpu.concatenate %23, %24, %25, %26, %27, %28, %29, %30, %31, %32, %33, %34, %35, %36, %37, %38 in 0 : vector<1x16x4xf32>, vector<1x16x4xf32>, vector<1x16x4xf32>, vector<1x16x4xf32>, vector<1x16x4xf32>, vector<1x16x4xf32>, vector<1x16x4xf32>, vector<1x16x4xf32>, vector<1x16x4xf32>, vector<1x16x4xf32>, vector<1x16x4xf32>, vector<1x16x4xf32>, vector<1x16x4xf32>, vector<1x16x4xf32>, vector<1x16x4xf32>, vector<1x16x4xf32> -> vector<16x16x4xf32>
    %40 = vector.extract_strided_slice %5 {offsets = [0, 64], sizes = [16, 64], strides = [1, 1]} : vector<16x192xf32> to vector<16x64xf32>
    %41 = vector.extract_strided_slice %40 {offsets = [0, 0], sizes = [16, 4], strides = [1, 1]} : vector<16x64xf32> to vector<16x4xf32>
    %42 = vector.extract_strided_slice %40 {offsets = [0, 4], sizes = [16, 4], strides = [1, 1]} : vector<16x64xf32> to vector<16x4xf32>
    %43 = vector.extract_strided_slice %40 {offsets = [0, 8], sizes = [16, 4], strides = [1, 1]} : vector<16x64xf32> to vector<16x4xf32>
    %44 = vector.extract_strided_slice %40 {offsets = [0, 12], sizes = [16, 4], strides = [1, 1]} : vector<16x64xf32> to vector<16x4xf32>
    %45 = vector.extract_strided_slice %40 {offsets = [0, 16], sizes = [16, 4], strides = [1, 1]} : vector<16x64xf32> to vector<16x4xf32>
    %46 = vector.extract_strided_slice %40 {offsets = [0, 20], sizes = [16, 4], strides = [1, 1]} : vector<16x64xf32> to vector<16x4xf32>
    %47 = vector.extract_strided_slice %40 {offsets = [0, 24], sizes = [16, 4], strides = [1, 1]} : vector<16x64xf32> to vector<16x4xf32>
    %48 = vector.extract_strided_slice %40 {offsets = [0, 28], sizes = [16, 4], strides = [1, 1]} : vector<16x64xf32> to vector<16x4xf32>
    %49 = vector.extract_strided_slice %40 {offsets = [0, 32], sizes = [16, 4], strides = [1, 1]} : vector<16x64xf32> to vector<16x4xf32>
    %50 = vector.extract_strided_slice %40 {offsets = [0, 36], sizes = [16, 4], strides = [1, 1]} : vector<16x64xf32> to vector<16x4xf32>
    %51 = vector.extract_strided_slice %40 {offsets = [0, 40], sizes = [16, 4], strides = [1, 1]} : vector<16x64xf32> to vector<16x4xf32>
    %52 = vector.extract_strided_slice %40 {offsets = [0, 44], sizes = [16, 4], strides = [1, 1]} : vector<16x64xf32> to vector<16x4xf32>
    %53 = vector.extract_strided_slice %40 {offsets = [0, 48], sizes = [16, 4], strides = [1, 1]} : vector<16x64xf32> to vector<16x4xf32>
    %54 = vector.extract_strided_slice %40 {offsets = [0, 52], sizes = [16, 4], strides = [1, 1]} : vector<16x64xf32> to vector<16x4xf32>
    %55 = vector.extract_strided_slice %40 {offsets = [0, 56], sizes = [16, 4], strides = [1, 1]} : vector<16x64xf32> to vector<16x4xf32>
    %56 = vector.extract_strided_slice %40 {offsets = [0, 60], sizes = [16, 4], strides = [1, 1]} : vector<16x64xf32> to vector<16x4xf32>
    %57 = vector.shape_cast %41 : vector<16x4xf32> to vector<1x16x4xf32>
    %58 = vector.shape_cast %42 : vector<16x4xf32> to vector<1x16x4xf32>
    %59 = vector.shape_cast %43 : vector<16x4xf32> to vector<1x16x4xf32>
    %60 = vector.shape_cast %44 : vector<16x4xf32> to vector<1x16x4xf32>
    %61 = vector.shape_cast %45 : vector<16x4xf32> to vector<1x16x4xf32>
    %62 = vector.shape_cast %46 : vector<16x4xf32> to vector<1x16x4xf32>
    %63 = vector.shape_cast %47 : vector<16x4xf32> to vector<1x16x4xf32>
    %64 = vector.shape_cast %48 : vector<16x4xf32> to vector<1x16x4xf32>
    %65 = vector.shape_cast %49 : vector<16x4xf32> to vector<1x16x4xf32>
    %66 = vector.shape_cast %50 : vector<16x4xf32> to vector<1x16x4xf32>
    %67 = vector.shape_cast %51 : vector<16x4xf32> to vector<1x16x4xf32>
    %68 = vector.shape_cast %52 : vector<16x4xf32> to vector<1x16x4xf32>
    %69 = vector.shape_cast %53 : vector<16x4xf32> to vector<1x16x4xf32>
    %70 = vector.shape_cast %54 : vector<16x4xf32> to vector<1x16x4xf32>
    %71 = vector.shape_cast %55 : vector<16x4xf32> to vector<1x16x4xf32>
    %72 = vector.shape_cast %56 : vector<16x4xf32> to vector<1x16x4xf32>
    %73 = tpu.concatenate %57, %58, %59, %60, %61, %62, %63, %64, %65, %66, %67, %68, %69, %70, %71, %72 in 0 : vector<1x16x4xf32>, vector<1x16x4xf32>, vector<1x16x4xf32>, vector<1x16x4xf32>, vector<1x16x4xf32>, vector<1x16x4xf32>, vector<1x16x4xf32>, vector<1x16x4xf32>, vector<1x16x4xf32>, vector<1x16x4xf32>, vector<1x16x4xf32>, vector<1x16x4xf32>, vector<1x16x4xf32>, vector<1x16x4xf32>, vector<1x16x4xf32>, vector<1x16x4xf32> -> vector<16x16x4xf32>
    %74 = vector.extract_strided_slice %5 {offsets = [0, 128], sizes = [16, 64], strides = [1, 1]} : vector<16x192xf32> to vector<16x64xf32>
    %75 = vector.extract_strided_slice %74 {offsets = [0, 0], sizes = [16, 4], strides = [1, 1]} : vector<16x64xf32> to vector<16x4xf32>
    %76 = vector.extract_strided_slice %74 {offsets = [0, 4], sizes = [16, 4], strides = [1, 1]} : vector<16x64xf32> to vector<16x4xf32>
    %77 = vector.extract_strided_slice %74 {offsets = [0, 8], sizes = [16, 4], strides = [1, 1]} : vector<16x64xf32> to vector<16x4xf32>
    %78 = vector.extract_strided_slice %74 {offsets = [0, 12], sizes = [16, 4], strides = [1, 1]} : vector<16x64xf32> to vector<16x4xf32>
    %79 = vector.extract_strided_slice %74 {offsets = [0, 16], sizes = [16, 4], strides = [1, 1]} : vector<16x64xf32> to vector<16x4xf32>
    %80 = vector.extract_strided_slice %74 {offsets = [0, 20], sizes = [16, 4], strides = [1, 1]} : vector<16x64xf32> to vector<16x4xf32>
    %81 = vector.extract_strided_slice %74 {offsets = [0, 24], sizes = [16, 4], strides = [1, 1]} : vector<16x64xf32> to vector<16x4xf32>
    %82 = vector.extract_strided_slice %74 {offsets = [0, 28], sizes = [16, 4], strides = [1, 1]} : vector<16x64xf32> to vector<16x4xf32>
    %83 = vector.extract_strided_slice %74 {offsets = [0, 32], sizes = [16, 4], strides = [1, 1]} : vector<16x64xf32> to vector<16x4xf32>
    %84 = vector.extract_strided_slice %74 {offsets = [0, 36], sizes = [16, 4], strides = [1, 1]} : vector<16x64xf32> to vector<16x4xf32>
    %85 = vector.extract_strided_slice %74 {offsets = [0, 40], sizes = [16, 4], strides = [1, 1]} : vector<16x64xf32> to vector<16x4xf32>
    %86 = vector.extract_strided_slice %74 {offsets = [0, 44], sizes = [16, 4], strides = [1, 1]} : vector<16x64xf32> to vector<16x4xf32>
    %87 = vector.extract_strided_slice %74 {offsets = [0, 48], sizes = [16, 4], strides = [1, 1]} : vector<16x64xf32> to vector<16x4xf32>
    %88 = vector.extract_strided_slice %74 {offsets = [0, 52], sizes = [16, 4], strides = [1, 1]} : vector<16x64xf32> to vector<16x4xf32>
    %89 = vector.extract_strided_slice %74 {offsets = [0, 56], sizes = [16, 4], strides = [1, 1]} : vector<16x64xf32> to vector<16x4xf32>
    %90 = vector.extract_strided_slice %74 {offsets = [0, 60], sizes = [16, 4], strides = [1, 1]} : vector<16x64xf32> to vector<16x4xf32>
    %91 = vector.shape_cast %75 : vector<16x4xf32> to vector<1x16x4xf32>
    %92 = vector.shape_cast %76 : vector<16x4xf32> to vector<1x16x4xf32>
    %93 = vector.shape_cast %77 : vector<16x4xf32> to vector<1x16x4xf32>
    %94 = vector.shape_cast %78 : vector<16x4xf32> to vector<1x16x4xf32>
    %95 = vector.shape_cast %79 : vector<16x4xf32> to vector<1x16x4xf32>
    %96 = vector.shape_cast %80 : vector<16x4xf32> to vector<1x16x4xf32>
    %97 = vector.shape_cast %81 : vector<16x4xf32> to vector<1x16x4xf32>
    %98 = vector.shape_cast %82 : vector<16x4xf32> to vector<1x16x4xf32>
    %99 = vector.shape_cast %83 : vector<16x4xf32> to vector<1x16x4xf32>
    %100 = vector.shape_cast %84 : vector<16x4xf32> to vector<1x16x4xf32>
    %101 = vector.shape_cast %85 : vector<16x4xf32> to vector<1x16x4xf32>
    %102 = vector.shape_cast %86 : vector<16x4xf32> to vector<1x16x4xf32>
    %103 = vector.shape_cast %87 : vector<16x4xf32> to vector<1x16x4xf32>
    %104 = vector.shape_cast %88 : vector<16x4xf32> to vector<1x16x4xf32>
    %105 = vector.shape_cast %89 : vector<16x4xf32> to vector<1x16x4xf32>
    %106 = vector.shape_cast %90 : vector<16x4xf32> to vector<1x16x4xf32>
    %107 = tpu.concatenate %91, %92, %93, %94, %95, %96, %97, %98, %99, %100, %101, %102, %103, %104, %105, %106 in 0 : vector<1x16x4xf32>, vector<1x16x4xf32>, vector<1x16x4xf32>, vector<1x16x4xf32>, vector<1x16x4xf32>, vector<1x16x4xf32>, vector<1x16x4xf32>, vector<1x16x4xf32>, vector<1x16x4xf32>, vector<1x16x4xf32>, vector<1x16x4xf32>, vector<1x16x4xf32>, vector<1x16x4xf32>, vector<1x16x4xf32>, vector<1x16x4xf32>, vector<1x16x4xf32> -> vector<16x16x4xf32>
    "tpu.trace_start"() <{level = 10 : i32, message = "hqd,hkd->hqk"}> : () -> ()
    %cst_5 = arith.constant dense<0.000000e+00> : vector<16x16x16xf32>
    %108 = tpu.matmul %39, %73, %cst_5 {dimension_numbers = #tpu.dot_dimension_numbers<[2], [2], [1], [1], [0, 0, 0, 1, 1, 1], [0], [0]>} : vector<16x16x4xf32>, vector<16x16x4xf32>, vector<16x16x16xf32> -> vector<16x16x16xf32>
    "tpu.trace_stop"() : () -> ()
    %109 = tpu.iota {dimensions = array<i32: 0>} : vector<16x16xi32>
    %110 = tpu.iota {dimensions = array<i32: 1>} : vector<16x16xi32>
    %c2_i32 = arith.constant 2 : i32
    %c0_i32 = arith.constant 0 : i32
    %111 = arith.cmpi eq, %c2_i32, %c0_i32 : i32
    %c1_i32 = arith.constant 1 : i32
    %112 = arith.select %111, %c1_i32, %c2_i32 : i32
    %113 = vector.broadcast %112 : i32 to vector<16x16xi32>
    %114 = arith.remsi %109, %113 : vector<16x16xi32>
    %c0_i32_6 = arith.constant 0 : i32
    %115 = vector.broadcast %c0_i32_6 : i32 to vector<16x16xi32>
    %116 = arith.cmpi ne, %114, %115 : vector<16x16xi32>
    %c0_i32_7 = arith.constant 0 : i32
    %117 = vector.broadcast %c0_i32_7 : i32 to vector<16x16xi32>
    %118 = arith.cmpi slt, %114, %117 : vector<16x16xi32>
    %c0_i32_8 = arith.constant 0 : i32
    %119 = arith.cmpi slt, %112, %c0_i32_8 : i32
    %120 = vector.broadcast %119 : i1 to vector<16x16xi1>
    %121 = vector.broadcast %120 : vector<16x16xi1> to vector<16x16xi1>
    %122 = arith.xori %118, %121 : vector<16x16xi1>
    %123 = arith.andi %122, %116 : vector<16x16xi1>
    %124 = vector.broadcast %112 : i32 to vector<16x16xi32>
    %125 = arith.addi %114, %124 : vector<16x16xi32>
    %126 = arith.select %123, %125, %114 : vector<16x16xi1>, vector<16x16xi32>
    %c2_i32_9 = arith.constant 2 : i32
    %c0_i32_10 = arith.constant 0 : i32
    %127 = arith.cmpi eq, %c2_i32_9, %c0_i32_10 : i32
    %c1_i32_11 = arith.constant 1 : i32
    %128 = arith.select %127, %c1_i32_11, %c2_i32_9 : i32
    %129 = vector.broadcast %128 : i32 to vector<16x16xi32>
    %130 = arith.remsi %110, %129 : vector<16x16xi32>
    %c0_i32_12 = arith.constant 0 : i32
    %131 = vector.broadcast %c0_i32_12 : i32 to vector<16x16xi32>
    %132 = arith.cmpi ne, %130, %131 : vector<16x16xi32>
    %c0_i32_13 = arith.constant 0 : i32
    %133 = vector.broadcast %c0_i32_13 : i32 to vector<16x16xi32>
    %134 = arith.cmpi slt, %130, %133 : vector<16x16xi32>
    %c0_i32_14 = arith.constant 0 : i32
    %135 = arith.cmpi slt, %128, %c0_i32_14 : i32
    %136 = vector.broadcast %135 : i1 to vector<16x16xi1>
    %137 = vector.broadcast %136 : vector<16x16xi1> to vector<16x16xi1>
    %138 = arith.xori %134, %137 : vector<16x16xi1>
    %139 = arith.andi %138, %132 : vector<16x16xi1>
    %140 = vector.broadcast %128 : i32 to vector<16x16xi32>
    %141 = arith.addi %130, %140 : vector<16x16xi32>
    %142 = arith.select %139, %141, %130 : vector<16x16xi1>, vector<16x16xi32>
    %143 = arith.cmpi eq, %126, %142 : vector<16x16xi32>
    %cst_15 = arith.constant 0.000000e+00 : f32
    %cst_16 = arith.constant -1.000000e+30 : f32
    %144 = vector.broadcast %cst_15 : f32 to vector<16x16xf32>
    %145 = vector.broadcast %cst_16 : f32 to vector<16x16xf32>
    %146 = arith.select %143, %144, %145 : vector<16x16xi1>, vector<16x16xf32>
    %147 = vector.shape_cast %146 : vector<16x16xf32> to vector<1x16x16xf32>
    %148 = vector.broadcast %147 : vector<1x16x16xf32> to vector<16x16x16xf32>
    %149 = arith.addf %108, %148 : vector<16x16x16xf32>
    %cst_17 = arith.constant dense<0xFF800000> : vector<16x16xf32>
    %150 = vector.multi_reduction <maximumf>, %149, %cst_17 [2] : vector<16x16x16xf32> to vector<16x16xf32>
    %151 = vector.shape_cast %150 : vector<16x16xf32> to vector<16x16x1xf32>
    %152 = vector.broadcast %151 : vector<16x16x1xf32> to vector<16x16x16xf32>
    %153 = arith.subf %149, %152 : vector<16x16x16xf32>
    %154 = math.exp %153 : vector<16x16x16xf32>
    %cst_18 = arith.constant dense<0.000000e+00> : vector<16x16xf32>
    %155 = vector.multi_reduction <add>, %154, %cst_18 [2] : vector<16x16x16xf32> to vector<16x16xf32>
    %156 = vector.shape_cast %155 : vector<16x16xf32> to vector<16x16x1xf32>
    %157 = tpu.reciprocal %156 {approx = true} : vector<16x16x1xf32> -> vector<16x16x1xf32>
    %158 = vector.broadcast %157 : vector<16x16x1xf32> to vector<16x16x16xf32>
    %159 = arith.mulf %154, %158 : vector<16x16x16xf32>
    "tpu.trace_start"() <{level = 10 : i32, message = "hqk,hkd->hqd"}> : () -> ()
    %cst_19 = arith.constant dense<0.000000e+00> : vector<16x16x4xf32>
    %160 = tpu.matmul %159, %107, %cst_19 {dimension_numbers = #tpu.dot_dimension_numbers<[2], [1], [1], [2], [0, 0, 0, 1, 1, 2], [0], [0]>} : vector<16x16x16xf32>, vector<16x16x4xf32>, vector<16x16x4xf32> -> vector<16x16x4xf32>
    "tpu.trace_stop"() : () -> ()
    %161 = vector.extract_strided_slice %160 {offsets = [0, 0, 0], sizes = [1, 16, 4], strides = [1, 1, 1]} : vector<16x16x4xf32> to vector<1x16x4xf32>
    %162 = vector.shape_cast %161 : vector<1x16x4xf32> to vector<16x4xf32>
    %163 = vector.extract_strided_slice %160 {offsets = [1, 0, 0], sizes = [1, 16, 4], strides = [1, 1, 1]} : vector<16x16x4xf32> to vector<1x16x4xf32>
    %164 = vector.shape_cast %163 : vector<1x16x4xf32> to vector<16x4xf32>
    %165 = vector.extract_strided_slice %160 {offsets = [2, 0, 0], sizes = [1, 16, 4], strides = [1, 1, 1]} : vector<16x16x4xf32> to vector<1x16x4xf32>
    %166 = vector.shape_cast %165 : vector<1x16x4xf32> to vector<16x4xf32>
    %167 = vector.extract_strided_slice %160 {offsets = [3, 0, 0], sizes = [1, 16, 4], strides = [1, 1, 1]} : vector<16x16x4xf32> to vector<1x16x4xf32>
    %168 = vector.shape_cast %167 : vector<1x16x4xf32> to vector<16x4xf32>
    %169 = vector.extract_strided_slice %160 {offsets = [4, 0, 0], sizes = [1, 16, 4], strides = [1, 1, 1]} : vector<16x16x4xf32> to vector<1x16x4xf32>
    %170 = vector.shape_cast %169 : vector<1x16x4xf32> to vector<16x4xf32>
    %171 = vector.extract_strided_slice %160 {offsets = [5, 0, 0], sizes = [1, 16, 4], strides = [1, 1, 1]} : vector<16x16x4xf32> to vector<1x16x4xf32>
    %172 = vector.shape_cast %171 : vector<1x16x4xf32> to vector<16x4xf32>
    %173 = vector.extract_strided_slice %160 {offsets = [6, 0, 0], sizes = [1, 16, 4], strides = [1, 1, 1]} : vector<16x16x4xf32> to vector<1x16x4xf32>
    %174 = vector.shape_cast %173 : vector<1x16x4xf32> to vector<16x4xf32>
    %175 = vector.extract_strided_slice %160 {offsets = [7, 0, 0], sizes = [1, 16, 4], strides = [1, 1, 1]} : vector<16x16x4xf32> to vector<1x16x4xf32>
    %176 = vector.shape_cast %175 : vector<1x16x4xf32> to vector<16x4xf32>
    %177 = vector.extract_strided_slice %160 {offsets = [8, 0, 0], sizes = [1, 16, 4], strides = [1, 1, 1]} : vector<16x16x4xf32> to vector<1x16x4xf32>
    %178 = vector.shape_cast %177 : vector<1x16x4xf32> to vector<16x4xf32>
    %179 = vector.extract_strided_slice %160 {offsets = [9, 0, 0], sizes = [1, 16, 4], strides = [1, 1, 1]} : vector<16x16x4xf32> to vector<1x16x4xf32>
    %180 = vector.shape_cast %179 : vector<1x16x4xf32> to vector<16x4xf32>
    %181 = vector.extract_strided_slice %160 {offsets = [10, 0, 0], sizes = [1, 16, 4], strides = [1, 1, 1]} : vector<16x16x4xf32> to vector<1x16x4xf32>
    %182 = vector.shape_cast %181 : vector<1x16x4xf32> to vector<16x4xf32>
    %183 = vector.extract_strided_slice %160 {offsets = [11, 0, 0], sizes = [1, 16, 4], strides = [1, 1, 1]} : vector<16x16x4xf32> to vector<1x16x4xf32>
    %184 = vector.shape_cast %183 : vector<1x16x4xf32> to vector<16x4xf32>
    %185 = vector.extract_strided_slice %160 {offsets = [12, 0, 0], sizes = [1, 16, 4], strides = [1, 1, 1]} : vector<16x16x4xf32> to vector<1x16x4xf32>
    %186 = vector.shape_cast %185 : vector<1x16x4xf32> to vector<16x4xf32>
    %187 = vector.extract_strided_slice %160 {offsets = [13, 0, 0], sizes = [1, 16, 4], strides = [1, 1, 1]} : vector<16x16x4xf32> to vector<1x16x4xf32>
    %188 = vector.shape_cast %187 : vector<1x16x4xf32> to vector<16x4xf32>
    %189 = vector.extract_strided_slice %160 {offsets = [14, 0, 0], sizes = [1, 16, 4], strides = [1, 1, 1]} : vector<16x16x4xf32> to vector<1x16x4xf32>
    %190 = vector.shape_cast %189 : vector<1x16x4xf32> to vector<16x4xf32>
    %191 = vector.extract_strided_slice %160 {offsets = [15, 0, 0], sizes = [1, 16, 4], strides = [1, 1, 1]} : vector<16x16x4xf32> to vector<1x16x4xf32>
    %192 = vector.shape_cast %191 : vector<1x16x4xf32> to vector<16x4xf32>
    %193 = tpu.concatenate %162, %164, %166, %168, %170, %172, %174, %176, %178, %180, %182, %184, %186, %188, %190, %192 in 1 : vector<16x4xf32>, vector<16x4xf32>, vector<16x4xf32>, vector<16x4xf32>, vector<16x4xf32>, vector<16x4xf32>, vector<16x4xf32>, vector<16x4xf32>, vector<16x4xf32>, vector<16x4xf32>, vector<16x4xf32>, vector<16x4xf32>, vector<16x4xf32>, vector<16x4xf32>, vector<16x4xf32>, vector<16x4xf32> -> vector<16x64xf32>
    %c0_20 = arith.constant 0 : index
    %c0_21 = arith.constant 0 : index
    %194 = vector.load %arg4[%c0_20, %c0_21] : memref<64x64xf32, #tpu.memory_space<vmem>>, vector<64x64xf32>
    %cst_22 = arith.constant dense<0.000000e+00> : vector<16x64xf32>
    %195 = tpu.matmul %193, %194, %cst_22 {dimension_numbers = #tpu.dot_dimension_numbers<[1], [0], [0], [1], [0, 0, 1, 1], [], []>} : vector<16x64xf32>, vector<64x64xf32>, vector<16x64xf32> -> vector<16x64xf32>
    %c0_23 = arith.constant 0 : index
    %c0_24 = arith.constant 0 : index
    %196 = vector.load %arg5[%c0_23, %c0_24] : memref<1x64xf32, #tpu.memory_space<vmem>>, vector<1x64xf32>
    %197 = vector.broadcast %196 : vector<1x64xf32> to vector<16x64xf32>
    %198 = arith.addf %195, %197 : vector<16x64xf32>
    %c0_25 = arith.constant 0 : index
    %c0_26 = arith.constant 0 : index
    %199 = vector.load %arg6[%c0_25, %c0_26] : memref<16x64xf32, #tpu.memory_space<vmem>>, vector<16x64xf32>
    tpu.vector_store %arg6[%c0_25, %c0_26], %198 {strides = array<i32>} : memref<16x64xf32, #tpu.memory_space<vmem>>, vector<16x64xf32>,
    return
  }
  func.func @transform_0(%arg0: i32) -> (i32, i32) {
    %c0_i32 = arith.constant 0 : i32
    %c0_i32_0 = arith.constant 0 : i32
    %c0_i32_1 = arith.constant 0 : i32
    return %c0_i32, %c0_i32_0 : i32, i32
  }
  func.func @transform_1(%arg0: i32) -> (i32, i32) {
    %c0_i32 = arith.constant 0 : i32
    %c0_i32_0 = arith.constant 0 : i32
    %c0_i32_1 = arith.constant 0 : i32
    return %c0_i32, %c0_i32_0 : i32, i32
  }
  func.func @transform_2(%arg0: i32) -> (i32, i32) {
    %c0_i32 = arith.constant 0 : i32
    %c0_i32_0 = arith.constant 0 : i32
    %c0_i32_1 = arith.constant 0 : i32
    return %c0_i32, %c0_i32_0 : i32, i32
  }
  func.func @transform_3(%arg0: i32) -> (i32, i32) {
    %c0_i32 = arith.constant 0 : i32
    %c0_i32_0 = arith.constant 0 : i32
    %c0_i32_1 = arith.constant 0 : i32
    return %c0_i32, %c0_i32_0 : i32, i32
  }
  func.func @transform_4(%arg0: i32) -> (i32, i32) {
    %c0_i32 = arith.constant 0 : i32
    %c0_i32_0 = arith.constant 0 : i32
    %c0_i32_1 = arith.constant 0 : i32
    return %c0_i32, %c0_i32_0 : i32, i32
  }
  func.func @transform_5(%arg0: i32) -> (i32, i32) {
    %c0_i32 = arith.constant 0 : i32
    %c0_i32_0 = arith.constant 0 : i32
    %c0_i32_1 = arith.constant 0 : i32
    return %c0_i32, %c0_i32_0 : i32, i32
  }
}

</mosaic_0001>

<llo_original>
// kernel: attention_forward.1
$region0: #{attention_forward.1}
  #allocation0 [shape = 'u32[]', space=smem, size = 0x4, offset = 0x4, fixed_abs, tag = 'smem constant byte address 0x4 - core index']
  #allocation1 [shape = 'u32[144,128]{1,0:T(1,128)}', space=vmem, size = 0x12000, scoped, tag = 'internal scratch']
  %s0 = inlined_call_operand.hbm [shape: f32[16,64], index: 0, kind: input, shape index: {}]
  %s1 = inlined_call_operand.hbm [shape: f32[64,192], index: 1, kind: input, shape index: {}]
  %s2 = inlined_call_operand.vmem [shape: f32[1,192], index: 2, kind: input, shape index: {}]
  %s3 = inlined_call_operand.hbm [shape: f32[64,64], index: 3, kind: input, shape index: {}]
  %s4 = inlined_call_operand.vmem [shape: f32[1,64], index: 4, kind: input, shape index: {}]
  %s5 = inlined_call_operand.hbm [shape: f32[16,64], index: 5, kind: output, shape index: {}]
  %s6 = sld [smem:[#allocation0]]
  $region42: #{attention_forward.1} parent=0
    _
  %s8 = ssub.s32 1, %s6
  %s9 = scalar_select 0, %s8, %s6
  $region1: #{attention_forward.1} parent=0
    #allocation2 [shape = 'u8[8192]{0}', space=vmem, size = 0x2000, scoped, tag = 'input window, operand 0, single buffered']
    #allocation3 [shape = 's32[1]{0}', space=sflag, size = 0x4, scoped, tag = 'scoped memory for attention_forward.1']
    #allocation4 [shape = 's32[1]{0}', space=sflag, size = 0x4, scoped, tag = 'scoped memory for attention_forward.1']
    #allocation5 [shape = 'u8[65536]{0}', space=vmem, size = 0x10000, scoped, tag = 'input window, operand 1, single buffered']
    #allocation6 [shape = 's32[1]{0}', space=sflag, size = 0x4, scoped, tag = 'scoped memory for attention_forward.1']
    #allocation7 [shape = 'u8[32768]{0}', space=vmem, size = 0x8000, scoped, tag = 'input window, operand 3, single buffered']
    #allocation8 [shape = 'u8[8192]{0}', space=vmem, size = 0x2000, scoped, tag = 'output window, operand 0, single buffered']
    %10 = vsyncpa [#allocation3], 0
    %11 = vsyncpa [#allocation6], 0
    %12 = vsyncpa [#allocation4], 0
    // Predicated region
    $region2: #{attention_forward.1} parent=1 // pred_check
      _
    $region3: #{attention_forward.1} parent=1 // pred_check_branch
      %14 = sbr.rel (0) target = $region5
    $region4: #{attention_forward.1} parent=1 // pred_region
      %s16 = ssub.s32 256, 256
      %17 = vsyncadd [#allocation3], %s16
      %s18 = sshll.u32 [#allocation2], 4
      %s19 = int_to_ptr.vmem [resolvable:$true] %s18
      %24 = dma.hbm_to_vmem [thread:$0]  %s0, 256, %s19, [#allocation3], 128, 128, 8
    $region5: #{attention_forward.1} parent=1 // pred_fallthru
      _
    // Predicated region
    $region6: #{attention_forward.1} parent=1 // pred_check
      _
    $region7: #{attention_forward.1} parent=1 // pred_check_branch
      %26 = sbr.rel (0) target = $region9
    $region8: #{attention_forward.1} parent=1 // pred_region
      %s28 = ssub.s32 2048, 2048
      %29 = vsyncadd [#allocation6], %s28
      %s30 = sshll.u32 [#allocation5], 4
      %s31 = int_to_ptr.vmem [resolvable:$true] %s30
      %36 = dma.hbm_to_vmem [thread:$0]  %s1, 2048, %s31, [#allocation6], 256, 256, 16
    $region9: #{attention_forward.1} parent=1 // pred_fallthru
      _
    // Predicated region
    $region10: #{attention_forward.1} parent=1 // pred_check
      _
    $region11: #{attention_forward.1} parent=1 // pred_check_branch
      %38 = sbr.rel (0) target = $region13
    $region12: #{attention_forward.1} parent=1 // pred_region
      _
    $region13: #{attention_forward.1} parent=1 // pred_fallthru
      _
    // Predicated region
    $region14: #{attention_forward.1} parent=1 // pred_check
      _
    $region15: #{attention_forward.1} parent=1 // pred_check_branch
      %40 = sbr.rel (0) target = $region17
    $region16: #{attention_forward.1} parent=1 // pred_region
      %s42 = ssub.s32 1024, 1024
      %43 = vsyncadd [#allocation6], %s42
      %s44 = sshll.u32 [#allocation7], 4
      %s45 = int_to_ptr.vmem [resolvable:$true] %s44
      %50 = dma.hbm_to_vmem [thread:$0]  %s3, 1024, %s45, [#allocation6], 128, 128, 8
    $region17: #{attention_forward.1} parent=1 // pred_fallthru
      _
    // Predicated region
    $region18: #{attention_forward.1} parent=1 // pred_check
      _
    $region19: #{attention_forward.1} parent=1 // pred_check_branch
      %52 = sbr.rel (0) target = $region21
    $region20: #{attention_forward.1} parent=1 // pred_region
      _
    $region21: #{attention_forward.1} parent=1 // pred_fallthru
      _
    // Predicated region
    $region22: #{attention_forward.1} parent=1 // pred_check
      _
    $region23: #{attention_forward.1} parent=1 // pred_check_branch
      %54 = sbr.rel (0) target = $region25
    $region24: #{attention_forward.1} parent=1 // pred_region
      %55 = dma.done [#allocation3], 256
    $region25: #{attention_forward.1} parent=1 // pred_fallthru
      _
    // Predicated region
    $region26: #{attention_forward.1} parent=1 // pred_check
      _
    $region27: #{attention_forward.1} parent=1 // pred_check_branch
      %57 = sbr.rel (0) target = $region29
    $region28: #{attention_forward.1} parent=1 // pred_region
      %58 = dma.done [#allocation6], 2048
    $region29: #{attention_forward.1} parent=1 // pred_fallthru
      _
    // Predicated region
    $region30: #{attention_forward.1} parent=1 // pred_check
      _
    $region31: #{attention_forward.1} parent=1 // pred_check_branch
      %60 = sbr.rel (0) target = $region33
    $region32: #{attention_forward.1} parent=1 // pred_region
      %61 = dma.done [#allocation6], 1024
    $region33: #{attention_forward.1} parent=1 // pred_fallthru
      _
    %v62 = vld [vmem:[#allocation2] sm:$0xff]
    %v63 = vld [vmem:[#allocation2 + $0x8] sm:$0xff]
    %v64 = vld [vmem:[#allocation5] sm:$0xff]
    %v65 = vld [vmem:[#allocation5 + $0x8] sm:$0xff]
    %v66 = vld [vmem:[#allocation5 + $0x10] sm:$0xff]
    %v67 = vld [vmem:[#allocation5 + $0x18] sm:$0xff]
    %v68 = vld [vmem:[#allocation5 + $0x20] sm:$0xff]
    %v69 = vld [vmem:[#allocation5 + $0x28] sm:$0xff]
    %v70 = vld [vmem:[#allocation5 + $0x30] sm:$0xff]
    %v71 = vld [vmem:[#allocation5 + $0x38] sm:$0xff]
    %v72 = vld [vmem:[#allocation5 + $0x40] sm:$0xff]
    %v73 = vld [vmem:[#allocation5 + $0x48] sm:$0xff]
    %v74 = vld [vmem:[#allocation5 + $0x50] sm:$0xff]
    %v75 = vld [vmem:[#allocation5 + $0x58] sm:$0xff]
    %v76 = vld [vmem:[#allocation5 + $0x60] sm:$0xff]
    %v77 = vld [vmem:[#allocation5 + $0x68] sm:$0xff]
    %v78 = vld [vmem:[#allocation5 + $0x70] sm:$0xff]
    %v79 = vld [vmem:[#allocation5 + $0x78] sm:$0xff]
    %v80 = vld [vmem:[%s2] sm:$0x3]
    %v82 = vlaneseq
    %v83 = vshrl.u32 %v82, 7
    %v84 = vsub.s32 0, %v83
    %v85 = vrot.slane %v80, %v84
    %v86 = vlaneseq
    %v87 = vshrl.u32 %v86, 7
    %v88 = vsub.s32 1, %v87
    %v89 = vrot.slane %v80, %v88
    %vm92 = vcmask 523264
    %v94 = vsel %vm92, %v62, 0
    %v97 = vsel %vm92, %v63, 0
    %99 = vmatprep.subr.mxu0 %v65
    %100 = vmatpush1.msra.mxu0 %v64
    %101 = vmatprep.subr.mxu0 %v67
    %102 = vmatpush1.msra.mxu0 %v66
    %103 = vmatprep.subr.mxu0 %v69
    %104 = vmatpush1.msra.mxu0 %v68
    %105 = vmatprep.subr.mxu0 %v71
    %106 = vmatpush1.msra.mxu0 %v70
    %107 = vmatprep.subr.mxu0 %v73
    %108 = vmatpush1.msra.mxu0 %v72
    %109 = vmatprep.subr.mxu0 %v75
    %110 = vmatpush1.msra.mxu0 %v74
    %111 = vmatprep.subr.mxu0 %v77
    %112 = vmatpush1.msra.mxu0 %v76
    %113 = vmatprep.subr.mxu0 %v79
    %114 = vmatpush1.msra.mxu0 %v78
    %115 = vmatprep.subr.mxu0 0.0
    %116 = vmatpush1.msra.mxu0 0.0
    %117 = vmatprep.subr.mxu0 0.0
    %118 = vmatpush1.msra.mxu0 0.0
    %119 = vmatprep.subr.mxu0 0.0
    %120 = vmatpush1.msra.mxu0 0.0
    %121 = vmatprep.subr.mxu0 0.0
    %122 = vmatpush1.msra.mxu0 0.0
    %123 = vmatprep.subr.mxu0 0.0
    %124 = vmatpush1.msra.mxu0 0.0
    %125 = vmatprep.subr.mxu0 0.0
    %126 = vmatpush1.msra.mxu0 0.0
    %127 = vmatprep.subr.mxu0 0.0
    %128 = vmatpush1.msra.mxu0 0.0
    %129 = vmatprep.subr.mxu0 0.0
    %130 = vmatpush1.msra.mxu0 0.0
    %131 = vmatprep.subr.mxu0 0.0
    %132 = vmatpush1.msra.mxu0 0.0
    %133 = vmatprep.subr.mxu0 0.0
    %134 = vmatpush1.msra.mxu0 0.0
    %135 = vmatprep.subr.mxu0 0.0
    %136 = vmatpush1.msra.mxu0 0.0
    %137 = vmatprep.subr.mxu0 0.0
    %138 = vmatpush1.msra.mxu0 0.0
    %139 = vmatprep.subr.mxu0 0.0
    %140 = vmatpush1.msra.mxu0 0.0
    %141 = vmatprep.subr.mxu0 0.0
    %142 = vmatpush1.msra.mxu0 0.0
    %143 = vmatprep.subr.mxu0 0.0
    %144 = vmatpush1.msra.mxu0 0.0
    %145 = vmatprep.subr.mxu0 0.0
    %146 = vmatpush1.msra.mxu0 0.0
    %147 = vmatprep.subr.mxu0 0.0
    %148 = vmatpush1.msra.mxu0 0.0
    %149 = vmatprep.subr.mxu0 0.0
    %150 = vmatpush1.msra.mxu0 0.0
    %151 = vmatprep.subr.mxu0 0.0
    %152 = vmatpush1.msra.mxu0 0.0
    %153 = vmatprep.subr.mxu0 0.0
    %154 = vmatpush1.msra.mxu0 0.0
    %155 = vmatprep.subr.mxu0 0.0
    %156 = vmatpush1.msra.mxu0 0.0
    %157 = vmatprep.subr.mxu0 0.0
    %158 = vmatpush1.msra.mxu0 0.0
    %159 = vmatprep.subr.mxu0 0.0
    %160 = vmatpush1.msra.mxu0 0.0
    %161 = vmatprep.subr.mxu0 0.0
    %162 = vmatpush1.msra.mxu0 0.0
    %163 = vmatprep.mubr.f32.mxu0 0.0
    %164 = vmatmul.mubr.f32.gmra.mrb[0].mxu0 %v94
    %v165 = vpop.f32.mrb[0].mxu0
    %v166 = vadd.f32 %v85, %v165
    %v167 = vpop.f32.mrb[0].mxu0
    %v168 = vadd.f32 %v89, %v167
    %169 = vmatprep.mubr.f32.mxu0 0.0
    %170 = vmatmul.mubr.f32.gmra.mrb[0].mxu0 %v97
    %v171 = vpop.f32.mrb[0].mxu0
    %v172 = vadd.f32 %v85, %v171
    %v173 = vpop.f32.mrb[0].mxu0
    %v174 = vadd.f32 %v89, %v173
    %175 = vdwg.mxu0
    %178 = vrot.lane.b32.xlu0 %v166, 124
    %v179 = vpop.permute.xlu0 %178
    %180 = vrot.lane.b32.xlu0 %v172, 124
    %v181 = vpop.permute.xlu0 %180
    %184 = vrot.lane.b32.xlu0 %v166, 120
    %v185 = vpop.permute.xlu0 %184
    %186 = vrot.lane.b32.xlu0 %v172, 120
    %v187 = vpop.permute.xlu0 %186
    %190 = vrot.lane.b32.xlu0 %v166, 116
    %v191 = vpop.permute.xlu0 %190
    %192 = vrot.lane.b32.xlu0 %v172, 116
    %v193 = vpop.permute.xlu0 %192
    %196 = vrot.lane.b32.xlu0 %v166, 112
    %v197 = vpop.permute.xlu0 %196
    %198 = vrot.lane.b32.xlu0 %v172, 112
    %v199 = vpop.permute.xlu0 %198
    %202 = vrot.lane.b32.xlu0 %v166, 108
    %v203 = vpop.permute.xlu0 %202
    %204 = vrot.lane.b32.xlu0 %v172, 108
    %v205 = vpop.permute.xlu0 %204
    %208 = vrot.lane.b32.xlu0 %v166, 104
    %v209 = vpop.permute.xlu0 %208
    %210 = vrot.lane.b32.xlu0 %v172, 104
    %v211 = vpop.permute.xlu0 %210
    %214 = vrot.lane.b32.xlu0 %v166, 100
    %v215 = vpop.permute.xlu0 %214
    %216 = vrot.lane.b32.xlu0 %v172, 100
    %v217 = vpop.permute.xlu0 %216
    %220 = vrot.lane.b32.xlu0 %v166, 96
    %v221 = vpop.permute.xlu0 %220
    %222 = vrot.lane.b32.xlu0 %v172, 96
    %v223 = vpop.permute.xlu0 %222
    %226 = vrot.lane.b32.xlu0 %v166, 92
    %v227 = vpop.permute.xlu0 %226
    %228 = vrot.lane.b32.xlu0 %v172, 92
    %v229 = vpop.permute.xlu0 %228
    %232 = vrot.lane.b32.xlu0 %v166, 88
    %v233 = vpop.permute.xlu0 %232
    %234 = vrot.lane.b32.xlu0 %v172, 88
    %v235 = vpop.permute.xlu0 %234
    %238 = vrot.lane.b32.xlu0 %v166, 84
    %v239 = vpop.permute.xlu0 %238
    %240 = vrot.lane.b32.xlu0 %v172, 84
    %v241 = vpop.permute.xlu0 %240
    %244 = vrot.lane.b32.xlu0 %v166, 80
    %v245 = vpop.permute.xlu0 %244
    %246 = vrot.lane.b32.xlu0 %v172, 80
    %v247 = vpop.permute.xlu0 %246
    %250 = vrot.lane.b32.xlu0 %v166, 76
    %v251 = vpop.permute.xlu0 %250
    %252 = vrot.lane.b32.xlu0 %v172, 76
    %v253 = vpop.permute.xlu0 %252
    %256 = vrot.lane.b32.xlu0 %v166, 72
    %v257 = vpop.permute.xlu0 %256
    %258 = vrot.lane.b32.xlu0 %v172, 72
    %v259 = vpop.permute.xlu0 %258
    %262 = vrot.lane.b32.xlu0 %v166, 68
    %v263 = vpop.permute.xlu0 %262
    %264 = vrot.lane.b32.xlu0 %v172, 68
    %v265 = vpop.permute.xlu0 %264
    %v268 = vcombine.low %v166, %v185
    %v269 = vcombine.high %v166, %v185
    %v271 = vunpack.c.l.s4 1983009808
    %v272 = vunpack.c.0.s8 %v271
    %v273 = vlaneseq
    %v274 = vshrl.u32 %v273, 7
    %v275 = vsub.s32 %v272, %v274
    %v276 = vrot.slane %v268, %v275
    %v278 = vunpack.c.l.s4 1983009808
    %v279 = vunpack.c.0.s8 %v278
    %v280 = vlaneseq
    %v281 = vshrl.u32 %v280, 7
    %v282 = vsub.s32 %v279, %v281
    %v283 = vrot.slane %v269, %v282
    %v284 = vcombine.low %v179, %v191
    %v285 = vcombine.high %v179, %v191
    %v287 = vunpack.c.l.s4 1983009808
    %v288 = vunpack.c.0.s8 %v287
    %v289 = vlaneseq
    %v290 = vshrl.u32 %v289, 7
    %v291 = vsub.s32 %v288, %v290
    %v292 = vrot.slane %v284, %v291
    %v294 = vunpack.c.l.s4 1983009808
    %v295 = vunpack.c.0.s8 %v294
    %v296 = vlaneseq
    %v297 = vshrl.u32 %v296, 7
    %v298 = vsub.s32 %v295, %v297
    %v299 = vrot.slane %v285, %v298
    %v300 = vcombine.low %v197, %v209
    %v301 = vcombine.high %v197, %v209
    %v303 = vunpack.c.l.s4 1983009808
    %v304 = vunpack.c.0.s8 %v303
    %v305 = vlaneseq
    %v306 = vshrl.u32 %v305, 7
    %v307 = vsub.s32 %v304, %v306
    %v308 = vrot.slane %v300, %v307
    %v310 = vunpack.c.l.s4 1983009808
    %v311 = vunpack.c.0.s8 %v310
    %v312 = vlaneseq
    %v313 = vshrl.u32 %v312, 7
    %v314 = vsub.s32 %v311, %v313
    %v315 = vrot.slane %v301, %v314
    %v316 = vcombine.low %v203, %v215
    %v317 = vcombine.high %v203, %v215
    %v319 = vunpack.c.l.s4 1983009808
    %v320 = vunpack.c.0.s8 %v319
    %v321 = vlaneseq
    %v322 = vshrl.u32 %v321, 7
    %v323 = vsub.s32 %v320, %v322
    %v324 = vrot.slane %v316, %v323
    %v326 = vunpack.c.l.s4 1983009808
    %v327 = vunpack.c.0.s8 %v326
    %v328 = vlaneseq
    %v329 = vshrl.u32 %v328, 7
    %v330 = vsub.s32 %v327, %v329
    %v331 = vrot.slane %v317, %v330
    %v332 = vcombine.low %v276, %v292
    %v333 = vcombine.high %v276, %v292
    %v335 = vunpack.c.l.s4 1934713408
    %v336 = vunpack.c.0.s8 %v335
    %v337 = vlaneseq
    %v338 = vshrl.u32 %v337, 7
    %v339 = vsub.s32 %v336, %v338
    %v340 = vrot.slane %v332, %v339
    %v342 = vunpack.c.l.s4 1934713408
    %v343 = vunpack.c.0.s8 %v342
    %v344 = vlaneseq
    %v345 = vshrl.u32 %v344, 7
    %v346 = vsub.s32 %v343, %v345
    %v347 = vrot.slane %v333, %v346
    %v348 = vcombine.low %v283, %v299
    %v349 = vcombine.high %v283, %v299
    %v351 = vunpack.c.l.s4 1934713408
    %v352 = vunpack.c.0.s8 %v351
    %v353 = vlaneseq
    %v354 = vshrl.u32 %v353, 7
    %v355 = vsub.s32 %v352, %v354
    %v356 = vrot.slane %v348, %v355
    %v358 = vunpack.c.l.s4 1934713408
    %v359 = vunpack.c.0.s8 %v358
    %v360 = vlaneseq
    %v361 = vshrl.u32 %v360, 7
    %v362 = vsub.s32 %v359, %v361
    %v363 = vrot.slane %v349, %v362
    %v364 = vcombine.low %v308, %v324
    %v365 = vcombine.high %v308, %v324
    %v367 = vunpack.c.l.s4 1934713408
    %v368 = vunpack.c.0.s8 %v367
    %v369 = vlaneseq
    %v370 = vshrl.u32 %v369, 7
    %v371 = vsub.s32 %v368, %v370
    %v372 = vrot.slane %v364, %v371
    %v374 = vunpack.c.l.s4 1934713408
    %v375 = vunpack.c.0.s8 %v374
    %v376 = vlaneseq
    %v377 = vshrl.u32 %v376, 7
    %v378 = vsub.s32 %v375, %v377
    %v379 = vrot.slane %v365, %v378
    %v380 = vcombine.low %v315, %v331
    %v381 = vcombine.high %v315, %v331
    %v383 = vunpack.c.l.s4 1934713408
    %v384 = vunpack.c.0.s8 %v383
    %v385 = vlaneseq
    %v386 = vshrl.u32 %v385, 7
    %v387 = vsub.s32 %v384, %v386
    %v388 = vrot.slane %v380, %v387
    %v390 = vunpack.c.l.s4 1934713408
    %v391 = vunpack.c.0.s8 %v390
    %v392 = vlaneseq
    %v393 = vshrl.u32 %v392, 7
    %v394 = vsub.s32 %v391, %v393
    %v395 = vrot.slane %v381, %v394
    %v396 = vcombine.low %v340, %v372
    %v397 = vcombine.high %v340, %v372
    %v398 = vcombine.low %v347, %v379
    %v399 = vcombine.high %v347, %v379
    %v400 = vcombine.low %v356, %v388
    %v401 = vcombine.high %v356, %v388
    %v402 = vcombine.low %v363, %v395
    %v403 = vcombine.high %v363, %v395
    %v404 = vcombine.low %v221, %v233
    %v405 = vcombine.high %v221, %v233
    %v407 = vunpack.c.l.s4 1983009808
    %v408 = vunpack.c.0.s8 %v407
    %v409 = vlaneseq
    %v410 = vshrl.u32 %v409, 7
    %v411 = vsub.s32 %v408, %v410
    %v412 = vrot.slane %v404, %v411
    %v414 = vunpack.c.l.s4 1983009808
    %v415 = vunpack.c.0.s8 %v414
    %v416 = vlaneseq
    %v417 = vshrl.u32 %v416, 7
    %v418 = vsub.s32 %v415, %v417
    %v419 = vrot.slane %v405, %v418
    %v420 = vcombine.low %v227, %v239
    %v421 = vcombine.high %v227, %v239
    %v423 = vunpack.c.l.s4 1983009808
    %v424 = vunpack.c.0.s8 %v423
    %v425 = vlaneseq
    %v426 = vshrl.u32 %v425, 7
    %v427 = vsub.s32 %v424, %v426
    %v428 = vrot.slane %v420, %v427
    %v430 = vunpack.c.l.s4 1983009808
    %v431 = vunpack.c.0.s8 %v430
    %v432 = vlaneseq
    %v433 = vshrl.u32 %v432, 7
    %v434 = vsub.s32 %v431, %v433
    %v435 = vrot.slane %v421, %v434
    %v436 = vcombine.low %v245, %v257
    %v437 = vcombine.high %v245, %v257
    %v439 = vunpack.c.l.s4 1983009808
    %v440 = vunpack.c.0.s8 %v439
    %v441 = vlaneseq
    %v442 = vshrl.u32 %v441, 7
    %v443 = vsub.s32 %v440, %v442
    %v444 = vrot.slane %v436, %v443
    %v446 = vunpack.c.l.s4 1983009808
    %v447 = vunpack.c.0.s8 %v446
    %v448 = vlaneseq
    %v449 = vshrl.u32 %v448, 7
    %v450 = vsub.s32 %v447, %v449
    %v451 = vrot.slane %v437, %v450
    %v452 = vcombine.low %v251, %v263
    %v453 = vcombine.high %v251, %v263
    %v455 = vunpack.c.l.s4 1983009808
    %v456 = vunpack.c.0.s8 %v455
    %v457 = vlaneseq
    %v458 = vshrl.u32 %v457, 7
    %v459 = vsub.s32 %v456, %v458
    %v460 = vrot.slane %v452, %v459
    %v462 = vunpack.c.l.s4 1983009808
    %v463 = vunpack.c.0.s8 %v462
    %v464 = vlaneseq
    %v465 = vshrl.u32 %v464, 7
    %v466 = vsub.s32 %v463, %v465
    %v467 = vrot.slane %v453, %v466
    %v468 = vcombine.low %v412, %v428
    %v469 = vcombine.high %v412, %v428
    %v471 = vunpack.c.l.s4 1934713408
    %v472 = vunpack.c.0.s8 %v471
    %v473 = vlaneseq
    %v474 = vshrl.u32 %v473, 7
    %v475 = vsub.s32 %v472, %v474
    %v476 = vrot.slane %v468, %v475
    %v478 = vunpack.c.l.s4 1934713408
    %v479 = vunpack.c.0.s8 %v478
    %v480 = vlaneseq
    %v481 = vshrl.u32 %v480, 7
    %v482 = vsub.s32 %v479, %v481
    %v483 = vrot.slane %v469, %v482
    %v484 = vcombine.low %v419, %v435
    %v485 = vcombine.high %v419, %v435
    %v487 = vunpack.c.l.s4 1934713408
    %v488 = vunpack.c.0.s8 %v487
    %v489 = vlaneseq
    %v490 = vshrl.u32 %v489, 7
    %v491 = vsub.s32 %v488, %v490
    %v492 = vrot.slane %v484, %v491
    %v494 = vunpack.c.l.s4 1934713408
    %v495 = vunpack.c.0.s8 %v494
    %v496 = vlaneseq
    %v497 = vshrl.u32 %v496, 7
    %v498 = vsub.s32 %v495, %v497
    %v499 = vrot.slane %v485, %v498
    %v500 = vcombine.low %v444, %v460
    %v501 = vcombine.high %v444, %v460
    %v503 = vunpack.c.l.s4 1934713408
    %v504 = vunpack.c.0.s8 %v503
    %v505 = vlaneseq
    %v506 = vshrl.u32 %v505, 7
    %v507 = vsub.s32 %v504, %v506
    %v508 = vrot.slane %v500, %v507
    %v510 = vunpack.c.l.s4 1934713408
    %v511 = vunpack.c.0.s8 %v510
    %v512 = vlaneseq
    %v513 = vshrl.u32 %v512, 7
    %v514 = vsub.s32 %v511, %v513
    %v515 = vrot.slane %v501, %v514
    %v516 = vcombine.low %v451, %v467
    %v517 = vcombine.high %v451, %v467
    %v519 = vunpack.c.l.s4 1934713408
    %v520 = vunpack.c.0.s8 %v519
    %v521 = vlaneseq
    %v522 = vshrl.u32 %v521, 7
    %v523 = vsub.s32 %v520, %v522
    %v524 = vrot.slane %v516, %v523
    %v526 = vunpack.c.l.s4 1934713408
    %v527 = vunpack.c.0.s8 %v526
    %v528 = vlaneseq
    %v529 = vshrl.u32 %v528, 7
    %v530 = vsub.s32 %v527, %v529
    %v531 = vrot.slane %v517, %v530
    %v532 = vcombine.low %v476, %v508
    %v533 = vcombine.high %v476, %v508
    %v534 = vcombine.low %v483, %v515
    %v535 = vcombine.high %v483, %v515
    %v536 = vcombine.low %v492, %v524
    %v537 = vcombine.high %v492, %v524
    %v538 = vcombine.low %v499, %v531
    %v539 = vcombine.high %v499, %v531
    %v540 = vcombine.low %v172, %v187
    %v541 = vcombine.high %v172, %v187
    %v543 = vunpack.c.l.s4 1983009808
    %v544 = vunpack.c.0.s8 %v543
    %v545 = vlaneseq
    %v546 = vshrl.u32 %v545, 7
    %v547 = vsub.s32 %v544, %v546
    %v548 = vrot.slane %v540, %v547
    %v550 = vunpack.c.l.s4 1983009808
    %v551 = vunpack.c.0.s8 %v550
    %v552 = vlaneseq
    %v553 = vshrl.u32 %v552, 7
    %v554 = vsub.s32 %v551, %v553
    %v555 = vrot.slane %v541, %v554
    %v556 = vcombine.low %v181, %v193
    %v557 = vcombine.high %v181, %v193
    %v559 = vunpack.c.l.s4 1983009808
    %v560 = vunpack.c.0.s8 %v559
    %v561 = vlaneseq
    %v562 = vshrl.u32 %v561, 7
    %v563 = vsub.s32 %v560, %v562
    %v564 = vrot.slane %v556, %v563
    %v566 = vunpack.c.l.s4 1983009808
    %v567 = vunpack.c.0.s8 %v566
    %v568 = vlaneseq
    %v569 = vshrl.u32 %v568, 7
    %v570 = vsub.s32 %v567, %v569
    %v571 = vrot.slane %v557, %v570
    %v572 = vcombine.low %v199, %v211
    %v573 = vcombine.high %v199, %v211
    %v575 = vunpack.c.l.s4 1983009808
    %v576 = vunpack.c.0.s8 %v575
    %v577 = vlaneseq
    %v578 = vshrl.u32 %v577, 7
    %v579 = vsub.s32 %v576, %v578
    %v580 = vrot.slane %v572, %v579
    %v582 = vunpack.c.l.s4 1983009808
    %v583 = vunpack.c.0.s8 %v582
    %v584 = vlaneseq
    %v585 = vshrl.u32 %v584, 7
    %v586 = vsub.s32 %v583, %v585
    %v587 = vrot.slane %v573, %v586
    %v588 = vcombine.low %v205, %v217
    %v589 = vcombine.high %v205, %v217
    %v591 = vunpack.c.l.s4 1983009808
    %v592 = vunpack.c.0.s8 %v591
    %v593 = vlaneseq
    %v594 = vshrl.u32 %v593, 7
    %v595 = vsub.s32 %v592, %v594
    %v596 = vrot.slane %v588, %v595
    %v598 = vunpack.c.l.s4 1983009808
    %v599 = vunpack.c.0.s8 %v598
    %v600 = vlaneseq
    %v601 = vshrl.u32 %v600, 7
    %v602 = vsub.s32 %v599, %v601
    %v603 = vrot.slane %v589, %v602
    %v604 = vcombine.low %v548, %v564
    %v605 = vcombine.high %v548, %v564
    %v607 = vunpack.c.l.s4 1934713408
    %v608 = vunpack.c.0.s8 %v607
    %v609 = vlaneseq
    %v610 = vshrl.u32 %v609, 7
    %v611 = vsub.s32 %v608, %v610
    %v612 = vrot.slane %v604, %v611
    %v614 = vunpack.c.l.s4 1934713408
    %v615 = vunpack.c.0.s8 %v614
    %v616 = vlaneseq
    %v617 = vshrl.u32 %v616, 7
    %v618 = vsub.s32 %v615, %v617
    %v619 = vrot.slane %v605, %v618
    %v620 = vcombine.low %v555, %v571
    %v621 = vcombine.high %v555, %v571
    %v623 = vunpack.c.l.s4 1934713408
    %v624 = vunpack.c.0.s8 %v623
    %v625 = vlaneseq
    %v626 = vshrl.u32 %v625, 7
    %v627 = vsub.s32 %v624, %v626
    %v628 = vrot.slane %v620, %v627
    %v630 = vunpack.c.l.s4 1934713408
    %v631 = vunpack.c.0.s8 %v630
    %v632 = vlaneseq
    %v633 = vshrl.u32 %v632, 7
    %v634 = vsub.s32 %v631, %v633
    %v635 = vrot.slane %v621, %v634
    %v636 = vcombine.low %v580, %v596
    %v637 = vcombine.high %v580, %v596
    %v639 = vunpack.c.l.s4 1934713408
    %v640 = vunpack.c.0.s8 %v639
    %v641 = vlaneseq
    %v642 = vshrl.u32 %v641, 7
    %v643 = vsub.s32 %v640, %v642
    %v644 = vrot.slane %v636, %v643
    %v646 = vunpack.c.l.s4 1934713408
    %v647 = vunpack.c.0.s8 %v646
    %v648 = vlaneseq
    %v649 = vshrl.u32 %v648, 7
    %v650 = vsub.s32 %v647, %v649
    %v651 = vrot.slane %v637, %v650
    %v652 = vcombine.low %v587, %v603
    %v653 = vcombine.high %v587, %v603
    %v655 = vunpack.c.l.s4 1934713408
    %v656 = vunpack.c.0.s8 %v655
    %v657 = vlaneseq
    %v658 = vshrl.u32 %v657, 7
    %v659 = vsub.s32 %v656, %v658
    %v660 = vrot.slane %v652, %v659
    %v662 = vunpack.c.l.s4 1934713408
    %v663 = vunpack.c.0.s8 %v662
    %v664 = vlaneseq
    %v665 = vshrl.u32 %v664, 7
    %v666 = vsub.s32 %v663, %v665
    %v667 = vrot.slane %v653, %v666
    %v668 = vcombine.low %v612, %v644
    %v669 = vcombine.high %v612, %v644
    %v670 = vcombine.low %v619, %v651
    %v671 = vcombine.high %v619, %v651
    %v672 = vcombine.low %v628, %v660
    %v673 = vcombine.high %v628, %v660
    %v674 = vcombine.low %v635, %v667
    %v675 = vcombine.high %v635, %v667
    %v676 = vcombine.low %v223, %v235
    %v677 = vcombine.high %v223, %v235
    %v679 = vunpack.c.l.s4 1983009808
    %v680 = vunpack.c.0.s8 %v679
    %v681 = vlaneseq
    %v682 = vshrl.u32 %v681, 7
    %v683 = vsub.s32 %v680, %v682
    %v684 = vrot.slane %v676, %v683
    %v686 = vunpack.c.l.s4 1983009808
    %v687 = vunpack.c.0.s8 %v686
    %v688 = vlaneseq
    %v689 = vshrl.u32 %v688, 7
    %v690 = vsub.s32 %v687, %v689
    %v691 = vrot.slane %v677, %v690
    %v692 = vcombine.low %v229, %v241
    %v693 = vcombine.high %v229, %v241
    %v695 = vunpack.c.l.s4 1983009808
    %v696 = vunpack.c.0.s8 %v695
    %v697 = vlaneseq
    %v698 = vshrl.u32 %v697, 7
    %v699 = vsub.s32 %v696, %v698
    %v700 = vrot.slane %v692, %v699
    %v702 = vunpack.c.l.s4 1983009808
    %v703 = vunpack.c.0.s8 %v702
    %v704 = vlaneseq
    %v705 = vshrl.u32 %v704, 7
    %v706 = vsub.s32 %v703, %v705
    %v707 = vrot.slane %v693, %v706
    %v708 = vcombine.low %v247, %v259
    %v709 = vcombine.high %v247, %v259
    %v711 = vunpack.c.l.s4 1983009808
    %v712 = vunpack.c.0.s8 %v711
    %v713 = vlaneseq
    %v714 = vshrl.u32 %v713, 7
    %v715 = vsub.s32 %v712, %v714
    %v716 = vrot.slane %v708, %v715
    %v718 = vunpack.c.l.s4 1983009808
    %v719 = vunpack.c.0.s8 %v718
    %v720 = vlaneseq
    %v721 = vshrl.u32 %v720, 7
    %v722 = vsub.s32 %v719, %v721
    %v723 = vrot.slane %v709, %v722
    %v724 = vcombine.low %v253, %v265
    %v725 = vcombine.high %v253, %v265
    %v727 = vunpack.c.l.s4 1983009808
    %v728 = vunpack.c.0.s8 %v727
    %v729 = vlaneseq
    %v730 = vshrl.u32 %v729, 7
    %v731 = vsub.s32 %v728, %v730
    %v732 = vrot.slane %v724, %v731
    %v734 = vunpack.c.l.s4 1983009808
    %v735 = vunpack.c.0.s8 %v734
    %v736 = vlaneseq
    %v737 = vshrl.u32 %v736, 7
    %v738 = vsub.s32 %v735, %v737
    %v739 = vrot.slane %v725, %v738
    %v740 = vcombine.low %v684, %v700
    %v741 = vcombine.high %v684, %v700
    %v743 = vunpack.c.l.s4 1934713408
    %v744 = vunpack.c.0.s8 %v743
    %v745 = vlaneseq
    %v746 = vshrl.u32 %v745, 7
    %v747 = vsub.s32 %v744, %v746
    %v748 = vrot.slane %v740, %v747
    %v750 = vunpack.c.l.s4 1934713408
    %v751 = vunpack.c.0.s8 %v750
    %v752 = vlaneseq
    %v753 = vshrl.u32 %v752, 7
    %v754 = vsub.s32 %v751, %v753
    %v755 = vrot.slane %v741, %v754
    %v756 = vcombine.low %v691, %v707
    %v757 = vcombine.high %v691, %v707
    %v759 = vunpack.c.l.s4 1934713408
    %v760 = vunpack.c.0.s8 %v759
    %v761 = vlaneseq
    %v762 = vshrl.u32 %v761, 7
    %v763 = vsub.s32 %v760, %v762
    %v764 = vrot.slane %v756, %v763
    %v766 = vunpack.c.l.s4 1934713408
    %v767 = vunpack.c.0.s8 %v766
    %v768 = vlaneseq
    %v769 = vshrl.u32 %v768, 7
    %v770 = vsub.s32 %v767, %v769
    %v771 = vrot.slane %v757, %v770
    %v772 = vcombine.low %v716, %v732
    %v773 = vcombine.high %v716, %v732
    %v775 = vunpack.c.l.s4 1934713408
    %v776 = vunpack.c.0.s8 %v775
    %v777 = vlaneseq
    %v778 = vshrl.u32 %v777, 7
    %v779 = vsub.s32 %v776, %v778
    %v780 = vrot.slane %v772, %v779
    %v782 = vunpack.c.l.s4 1934713408
    %v783 = vunpack.c.0.s8 %v782
    %v784 = vlaneseq
    %v785 = vshrl.u32 %v784, 7
    %v786 = vsub.s32 %v783, %v785
    %v787 = vrot.slane %v773, %v786
    %v788 = vcombine.low %v723, %v739
    %v789 = vcombine.high %v723, %v739
    %v791 = vunpack.c.l.s4 1934713408
    %v792 = vunpack.c.0.s8 %v791
    %v793 = vlaneseq
    %v794 = vshrl.u32 %v793, 7
    %v795 = vsub.s32 %v792, %v794
    %v796 = vrot.slane %v788, %v795
    %v798 = vunpack.c.l.s4 1934713408
    %v799 = vunpack.c.0.s8 %v798
    %v800 = vlaneseq
    %v801 = vshrl.u32 %v800, 7
    %v802 = vsub.s32 %v799, %v801
    %v803 = vrot.slane %v789, %v802
    %v804 = vcombine.low %v748, %v780
    %v805 = vcombine.high %v748, %v780
    %v806 = vcombine.low %v755, %v787
    %v807 = vcombine.high %v755, %v787
    %v808 = vcombine.low %v764, %v796
    %v809 = vcombine.high %v764, %v796
    %v810 = vcombine.low %v771, %v803
    %v811 = vcombine.high %v771, %v803
    %v812 = vcombine.low %v396, %v398
    %v813 = vcombine.high %v396, %v398
    %v815 = vunpack.c.l.s4 1983009808
    %v816 = vunpack.c.0.s8 %v815
    %v817 = vlaneseq
    %v818 = vshrl.u32 %v817, 7
    %v819 = vsub.s32 %v816, %v818
    %v820 = vrot.slane %v812, %v819
    %v822 = vunpack.c.l.s4 1983009808
    %v823 = vunpack.c.0.s8 %v822
    %v824 = vlaneseq
    %v825 = vshrl.u32 %v824, 7
    %v826 = vsub.s32 %v823, %v825
    %v827 = vrot.slane %v813, %v826
    %v828 = vcombine.low %v397, %v399
    %v829 = vcombine.high %v397, %v399
    %v831 = vunpack.c.l.s4 1983009808
    %v832 = vunpack.c.0.s8 %v831
    %v833 = vlaneseq
    %v834 = vshrl.u32 %v833, 7
    %v835 = vsub.s32 %v832, %v834
    %v836 = vrot.slane %v828, %v835
    %v838 = vunpack.c.l.s4 1983009808
    %v839 = vunpack.c.0.s8 %v838
    %v840 = vlaneseq
    %v841 = vshrl.u32 %v840, 7
    %v842 = vsub.s32 %v839, %v841
    %v843 = vrot.slane %v829, %v842
    %v844 = vcombine.low %v400, %v402
    %v845 = vcombine.high %v400, %v402
    %v847 = vunpack.c.l.s4 1983009808
    %v848 = vunpack.c.0.s8 %v847
    %v849 = vlaneseq
    %v850 = vshrl.u32 %v849, 7
    %v851 = vsub.s32 %v848, %v850
    %v852 = vrot.slane %v844, %v851
    %v854 = vunpack.c.l.s4 1983009808
    %v855 = vunpack.c.0.s8 %v854
    %v856 = vlaneseq
    %v857 = vshrl.u32 %v856, 7
    %v858 = vsub.s32 %v855, %v857
    %v859 = vrot.slane %v845, %v858
    %v860 = vcombine.low %v401, %v403
    %v861 = vcombine.high %v401, %v403
    %v863 = vunpack.c.l.s4 1983009808
    %v864 = vunpack.c.0.s8 %v863
    %v865 = vlaneseq
    %v866 = vshrl.u32 %v865, 7
    %v867 = vsub.s32 %v864, %v866
    %v868 = vrot.slane %v860, %v867
    %v870 = vunpack.c.l.s4 1983009808
    %v871 = vunpack.c.0.s8 %v870
    %v872 = vlaneseq
    %v873 = vshrl.u32 %v872, 7
    %v874 = vsub.s32 %v871, %v873
    %v875 = vrot.slane %v861, %v874
    %v876 = vcombine.low %v820, %v836
    %v877 = vcombine.high %v820, %v836
    %v879 = vunpack.c.l.s4 1934713408
    %v880 = vunpack.c.0.s8 %v879
    %v881 = vlaneseq
    %v882 = vshrl.u32 %v881, 7
    %v883 = vsub.s32 %v880, %v882
    %v884 = vrot.slane %v876, %v883
    %v886 = vunpack.c.l.s4 1934713408
    %v887 = vunpack.c.0.s8 %v886
    %v888 = vlaneseq
    %v889 = vshrl.u32 %v888, 7
    %v890 = vsub.s32 %v887, %v889
    %v891 = vrot.slane %v877, %v890
    %v892 = vcombine.low %v827, %v843
    %v893 = vcombine.high %v827, %v843
    %v895 = vunpack.c.l.s4 1934713408
    %v896 = vunpack.c.0.s8 %v895
    %v897 = vlaneseq
    %v898 = vshrl.u32 %v897, 7
    %v899 = vsub.s32 %v896, %v898
    %v900 = vrot.slane %v892, %v899
    %v902 = vunpack.c.l.s4 1934713408
    %v903 = vunpack.c.0.s8 %v902
    %v904 = vlaneseq
    %v905 = vshrl.u32 %v904, 7
    %v906 = vsub.s32 %v903, %v905
    %v907 = vrot.slane %v893, %v906
    %v908 = vcombine.low %v852, %v868
    %v909 = vcombine.high %v852, %v868
    %v911 = vunpack.c.l.s4 1934713408
    %v912 = vunpack.c.0.s8 %v911
    %v913 = vlaneseq
    %v914 = vshrl.u32 %v913, 7
    %v915 = vsub.s32 %v912, %v914
    %v916 = vrot.slane %v908, %v915
    %v918 = vunpack.c.l.s4 1934713408
    %v919 = vunpack.c.0.s8 %v918
    %v920 = vlaneseq
    %v921 = vshrl.u32 %v920, 7
    %v922 = vsub.s32 %v919, %v921
    %v923 = vrot.slane %v909, %v922
    %v924 = vcombine.low %v859, %v875
    %v925 = vcombine.high %v859, %v875
    %v927 = vunpack.c.l.s4 1934713408
    %v928 = vunpack.c.0.s8 %v927
    %v929 = vlaneseq
    %v930 = vshrl.u32 %v929, 7
    %v931 = vsub.s32 %v928, %v930
    %v932 = vrot.slane %v924, %v931
    %v934 = vunpack.c.l.s4 1934713408
    %v935 = vunpack.c.0.s8 %v934
    %v936 = vlaneseq
    %v937 = vshrl.u32 %v936, 7
    %v938 = vsub.s32 %v935, %v937
    %v939 = vrot.slane %v925, %v938
    %v940 = vcombine.low %v884, %v916
    %v941 = vcombine.high %v884, %v916
    %v942 = vcombine.low %v891, %v923
    %v943 = vcombine.high %v891, %v923
    %v944 = vcombine.low %v900, %v932
    %v945 = vcombine.high %v900, %v932
    %v946 = vcombine.low %v907, %v939
    %v947 = vcombine.high %v907, %v939
    %v948 = vcombine.low %v668, %v670
    %v949 = vcombine.high %v668, %v670
    %v951 = vunpack.c.l.s4 1983009808
    %v952 = vunpack.c.0.s8 %v951
    %v953 = vlaneseq
    %v954 = vshrl.u32 %v953, 7
    %v955 = vsub.s32 %v952, %v954
    %v956 = vrot.slane %v948, %v955
    %v958 = vunpack.c.l.s4 1983009808
    %v959 = vunpack.c.0.s8 %v958
    %v960 = vlaneseq
    %v961 = vshrl.u32 %v960, 7
    %v962 = vsub.s32 %v959, %v961
    %v963 = vrot.slane %v949, %v962
    %v964 = vcombine.low %v669, %v671
    %v965 = vcombine.high %v669, %v671
    %v967 = vunpack.c.l.s4 1983009808
    %v968 = vunpack.c.0.s8 %v967
    %v969 = vlaneseq
    %v970 = vshrl.u32 %v969, 7
    %v971 = vsub.s32 %v968, %v970
    %v972 = vrot.slane %v964, %v971
    %v974 = vunpack.c.l.s4 1983009808
    %v975 = vunpack.c.0.s8 %v974
    %v976 = vlaneseq
    %v977 = vshrl.u32 %v976, 7
    %v978 = vsub.s32 %v975, %v977
    %v979 = vrot.slane %v965, %v978
    %v980 = vcombine.low %v672, %v674
    %v981 = vcombine.high %v672, %v674
    %v983 = vunpack.c.l.s4 1983009808
    %v984 = vunpack.c.0.s8 %v983
    %v985 = vlaneseq
    %v986 = vshrl.u32 %v985, 7
    %v987 = vsub.s32 %v984, %v986
    %v988 = vrot.slane %v980, %v987
    %v990 = vunpack.c.l.s4 1983009808
    %v991 = vunpack.c.0.s8 %v990
    %v992 = vlaneseq
    %v993 = vshrl.u32 %v992, 7
    %v994 = vsub.s32 %v991, %v993
    %v995 = vrot.slane %v981, %v994
    %v996 = vcombine.low %v673, %v675
    %v997 = vcombine.high %v673, %v675
    %v999 = vunpack.c.l.s4 1983009808
    %v1000 = vunpack.c.0.s8 %v999
    %v1001 = vlaneseq
    %v1002 = vshrl.u32 %v1001, 7
    %v1003 = vsub.s32 %v1000, %v1002
    %v1004 = vrot.slane %v996, %v1003
    %v1006 = vunpack.c.l.s4 1983009808
    %v1007 = vunpack.c.0.s8 %v1006
    %v1008 = vlaneseq
    %v1009 = vshrl.u32 %v1008, 7
    %v1010 = vsub.s32 %v1007, %v1009
    %v1011 = vrot.slane %v997, %v1010
    %v1012 = vcombine.low %v956, %v972
    %v1013 = vcombine.high %v956, %v972
    %v1015 = vunpack.c.l.s4 1934713408
    %v1016 = vunpack.c.0.s8 %v1015
    %v1017 = vlaneseq
    %v1018 = vshrl.u32 %v1017, 7
    %v1019 = vsub.s32 %v1016, %v1018
    %v1020 = vrot.slane %v1012, %v1019
    %v1022 = vunpack.c.l.s4 1934713408
    %v1023 = vunpack.c.0.s8 %v1022
    %v1024 = vlaneseq
    %v1025 = vshrl.u32 %v1024, 7
    %v1026 = vsub.s32 %v1023, %v1025
    %v1027 = vrot.slane %v1013, %v1026
    %v1028 = vcombine.low %v963, %v979
    %v1029 = vcombine.high %v963, %v979
    %v1031 = vunpack.c.l.s4 1934713408
    %v1032 = vunpack.c.0.s8 %v1031
    %v1033 = vlaneseq
    %v1034 = vshrl.u32 %v1033, 7
    %v1035 = vsub.s32 %v1032, %v1034
    %v1036 = vrot.slane %v1028, %v1035
    %v1038 = vunpack.c.l.s4 1934713408
    %v1039 = vunpack.c.0.s8 %v1038
    %v1040 = vlaneseq
    %v1041 = vshrl.u32 %v1040, 7
    %v1042 = vsub.s32 %v1039, %v1041
    %v1043 = vrot.slane %v1029, %v1042
    %v1044 = vcombine.low %v988, %v1004
    %v1045 = vcombine.high %v988, %v1004
    %v1047 = vunpack.c.l.s4 1934713408
    %v1048 = vunpack.c.0.s8 %v1047
    %v1049 = vlaneseq
    %v1050 = vshrl.u32 %v1049, 7
    %v1051 = vsub.s32 %v1048, %v1050
    %v1052 = vrot.slane %v1044, %v1051
    %v1054 = vunpack.c.l.s4 1934713408
    %v1055 = vunpack.c.0.s8 %v1054
    %v1056 = vlaneseq
    %v1057 = vshrl.u32 %v1056, 7
    %v1058 = vsub.s32 %v1055, %v1057
    %v1059 = vrot.slane %v1045, %v1058
    %v1060 = vcombine.low %v995, %v1011
    %v1061 = vcombine.high %v995, %v1011
    %v1063 = vunpack.c.l.s4 1934713408
    %v1064 = vunpack.c.0.s8 %v1063
    %v1065 = vlaneseq
    %v1066 = vshrl.u32 %v1065, 7
    %v1067 = vsub.s32 %v1064, %v1066
    %v1068 = vrot.slane %v1060, %v1067
    %v1070 = vunpack.c.l.s4 1934713408
    %v1071 = vunpack.c.0.s8 %v1070
    %v1072 = vlaneseq
    %v1073 = vshrl.u32 %v1072, 7
    %v1074 = vsub.s32 %v1071, %v1073
    %v1075 = vrot.slane %v1061, %v1074
    %v1076 = vcombine.low %v1020, %v1052
    %v1077 = vcombine.high %v1020, %v1052
    %v1078 = vcombine.low %v1027, %v1059
    %v1079 = vcombine.high %v1027, %v1059
    %v1080 = vcombine.low %v1036, %v1068
    %v1081 = vcombine.high %v1036, %v1068
    %v1082 = vcombine.low %v1043, %v1075
    %v1083 = vcombine.high %v1043, %v1075
    %v1084 = vcombine.low %v532, %v534
    %v1085 = vcombine.high %v532, %v534
    %v1087 = vunpack.c.l.s4 1983009808
    %v1088 = vunpack.c.0.s8 %v1087
    %v1089 = vlaneseq
    %v1090 = vshrl.u32 %v1089, 7
    %v1091 = vsub.s32 %v1088, %v1090
    %v1092 = vrot.slane %v1084, %v1091
    %v1094 = vunpack.c.l.s4 1983009808
    %v1095 = vunpack.c.0.s8 %v1094
    %v1096 = vlaneseq
    %v1097 = vshrl.u32 %v1096, 7
    %v1098 = vsub.s32 %v1095, %v1097
    %v1099 = vrot.slane %v1085, %v1098
    %v1100 = vcombine.low %v533, %v535
    %v1101 = vcombine.high %v533, %v535
    %v1103 = vunpack.c.l.s4 1983009808
    %v1104 = vunpack.c.0.s8 %v1103
    %v1105 = vlaneseq
    %v1106 = vshrl.u32 %v1105, 7
    %v1107 = vsub.s32 %v1104, %v1106
    %v1108 = vrot.slane %v1100, %v1107
    %v1110 = vunpack.c.l.s4 1983009808
    %v1111 = vunpack.c.0.s8 %v1110
    %v1112 = vlaneseq
    %v1113 = vshrl.u32 %v1112, 7
    %v1114 = vsub.s32 %v1111, %v1113
    %v1115 = vrot.slane %v1101, %v1114
    %v1116 = vcombine.low %v536, %v538
    %v1117 = vcombine.high %v536, %v538
    %v1119 = vunpack.c.l.s4 1983009808
    %v1120 = vunpack.c.0.s8 %v1119
    %v1121 = vlaneseq
    %v1122 = vshrl.u32 %v1121, 7
    %v1123 = vsub.s32 %v1120, %v1122
    %v1124 = vrot.slane %v1116, %v1123
    %v1126 = vunpack.c.l.s4 1983009808
    %v1127 = vunpack.c.0.s8 %v1126
    %v1128 = vlaneseq
    %v1129 = vshrl.u32 %v1128, 7
    %v1130 = vsub.s32 %v1127, %v1129
    %v1131 = vrot.slane %v1117, %v1130
    %v1132 = vcombine.low %v537, %v539
    %v1133 = vcombine.high %v537, %v539
    %v1135 = vunpack.c.l.s4 1983009808
    %v1136 = vunpack.c.0.s8 %v1135
    %v1137 = vlaneseq
    %v1138 = vshrl.u32 %v1137, 7
    %v1139 = vsub.s32 %v1136, %v1138
    %v1140 = vrot.slane %v1132, %v1139
    %v1142 = vunpack.c.l.s4 1983009808
    %v1143 = vunpack.c.0.s8 %v1142
    %v1144 = vlaneseq
    %v1145 = vshrl.u32 %v1144, 7
    %v1146 = vsub.s32 %v1143, %v1145
    %v1147 = vrot.slane %v1133, %v1146
    %v1148 = vcombine.low %v1092, %v1108
    %v1149 = vcombine.high %v1092, %v1108
    %v1151 = vunpack.c.l.s4 1934713408
    %v1152 = vunpack.c.0.s8 %v1151
    %v1153 = vlaneseq
    %v1154 = vshrl.u32 %v1153, 7
    %v1155 = vsub.s32 %v1152, %v1154
    %v1156 = vrot.slane %v1148, %v1155
    %v1158 = vunpack.c.l.s4 1934713408
    %v1159 = vunpack.c.0.s8 %v1158
    %v1160 = vlaneseq
    %v1161 = vshrl.u32 %v1160, 7
    %v1162 = vsub.s32 %v1159, %v1161
    %v1163 = vrot.slane %v1149, %v1162
    %v1164 = vcombine.low %v1099, %v1115
    %v1165 = vcombine.high %v1099, %v1115
    %v1167 = vunpack.c.l.s4 1934713408
    %v1168 = vunpack.c.0.s8 %v1167
    %v1169 = vlaneseq
    %v1170 = vshrl.u32 %v1169, 7
    %v1171 = vsub.s32 %v1168, %v1170
    %v1172 = vrot.slane %v1164, %v1171
    %v1174 = vunpack.c.l.s4 1934713408
    %v1175 = vunpack.c.0.s8 %v1174
    %v1176 = vlaneseq
    %v1177 = vshrl.u32 %v1176, 7
    %v1178 = vsub.s32 %v1175, %v1177
    %v1179 = vrot.slane %v1165, %v1178
    %v1180 = vcombine.low %v1124, %v1140
    %v1181 = vcombine.high %v1124, %v1140
    %v1183 = vunpack.c.l.s4 1934713408
    %v1184 = vunpack.c.0.s8 %v1183
    %v1185 = vlaneseq
    %v1186 = vshrl.u32 %v1185, 7
    %v1187 = vsub.s32 %v1184, %v1186
    %v1188 = vrot.slane %v1180, %v1187
    %v1190 = vunpack.c.l.s4 1934713408
    %v1191 = vunpack.c.0.s8 %v1190
    %v1192 = vlaneseq
    %v1193 = vshrl.u32 %v1192, 7
    %v1194 = vsub.s32 %v1191, %v1193
    %v1195 = vrot.slane %v1181, %v1194
    %v1196 = vcombine.low %v1131, %v1147
    %v1197 = vcombine.high %v1131, %v1147
    %v1199 = vunpack.c.l.s4 1934713408
    %v1200 = vunpack.c.0.s8 %v1199
    %v1201 = vlaneseq
    %v1202 = vshrl.u32 %v1201, 7
    %v1203 = vsub.s32 %v1200, %v1202
    %v1204 = vrot.slane %v1196, %v1203
    %v1206 = vunpack.c.l.s4 1934713408
    %v1207 = vunpack.c.0.s8 %v1206
    %v1208 = vlaneseq
    %v1209 = vshrl.u32 %v1208, 7
    %v1210 = vsub.s32 %v1207, %v1209
    %v1211 = vrot.slane %v1197, %v1210
    %v1212 = vcombine.low %v1156, %v1188
    %v1213 = vcombine.high %v1156, %v1188
    %v1214 = vcombine.low %v1163, %v1195
    %v1215 = vcombine.high %v1163, %v1195
    %v1216 = vcombine.low %v1172, %v1204
    %v1217 = vcombine.high %v1172, %v1204
    %v1218 = vcombine.low %v1179, %v1211
    %v1219 = vcombine.high %v1179, %v1211
    %v1220 = vcombine.low %v804, %v806
    %v1221 = vcombine.high %v804, %v806
    %v1223 = vunpack.c.l.s4 1983009808
    %v1224 = vunpack.c.0.s8 %v1223
    %v1225 = vlaneseq
    %v1226 = vshrl.u32 %v1225, 7
    %v1227 = vsub.s32 %v1224, %v1226
    %v1228 = vrot.slane %v1220, %v1227
    %v1230 = vunpack.c.l.s4 1983009808
    %v1231 = vunpack.c.0.s8 %v1230
    %v1232 = vlaneseq
    %v1233 = vshrl.u32 %v1232, 7
    %v1234 = vsub.s32 %v1231, %v1233
    %v1235 = vrot.slane %v1221, %v1234
    %v1236 = vcombine.low %v805, %v807
    %v1237 = vcombine.high %v805, %v807
    %v1239 = vunpack.c.l.s4 1983009808
    %v1240 = vunpack.c.0.s8 %v1239
    %v1241 = vlaneseq
    %v1242 = vshrl.u32 %v1241, 7
    %v1243 = vsub.s32 %v1240, %v1242
    %v1244 = vrot.slane %v1236, %v1243
    %v1246 = vunpack.c.l.s4 1983009808
    %v1247 = vunpack.c.0.s8 %v1246
    %v1248 = vlaneseq
    %v1249 = vshrl.u32 %v1248, 7
    %v1250 = vsub.s32 %v1247, %v1249
    %v1251 = vrot.slane %v1237, %v1250
    %v1252 = vcombine.low %v808, %v810
    %v1253 = vcombine.high %v808, %v810
    %v1255 = vunpack.c.l.s4 1983009808
    %v1256 = vunpack.c.0.s8 %v1255
    %v1257 = vlaneseq
    %v1258 = vshrl.u32 %v1257, 7
    %v1259 = vsub.s32 %v1256, %v1258
    %v1260 = vrot.slane %v1252, %v1259
    %v1262 = vunpack.c.l.s4 1983009808
    %v1263 = vunpack.c.0.s8 %v1262
    %v1264 = vlaneseq
    %v1265 = vshrl.u32 %v1264, 7
    %v1266 = vsub.s32 %v1263, %v1265
    %v1267 = vrot.slane %v1253, %v1266
    %v1268 = vcombine.low %v809, %v811
    %v1269 = vcombine.high %v809, %v811
    %v1271 = vunpack.c.l.s4 1983009808
    %v1272 = vunpack.c.0.s8 %v1271
    %v1273 = vlaneseq
    %v1274 = vshrl.u32 %v1273, 7
    %v1275 = vsub.s32 %v1272, %v1274
    %v1276 = vrot.slane %v1268, %v1275
    %v1278 = vunpack.c.l.s4 1983009808
    %v1279 = vunpack.c.0.s8 %v1278
    %v1280 = vlaneseq
    %v1281 = vshrl.u32 %v1280, 7
    %v1282 = vsub.s32 %v1279, %v1281
    %v1283 = vrot.slane %v1269, %v1282
    %v1284 = vcombine.low %v1228, %v1244
    %v1285 = vcombine.high %v1228, %v1244
    %v1287 = vunpack.c.l.s4 1934713408
    %v1288 = vunpack.c.0.s8 %v1287
    %v1289 = vlaneseq
    %v1290 = vshrl.u32 %v1289, 7
    %v1291 = vsub.s32 %v1288, %v1290
    %v1292 = vrot.slane %v1284, %v1291
    %v1294 = vunpack.c.l.s4 1934713408
    %v1295 = vunpack.c.0.s8 %v1294
    %v1296 = vlaneseq
    %v1297 = vshrl.u32 %v1296, 7
    %v1298 = vsub.s32 %v1295, %v1297
    %v1299 = vrot.slane %v1285, %v1298
    %v1300 = vcombine.low %v1235, %v1251
    %v1301 = vcombine.high %v1235, %v1251
    %v1303 = vunpack.c.l.s4 1934713408
    %v1304 = vunpack.c.0.s8 %v1303
    %v1305 = vlaneseq
    %v1306 = vshrl.u32 %v1305, 7
    %v1307 = vsub.s32 %v1304, %v1306
    %v1308 = vrot.slane %v1300, %v1307
    %v1310 = vunpack.c.l.s4 1934713408
    %v1311 = vunpack.c.0.s8 %v1310
    %v1312 = vlaneseq
    %v1313 = vshrl.u32 %v1312, 7
    %v1314 = vsub.s32 %v1311, %v1313
    %v1315 = vrot.slane %v1301, %v1314
    %v1316 = vcombine.low %v1260, %v1276
    %v1317 = vcombine.high %v1260, %v1276
    %v1319 = vunpack.c.l.s4 1934713408
    %v1320 = vunpack.c.0.s8 %v1319
    %v1321 = vlaneseq
    %v1322 = vshrl.u32 %v1321, 7
    %v1323 = vsub.s32 %v1320, %v1322
    %v1324 = vrot.slane %v1316, %v1323
    %v1326 = vunpack.c.l.s4 1934713408
    %v1327 = vunpack.c.0.s8 %v1326
    %v1328 = vlaneseq
    %v1329 = vshrl.u32 %v1328, 7
    %v1330 = vsub.s32 %v1327, %v1329
    %v1331 = vrot.slane %v1317, %v1330
    %v1332 = vcombine.low %v1267, %v1283
    %v1333 = vcombine.high %v1267, %v1283
    %v1335 = vunpack.c.l.s4 1934713408
    %v1336 = vunpack.c.0.s8 %v1335
    %v1337 = vlaneseq
    %v1338 = vshrl.u32 %v1337, 7
    %v1339 = vsub.s32 %v1336, %v1338
    %v1340 = vrot.slane %v1332, %v1339
    %v1342 = vunpack.c.l.s4 1934713408
    %v1343 = vunpack.c.0.s8 %v1342
    %v1344 = vlaneseq
    %v1345 = vshrl.u32 %v1344, 7
    %v1346 = vsub.s32 %v1343, %v1345
    %v1347 = vrot.slane %v1333, %v1346
    %v1348 = vcombine.low %v1292, %v1324
    %v1349 = vcombine.high %v1292, %v1324
    %v1350 = vcombine.low %v1299, %v1331
    %v1351 = vcombine.high %v1299, %v1331
    %v1352 = vcombine.low %v1308, %v1340
    %v1353 = vcombine.high %v1308, %v1340
    %v1354 = vcombine.low %v1315, %v1347
    %v1355 = vcombine.high %v1315, %v1347
    %1356 = vrot.lane.b32.xlu0 %v166, 64
    %v1357 = vpop.permute.xlu0 %1356
    %1358 = vrot.lane.b32.xlu0 %v172, 64
    %v1359 = vpop.permute.xlu0 %1358
    %1360 = vrot.lane.b32.xlu0 %v179, 64
    %v1361 = vpop.permute.xlu0 %1360
    %1362 = vrot.lane.b32.xlu0 %v181, 64
    %v1363 = vpop.permute.xlu0 %1362
    %1364 = vrot.lane.b32.xlu0 %v185, 64
    %v1365 = vpop.permute.xlu0 %1364
    %1366 = vrot.lane.b32.xlu0 %v187, 64
    %v1367 = vpop.permute.xlu0 %1366
    %1368 = vrot.lane.b32.xlu0 %v191, 64
    %v1369 = vpop.permute.xlu0 %1368
    %1370 = vrot.lane.b32.xlu0 %v193, 64
    %v1371 = vpop.permute.xlu0 %1370
    %1372 = vrot.lane.b32.xlu0 %v197, 64
    %v1373 = vpop.permute.xlu0 %1372
    %1374 = vrot.lane.b32.xlu0 %v199, 64
    %v1375 = vpop.permute.xlu0 %1374
    %1376 = vrot.lane.b32.xlu0 %v203, 64
    %v1377 = vpop.permute.xlu0 %1376
    %1378 = vrot.lane.b32.xlu0 %v205, 64
    %v1379 = vpop.permute.xlu0 %1378
    %1380 = vrot.lane.b32.xlu0 %v209, 64
    %v1381 = vpop.permute.xlu0 %1380
    %1382 = vrot.lane.b32.xlu0 %v211, 64
    %v1383 = vpop.permute.xlu0 %1382
    %1384 = vrot.lane.b32.xlu0 %v215, 64
    %v1385 = vpop.permute.xlu0 %1384
    %1386 = vrot.lane.b32.xlu0 %v217, 64
    %v1387 = vpop.permute.xlu0 %1386
    %1388 = vrot.lane.b32.xlu0 %v221, 64
    %v1389 = vpop.permute.xlu0 %1388
    %1390 = vrot.lane.b32.xlu0 %v223, 64
    %v1391 = vpop.permute.xlu0 %1390
    %1392 = vrot.lane.b32.xlu0 %v227, 64
    %v1393 = vpop.permute.xlu0 %1392
    %1394 = vrot.lane.b32.xlu0 %v229, 64
    %v1395 = vpop.permute.xlu0 %1394
    %1396 = vrot.lane.b32.xlu0 %v233, 64
    %v1397 = vpop.permute.xlu0 %1396
    %1398 = vrot.lane.b32.xlu0 %v235, 64
    %v1399 = vpop.permute.xlu0 %1398
    %1400 = vrot.lane.b32.xlu0 %v239, 64
    %v1401 = vpop.permute.xlu0 %1400
    %1402 = vrot.lane.b32.xlu0 %v241, 64
    %v1403 = vpop.permute.xlu0 %1402
    %1404 = vrot.lane.b32.xlu0 %v245, 64
    %v1405 = vpop.permute.xlu0 %1404
    %1406 = vrot.lane.b32.xlu0 %v247, 64
    %v1407 = vpop.permute.xlu0 %1406
    %1408 = vrot.lane.b32.xlu0 %v251, 64
    %v1409 = vpop.permute.xlu0 %1408
    %1410 = vrot.lane.b32.xlu0 %v253, 64
    %v1411 = vpop.permute.xlu0 %1410
    %1412 = vrot.lane.b32.xlu0 %v257, 64
    %v1413 = vpop.permute.xlu0 %1412
    %1414 = vrot.lane.b32.xlu0 %v259, 64
    %v1415 = vpop.permute.xlu0 %1414
    %1416 = vrot.lane.b32.xlu0 %v263, 64
    %v1417 = vpop.permute.xlu0 %1416
    %1418 = vrot.lane.b32.xlu0 %v265, 64
    %v1419 = vpop.permute.xlu0 %1418
    %v1452 = vcombine.low %v1357, %v1365
    %v1453 = vcombine.high %v1357, %v1365
    %v1455 = vunpack.c.l.s4 1983009808
    %v1456 = vunpack.c.0.s8 %v1455
    %v1457 = vlaneseq
    %v1458 = vshrl.u32 %v1457, 7
    %v1459 = vsub.s32 %v1456, %v1458
    %v1460 = vrot.slane %v1452, %v1459
    %v1462 = vunpack.c.l.s4 1983009808
    %v1463 = vunpack.c.0.s8 %v1462
    %v1464 = vlaneseq
    %v1465 = vshrl.u32 %v1464, 7
    %v1466 = vsub.s32 %v1463, %v1465
    %v1467 = vrot.slane %v1453, %v1466
    %v1468 = vcombine.low %v1361, %v1369
    %v1469 = vcombine.high %v1361, %v1369
    %v1471 = vunpack.c.l.s4 1983009808
    %v1472 = vunpack.c.0.s8 %v1471
    %v1473 = vlaneseq
    %v1474 = vshrl.u32 %v1473, 7
    %v1475 = vsub.s32 %v1472, %v1474
    %v1476 = vrot.slane %v1468, %v1475
    %v1478 = vunpack.c.l.s4 1983009808
    %v1479 = vunpack.c.0.s8 %v1478
    %v1480 = vlaneseq
    %v1481 = vshrl.u32 %v1480, 7
    %v1482 = vsub.s32 %v1479, %v1481
    %v1483 = vrot.slane %v1469, %v1482
    %v1484 = vcombine.low %v1373, %v1381
    %v1485 = vcombine.high %v1373, %v1381
    %v1487 = vunpack.c.l.s4 1983009808
    %v1488 = vunpack.c.0.s8 %v1487
    %v1489 = vlaneseq
    %v1490 = vshrl.u32 %v1489, 7
    %v1491 = vsub.s32 %v1488, %v1490
    %v1492 = vrot.slane %v1484, %v1491
    %v1494 = vunpack.c.l.s4 1983009808
    %v1495 = vunpack.c.0.s8 %v1494
    %v1496 = vlaneseq
    %v1497 = vshrl.u32 %v1496, 7
    %v1498 = vsub.s32 %v1495, %v1497
    %v1499 = vrot.slane %v1485, %v1498
    %v1500 = vcombine.low %v1377, %v1385
    %v1501 = vcombine.high %v1377, %v1385
    %v1503 = vunpack.c.l.s4 1983009808
    %v1504 = vunpack.c.0.s8 %v1503
    %v1505 = vlaneseq
    %v1506 = vshrl.u32 %v1505, 7
    %v1507 = vsub.s32 %v1504, %v1506
    %v1508 = vrot.slane %v1500, %v1507
    %v1510 = vunpack.c.l.s4 1983009808
    %v1511 = vunpack.c.0.s8 %v1510
    %v1512 = vlaneseq
    %v1513 = vshrl.u32 %v1512, 7
    %v1514 = vsub.s32 %v1511, %v1513
    %v1515 = vrot.slane %v1501, %v1514
    %v1516 = vcombine.low %v1460, %v1476
    %v1517 = vcombine.high %v1460, %v1476
    %v1519 = vunpack.c.l.s4 1934713408
    %v1520 = vunpack.c.0.s8 %v1519
    %v1521 = vlaneseq
    %v1522 = vshrl.u32 %v1521, 7
    %v1523 = vsub.s32 %v1520, %v1522
    %v1524 = vrot.slane %v1516, %v1523
    %v1526 = vunpack.c.l.s4 1934713408
    %v1527 = vunpack.c.0.s8 %v1526
    %v1528 = vlaneseq
    %v1529 = vshrl.u32 %v1528, 7
    %v1530 = vsub.s32 %v1527, %v1529
    %v1531 = vrot.slane %v1517, %v1530
    %v1532 = vcombine.low %v1467, %v1483
    %v1533 = vcombine.high %v1467, %v1483
    %v1535 = vunpack.c.l.s4 1934713408
    %v1536 = vunpack.c.0.s8 %v1535
    %v1537 = vlaneseq
    %v1538 = vshrl.u32 %v1537, 7
    %v1539 = vsub.s32 %v1536, %v1538
    %v1540 = vrot.slane %v1532, %v1539
    %v1542 = vunpack.c.l.s4 1934713408
    %v1543 = vunpack.c.0.s8 %v1542
    %v1544 = vlaneseq
    %v1545 = vshrl.u32 %v1544, 7
    %v1546 = vsub.s32 %v1543, %v1545
    %v1547 = vrot.slane %v1533, %v1546
    %v1548 = vcombine.low %v1492, %v1508
    %v1549 = vcombine.high %v1492, %v1508
    %v1551 = vunpack.c.l.s4 1934713408
    %v1552 = vunpack.c.0.s8 %v1551
    %v1553 = vlaneseq
    %v1554 = vshrl.u32 %v1553, 7
    %v1555 = vsub.s32 %v1552, %v1554
    %v1556 = vrot.slane %v1548, %v1555
    %v1558 = vunpack.c.l.s4 1934713408
    %v1559 = vunpack.c.0.s8 %v1558
    %v1560 = vlaneseq
    %v1561 = vshrl.u32 %v1560, 7
    %v1562 = vsub.s32 %v1559, %v1561
    %v1563 = vrot.slane %v1549, %v1562
    %v1564 = vcombine.low %v1499, %v1515
    %v1565 = vcombine.high %v1499, %v1515
    %v1567 = vunpack.c.l.s4 1934713408
    %v1568 = vunpack.c.0.s8 %v1567
    %v1569 = vlaneseq
    %v1570 = vshrl.u32 %v1569, 7
    %v1571 = vsub.s32 %v1568, %v1570
    %v1572 = vrot.slane %v1564, %v1571
    %v1574 = vunpack.c.l.s4 1934713408
    %v1575 = vunpack.c.0.s8 %v1574
    %v1576 = vlaneseq
    %v1577 = vshrl.u32 %v1576, 7
    %v1578 = vsub.s32 %v1575, %v1577
    %v1579 = vrot.slane %v1565, %v1578
    %v1580 = vcombine.low %v1524, %v1556
    %v1581 = vcombine.high %v1524, %v1556
    %v1582 = vcombine.low %v1531, %v1563
    %v1583 = vcombine.high %v1531, %v1563
    %v1584 = vcombine.low %v1540, %v1572
    %v1585 = vcombine.high %v1540, %v1572
    %v1586 = vcombine.low %v1547, %v1579
    %v1587 = vcombine.high %v1547, %v1579
    %v1588 = vcombine.low %v1389, %v1397
    %v1589 = vcombine.high %v1389, %v1397
    %v1591 = vunpack.c.l.s4 1983009808
    %v1592 = vunpack.c.0.s8 %v1591
    %v1593 = vlaneseq
    %v1594 = vshrl.u32 %v1593, 7
    %v1595 = vsub.s32 %v1592, %v1594
    %v1596 = vrot.slane %v1588, %v1595
    %v1598 = vunpack.c.l.s4 1983009808
    %v1599 = vunpack.c.0.s8 %v1598
    %v1600 = vlaneseq
    %v1601 = vshrl.u32 %v1600, 7
    %v1602 = vsub.s32 %v1599, %v1601
    %v1603 = vrot.slane %v1589, %v1602
    %v1604 = vcombine.low %v1393, %v1401
    %v1605 = vcombine.high %v1393, %v1401
    %v1607 = vunpack.c.l.s4 1983009808
    %v1608 = vunpack.c.0.s8 %v1607
    %v1609 = vlaneseq
    %v1610 = vshrl.u32 %v1609, 7
    %v1611 = vsub.s32 %v1608, %v1610
    %v1612 = vrot.slane %v1604, %v1611
    %v1614 = vunpack.c.l.s4 1983009808
    %v1615 = vunpack.c.0.s8 %v1614
    %v1616 = vlaneseq
    %v1617 = vshrl.u32 %v1616, 7
    %v1618 = vsub.s32 %v1615, %v1617
    %v1619 = vrot.slane %v1605, %v1618
    %v1620 = vcombine.low %v1405, %v1413
    %v1621 = vcombine.high %v1405, %v1413
    %v1623 = vunpack.c.l.s4 1983009808
    %v1624 = vunpack.c.0.s8 %v1623
    %v1625 = vlaneseq
    %v1626 = vshrl.u32 %v1625, 7
    %v1627 = vsub.s32 %v1624, %v1626
    %v1628 = vrot.slane %v1620, %v1627
    %v1630 = vunpack.c.l.s4 1983009808
    %v1631 = vunpack.c.0.s8 %v1630
    %v1632 = vlaneseq
    %v1633 = vshrl.u32 %v1632, 7
    %v1634 = vsub.s32 %v1631, %v1633
    %v1635 = vrot.slane %v1621, %v1634
    %v1636 = vcombine.low %v1409, %v1417
    %v1637 = vcombine.high %v1409, %v1417
    %v1639 = vunpack.c.l.s4 1983009808
    %v1640 = vunpack.c.0.s8 %v1639
    %v1641 = vlaneseq
    %v1642 = vshrl.u32 %v1641, 7
    %v1643 = vsub.s32 %v1640, %v1642
    %v1644 = vrot.slane %v1636, %v1643
    %v1646 = vunpack.c.l.s4 1983009808
    %v1647 = vunpack.c.0.s8 %v1646
    %v1648 = vlaneseq
    %v1649 = vshrl.u32 %v1648, 7
    %v1650 = vsub.s32 %v1647, %v1649
    %v1651 = vrot.slane %v1637, %v1650
    %v1652 = vcombine.low %v1596, %v1612
    %v1653 = vcombine.high %v1596, %v1612
    %v1655 = vunpack.c.l.s4 1934713408
    %v1656 = vunpack.c.0.s8 %v1655
    %v1657 = vlaneseq
    %v1658 = vshrl.u32 %v1657, 7
    %v1659 = vsub.s32 %v1656, %v1658
    %v1660 = vrot.slane %v1652, %v1659
    %v1662 = vunpack.c.l.s4 1934713408
    %v1663 = vunpack.c.0.s8 %v1662
    %v1664 = vlaneseq
    %v1665 = vshrl.u32 %v1664, 7
    %v1666 = vsub.s32 %v1663, %v1665
    %v1667 = vrot.slane %v1653, %v1666
    %v1668 = vcombine.low %v1603, %v1619
    %v1669 = vcombine.high %v1603, %v1619
    %v1671 = vunpack.c.l.s4 1934713408
    %v1672 = vunpack.c.0.s8 %v1671
    %v1673 = vlaneseq
    %v1674 = vshrl.u32 %v1673, 7
    %v1675 = vsub.s32 %v1672, %v1674
    %v1676 = vrot.slane %v1668, %v1675
    %v1678 = vunpack.c.l.s4 1934713408
    %v1679 = vunpack.c.0.s8 %v1678
    %v1680 = vlaneseq
    %v1681 = vshrl.u32 %v1680, 7
    %v1682 = vsub.s32 %v1679, %v1681
    %v1683 = vrot.slane %v1669, %v1682
    %v1684 = vcombine.low %v1628, %v1644
    %v1685 = vcombine.high %v1628, %v1644
    %v1687 = vunpack.c.l.s4 1934713408
    %v1688 = vunpack.c.0.s8 %v1687
    %v1689 = vlaneseq
    %v1690 = vshrl.u32 %v1689, 7
    %v1691 = vsub.s32 %v1688, %v1690
    %v1692 = vrot.slane %v1684, %v1691
    %v1694 = vunpack.c.l.s4 1934713408
    %v1695 = vunpack.c.0.s8 %v1694
    %v1696 = vlaneseq
    %v1697 = vshrl.u32 %v1696, 7
    %v1698 = vsub.s32 %v1695, %v1697
    %v1699 = vrot.slane %v1685, %v1698
    %v1700 = vcombine.low %v1635, %v1651
    %v1701 = vcombine.high %v1635, %v1651
    %v1703 = vunpack.c.l.s4 1934713408
    %v1704 = vunpack.c.0.s8 %v1703
    %v1705 = vlaneseq
    %v1706 = vshrl.u32 %v1705, 7
    %v1707 = vsub.s32 %v1704, %v1706
    %v1708 = vrot.slane %v1700, %v1707
    %v1710 = vunpack.c.l.s4 1934713408
    %v1711 = vunpack.c.0.s8 %v1710
    %v1712 = vlaneseq
    %v1713 = vshrl.u32 %v1712, 7
    %v1714 = vsub.s32 %v1711, %v1713
    %v1715 = vrot.slane %v1701, %v1714
    %v1716 = vcombine.low %v1660, %v1692
    %v1717 = vcombine.high %v1660, %v1692
    %v1718 = vcombine.low %v1667, %v1699
    %v1719 = vcombine.high %v1667, %v1699
    %v1720 = vcombine.low %v1676, %v1708
    %v1721 = vcombine.high %v1676, %v1708
    %v1722 = vcombine.low %v1683, %v1715
    %v1723 = vcombine.high %v1683, %v1715
    %v1724 = vcombine.low %v1359, %v1367
    %v1725 = vcombine.high %v1359, %v1367
    %v1727 = vunpack.c.l.s4 1983009808
    %v1728 = vunpack.c.0.s8 %v1727
    %v1729 = vlaneseq
    %v1730 = vshrl.u32 %v1729, 7
    %v1731 = vsub.s32 %v1728, %v1730
    %v1732 = vrot.slane %v1724, %v1731
    %v1734 = vunpack.c.l.s4 1983009808
    %v1735 = vunpack.c.0.s8 %v1734
    %v1736 = vlaneseq
    %v1737 = vshrl.u32 %v1736, 7
    %v1738 = vsub.s32 %v1735, %v1737
    %v1739 = vrot.slane %v1725, %v1738
    %v1740 = vcombine.low %v1363, %v1371
    %v1741 = vcombine.high %v1363, %v1371
    %v1743 = vunpack.c.l.s4 1983009808
    %v1744 = vunpack.c.0.s8 %v1743
    %v1745 = vlaneseq
    %v1746 = vshrl.u32 %v1745, 7
    %v1747 = vsub.s32 %v1744, %v1746
    %v1748 = vrot.slane %v1740, %v1747
    %v1750 = vunpack.c.l.s4 1983009808
    %v1751 = vunpack.c.0.s8 %v1750
    %v1752 = vlaneseq
    %v1753 = vshrl.u32 %v1752, 7
    %v1754 = vsub.s32 %v1751, %v1753
    %v1755 = vrot.slane %v1741, %v1754
    %v1756 = vcombine.low %v1375, %v1383
    %v1757 = vcombine.high %v1375, %v1383
    %v1759 = vunpack.c.l.s4 1983009808
    %v1760 = vunpack.c.0.s8 %v1759
    %v1761 = vlaneseq
    %v1762 = vshrl.u32 %v1761, 7
    %v1763 = vsub.s32 %v1760, %v1762
    %v1764 = vrot.slane %v1756, %v1763
    %v1766 = vunpack.c.l.s4 1983009808
    %v1767 = vunpack.c.0.s8 %v1766
    %v1768 = vlaneseq
    %v1769 = vshrl.u32 %v1768, 7
    %v1770 = vsub.s32 %v1767, %v1769
    %v1771 = vrot.slane %v1757, %v1770
    %v1772 = vcombine.low %v1379, %v1387
    %v1773 = vcombine.high %v1379, %v1387
    %v1775 = vunpack.c.l.s4 1983009808
    %v1776 = vunpack.c.0.s8 %v1775
    %v1777 = vlaneseq
    %v1778 = vshrl.u32 %v1777, 7
    %v1779 = vsub.s32 %v1776, %v1778
    %v1780 = vrot.slane %v1772, %v1779
    %v1782 = vunpack.c.l.s4 1983009808
    %v1783 = vunpack.c.0.s8 %v1782
    %v1784 = vlaneseq
    %v1785 = vshrl.u32 %v1784, 7
    %v1786 = vsub.s32 %v1783, %v1785
    %v1787 = vrot.slane %v1773, %v1786
    %v1788 = vcombine.low %v1732, %v1748
    %v1789 = vcombine.high %v1732, %v1748
    %v1791 = vunpack.c.l.s4 1934713408
    %v1792 = vunpack.c.0.s8 %v1791
    %v1793 = vlaneseq
    %v1794 = vshrl.u32 %v1793, 7
    %v1795 = vsub.s32 %v1792, %v1794
    %v1796 = vrot.slane %v1788, %v1795
    %v1798 = vunpack.c.l.s4 1934713408
    %v1799 = vunpack.c.0.s8 %v1798
    %v1800 = vlaneseq
    %v1801 = vshrl.u32 %v1800, 7
    %v1802 = vsub.s32 %v1799, %v1801
    %v1803 = vrot.slane %v1789, %v1802
    %v1804 = vcombine.low %v1739, %v1755
    %v1805 = vcombine.high %v1739, %v1755
    %v1807 = vunpack.c.l.s4 1934713408
    %v1808 = vunpack.c.0.s8 %v1807
    %v1809 = vlaneseq
    %v1810 = vshrl.u32 %v1809, 7
    %v1811 = vsub.s32 %v1808, %v1810
    %v1812 = vrot.slane %v1804, %v1811
    %v1814 = vunpack.c.l.s4 1934713408
    %v1815 = vunpack.c.0.s8 %v1814
    %v1816 = vlaneseq
    %v1817 = vshrl.u32 %v1816, 7
    %v1818 = vsub.s32 %v1815, %v1817
    %v1819 = vrot.slane %v1805, %v1818
    %v1820 = vcombine.low %v1764, %v1780
    %v1821 = vcombine.high %v1764, %v1780
    %v1823 = vunpack.c.l.s4 1934713408
    %v1824 = vunpack.c.0.s8 %v1823
    %v1825 = vlaneseq
    %v1826 = vshrl.u32 %v1825, 7
    %v1827 = vsub.s32 %v1824, %v1826
    %v1828 = vrot.slane %v1820, %v1827
    %v1830 = vunpack.c.l.s4 1934713408
    %v1831 = vunpack.c.0.s8 %v1830
    %v1832 = vlaneseq
    %v1833 = vshrl.u32 %v1832, 7
    %v1834 = vsub.s32 %v1831, %v1833
    %v1835 = vrot.slane %v1821, %v1834
    %v1836 = vcombine.low %v1771, %v1787
    %v1837 = vcombine.high %v1771, %v1787
    %v1839 = vunpack.c.l.s4 1934713408
    %v1840 = vunpack.c.0.s8 %v1839
    %v1841 = vlaneseq
    %v1842 = vshrl.u32 %v1841, 7
    %v1843 = vsub.s32 %v1840, %v1842
    %v1844 = vrot.slane %v1836, %v1843
    %v1846 = vunpack.c.l.s4 1934713408
    %v1847 = vunpack.c.0.s8 %v1846
    %v1848 = vlaneseq
    %v1849 = vshrl.u32 %v1848, 7
    %v1850 = vsub.s32 %v1847, %v1849
    %v1851 = vrot.slane %v1837, %v1850
    %v1852 = vcombine.low %v1796, %v1828
    %v1853 = vcombine.high %v1796, %v1828
    %v1854 = vcombine.low %v1803, %v1835
    %v1855 = vcombine.high %v1803, %v1835
    %v1856 = vcombine.low %v1812, %v1844
    %v1857 = vcombine.high %v1812, %v1844
    %v1858 = vcombine.low %v1819, %v1851
    %v1859 = vcombine.high %v1819, %v1851
    %v1860 = vcombine.low %v1391, %v1399
    %v1861 = vcombine.high %v1391, %v1399
    %v1863 = vunpack.c.l.s4 1983009808
    %v1864 = vunpack.c.0.s8 %v1863
    %v1865 = vlaneseq
    %v1866 = vshrl.u32 %v1865, 7
    %v1867 = vsub.s32 %v1864, %v1866
    %v1868 = vrot.slane %v1860, %v1867
    %v1870 = vunpack.c.l.s4 1983009808
    %v1871 = vunpack.c.0.s8 %v1870
    %v1872 = vlaneseq
    %v1873 = vshrl.u32 %v1872, 7
    %v1874 = vsub.s32 %v1871, %v1873
    %v1875 = vrot.slane %v1861, %v1874
    %v1876 = vcombine.low %v1395, %v1403
    %v1877 = vcombine.high %v1395, %v1403
    %v1879 = vunpack.c.l.s4 1983009808
    %v1880 = vunpack.c.0.s8 %v1879
    %v1881 = vlaneseq
    %v1882 = vshrl.u32 %v1881, 7
    %v1883 = vsub.s32 %v1880, %v1882
    %v1884 = vrot.slane %v1876, %v1883
    %v1886 = vunpack.c.l.s4 1983009808
    %v1887 = vunpack.c.0.s8 %v1886
    %v1888 = vlaneseq
    %v1889 = vshrl.u32 %v1888, 7
    %v1890 = vsub.s32 %v1887, %v1889
    %v1891 = vrot.slane %v1877, %v1890
    %v1892 = vcombine.low %v1407, %v1415
    %v1893 = vcombine.high %v1407, %v1415
    %v1895 = vunpack.c.l.s4 1983009808
    %v1896 = vunpack.c.0.s8 %v1895
    %v1897 = vlaneseq
    %v1898 = vshrl.u32 %v1897, 7
    %v1899 = vsub.s32 %v1896, %v1898
    %v1900 = vrot.slane %v1892, %v1899
    %v1902 = vunpack.c.l.s4 1983009808
    %v1903 = vunpack.c.0.s8 %v1902
    %v1904 = vlaneseq
    %v1905 = vshrl.u32 %v1904, 7
    %v1906 = vsub.s32 %v1903, %v1905
    %v1907 = vrot.slane %v1893, %v1906
    %v1908 = vcombine.low %v1411, %v1419
    %v1909 = vcombine.high %v1411, %v1419
    %v1911 = vunpack.c.l.s4 1983009808
    %v1912 = vunpack.c.0.s8 %v1911
    %v1913 = vlaneseq
    %v1914 = vshrl.u32 %v1913, 7
    %v1915 = vsub.s32 %v1912, %v1914
    %v1916 = vrot.slane %v1908, %v1915
    %v1918 = vunpack.c.l.s4 1983009808
    %v1919 = vunpack.c.0.s8 %v1918
    %v1920 = vlaneseq
    %v1921 = vshrl.u32 %v1920, 7
    %v1922 = vsub.s32 %v1919, %v1921
    %v1923 = vrot.slane %v1909, %v1922
    %v1924 = vcombine.low %v1868, %v1884
    %v1925 = vcombine.high %v1868, %v1884
    %v1927 = vunpack.c.l.s4 1934713408
    %v1928 = vunpack.c.0.s8 %v1927
    %v1929 = vlaneseq
    %v1930 = vshrl.u32 %v1929, 7
    %v1931 = vsub.s32 %v1928, %v1930
    %v1932 = vrot.slane %v1924, %v1931
    %v1934 = vunpack.c.l.s4 1934713408
    %v1935 = vunpack.c.0.s8 %v1934
    %v1936 = vlaneseq
    %v1937 = vshrl.u32 %v1936, 7
    %v1938 = vsub.s32 %v1935, %v1937
    %v1939 = vrot.slane %v1925, %v1938
    %v1940 = vcombine.low %v1875, %v1891
    %v1941 = vcombine.high %v1875, %v1891
    %v1943 = vunpack.c.l.s4 1934713408
    %v1944 = vunpack.c.0.s8 %v1943
    %v1945 = vlaneseq
    %v1946 = vshrl.u32 %v1945, 7
    %v1947 = vsub.s32 %v1944, %v1946
    %v1948 = vrot.slane %v1940, %v1947
    %v1950 = vunpack.c.l.s4 1934713408
    %v1951 = vunpack.c.0.s8 %v1950
    %v1952 = vlaneseq
    %v1953 = vshrl.u32 %v1952, 7
    %v1954 = vsub.s32 %v1951, %v1953
    %v1955 = vrot.slane %v1941, %v1954
    %v1956 = vcombine.low %v1900, %v1916
    %v1957 = vcombine.high %v1900, %v1916
    %v1959 = vunpack.c.l.s4 1934713408
    %v1960 = vunpack.c.0.s8 %v1959
    %v1961 = vlaneseq
    %v1962 = vshrl.u32 %v1961, 7
    %v1963 = vsub.s32 %v1960, %v1962
    %v1964 = vrot.slane %v1956, %v1963
    %v1966 = vunpack.c.l.s4 1934713408
    %v1967 = vunpack.c.0.s8 %v1966
    %v1968 = vlaneseq
    %v1969 = vshrl.u32 %v1968, 7
    %v1970 = vsub.s32 %v1967, %v1969
    %v1971 = vrot.slane %v1957, %v1970
    %v1972 = vcombine.low %v1907, %v1923
    %v1973 = vcombine.high %v1907, %v1923
    %v1975 = vunpack.c.l.s4 1934713408
    %v1976 = vunpack.c.0.s8 %v1975
    %v1977 = vlaneseq
    %v1978 = vshrl.u32 %v1977, 7
    %v1979 = vsub.s32 %v1976, %v1978
    %v1980 = vrot.slane %v1972, %v1979
    %v1982 = vunpack.c.l.s4 1934713408
    %v1983 = vunpack.c.0.s8 %v1982
    %v1984 = vlaneseq
    %v1985 = vshrl.u32 %v1984, 7
    %v1986 = vsub.s32 %v1983, %v1985
    %v1987 = vrot.slane %v1973, %v1986
    %v1988 = vcombine.low %v1932, %v1964
    %v1989 = vcombine.high %v1932, %v1964
    %v1990 = vcombine.low %v1939, %v1971
    %v1991 = vcombine.high %v1939, %v1971
    %v1992 = vcombine.low %v1948, %v1980
    %v1993 = vcombine.high %v1948, %v1980
    %v1994 = vcombine.low %v1955, %v1987
    %v1995 = vcombine.high %v1955, %v1987
    %v1996 = vcombine.low %v1580, %v1582
    %v1997 = vcombine.high %v1580, %v1582
    %v1999 = vunpack.c.l.s4 1983009808
    %v2000 = vunpack.c.0.s8 %v1999
    %v2001 = vlaneseq
    %v2002 = vshrl.u32 %v2001, 7
    %v2003 = vsub.s32 %v2000, %v2002
    %v2004 = vrot.slane %v1996, %v2003
    %v2006 = vunpack.c.l.s4 1983009808
    %v2007 = vunpack.c.0.s8 %v2006
    %v2008 = vlaneseq
    %v2009 = vshrl.u32 %v2008, 7
    %v2010 = vsub.s32 %v2007, %v2009
    %v2011 = vrot.slane %v1997, %v2010
    %v2012 = vcombine.low %v1581, %v1583
    %v2013 = vcombine.high %v1581, %v1583
    %v2015 = vunpack.c.l.s4 1983009808
    %v2016 = vunpack.c.0.s8 %v2015
    %v2017 = vlaneseq
    %v2018 = vshrl.u32 %v2017, 7
    %v2019 = vsub.s32 %v2016, %v2018
    %v2020 = vrot.slane %v2012, %v2019
    %v2022 = vunpack.c.l.s4 1983009808
    %v2023 = vunpack.c.0.s8 %v2022
    %v2024 = vlaneseq
    %v2025 = vshrl.u32 %v2024, 7
    %v2026 = vsub.s32 %v2023, %v2025
    %v2027 = vrot.slane %v2013, %v2026
    %v2028 = vcombine.low %v1584, %v1586
    %v2029 = vcombine.high %v1584, %v1586
    %v2031 = vunpack.c.l.s4 1983009808
    %v2032 = vunpack.c.0.s8 %v2031
    %v2033 = vlaneseq
    %v2034 = vshrl.u32 %v2033, 7
    %v2035 = vsub.s32 %v2032, %v2034
    %v2036 = vrot.slane %v2028, %v2035
    %v2038 = vunpack.c.l.s4 1983009808
    %v2039 = vunpack.c.0.s8 %v2038
    %v2040 = vlaneseq
    %v2041 = vshrl.u32 %v2040, 7
    %v2042 = vsub.s32 %v2039, %v2041
    %v2043 = vrot.slane %v2029, %v2042
    %v2044 = vcombine.low %v1585, %v1587
    %v2045 = vcombine.high %v1585, %v1587
    %v2047 = vunpack.c.l.s4 1983009808
    %v2048 = vunpack.c.0.s8 %v2047
    %v2049 = vlaneseq
    %v2050 = vshrl.u32 %v2049, 7
    %v2051 = vsub.s32 %v2048, %v2050
    %v2052 = vrot.slane %v2044, %v2051
    %v2054 = vunpack.c.l.s4 1983009808
    %v2055 = vunpack.c.0.s8 %v2054
    %v2056 = vlaneseq
    %v2057 = vshrl.u32 %v2056, 7
    %v2058 = vsub.s32 %v2055, %v2057
    %v2059 = vrot.slane %v2045, %v2058
    %v2060 = vcombine.low %v2004, %v2020
    %v2061 = vcombine.high %v2004, %v2020
    %v2063 = vunpack.c.l.s4 1934713408
    %v2064 = vunpack.c.0.s8 %v2063
    %v2065 = vlaneseq
    %v2066 = vshrl.u32 %v2065, 7
    %v2067 = vsub.s32 %v2064, %v2066
    %v2068 = vrot.slane %v2060, %v2067
    %v2070 = vunpack.c.l.s4 1934713408
    %v2071 = vunpack.c.0.s8 %v2070
    %v2072 = vlaneseq
    %v2073 = vshrl.u32 %v2072, 7
    %v2074 = vsub.s32 %v2071, %v2073
    %v2075 = vrot.slane %v2061, %v2074
    %v2076 = vcombine.low %v2011, %v2027
    %v2077 = vcombine.high %v2011, %v2027
    %v2079 = vunpack.c.l.s4 1934713408
    %v2080 = vunpack.c.0.s8 %v2079
    %v2081 = vlaneseq
    %v2082 = vshrl.u32 %v2081, 7
    %v2083 = vsub.s32 %v2080, %v2082
    %v2084 = vrot.slane %v2076, %v2083
    %v2086 = vunpack.c.l.s4 1934713408
    %v2087 = vunpack.c.0.s8 %v2086
    %v2088 = vlaneseq
    %v2089 = vshrl.u32 %v2088, 7
    %v2090 = vsub.s32 %v2087, %v2089
    %v2091 = vrot.slane %v2077, %v2090
    %v2092 = vcombine.low %v2036, %v2052
    %v2093 = vcombine.high %v2036, %v2052
    %v2095 = vunpack.c.l.s4 1934713408
    %v2096 = vunpack.c.0.s8 %v2095
    %v2097 = vlaneseq
    %v2098 = vshrl.u32 %v2097, 7
    %v2099 = vsub.s32 %v2096, %v2098
    %v2100 = vrot.slane %v2092, %v2099
    %v2102 = vunpack.c.l.s4 1934713408
    %v2103 = vunpack.c.0.s8 %v2102
    %v2104 = vlaneseq
    %v2105 = vshrl.u32 %v2104, 7
    %v2106 = vsub.s32 %v2103, %v2105
    %v2107 = vrot.slane %v2093, %v2106
    %v2108 = vcombine.low %v2043, %v2059
    %v2109 = vcombine.high %v2043, %v2059
    %v2111 = vunpack.c.l.s4 1934713408
    %v2112 = vunpack.c.0.s8 %v2111
    %v2113 = vlaneseq
    %v2114 = vshrl.u32 %v2113, 7
    %v2115 = vsub.s32 %v2112, %v2114
    %v2116 = vrot.slane %v2108, %v2115
    %v2118 = vunpack.c.l.s4 1934713408
    %v2119 = vunpack.c.0.s8 %v2118
    %v2120 = vlaneseq
    %v2121 = vshrl.u32 %v2120, 7
    %v2122 = vsub.s32 %v2119, %v2121
    %v2123 = vrot.slane %v2109, %v2122
    %v2124 = vcombine.low %v2068, %v2100
    %v2125 = vcombine.high %v2068, %v2100
    %v2126 = vcombine.low %v2075, %v2107
    %v2127 = vcombine.high %v2075, %v2107
    %v2128 = vcombine.low %v2084, %v2116
    %v2129 = vcombine.high %v2084, %v2116
    %v2130 = vcombine.low %v2091, %v2123
    %v2131 = vcombine.high %v2091, %v2123
    %v2132 = vcombine.low %v1852, %v1854
    %v2133 = vcombine.high %v1852, %v1854
    %v2135 = vunpack.c.l.s4 1983009808
    %v2136 = vunpack.c.0.s8 %v2135
    %v2137 = vlaneseq
    %v2138 = vshrl.u32 %v2137, 7
    %v2139 = vsub.s32 %v2136, %v2138
    %v2140 = vrot.slane %v2132, %v2139
    %v2142 = vunpack.c.l.s4 1983009808
    %v2143 = vunpack.c.0.s8 %v2142
    %v2144 = vlaneseq
    %v2145 = vshrl.u32 %v2144, 7
    %v2146 = vsub.s32 %v2143, %v2145
    %v2147 = vrot.slane %v2133, %v2146
    %v2148 = vcombine.low %v1853, %v1855
    %v2149 = vcombine.high %v1853, %v1855
    %v2151 = vunpack.c.l.s4 1983009808
    %v2152 = vunpack.c.0.s8 %v2151
    %v2153 = vlaneseq
    %v2154 = vshrl.u32 %v2153, 7
    %v2155 = vsub.s32 %v2152, %v2154
    %v2156 = vrot.slane %v2148, %v2155
    %v2158 = vunpack.c.l.s4 1983009808
    %v2159 = vunpack.c.0.s8 %v2158
    %v2160 = vlaneseq
    %v2161 = vshrl.u32 %v2160, 7
    %v2162 = vsub.s32 %v2159, %v2161
    %v2163 = vrot.slane %v2149, %v2162
    %v2164 = vcombine.low %v1856, %v1858
    %v2165 = vcombine.high %v1856, %v1858
    %v2167 = vunpack.c.l.s4 1983009808
    %v2168 = vunpack.c.0.s8 %v2167
    %v2169 = vlaneseq
    %v2170 = vshrl.u32 %v2169, 7
    %v2171 = vsub.s32 %v2168, %v2170
    %v2172 = vrot.slane %v2164, %v2171
    %v2174 = vunpack.c.l.s4 1983009808
    %v2175 = vunpack.c.0.s8 %v2174
    %v2176 = vlaneseq
    %v2177 = vshrl.u32 %v2176, 7
    %v2178 = vsub.s32 %v2175, %v2177
    %v2179 = vrot.slane %v2165, %v2178
    %v2180 = vcombine.low %v1857, %v1859
    %v2181 = vcombine.high %v1857, %v1859
    %v2183 = vunpack.c.l.s4 1983009808
    %v2184 = vunpack.c.0.s8 %v2183
    %v2185 = vlaneseq
    %v2186 = vshrl.u32 %v2185, 7
    %v2187 = vsub.s32 %v2184, %v2186
    %v2188 = vrot.slane %v2180, %v2187
    %v2190 = vunpack.c.l.s4 1983009808
    %v2191 = vunpack.c.0.s8 %v2190
    %v2192 = vlaneseq
    %v2193 = vshrl.u32 %v2192, 7
    %v2194 = vsub.s32 %v2191, %v2193
    %v2195 = vrot.slane %v2181, %v2194
    %v2196 = vcombine.low %v2140, %v2156
    %v2197 = vcombine.high %v2140, %v2156
    %v2199 = vunpack.c.l.s4 1934713408
    %v2200 = vunpack.c.0.s8 %v2199
    %v2201 = vlaneseq
    %v2202 = vshrl.u32 %v2201, 7
    %v2203 = vsub.s32 %v2200, %v2202
    %v2204 = vrot.slane %v2196, %v2203
    %v2206 = vunpack.c.l.s4 1934713408
    %v2207 = vunpack.c.0.s8 %v2206
    %v2208 = vlaneseq
    %v2209 = vshrl.u32 %v2208, 7
    %v2210 = vsub.s32 %v2207, %v2209
    %v2211 = vrot.slane %v2197, %v2210
    %v2212 = vcombine.low %v2147, %v2163
    %v2213 = vcombine.high %v2147, %v2163
    %v2215 = vunpack.c.l.s4 1934713408
    %v2216 = vunpack.c.0.s8 %v2215
    %v2217 = vlaneseq
    %v2218 = vshrl.u32 %v2217, 7
    %v2219 = vsub.s32 %v2216, %v2218
    %v2220 = vrot.slane %v2212, %v2219
    %v2222 = vunpack.c.l.s4 1934713408
    %v2223 = vunpack.c.0.s8 %v2222
    %v2224 = vlaneseq
    %v2225 = vshrl.u32 %v2224, 7
    %v2226 = vsub.s32 %v2223, %v2225
    %v2227 = vrot.slane %v2213, %v2226
    %v2228 = vcombine.low %v2172, %v2188
    %v2229 = vcombine.high %v2172, %v2188
    %v2231 = vunpack.c.l.s4 1934713408
    %v2232 = vunpack.c.0.s8 %v2231
    %v2233 = vlaneseq
    %v2234 = vshrl.u32 %v2233, 7
    %v2235 = vsub.s32 %v2232, %v2234
    %v2236 = vrot.slane %v2228, %v2235
    %v2238 = vunpack.c.l.s4 1934713408
    %v2239 = vunpack.c.0.s8 %v2238
    %v2240 = vlaneseq
    %v2241 = vshrl.u32 %v2240, 7
    %v2242 = vsub.s32 %v2239, %v2241
    %v2243 = vrot.slane %v2229, %v2242
    %v2244 = vcombine.low %v2179, %v2195
    %v2245 = vcombine.high %v2179, %v2195
    %v2247 = vunpack.c.l.s4 1934713408
    %v2248 = vunpack.c.0.s8 %v2247
    %v2249 = vlaneseq
    %v2250 = vshrl.u32 %v2249, 7
    %v2251 = vsub.s32 %v2248, %v2250
    %v2252 = vrot.slane %v2244, %v2251
    %v2254 = vunpack.c.l.s4 1934713408
    %v2255 = vunpack.c.0.s8 %v2254
    %v2256 = vlaneseq
    %v2257 = vshrl.u32 %v2256, 7
    %v2258 = vsub.s32 %v2255, %v2257
    %v2259 = vrot.slane %v2245, %v2258
    %v2260 = vcombine.low %v2204, %v2236
    %v2261 = vcombine.high %v2204, %v2236
    %v2262 = vcombine.low %v2211, %v2243
    %v2263 = vcombine.high %v2211, %v2243
    %v2264 = vcombine.low %v2220, %v2252
    %v2265 = vcombine.high %v2220, %v2252
    %v2266 = vcombine.low %v2227, %v2259
    %v2267 = vcombine.high %v2227, %v2259
    %v2268 = vcombine.low %v1716, %v1718
    %v2269 = vcombine.high %v1716, %v1718
    %v2271 = vunpack.c.l.s4 1983009808
    %v2272 = vunpack.c.0.s8 %v2271
    %v2273 = vlaneseq
    %v2274 = vshrl.u32 %v2273, 7
    %v2275 = vsub.s32 %v2272, %v2274
    %v2276 = vrot.slane %v2268, %v2275
    %v2278 = vunpack.c.l.s4 1983009808
    %v2279 = vunpack.c.0.s8 %v2278
    %v2280 = vlaneseq
    %v2281 = vshrl.u32 %v2280, 7
    %v2282 = vsub.s32 %v2279, %v2281
    %v2283 = vrot.slane %v2269, %v2282
    %v2284 = vcombine.low %v1717, %v1719
    %v2285 = vcombine.high %v1717, %v1719
    %v2287 = vunpack.c.l.s4 1983009808
    %v2288 = vunpack.c.0.s8 %v2287
    %v2289 = vlaneseq
    %v2290 = vshrl.u32 %v2289, 7
    %v2291 = vsub.s32 %v2288, %v2290
    %v2292 = vrot.slane %v2284, %v2291
    %v2294 = vunpack.c.l.s4 1983009808
    %v2295 = vunpack.c.0.s8 %v2294
    %v2296 = vlaneseq
    %v2297 = vshrl.u32 %v2296, 7
    %v2298 = vsub.s32 %v2295, %v2297
    %v2299 = vrot.slane %v2285, %v2298
    %v2300 = vcombine.low %v1720, %v1722
    %v2301 = vcombine.high %v1720, %v1722
    %v2303 = vunpack.c.l.s4 1983009808
    %v2304 = vunpack.c.0.s8 %v2303
    %v2305 = vlaneseq
    %v2306 = vshrl.u32 %v2305, 7
    %v2307 = vsub.s32 %v2304, %v2306
    %v2308 = vrot.slane %v2300, %v2307
    %v2310 = vunpack.c.l.s4 1983009808
    %v2311 = vunpack.c.0.s8 %v2310
    %v2312 = vlaneseq
    %v2313 = vshrl.u32 %v2312, 7
    %v2314 = vsub.s32 %v2311, %v2313
    %v2315 = vrot.slane %v2301, %v2314
    %v2316 = vcombine.low %v1721, %v1723
    %v2317 = vcombine.high %v1721, %v1723
    %v2319 = vunpack.c.l.s4 1983009808
    %v2320 = vunpack.c.0.s8 %v2319
    %v2321 = vlaneseq
    %v2322 = vshrl.u32 %v2321, 7
    %v2323 = vsub.s32 %v2320, %v2322
    %v2324 = vrot.slane %v2316, %v2323
    %v2326 = vunpack.c.l.s4 1983009808
    %v2327 = vunpack.c.0.s8 %v2326
    %v2328 = vlaneseq
    %v2329 = vshrl.u32 %v2328, 7
    %v2330 = vsub.s32 %v2327, %v2329
    %v2331 = vrot.slane %v2317, %v2330
    %v2332 = vcombine.low %v2276, %v2292
    %v2333 = vcombine.high %v2276, %v2292
    %v2335 = vunpack.c.l.s4 1934713408
    %v2336 = vunpack.c.0.s8 %v2335
    %v2337 = vlaneseq
    %v2338 = vshrl.u32 %v2337, 7
    %v2339 = vsub.s32 %v2336, %v2338
    %v2340 = vrot.slane %v2332, %v2339
    %v2342 = vunpack.c.l.s4 1934713408
    %v2343 = vunpack.c.0.s8 %v2342
    %v2344 = vlaneseq
    %v2345 = vshrl.u32 %v2344, 7
    %v2346 = vsub.s32 %v2343, %v2345
    %v2347 = vrot.slane %v2333, %v2346
    %v2348 = vcombine.low %v2283, %v2299
    %v2349 = vcombine.high %v2283, %v2299
    %v2351 = vunpack.c.l.s4 1934713408
    %v2352 = vunpack.c.0.s8 %v2351
    %v2353 = vlaneseq
    %v2354 = vshrl.u32 %v2353, 7
    %v2355 = vsub.s32 %v2352, %v2354
    %v2356 = vrot.slane %v2348, %v2355
    %v2358 = vunpack.c.l.s4 1934713408
    %v2359 = vunpack.c.0.s8 %v2358
    %v2360 = vlaneseq
    %v2361 = vshrl.u32 %v2360, 7
    %v2362 = vsub.s32 %v2359, %v2361
    %v2363 = vrot.slane %v2349, %v2362
    %v2364 = vcombine.low %v2308, %v2324
    %v2365 = vcombine.high %v2308, %v2324
    %v2367 = vunpack.c.l.s4 1934713408
    %v2368 = vunpack.c.0.s8 %v2367
    %v2369 = vlaneseq
    %v2370 = vshrl.u32 %v2369, 7
    %v2371 = vsub.s32 %v2368, %v2370
    %v2372 = vrot.slane %v2364, %v2371
    %v2374 = vunpack.c.l.s4 1934713408
    %v2375 = vunpack.c.0.s8 %v2374
    %v2376 = vlaneseq
    %v2377 = vshrl.u32 %v2376, 7
    %v2378 = vsub.s32 %v2375, %v2377
    %v2379 = vrot.slane %v2365, %v2378
    %v2380 = vcombine.low %v2315, %v2331
    %v2381 = vcombine.high %v2315, %v2331
    %v2383 = vunpack.c.l.s4 1934713408
    %v2384 = vunpack.c.0.s8 %v2383
    %v2385 = vlaneseq
    %v2386 = vshrl.u32 %v2385, 7
    %v2387 = vsub.s32 %v2384, %v2386
    %v2388 = vrot.slane %v2380, %v2387
    %v2390 = vunpack.c.l.s4 1934713408
    %v2391 = vunpack.c.0.s8 %v2390
    %v2392 = vlaneseq
    %v2393 = vshrl.u32 %v2392, 7
    %v2394 = vsub.s32 %v2391, %v2393
    %v2395 = vrot.slane %v2381, %v2394
    %v2396 = vcombine.low %v2340, %v2372
    %v2397 = vcombine.high %v2340, %v2372
    %v2398 = vcombine.low %v2347, %v2379
    %v2399 = vcombine.high %v2347, %v2379
    %v2400 = vcombine.low %v2356, %v2388
    %v2401 = vcombine.high %v2356, %v2388
    %v2402 = vcombine.low %v2363, %v2395
    %v2403 = vcombine.high %v2363, %v2395
    %v2404 = vcombine.low %v1988, %v1990
    %v2405 = vcombine.high %v1988, %v1990
    %v2407 = vunpack.c.l.s4 1983009808
    %v2408 = vunpack.c.0.s8 %v2407
    %v2409 = vlaneseq
    %v2410 = vshrl.u32 %v2409, 7
    %v2411 = vsub.s32 %v2408, %v2410
    %v2412 = vrot.slane %v2404, %v2411
    %v2414 = vunpack.c.l.s4 1983009808
    %v2415 = vunpack.c.0.s8 %v2414
    %v2416 = vlaneseq
    %v2417 = vshrl.u32 %v2416, 7
    %v2418 = vsub.s32 %v2415, %v2417
    %v2419 = vrot.slane %v2405, %v2418
    %v2420 = vcombine.low %v1989, %v1991
    %v2421 = vcombine.high %v1989, %v1991
    %v2423 = vunpack.c.l.s4 1983009808
    %v2424 = vunpack.c.0.s8 %v2423
    %v2425 = vlaneseq
    %v2426 = vshrl.u32 %v2425, 7
    %v2427 = vsub.s32 %v2424, %v2426
    %v2428 = vrot.slane %v2420, %v2427
    %v2430 = vunpack.c.l.s4 1983009808
    %v2431 = vunpack.c.0.s8 %v2430
    %v2432 = vlaneseq
    %v2433 = vshrl.u32 %v2432, 7
    %v2434 = vsub.s32 %v2431, %v2433
    %v2435 = vrot.slane %v2421, %v2434
    %v2436 = vcombine.low %v1992, %v1994
    %v2437 = vcombine.high %v1992, %v1994
    %v2439 = vunpack.c.l.s4 1983009808
    %v2440 = vunpack.c.0.s8 %v2439
    %v2441 = vlaneseq
    %v2442 = vshrl.u32 %v2441, 7
    %v2443 = vsub.s32 %v2440, %v2442
    %v2444 = vrot.slane %v2436, %v2443
    %v2446 = vunpack.c.l.s4 1983009808
    %v2447 = vunpack.c.0.s8 %v2446
    %v2448 = vlaneseq
    %v2449 = vshrl.u32 %v2448, 7
    %v2450 = vsub.s32 %v2447, %v2449
    %v2451 = vrot.slane %v2437, %v2450
    %v2452 = vcombine.low %v1993, %v1995
    %v2453 = vcombine.high %v1993, %v1995
    %v2455 = vunpack.c.l.s4 1983009808
    %v2456 = vunpack.c.0.s8 %v2455
    %v2457 = vlaneseq
    %v2458 = vshrl.u32 %v2457, 7
    %v2459 = vsub.s32 %v2456, %v2458
    %v2460 = vrot.slane %v2452, %v2459
    %v2462 = vunpack.c.l.s4 1983009808
    %v2463 = vunpack.c.0.s8 %v2462
    %v2464 = vlaneseq
    %v2465 = vshrl.u32 %v2464, 7
    %v2466 = vsub.s32 %v2463, %v2465
    %v2467 = vrot.slane %v2453, %v2466
    %v2468 = vcombine.low %v2412, %v2428
    %v2469 = vcombine.high %v2412, %v2428
    %v2471 = vunpack.c.l.s4 1934713408
    %v2472 = vunpack.c.0.s8 %v2471
    %v2473 = vlaneseq
    %v2474 = vshrl.u32 %v2473, 7
    %v2475 = vsub.s32 %v2472, %v2474
    %v2476 = vrot.slane %v2468, %v2475
    %v2478 = vunpack.c.l.s4 1934713408
    %v2479 = vunpack.c.0.s8 %v2478
    %v2480 = vlaneseq
    %v2481 = vshrl.u32 %v2480, 7
    %v2482 = vsub.s32 %v2479, %v2481
    %v2483 = vrot.slane %v2469, %v2482
    %v2484 = vcombine.low %v2419, %v2435
    %v2485 = vcombine.high %v2419, %v2435
    %v2487 = vunpack.c.l.s4 1934713408
    %v2488 = vunpack.c.0.s8 %v2487
    %v2489 = vlaneseq
    %v2490 = vshrl.u32 %v2489, 7
    %v2491 = vsub.s32 %v2488, %v2490
    %v2492 = vrot.slane %v2484, %v2491
    %v2494 = vunpack.c.l.s4 1934713408
    %v2495 = vunpack.c.0.s8 %v2494
    %v2496 = vlaneseq
    %v2497 = vshrl.u32 %v2496, 7
    %v2498 = vsub.s32 %v2495, %v2497
    %v2499 = vrot.slane %v2485, %v2498
    %v2500 = vcombine.low %v2444, %v2460
    %v2501 = vcombine.high %v2444, %v2460
    %v2503 = vunpack.c.l.s4 1934713408
    %v2504 = vunpack.c.0.s8 %v2503
    %v2505 = vlaneseq
    %v2506 = vshrl.u32 %v2505, 7
    %v2507 = vsub.s32 %v2504, %v2506
    %v2508 = vrot.slane %v2500, %v2507
    %v2510 = vunpack.c.l.s4 1934713408
    %v2511 = vunpack.c.0.s8 %v2510
    %v2512 = vlaneseq
    %v2513 = vshrl.u32 %v2512, 7
    %v2514 = vsub.s32 %v2511, %v2513
    %v2515 = vrot.slane %v2501, %v2514
    %v2516 = vcombine.low %v2451, %v2467
    %v2517 = vcombine.high %v2451, %v2467
    %v2519 = vunpack.c.l.s4 1934713408
    %v2520 = vunpack.c.0.s8 %v2519
    %v2521 = vlaneseq
    %v2522 = vshrl.u32 %v2521, 7
    %v2523 = vsub.s32 %v2520, %v2522
    %v2524 = vrot.slane %v2516, %v2523
    %v2526 = vunpack.c.l.s4 1934713408
    %v2527 = vunpack.c.0.s8 %v2526
    %v2528 = vlaneseq
    %v2529 = vshrl.u32 %v2528, 7
    %v2530 = vsub.s32 %v2527, %v2529
    %v2531 = vrot.slane %v2517, %v2530
    %v2532 = vcombine.low %v2476, %v2508
    %v2533 = vcombine.high %v2476, %v2508
    %v2534 = vcombine.low %v2483, %v2515
    %v2535 = vcombine.high %v2483, %v2515
    %v2536 = vcombine.low %v2492, %v2524
    %v2537 = vcombine.high %v2492, %v2524
    %v2538 = vcombine.low %v2499, %v2531
    %v2539 = vcombine.high %v2499, %v2531
    %2542 = vrot.lane.b32.xlu0 %v168, 124
    %v2543 = vpop.permute.xlu0 %2542
    %2544 = vrot.lane.b32.xlu0 %v174, 124
    %v2545 = vpop.permute.xlu0 %2544
    %2548 = vrot.lane.b32.xlu0 %v168, 120
    %v2549 = vpop.permute.xlu0 %2548
    %2550 = vrot.lane.b32.xlu0 %v174, 120
    %v2551 = vpop.permute.xlu0 %2550
    %2554 = vrot.lane.b32.xlu0 %v168, 116
    %v2555 = vpop.permute.xlu0 %2554
    %2556 = vrot.lane.b32.xlu0 %v174, 116
    %v2557 = vpop.permute.xlu0 %2556
    %2560 = vrot.lane.b32.xlu0 %v168, 112
    %v2561 = vpop.permute.xlu0 %2560
    %2562 = vrot.lane.b32.xlu0 %v174, 112
    %v2563 = vpop.permute.xlu0 %2562
    %2566 = vrot.lane.b32.xlu0 %v168, 108
    %v2567 = vpop.permute.xlu0 %2566
    %2568 = vrot.lane.b32.xlu0 %v174, 108
    %v2569 = vpop.permute.xlu0 %2568
    %2572 = vrot.lane.b32.xlu0 %v168, 104
    %v2573 = vpop.permute.xlu0 %2572
    %2574 = vrot.lane.b32.xlu0 %v174, 104
    %v2575 = vpop.permute.xlu0 %2574
    %2578 = vrot.lane.b32.xlu0 %v168, 100
    %v2579 = vpop.permute.xlu0 %2578
    %2580 = vrot.lane.b32.xlu0 %v174, 100
    %v2581 = vpop.permute.xlu0 %2580
    %2584 = vrot.lane.b32.xlu0 %v168, 96
    %v2585 = vpop.permute.xlu0 %2584
    %2586 = vrot.lane.b32.xlu0 %v174, 96
    %v2587 = vpop.permute.xlu0 %2586
    %2590 = vrot.lane.b32.xlu0 %v168, 92
    %v2591 = vpop.permute.xlu0 %2590
    %2592 = vrot.lane.b32.xlu0 %v174, 92
    %v2593 = vpop.permute.xlu0 %2592
    %2596 = vrot.lane.b32.xlu0 %v168, 88
    %v2597 = vpop.permute.xlu0 %2596
    %2598 = vrot.lane.b32.xlu0 %v174, 88
    %v2599 = vpop.permute.xlu0 %2598
    %2602 = vrot.lane.b32.xlu0 %v168, 84
    %v2603 = vpop.permute.xlu0 %2602
    %2604 = vrot.lane.b32.xlu0 %v174, 84
    %v2605 = vpop.permute.xlu0 %2604
    %2608 = vrot.lane.b32.xlu0 %v168, 80
    %v2609 = vpop.permute.xlu0 %2608
    %2610 = vrot.lane.b32.xlu0 %v174, 80
    %v2611 = vpop.permute.xlu0 %2610
    %2614 = vrot.lane.b32.xlu0 %v168, 76
    %v2615 = vpop.permute.xlu0 %2614
    %2616 = vrot.lane.b32.xlu0 %v174, 76
    %v2617 = vpop.permute.xlu0 %2616
    %2620 = vrot.lane.b32.xlu0 %v168, 72
    %v2621 = vpop.permute.xlu0 %2620
    %2622 = vrot.lane.b32.xlu0 %v174, 72
    %v2623 = vpop.permute.xlu0 %2622
    %2626 = vrot.lane.b32.xlu0 %v168, 68
    %v2627 = vpop.permute.xlu0 %2626
    %2628 = vrot.lane.b32.xlu0 %v174, 68
    %v2629 = vpop.permute.xlu0 %2628
    %v2632 = vcombine.low %v168, %v2549
    %v2633 = vcombine.high %v168, %v2549
    %v2635 = vunpack.c.l.s4 1983009808
    %v2636 = vunpack.c.0.s8 %v2635
    %v2637 = vlaneseq
    %v2638 = vshrl.u32 %v2637, 7
    %v2639 = vsub.s32 %v2636, %v2638
    %v2640 = vrot.slane %v2632, %v2639
    %v2642 = vunpack.c.l.s4 1983009808
    %v2643 = vunpack.c.0.s8 %v2642
    %v2644 = vlaneseq
    %v2645 = vshrl.u32 %v2644, 7
    %v2646 = vsub.s32 %v2643, %v2645
    %v2647 = vrot.slane %v2633, %v2646
    %v2648 = vcombine.low %v2543, %v2555
    %v2649 = vcombine.high %v2543, %v2555
    %v2651 = vunpack.c.l.s4 1983009808
    %v2652 = vunpack.c.0.s8 %v2651
    %v2653 = vlaneseq
    %v2654 = vshrl.u32 %v2653, 7
    %v2655 = vsub.s32 %v2652, %v2654
    %v2656 = vrot.slane %v2648, %v2655
    %v2658 = vunpack.c.l.s4 1983009808
    %v2659 = vunpack.c.0.s8 %v2658
    %v2660 = vlaneseq
    %v2661 = vshrl.u32 %v2660, 7
    %v2662 = vsub.s32 %v2659, %v2661
    %v2663 = vrot.slane %v2649, %v2662
    %v2664 = vcombine.low %v2561, %v2573
    %v2665 = vcombine.high %v2561, %v2573
    %v2667 = vunpack.c.l.s4 1983009808
    %v2668 = vunpack.c.0.s8 %v2667
    %v2669 = vlaneseq
    %v2670 = vshrl.u32 %v2669, 7
    %v2671 = vsub.s32 %v2668, %v2670
    %v2672 = vrot.slane %v2664, %v2671
    %v2674 = vunpack.c.l.s4 1983009808
    %v2675 = vunpack.c.0.s8 %v2674
    %v2676 = vlaneseq
    %v2677 = vshrl.u32 %v2676, 7
    %v2678 = vsub.s32 %v2675, %v2677
    %v2679 = vrot.slane %v2665, %v2678
    %v2680 = vcombine.low %v2567, %v2579
    %v2681 = vcombine.high %v2567, %v2579
    %v2683 = vunpack.c.l.s4 1983009808
    %v2684 = vunpack.c.0.s8 %v2683
    %v2685 = vlaneseq
    %v2686 = vshrl.u32 %v2685, 7
    %v2687 = vsub.s32 %v2684, %v2686
    %v2688 = vrot.slane %v2680, %v2687
    %v2690 = vunpack.c.l.s4 1983009808
    %v2691 = vunpack.c.0.s8 %v2690
    %v2692 = vlaneseq
    %v2693 = vshrl.u32 %v2692, 7
    %v2694 = vsub.s32 %v2691, %v2693
    %v2695 = vrot.slane %v2681, %v2694
    %v2696 = vcombine.low %v2640, %v2656
    %v2697 = vcombine.high %v2640, %v2656
    %v2699 = vunpack.c.l.s4 1934713408
    %v2700 = vunpack.c.0.s8 %v2699
    %v2701 = vlaneseq
    %v2702 = vshrl.u32 %v2701, 7
    %v2703 = vsub.s32 %v2700, %v2702
    %v2704 = vrot.slane %v2696, %v2703
    %v2706 = vunpack.c.l.s4 1934713408
    %v2707 = vunpack.c.0.s8 %v2706
    %v2708 = vlaneseq
    %v2709 = vshrl.u32 %v2708, 7
    %v2710 = vsub.s32 %v2707, %v2709
    %v2711 = vrot.slane %v2697, %v2710
    %v2712 = vcombine.low %v2647, %v2663
    %v2713 = vcombine.high %v2647, %v2663
    %v2715 = vunpack.c.l.s4 1934713408
    %v2716 = vunpack.c.0.s8 %v2715
    %v2717 = vlaneseq
    %v2718 = vshrl.u32 %v2717, 7
    %v2719 = vsub.s32 %v2716, %v2718
    %v2720 = vrot.slane %v2712, %v2719
    %v2722 = vunpack.c.l.s4 1934713408
    %v2723 = vunpack.c.0.s8 %v2722
    %v2724 = vlaneseq
    %v2725 = vshrl.u32 %v2724, 7
    %v2726 = vsub.s32 %v2723, %v2725
    %v2727 = vrot.slane %v2713, %v2726
    %v2728 = vcombine.low %v2672, %v2688
    %v2729 = vcombine.high %v2672, %v2688
    %v2731 = vunpack.c.l.s4 1934713408
    %v2732 = vunpack.c.0.s8 %v2731
    %v2733 = vlaneseq
    %v2734 = vshrl.u32 %v2733, 7
    %v2735 = vsub.s32 %v2732, %v2734
    %v2736 = vrot.slane %v2728, %v2735
    %v2738 = vunpack.c.l.s4 1934713408
    %v2739 = vunpack.c.0.s8 %v2738
    %v2740 = vlaneseq
    %v2741 = vshrl.u32 %v2740, 7
    %v2742 = vsub.s32 %v2739, %v2741
    %v2743 = vrot.slane %v2729, %v2742
    %v2744 = vcombine.low %v2679, %v2695
    %v2745 = vcombine.high %v2679, %v2695
    %v2747 = vunpack.c.l.s4 1934713408
    %v2748 = vunpack.c.0.s8 %v2747
    %v2749 = vlaneseq
    %v2750 = vshrl.u32 %v2749, 7
    %v2751 = vsub.s32 %v2748, %v2750
    %v2752 = vrot.slane %v2744, %v2751
    %v2754 = vunpack.c.l.s4 1934713408
    %v2755 = vunpack.c.0.s8 %v2754
    %v2756 = vlaneseq
    %v2757 = vshrl.u32 %v2756, 7
    %v2758 = vsub.s32 %v2755, %v2757
    %v2759 = vrot.slane %v2745, %v2758
    %v2760 = vcombine.low %v2704, %v2736
    %v2761 = vcombine.high %v2704, %v2736
    %v2762 = vcombine.low %v2711, %v2743
    %v2763 = vcombine.high %v2711, %v2743
    %v2764 = vcombine.low %v2720, %v2752
    %v2765 = vcombine.high %v2720, %v2752
    %v2766 = vcombine.low %v2727, %v2759
    %v2767 = vcombine.high %v2727, %v2759
    %v2768 = vcombine.low %v2585, %v2597
    %v2769 = vcombine.high %v2585, %v2597
    %v2771 = vunpack.c.l.s4 1983009808
    %v2772 = vunpack.c.0.s8 %v2771
    %v2773 = vlaneseq
    %v2774 = vshrl.u32 %v2773, 7
    %v2775 = vsub.s32 %v2772, %v2774
    %v2776 = vrot.slane %v2768, %v2775
    %v2778 = vunpack.c.l.s4 1983009808
    %v2779 = vunpack.c.0.s8 %v2778
    %v2780 = vlaneseq
    %v2781 = vshrl.u32 %v2780, 7
    %v2782 = vsub.s32 %v2779, %v2781
    %v2783 = vrot.slane %v2769, %v2782
    %v2784 = vcombine.low %v2591, %v2603
    %v2785 = vcombine.high %v2591, %v2603
    %v2787 = vunpack.c.l.s4 1983009808
    %v2788 = vunpack.c.0.s8 %v2787
    %v2789 = vlaneseq
    %v2790 = vshrl.u32 %v2789, 7
    %v2791 = vsub.s32 %v2788, %v2790
    %v2792 = vrot.slane %v2784, %v2791
    %v2794 = vunpack.c.l.s4 1983009808
    %v2795 = vunpack.c.0.s8 %v2794
    %v2796 = vlaneseq
    %v2797 = vshrl.u32 %v2796, 7
    %v2798 = vsub.s32 %v2795, %v2797
    %v2799 = vrot.slane %v2785, %v2798
    %v2800 = vcombine.low %v2609, %v2621
    %v2801 = vcombine.high %v2609, %v2621
    %v2803 = vunpack.c.l.s4 1983009808
    %v2804 = vunpack.c.0.s8 %v2803
    %v2805 = vlaneseq
    %v2806 = vshrl.u32 %v2805, 7
    %v2807 = vsub.s32 %v2804, %v2806
    %v2808 = vrot.slane %v2800, %v2807
    %v2810 = vunpack.c.l.s4 1983009808
    %v2811 = vunpack.c.0.s8 %v2810
    %v2812 = vlaneseq
    %v2813 = vshrl.u32 %v2812, 7
    %v2814 = vsub.s32 %v2811, %v2813
    %v2815 = vrot.slane %v2801, %v2814
    %v2816 = vcombine.low %v2615, %v2627
    %v2817 = vcombine.high %v2615, %v2627
    %v2819 = vunpack.c.l.s4 1983009808
    %v2820 = vunpack.c.0.s8 %v2819
    %v2821 = vlaneseq
    %v2822 = vshrl.u32 %v2821, 7
    %v2823 = vsub.s32 %v2820, %v2822
    %v2824 = vrot.slane %v2816, %v2823
    %v2826 = vunpack.c.l.s4 1983009808
    %v2827 = vunpack.c.0.s8 %v2826
    %v2828 = vlaneseq
    %v2829 = vshrl.u32 %v2828, 7
    %v2830 = vsub.s32 %v2827, %v2829
    %v2831 = vrot.slane %v2817, %v2830
    %v2832 = vcombine.low %v2776, %v2792
    %v2833 = vcombine.high %v2776, %v2792
    %v2835 = vunpack.c.l.s4 1934713408
    %v2836 = vunpack.c.0.s8 %v2835
    %v2837 = vlaneseq
    %v2838 = vshrl.u32 %v2837, 7
    %v2839 = vsub.s32 %v2836, %v2838
    %v2840 = vrot.slane %v2832, %v2839
    %v2842 = vunpack.c.l.s4 1934713408
    %v2843 = vunpack.c.0.s8 %v2842
    %v2844 = vlaneseq
    %v2845 = vshrl.u32 %v2844, 7
    %v2846 = vsub.s32 %v2843, %v2845
    %v2847 = vrot.slane %v2833, %v2846
    %v2848 = vcombine.low %v2783, %v2799
    %v2849 = vcombine.high %v2783, %v2799
    %v2851 = vunpack.c.l.s4 1934713408
    %v2852 = vunpack.c.0.s8 %v2851
    %v2853 = vlaneseq
    %v2854 = vshrl.u32 %v2853, 7
    %v2855 = vsub.s32 %v2852, %v2854
    %v2856 = vrot.slane %v2848, %v2855
    %v2858 = vunpack.c.l.s4 1934713408
    %v2859 = vunpack.c.0.s8 %v2858
    %v2860 = vlaneseq
    %v2861 = vshrl.u32 %v2860, 7
    %v2862 = vsub.s32 %v2859, %v2861
    %v2863 = vrot.slane %v2849, %v2862
    %v2864 = vcombine.low %v2808, %v2824
    %v2865 = vcombine.high %v2808, %v2824
    %v2867 = vunpack.c.l.s4 1934713408
    %v2868 = vunpack.c.0.s8 %v2867
    %v2869 = vlaneseq
    %v2870 = vshrl.u32 %v2869, 7
    %v2871 = vsub.s32 %v2868, %v2870
    %v2872 = vrot.slane %v2864, %v2871
    %v2874 = vunpack.c.l.s4 1934713408
    %v2875 = vunpack.c.0.s8 %v2874
    %v2876 = vlaneseq
    %v2877 = vshrl.u32 %v2876, 7
    %v2878 = vsub.s32 %v2875, %v2877
    %v2879 = vrot.slane %v2865, %v2878
    %v2880 = vcombine.low %v2815, %v2831
    %v2881 = vcombine.high %v2815, %v2831
    %v2883 = vunpack.c.l.s4 1934713408
    %v2884 = vunpack.c.0.s8 %v2883
    %v2885 = vlaneseq
    %v2886 = vshrl.u32 %v2885, 7
    %v2887 = vsub.s32 %v2884, %v2886
    %v2888 = vrot.slane %v2880, %v2887
    %v2890 = vunpack.c.l.s4 1934713408
    %v2891 = vunpack.c.0.s8 %v2890
    %v2892 = vlaneseq
    %v2893 = vshrl.u32 %v2892, 7
    %v2894 = vsub.s32 %v2891, %v2893
    %v2895 = vrot.slane %v2881, %v2894
    %v2896 = vcombine.low %v2840, %v2872
    %v2897 = vcombine.high %v2840, %v2872
    %v2898 = vcombine.low %v2847, %v2879
    %v2899 = vcombine.high %v2847, %v2879
    %v2900 = vcombine.low %v2856, %v2888
    %v2901 = vcombine.high %v2856, %v2888
    %v2902 = vcombine.low %v2863, %v2895
    %v2903 = vcombine.high %v2863, %v2895
    %v2904 = vcombine.low %v174, %v2551
    %v2905 = vcombine.high %v174, %v2551
    %v2907 = vunpack.c.l.s4 1983009808
    %v2908 = vunpack.c.0.s8 %v2907
    %v2909 = vlaneseq
    %v2910 = vshrl.u32 %v2909, 7
    %v2911 = vsub.s32 %v2908, %v2910
    %v2912 = vrot.slane %v2904, %v2911
    %v2914 = vunpack.c.l.s4 1983009808
    %v2915 = vunpack.c.0.s8 %v2914
    %v2916 = vlaneseq
    %v2917 = vshrl.u32 %v2916, 7
    %v2918 = vsub.s32 %v2915, %v2917
    %v2919 = vrot.slane %v2905, %v2918
    %v2920 = vcombine.low %v2545, %v2557
    %v2921 = vcombine.high %v2545, %v2557
    %v2923 = vunpack.c.l.s4 1983009808
    %v2924 = vunpack.c.0.s8 %v2923
    %v2925 = vlaneseq
    %v2926 = vshrl.u32 %v2925, 7
    %v2927 = vsub.s32 %v2924, %v2926
    %v2928 = vrot.slane %v2920, %v2927
    %v2930 = vunpack.c.l.s4 1983009808
    %v2931 = vunpack.c.0.s8 %v2930
    %v2932 = vlaneseq
    %v2933 = vshrl.u32 %v2932, 7
    %v2934 = vsub.s32 %v2931, %v2933
    %v2935 = vrot.slane %v2921, %v2934
    %v2936 = vcombine.low %v2563, %v2575
    %v2937 = vcombine.high %v2563, %v2575
    %v2939 = vunpack.c.l.s4 1983009808
    %v2940 = vunpack.c.0.s8 %v2939
    %v2941 = vlaneseq
    %v2942 = vshrl.u32 %v2941, 7
    %v2943 = vsub.s32 %v2940, %v2942
    %v2944 = vrot.slane %v2936, %v2943
    %v2946 = vunpack.c.l.s4 1983009808
    %v2947 = vunpack.c.0.s8 %v2946
    %v2948 = vlaneseq
    %v2949 = vshrl.u32 %v2948, 7
    %v2950 = vsub.s32 %v2947, %v2949
    %v2951 = vrot.slane %v2937, %v2950
    %v2952 = vcombine.low %v2569, %v2581
    %v2953 = vcombine.high %v2569, %v2581
    %v2955 = vunpack.c.l.s4 1983009808
    %v2956 = vunpack.c.0.s8 %v2955
    %v2957 = vlaneseq
    %v2958 = vshrl.u32 %v2957, 7
    %v2959 = vsub.s32 %v2956, %v2958
    %v2960 = vrot.slane %v2952, %v2959
    %v2962 = vunpack.c.l.s4 1983009808
    %v2963 = vunpack.c.0.s8 %v2962
    %v2964 = vlaneseq
    %v2965 = vshrl.u32 %v2964, 7
    %v2966 = vsub.s32 %v2963, %v2965
    %v2967 = vrot.slane %v2953, %v2966
    %v2968 = vcombine.low %v2912, %v2928
    %v2969 = vcombine.high %v2912, %v2928
    %v2971 = vunpack.c.l.s4 1934713408
    %v2972 = vunpack.c.0.s8 %v2971
    %v2973 = vlaneseq
    %v2974 = vshrl.u32 %v2973, 7
    %v2975 = vsub.s32 %v2972, %v2974
    %v2976 = vrot.slane %v2968, %v2975
    %v2978 = vunpack.c.l.s4 1934713408
    %v2979 = vunpack.c.0.s8 %v2978
    %v2980 = vlaneseq
    %v2981 = vshrl.u32 %v2980, 7
    %v2982 = vsub.s32 %v2979, %v2981
    %v2983 = vrot.slane %v2969, %v2982
    %v2984 = vcombine.low %v2919, %v2935
    %v2985 = vcombine.high %v2919, %v2935
    %v2987 = vunpack.c.l.s4 1934713408
    %v2988 = vunpack.c.0.s8 %v2987
    %v2989 = vlaneseq
    %v2990 = vshrl.u32 %v2989, 7
    %v2991 = vsub.s32 %v2988, %v2990
    %v2992 = vrot.slane %v2984, %v2991
    %v2994 = vunpack.c.l.s4 1934713408
    %v2995 = vunpack.c.0.s8 %v2994
    %v2996 = vlaneseq
    %v2997 = vshrl.u32 %v2996, 7
    %v2998 = vsub.s32 %v2995, %v2997
    %v2999 = vrot.slane %v2985, %v2998
    %v3000 = vcombine.low %v2944, %v2960
    %v3001 = vcombine.high %v2944, %v2960
    %v3003 = vunpack.c.l.s4 1934713408
    %v3004 = vunpack.c.0.s8 %v3003
    %v3005 = vlaneseq
    %v3006 = vshrl.u32 %v3005, 7
    %v3007 = vsub.s32 %v3004, %v3006
    %v3008 = vrot.slane %v3000, %v3007
    %v3010 = vunpack.c.l.s4 1934713408
    %v3011 = vunpack.c.0.s8 %v3010
    %v3012 = vlaneseq
    %v3013 = vshrl.u32 %v3012, 7
    %v3014 = vsub.s32 %v3011, %v3013
    %v3015 = vrot.slane %v3001, %v3014
    %v3016 = vcombine.low %v2951, %v2967
    %v3017 = vcombine.high %v2951, %v2967
    %v3019 = vunpack.c.l.s4 1934713408
    %v3020 = vunpack.c.0.s8 %v3019
    %v3021 = vlaneseq
    %v3022 = vshrl.u32 %v3021, 7
    %v3023 = vsub.s32 %v3020, %v3022
    %v3024 = vrot.slane %v3016, %v3023
    %v3026 = vunpack.c.l.s4 1934713408
    %v3027 = vunpack.c.0.s8 %v3026
    %v3028 = vlaneseq
    %v3029 = vshrl.u32 %v3028, 7
    %v3030 = vsub.s32 %v3027, %v3029
    %v3031 = vrot.slane %v3017, %v3030
    %v3032 = vcombine.low %v2976, %v3008
    %v3033 = vcombine.high %v2976, %v3008
    %v3034 = vcombine.low %v2983, %v3015
    %v3035 = vcombine.high %v2983, %v3015
    %v3036 = vcombine.low %v2992, %v3024
    %v3037 = vcombine.high %v2992, %v3024
    %v3038 = vcombine.low %v2999, %v3031
    %v3039 = vcombine.high %v2999, %v3031
    %v3040 = vcombine.low %v2587, %v2599
    %v3041 = vcombine.high %v2587, %v2599
    %v3043 = vunpack.c.l.s4 1983009808
    %v3044 = vunpack.c.0.s8 %v3043
    %v3045 = vlaneseq
    %v3046 = vshrl.u32 %v3045, 7
    %v3047 = vsub.s32 %v3044, %v3046
    %v3048 = vrot.slane %v3040, %v3047
    %v3050 = vunpack.c.l.s4 1983009808
    %v3051 = vunpack.c.0.s8 %v3050
    %v3052 = vlaneseq
    %v3053 = vshrl.u32 %v3052, 7
    %v3054 = vsub.s32 %v3051, %v3053
    %v3055 = vrot.slane %v3041, %v3054
    %v3056 = vcombine.low %v2593, %v2605
    %v3057 = vcombine.high %v2593, %v2605
    %v3059 = vunpack.c.l.s4 1983009808
    %v3060 = vunpack.c.0.s8 %v3059
    %v3061 = vlaneseq
    %v3062 = vshrl.u32 %v3061, 7
    %v3063 = vsub.s32 %v3060, %v3062
    %v3064 = vrot.slane %v3056, %v3063
    %v3066 = vunpack.c.l.s4 1983009808
    %v3067 = vunpack.c.0.s8 %v3066
    %v3068 = vlaneseq
    %v3069 = vshrl.u32 %v3068, 7
    %v3070 = vsub.s32 %v3067, %v3069
    %v3071 = vrot.slane %v3057, %v3070
    %v3072 = vcombine.low %v2611, %v2623
    %v3073 = vcombine.high %v2611, %v2623
    %v3075 = vunpack.c.l.s4 1983009808
    %v3076 = vunpack.c.0.s8 %v3075
    %v3077 = vlaneseq
    %v3078 = vshrl.u32 %v3077, 7
    %v3079 = vsub.s32 %v3076, %v3078
    %v3080 = vrot.slane %v3072, %v3079
    %v3082 = vunpack.c.l.s4 1983009808
    %v3083 = vunpack.c.0.s8 %v3082
    %v3084 = vlaneseq
    %v3085 = vshrl.u32 %v3084, 7
    %v3086 = vsub.s32 %v3083, %v3085
    %v3087 = vrot.slane %v3073, %v3086
    %v3088 = vcombine.low %v2617, %v2629
    %v3089 = vcombine.high %v2617, %v2629
    %v3091 = vunpack.c.l.s4 1983009808
    %v3092 = vunpack.c.0.s8 %v3091
    %v3093 = vlaneseq
    %v3094 = vshrl.u32 %v3093, 7
    %v3095 = vsub.s32 %v3092, %v3094
    %v3096 = vrot.slane %v3088, %v3095
    %v3098 = vunpack.c.l.s4 1983009808
    %v3099 = vunpack.c.0.s8 %v3098
    %v3100 = vlaneseq
    %v3101 = vshrl.u32 %v3100, 7
    %v3102 = vsub.s32 %v3099, %v3101
    %v3103 = vrot.slane %v3089, %v3102
    %v3104 = vcombine.low %v3048, %v3064
    %v3105 = vcombine.high %v3048, %v3064
    %v3107 = vunpack.c.l.s4 1934713408
    %v3108 = vunpack.c.0.s8 %v3107
    %v3109 = vlaneseq
    %v3110 = vshrl.u32 %v3109, 7
    %v3111 = vsub.s32 %v3108, %v3110
    %v3112 = vrot.slane %v3104, %v3111
    %v3114 = vunpack.c.l.s4 1934713408
    %v3115 = vunpack.c.0.s8 %v3114
    %v3116 = vlaneseq
    %v3117 = vshrl.u32 %v3116, 7
    %v3118 = vsub.s32 %v3115, %v3117
    %v3119 = vrot.slane %v3105, %v3118
    %v3120 = vcombine.low %v3055, %v3071
    %v3121 = vcombine.high %v3055, %v3071
    %v3123 = vunpack.c.l.s4 1934713408
    %v3124 = vunpack.c.0.s8 %v3123
    %v3125 = vlaneseq
    %v3126 = vshrl.u32 %v3125, 7
    %v3127 = vsub.s32 %v3124, %v3126
    %v3128 = vrot.slane %v3120, %v3127
    %v3130 = vunpack.c.l.s4 1934713408
    %v3131 = vunpack.c.0.s8 %v3130
    %v3132 = vlaneseq
    %v3133 = vshrl.u32 %v3132, 7
    %v3134 = vsub.s32 %v3131, %v3133
    %v3135 = vrot.slane %v3121, %v3134
    %v3136 = vcombine.low %v3080, %v3096
    %v3137 = vcombine.high %v3080, %v3096
    %v3139 = vunpack.c.l.s4 1934713408
    %v3140 = vunpack.c.0.s8 %v3139
    %v3141 = vlaneseq
    %v3142 = vshrl.u32 %v3141, 7
    %v3143 = vsub.s32 %v3140, %v3142
    %v3144 = vrot.slane %v3136, %v3143
    %v3146 = vunpack.c.l.s4 1934713408
    %v3147 = vunpack.c.0.s8 %v3146
    %v3148 = vlaneseq
    %v3149 = vshrl.u32 %v3148, 7
    %v3150 = vsub.s32 %v3147, %v3149
    %v3151 = vrot.slane %v3137, %v3150
    %v3152 = vcombine.low %v3087, %v3103
    %v3153 = vcombine.high %v3087, %v3103
    %v3155 = vunpack.c.l.s4 1934713408
    %v3156 = vunpack.c.0.s8 %v3155
    %v3157 = vlaneseq
    %v3158 = vshrl.u32 %v3157, 7
    %v3159 = vsub.s32 %v3156, %v3158
    %v3160 = vrot.slane %v3152, %v3159
    %v3162 = vunpack.c.l.s4 1934713408
    %v3163 = vunpack.c.0.s8 %v3162
    %v3164 = vlaneseq
    %v3165 = vshrl.u32 %v3164, 7
    %v3166 = vsub.s32 %v3163, %v3165
    %v3167 = vrot.slane %v3153, %v3166
    %v3168 = vcombine.low %v3112, %v3144
    %v3169 = vcombine.high %v3112, %v3144
    %v3170 = vcombine.low %v3119, %v3151
    %v3171 = vcombine.high %v3119, %v3151
    %v3172 = vcombine.low %v3128, %v3160
    %v3173 = vcombine.high %v3128, %v3160
    %v3174 = vcombine.low %v3135, %v3167
    %v3175 = vcombine.high %v3135, %v3167
    %v3176 = vcombine.low %v2760, %v2762
    %v3177 = vcombine.high %v2760, %v2762
    %v3179 = vunpack.c.l.s4 1983009808
    %v3180 = vunpack.c.0.s8 %v3179
    %v3181 = vlaneseq
    %v3182 = vshrl.u32 %v3181, 7
    %v3183 = vsub.s32 %v3180, %v3182
    %v3184 = vrot.slane %v3176, %v3183
    %v3186 = vunpack.c.l.s4 1983009808
    %v3187 = vunpack.c.0.s8 %v3186
    %v3188 = vlaneseq
    %v3189 = vshrl.u32 %v3188, 7
    %v3190 = vsub.s32 %v3187, %v3189
    %v3191 = vrot.slane %v3177, %v3190
    %v3192 = vcombine.low %v2761, %v2763
    %v3193 = vcombine.high %v2761, %v2763
    %v3195 = vunpack.c.l.s4 1983009808
    %v3196 = vunpack.c.0.s8 %v3195
    %v3197 = vlaneseq
    %v3198 = vshrl.u32 %v3197, 7
    %v3199 = vsub.s32 %v3196, %v3198
    %v3200 = vrot.slane %v3192, %v3199
    %v3202 = vunpack.c.l.s4 1983009808
    %v3203 = vunpack.c.0.s8 %v3202
    %v3204 = vlaneseq
    %v3205 = vshrl.u32 %v3204, 7
    %v3206 = vsub.s32 %v3203, %v3205
    %v3207 = vrot.slane %v3193, %v3206
    %v3208 = vcombine.low %v2764, %v2766
    %v3209 = vcombine.high %v2764, %v2766
    %v3211 = vunpack.c.l.s4 1983009808
    %v3212 = vunpack.c.0.s8 %v3211
    %v3213 = vlaneseq
    %v3214 = vshrl.u32 %v3213, 7
    %v3215 = vsub.s32 %v3212, %v3214
    %v3216 = vrot.slane %v3208, %v3215
    %v3218 = vunpack.c.l.s4 1983009808
    %v3219 = vunpack.c.0.s8 %v3218
    %v3220 = vlaneseq
    %v3221 = vshrl.u32 %v3220, 7
    %v3222 = vsub.s32 %v3219, %v3221
    %v3223 = vrot.slane %v3209, %v3222
    %v3224 = vcombine.low %v2765, %v2767
    %v3225 = vcombine.high %v2765, %v2767
    %v3227 = vunpack.c.l.s4 1983009808
    %v3228 = vunpack.c.0.s8 %v3227
    %v3229 = vlaneseq
    %v3230 = vshrl.u32 %v3229, 7
    %v3231 = vsub.s32 %v3228, %v3230
    %v3232 = vrot.slane %v3224, %v3231
    %v3234 = vunpack.c.l.s4 1983009808
    %v3235 = vunpack.c.0.s8 %v3234
    %v3236 = vlaneseq
    %v3237 = vshrl.u32 %v3236, 7
    %v3238 = vsub.s32 %v3235, %v3237
    %v3239 = vrot.slane %v3225, %v3238
    %v3240 = vcombine.low %v3184, %v3200
    %v3241 = vcombine.high %v3184, %v3200
    %v3243 = vunpack.c.l.s4 1934713408
    %v3244 = vunpack.c.0.s8 %v3243
    %v3245 = vlaneseq
    %v3246 = vshrl.u32 %v3245, 7
    %v3247 = vsub.s32 %v3244, %v3246
    %v3248 = vrot.slane %v3240, %v3247
    %v3250 = vunpack.c.l.s4 1934713408
    %v3251 = vunpack.c.0.s8 %v3250
    %v3252 = vlaneseq
    %v3253 = vshrl.u32 %v3252, 7
    %v3254 = vsub.s32 %v3251, %v3253
    %v3255 = vrot.slane %v3241, %v3254
    %v3256 = vcombine.low %v3191, %v3207
    %v3257 = vcombine.high %v3191, %v3207
    %v3259 = vunpack.c.l.s4 1934713408
    %v3260 = vunpack.c.0.s8 %v3259
    %v3261 = vlaneseq
    %v3262 = vshrl.u32 %v3261, 7
    %v3263 = vsub.s32 %v3260, %v3262
    %v3264 = vrot.slane %v3256, %v3263
    %v3266 = vunpack.c.l.s4 1934713408
    %v3267 = vunpack.c.0.s8 %v3266
    %v3268 = vlaneseq
    %v3269 = vshrl.u32 %v3268, 7
    %v3270 = vsub.s32 %v3267, %v3269
    %v3271 = vrot.slane %v3257, %v3270
    %v3272 = vcombine.low %v3216, %v3232
    %v3273 = vcombine.high %v3216, %v3232
    %v3275 = vunpack.c.l.s4 1934713408
    %v3276 = vunpack.c.0.s8 %v3275
    %v3277 = vlaneseq
    %v3278 = vshrl.u32 %v3277, 7
    %v3279 = vsub.s32 %v3276, %v3278
    %v3280 = vrot.slane %v3272, %v3279
    %v3282 = vunpack.c.l.s4 1934713408
    %v3283 = vunpack.c.0.s8 %v3282
    %v3284 = vlaneseq
    %v3285 = vshrl.u32 %v3284, 7
    %v3286 = vsub.s32 %v3283, %v3285
    %v3287 = vrot.slane %v3273, %v3286
    %v3288 = vcombine.low %v3223, %v3239
    %v3289 = vcombine.high %v3223, %v3239
    %v3291 = vunpack.c.l.s4 1934713408
    %v3292 = vunpack.c.0.s8 %v3291
    %v3293 = vlaneseq
    %v3294 = vshrl.u32 %v3293, 7
    %v3295 = vsub.s32 %v3292, %v3294
    %v3296 = vrot.slane %v3288, %v3295
    %v3298 = vunpack.c.l.s4 1934713408
    %v3299 = vunpack.c.0.s8 %v3298
    %v3300 = vlaneseq
    %v3301 = vshrl.u32 %v3300, 7
    %v3302 = vsub.s32 %v3299, %v3301
    %v3303 = vrot.slane %v3289, %v3302
    %v3304 = vcombine.low %v3248, %v3280
    %v3305 = vcombine.high %v3248, %v3280
    %v3306 = vcombine.low %v3255, %v3287
    %v3307 = vcombine.high %v3255, %v3287
    %v3308 = vcombine.low %v3264, %v3296
    %v3309 = vcombine.high %v3264, %v3296
    %v3310 = vcombine.low %v3271, %v3303
    %v3311 = vcombine.high %v3271, %v3303
    %v3312 = vcombine.low %v3032, %v3034
    %v3313 = vcombine.high %v3032, %v3034
    %v3315 = vunpack.c.l.s4 1983009808
    %v3316 = vunpack.c.0.s8 %v3315
    %v3317 = vlaneseq
    %v3318 = vshrl.u32 %v3317, 7
    %v3319 = vsub.s32 %v3316, %v3318
    %v3320 = vrot.slane %v3312, %v3319
    %v3322 = vunpack.c.l.s4 1983009808
    %v3323 = vunpack.c.0.s8 %v3322
    %v3324 = vlaneseq
    %v3325 = vshrl.u32 %v3324, 7
    %v3326 = vsub.s32 %v3323, %v3325
    %v3327 = vrot.slane %v3313, %v3326
    %v3328 = vcombine.low %v3033, %v3035
    %v3329 = vcombine.high %v3033, %v3035
    %v3331 = vunpack.c.l.s4 1983009808
    %v3332 = vunpack.c.0.s8 %v3331
    %v3333 = vlaneseq
    %v3334 = vshrl.u32 %v3333, 7
    %v3335 = vsub.s32 %v3332, %v3334
    %v3336 = vrot.slane %v3328, %v3335
    %v3338 = vunpack.c.l.s4 1983009808
    %v3339 = vunpack.c.0.s8 %v3338
    %v3340 = vlaneseq
    %v3341 = vshrl.u32 %v3340, 7
    %v3342 = vsub.s32 %v3339, %v3341
    %v3343 = vrot.slane %v3329, %v3342
    %v3344 = vcombine.low %v3036, %v3038
    %v3345 = vcombine.high %v3036, %v3038
    %v3347 = vunpack.c.l.s4 1983009808
    %v3348 = vunpack.c.0.s8 %v3347
    %v3349 = vlaneseq
    %v3350 = vshrl.u32 %v3349, 7
    %v3351 = vsub.s32 %v3348, %v3350
    %v3352 = vrot.slane %v3344, %v3351
    %v3354 = vunpack.c.l.s4 1983009808
    %v3355 = vunpack.c.0.s8 %v3354
    %v3356 = vlaneseq
    %v3357 = vshrl.u32 %v3356, 7
    %v3358 = vsub.s32 %v3355, %v3357
    %v3359 = vrot.slane %v3345, %v3358
    %v3360 = vcombine.low %v3037, %v3039
    %v3361 = vcombine.high %v3037, %v3039
    %v3363 = vunpack.c.l.s4 1983009808
    %v3364 = vunpack.c.0.s8 %v3363
    %v3365 = vlaneseq
    %v3366 = vshrl.u32 %v3365, 7
    %v3367 = vsub.s32 %v3364, %v3366
    %v3368 = vrot.slane %v3360, %v3367
    %v3370 = vunpack.c.l.s4 1983009808
    %v3371 = vunpack.c.0.s8 %v3370
    %v3372 = vlaneseq
    %v3373 = vshrl.u32 %v3372, 7
    %v3374 = vsub.s32 %v3371, %v3373
    %v3375 = vrot.slane %v3361, %v3374
    %v3376 = vcombine.low %v3320, %v3336
    %v3377 = vcombine.high %v3320, %v3336
    %v3379 = vunpack.c.l.s4 1934713408
    %v3380 = vunpack.c.0.s8 %v3379
    %v3381 = vlaneseq
    %v3382 = vshrl.u32 %v3381, 7
    %v3383 = vsub.s32 %v3380, %v3382
    %v3384 = vrot.slane %v3376, %v3383
    %v3386 = vunpack.c.l.s4 1934713408
    %v3387 = vunpack.c.0.s8 %v3386
    %v3388 = vlaneseq
    %v3389 = vshrl.u32 %v3388, 7
    %v3390 = vsub.s32 %v3387, %v3389
    %v3391 = vrot.slane %v3377, %v3390
    %v3392 = vcombine.low %v3327, %v3343
    %v3393 = vcombine.high %v3327, %v3343
    %v3395 = vunpack.c.l.s4 1934713408
    %v3396 = vunpack.c.0.s8 %v3395
    %v3397 = vlaneseq
    %v3398 = vshrl.u32 %v3397, 7
    %v3399 = vsub.s32 %v3396, %v3398
    %v3400 = vrot.slane %v3392, %v3399
    %v3402 = vunpack.c.l.s4 1934713408
    %v3403 = vunpack.c.0.s8 %v3402
    %v3404 = vlaneseq
    %v3405 = vshrl.u32 %v3404, 7
    %v3406 = vsub.s32 %v3403, %v3405
    %v3407 = vrot.slane %v3393, %v3406
    %v3408 = vcombine.low %v3352, %v3368
    %v3409 = vcombine.high %v3352, %v3368
    %v3411 = vunpack.c.l.s4 1934713408
    %v3412 = vunpack.c.0.s8 %v3411
    %v3413 = vlaneseq
    %v3414 = vshrl.u32 %v3413, 7
    %v3415 = vsub.s32 %v3412, %v3414
    %v3416 = vrot.slane %v3408, %v3415
    %v3418 = vunpack.c.l.s4 1934713408
    %v3419 = vunpack.c.0.s8 %v3418
    %v3420 = vlaneseq
    %v3421 = vshrl.u32 %v3420, 7
    %v3422 = vsub.s32 %v3419, %v3421
    %v3423 = vrot.slane %v3409, %v3422
    %v3424 = vcombine.low %v3359, %v3375
    %v3425 = vcombine.high %v3359, %v3375
    %v3427 = vunpack.c.l.s4 1934713408
    %v3428 = vunpack.c.0.s8 %v3427
    %v3429 = vlaneseq
    %v3430 = vshrl.u32 %v3429, 7
    %v3431 = vsub.s32 %v3428, %v3430
    %v3432 = vrot.slane %v3424, %v3431
    %v3434 = vunpack.c.l.s4 1934713408
    %v3435 = vunpack.c.0.s8 %v3434
    %v3436 = vlaneseq
    %v3437 = vshrl.u32 %v3436, 7
    %v3438 = vsub.s32 %v3435, %v3437
    %v3439 = vrot.slane %v3425, %v3438
    %v3440 = vcombine.low %v3384, %v3416
    %v3441 = vcombine.high %v3384, %v3416
    %v3442 = vcombine.low %v3391, %v3423
    %v3443 = vcombine.high %v3391, %v3423
    %v3444 = vcombine.low %v3400, %v3432
    %v3445 = vcombine.high %v3400, %v3432
    %v3446 = vcombine.low %v3407, %v3439
    %v3447 = vcombine.high %v3407, %v3439
    %v3448 = vcombine.low %v2896, %v2898
    %v3449 = vcombine.high %v2896, %v2898
    %v3451 = vunpack.c.l.s4 1983009808
    %v3452 = vunpack.c.0.s8 %v3451
    %v3453 = vlaneseq
    %v3454 = vshrl.u32 %v3453, 7
    %v3455 = vsub.s32 %v3452, %v3454
    %v3456 = vrot.slane %v3448, %v3455
    %v3458 = vunpack.c.l.s4 1983009808
    %v3459 = vunpack.c.0.s8 %v3458
    %v3460 = vlaneseq
    %v3461 = vshrl.u32 %v3460, 7
    %v3462 = vsub.s32 %v3459, %v3461
    %v3463 = vrot.slane %v3449, %v3462
    %v3464 = vcombine.low %v2897, %v2899
    %v3465 = vcombine.high %v2897, %v2899
    %v3467 = vunpack.c.l.s4 1983009808
    %v3468 = vunpack.c.0.s8 %v3467
    %v3469 = vlaneseq
    %v3470 = vshrl.u32 %v3469, 7
    %v3471 = vsub.s32 %v3468, %v3470
    %v3472 = vrot.slane %v3464, %v3471
    %v3474 = vunpack.c.l.s4 1983009808
    %v3475 = vunpack.c.0.s8 %v3474
    %v3476 = vlaneseq
    %v3477 = vshrl.u32 %v3476, 7
    %v3478 = vsub.s32 %v3475, %v3477
    %v3479 = vrot.slane %v3465, %v3478
    %v3480 = vcombine.low %v2900, %v2902
    %v3481 = vcombine.high %v2900, %v2902
    %v3483 = vunpack.c.l.s4 1983009808
    %v3484 = vunpack.c.0.s8 %v3483
    %v3485 = vlaneseq
    %v3486 = vshrl.u32 %v3485, 7
    %v3487 = vsub.s32 %v3484, %v3486
    %v3488 = vrot.slane %v3480, %v3487
    %v3490 = vunpack.c.l.s4 1983009808
    %v3491 = vunpack.c.0.s8 %v3490
    %v3492 = vlaneseq
    %v3493 = vshrl.u32 %v3492, 7
    %v3494 = vsub.s32 %v3491, %v3493
    %v3495 = vrot.slane %v3481, %v3494
    %v3496 = vcombine.low %v2901, %v2903
    %v3497 = vcombine.high %v2901, %v2903
    %v3499 = vunpack.c.l.s4 1983009808
    %v3500 = vunpack.c.0.s8 %v3499
    %v3501 = vlaneseq
    %v3502 = vshrl.u32 %v3501, 7
    %v3503 = vsub.s32 %v3500, %v3502
    %v3504 = vrot.slane %v3496, %v3503
    %v3506 = vunpack.c.l.s4 1983009808
    %v3507 = vunpack.c.0.s8 %v3506
    %v3508 = vlaneseq
    %v3509 = vshrl.u32 %v3508, 7
    %v3510 = vsub.s32 %v3507, %v3509
    %v3511 = vrot.slane %v3497, %v3510
    %v3512 = vcombine.low %v3456, %v3472
    %v3513 = vcombine.high %v3456, %v3472
    %v3515 = vunpack.c.l.s4 1934713408
    %v3516 = vunpack.c.0.s8 %v3515
    %v3517 = vlaneseq
    %v3518 = vshrl.u32 %v3517, 7
    %v3519 = vsub.s32 %v3516, %v3518
    %v3520 = vrot.slane %v3512, %v3519
    %v3522 = vunpack.c.l.s4 1934713408
    %v3523 = vunpack.c.0.s8 %v3522
    %v3524 = vlaneseq
    %v3525 = vshrl.u32 %v3524, 7
    %v3526 = vsub.s32 %v3523, %v3525
    %v3527 = vrot.slane %v3513, %v3526
    %v3528 = vcombine.low %v3463, %v3479
    %v3529 = vcombine.high %v3463, %v3479
    %v3531 = vunpack.c.l.s4 1934713408
    %v3532 = vunpack.c.0.s8 %v3531
    %v3533 = vlaneseq
    %v3534 = vshrl.u32 %v3533, 7
    %v3535 = vsub.s32 %v3532, %v3534
    %v3536 = vrot.slane %v3528, %v3535
    %v3538 = vunpack.c.l.s4 1934713408
    %v3539 = vunpack.c.0.s8 %v3538
    %v3540 = vlaneseq
    %v3541 = vshrl.u32 %v3540, 7
    %v3542 = vsub.s32 %v3539, %v3541
    %v3543 = vrot.slane %v3529, %v3542
    %v3544 = vcombine.low %v3488, %v3504
    %v3545 = vcombine.high %v3488, %v3504
    %v3547 = vunpack.c.l.s4 1934713408
    %v3548 = vunpack.c.0.s8 %v3547
    %v3549 = vlaneseq
    %v3550 = vshrl.u32 %v3549, 7
    %v3551 = vsub.s32 %v3548, %v3550
    %v3552 = vrot.slane %v3544, %v3551
    %v3554 = vunpack.c.l.s4 1934713408
    %v3555 = vunpack.c.0.s8 %v3554
    %v3556 = vlaneseq
    %v3557 = vshrl.u32 %v3556, 7
    %v3558 = vsub.s32 %v3555, %v3557
    %v3559 = vrot.slane %v3545, %v3558
    %v3560 = vcombine.low %v3495, %v3511
    %v3561 = vcombine.high %v3495, %v3511
    %v3563 = vunpack.c.l.s4 1934713408
    %v3564 = vunpack.c.0.s8 %v3563
    %v3565 = vlaneseq
    %v3566 = vshrl.u32 %v3565, 7
    %v3567 = vsub.s32 %v3564, %v3566
    %v3568 = vrot.slane %v3560, %v3567
    %v3570 = vunpack.c.l.s4 1934713408
    %v3571 = vunpack.c.0.s8 %v3570
    %v3572 = vlaneseq
    %v3573 = vshrl.u32 %v3572, 7
    %v3574 = vsub.s32 %v3571, %v3573
    %v3575 = vrot.slane %v3561, %v3574
    %v3576 = vcombine.low %v3520, %v3552
    %v3577 = vcombine.high %v3520, %v3552
    %v3578 = vcombine.low %v3527, %v3559
    %v3579 = vcombine.high %v3527, %v3559
    %v3580 = vcombine.low %v3536, %v3568
    %v3581 = vcombine.high %v3536, %v3568
    %v3582 = vcombine.low %v3543, %v3575
    %v3583 = vcombine.high %v3543, %v3575
    %v3584 = vcombine.low %v3168, %v3170
    %v3585 = vcombine.high %v3168, %v3170
    %v3587 = vunpack.c.l.s4 1983009808
    %v3588 = vunpack.c.0.s8 %v3587
    %v3589 = vlaneseq
    %v3590 = vshrl.u32 %v3589, 7
    %v3591 = vsub.s32 %v3588, %v3590
    %v3592 = vrot.slane %v3584, %v3591
    %v3594 = vunpack.c.l.s4 1983009808
    %v3595 = vunpack.c.0.s8 %v3594
    %v3596 = vlaneseq
    %v3597 = vshrl.u32 %v3596, 7
    %v3598 = vsub.s32 %v3595, %v3597
    %v3599 = vrot.slane %v3585, %v3598
    %v3600 = vcombine.low %v3169, %v3171
    %v3601 = vcombine.high %v3169, %v3171
    %v3603 = vunpack.c.l.s4 1983009808
    %v3604 = vunpack.c.0.s8 %v3603
    %v3605 = vlaneseq
    %v3606 = vshrl.u32 %v3605, 7
    %v3607 = vsub.s32 %v3604, %v3606
    %v3608 = vrot.slane %v3600, %v3607
    %v3610 = vunpack.c.l.s4 1983009808
    %v3611 = vunpack.c.0.s8 %v3610
    %v3612 = vlaneseq
    %v3613 = vshrl.u32 %v3612, 7
    %v3614 = vsub.s32 %v3611, %v3613
    %v3615 = vrot.slane %v3601, %v3614
    %v3616 = vcombine.low %v3172, %v3174
    %v3617 = vcombine.high %v3172, %v3174
    %v3619 = vunpack.c.l.s4 1983009808
    %v3620 = vunpack.c.0.s8 %v3619
    %v3621 = vlaneseq
    %v3622 = vshrl.u32 %v3621, 7
    %v3623 = vsub.s32 %v3620, %v3622
    %v3624 = vrot.slane %v3616, %v3623
    %v3626 = vunpack.c.l.s4 1983009808
    %v3627 = vunpack.c.0.s8 %v3626
    %v3628 = vlaneseq
    %v3629 = vshrl.u32 %v3628, 7
    %v3630 = vsub.s32 %v3627, %v3629
    %v3631 = vrot.slane %v3617, %v3630
    %v3632 = vcombine.low %v3173, %v3175
    %v3633 = vcombine.high %v3173, %v3175
    %v3635 = vunpack.c.l.s4 1983009808
    %v3636 = vunpack.c.0.s8 %v3635
    %v3637 = vlaneseq
    %v3638 = vshrl.u32 %v3637, 7
    %v3639 = vsub.s32 %v3636, %v3638
    %v3640 = vrot.slane %v3632, %v3639
    %v3642 = vunpack.c.l.s4 1983009808
    %v3643 = vunpack.c.0.s8 %v3642
    %v3644 = vlaneseq
    %v3645 = vshrl.u32 %v3644, 7
    %v3646 = vsub.s32 %v3643, %v3645
    %v3647 = vrot.slane %v3633, %v3646
    %v3648 = vcombine.low %v3592, %v3608
    %v3649 = vcombine.high %v3592, %v3608
    %v3651 = vunpack.c.l.s4 1934713408
    %v3652 = vunpack.c.0.s8 %v3651
    %v3653 = vlaneseq
    %v3654 = vshrl.u32 %v3653, 7
    %v3655 = vsub.s32 %v3652, %v3654
    %v3656 = vrot.slane %v3648, %v3655
    %v3658 = vunpack.c.l.s4 1934713408
    %v3659 = vunpack.c.0.s8 %v3658
    %v3660 = vlaneseq
    %v3661 = vshrl.u32 %v3660, 7
    %v3662 = vsub.s32 %v3659, %v3661
    %v3663 = vrot.slane %v3649, %v3662
    %v3664 = vcombine.low %v3599, %v3615
    %v3665 = vcombine.high %v3599, %v3615
    %v3667 = vunpack.c.l.s4 1934713408
    %v3668 = vunpack.c.0.s8 %v3667
    %v3669 = vlaneseq
    %v3670 = vshrl.u32 %v3669, 7
    %v3671 = vsub.s32 %v3668, %v3670
    %v3672 = vrot.slane %v3664, %v3671
    %v3674 = vunpack.c.l.s4 1934713408
    %v3675 = vunpack.c.0.s8 %v3674
    %v3676 = vlaneseq
    %v3677 = vshrl.u32 %v3676, 7
    %v3678 = vsub.s32 %v3675, %v3677
    %v3679 = vrot.slane %v3665, %v3678
    %v3680 = vcombine.low %v3624, %v3640
    %v3681 = vcombine.high %v3624, %v3640
    %v3683 = vunpack.c.l.s4 1934713408
    %v3684 = vunpack.c.0.s8 %v3683
    %v3685 = vlaneseq
    %v3686 = vshrl.u32 %v3685, 7
    %v3687 = vsub.s32 %v3684, %v3686
    %v3688 = vrot.slane %v3680, %v3687
    %v3690 = vunpack.c.l.s4 1934713408
    %v3691 = vunpack.c.0.s8 %v3690
    %v3692 = vlaneseq
    %v3693 = vshrl.u32 %v3692, 7
    %v3694 = vsub.s32 %v3691, %v3693
    %v3695 = vrot.slane %v3681, %v3694
    %v3696 = vcombine.low %v3631, %v3647
    %v3697 = vcombine.high %v3631, %v3647
    %v3699 = vunpack.c.l.s4 1934713408
    %v3700 = vunpack.c.0.s8 %v3699
    %v3701 = vlaneseq
    %v3702 = vshrl.u32 %v3701, 7
    %v3703 = vsub.s32 %v3700, %v3702
    %v3704 = vrot.slane %v3696, %v3703
    %v3706 = vunpack.c.l.s4 1934713408
    %v3707 = vunpack.c.0.s8 %v3706
    %v3708 = vlaneseq
    %v3709 = vshrl.u32 %v3708, 7
    %v3710 = vsub.s32 %v3707, %v3709
    %v3711 = vrot.slane %v3697, %v3710
    %v3712 = vcombine.low %v3656, %v3688
    %v3713 = vcombine.high %v3656, %v3688
    %v3714 = vcombine.low %v3663, %v3695
    %v3715 = vcombine.high %v3663, %v3695
    %v3716 = vcombine.low %v3672, %v3704
    %v3717 = vcombine.high %v3672, %v3704
    %v3718 = vcombine.low %v3679, %v3711
    %v3719 = vcombine.high %v3679, %v3711
    %v3720 = vlaneseq
    %v3721 = vshrl.u32 %v3720, 7
    %v3722 = vadd.s32 %v3721, 8
    %v3723 = vlaneseq
    %v3724 = vand.u32 %v3723, 127
    %vm3725 = vcmp.lt.s32.totalorder %v3721, 0
    %v3726 = vsub.s32 0, %v3721
    %v3727 = vsel %vm3725, %v3726, %v3721
    %v3728 = vshrl.u32 %v3727, 1
    %v3729 = vand.u32 %v3727, 1
    %v3730 = vsub.s32 0, %v3729
    %v3731 = vsel %vm3725, %v3730, %v3729
    %vm3732 = vcmp.lt.s32.totalorder %v3722, 0
    %v3733 = vsub.s32 0, %v3722
    %v3734 = vsel %vm3732, %v3733, %v3722
    %v3735 = vshrl.u32 %v3734, 1
    %v3736 = vand.u32 %v3734, 1
    %v3737 = vsub.s32 0, %v3736
    %v3738 = vsel %vm3732, %v3737, %v3736
    %vm3739 = vcmp.ne.s32.totalorder %v3731, 0
    %vm3740 = vcmp.ne.s32.totalorder %v3738, 0
    %vm3741 = vcmp.lt.s32.totalorder %v3731, 0
    %vm3742 = vcmp.lt.s32.totalorder %v3738, 0
    %vm3743 = vmand %vm3741, %vm3739
    %vm3744 = vmand %vm3742, %vm3740
    %v3745 = vadd.s32 %v3731, 2
    %v3746 = vadd.s32 %v3738, 2
    %v3747 = vsel %vm3743, %v3745, %v3731
    %v3748 = vsel %vm3744, %v3746, %v3738
    %vm3749 = vcmp.lt.s32.totalorder %v3724, 0
    %v3750 = vsub.s32 0, %v3724
    %v3751 = vsel %vm3749, %v3750, %v3724
    %v3752 = vshrl.u32 %v3751, 1
    %v3753 = vand.u32 %v3751, 1
    %v3754 = vsub.s32 0, %v3753
    %v3755 = vsel %vm3749, %v3754, %v3753
    %vm3756 = vcmp.ne.s32.totalorder %v3755, 0
    %vm3757 = vcmp.lt.s32.totalorder %v3755, 0
    %vm3758 = vmand %vm3757, %vm3756
    %v3759 = vadd.s32 %v3755, 2
    %v3760 = vsel %vm3758, %v3759, %v3755
    %vm3761 = vcmp.eq.s32.totalorder %v3747, %v3760
    %vm3762 = vcmp.eq.s32.totalorder %v3748, %v3760
    %v3763 = vsel %vm3761, 0.0, -1e+30
    %v3764 = vsel %vm3762, 0.0, -1e+30
    %vm3765 = vcmask 31744
    %v3767 = vsel %vm3765, %v940, 0
    %v3770 = vsel %vm3765, %v1076, 0
    %v3773 = vsel %vm3765, %v2124, 0
    %v3776 = vsel %vm3765, %v2260, 0
    %3778 = vmatprep.subr.mxu0 0.0
    %3779 = vmatpush1.xpose.msra.mxu0 %v3773
    %3780 = vmatprep.subr.mxu0 0.0
    %3781 = vmatpush1.xpose.msra.mxu0 %v3776
    %3782 = vmatprep.subr.mxu0 0.0
    %3783 = vmatpush1.xpose.msra.mxu0 0.0
    %3784 = vmatprep.subr.mxu0 0.0
    %3785 = vmatpush1.xpose.msra.mxu0 0.0
    %3786 = vmatprep.subr.mxu0 0.0
    %3787 = vmatpush1.xpose.msra.mxu0 0.0
    %3788 = vmatprep.subr.mxu0 0.0
    %3789 = vmatpush1.xpose.msra.mxu0 0.0
    %3790 = vmatprep.subr.mxu0 0.0
    %3791 = vmatpush1.xpose.msra.mxu0 0.0
    %3792 = vmatprep.subr.mxu0 0.0
    %3793 = vmatpush1.xpose.msra.mxu0 0.0
    %3794 = vmatprep.subr.mxu0 0.0
    %3795 = vmatpush1.xpose.msra.mxu0 0.0
    %3796 = vmatprep.subr.mxu0 0.0
    %3797 = vmatpush1.xpose.msra.mxu0 0.0
    %3798 = vmatprep.subr.mxu0 0.0
    %3799 = vmatpush1.xpose.msra.mxu0 0.0
    %3800 = vmatprep.subr.mxu0 0.0
    %3801 = vmatpush1.xpose.msra.mxu0 0.0
    %3802 = vmatprep.subr.mxu0 0.0
    %3803 = vmatpush1.xpose.msra.mxu0 0.0
    %3804 = vmatprep.subr.mxu0 0.0
    %3805 = vmatpush1.xpose.msra.mxu0 0.0
    %3806 = vmatprep.subr.mxu0 0.0
    %3807 = vmatpush1.xpose.msra.mxu0 0.0
    %3808 = vmatprep.subr.mxu0 0.0
    %3809 = vmatpush1.xpose.msra.mxu0 0.0
    %3810 = vmatprep.subr.mxu0 0.0
    %3811 = vmatpush1.xpose.msra.mxu0 0.0
    %3812 = vmatprep.subr.mxu0 0.0
    %3813 = vmatpush1.xpose.msra.mxu0 0.0
    %3814 = vmatprep.subr.mxu0 0.0
    %3815 = vmatpush1.xpose.msra.mxu0 0.0
    %3816 = vmatprep.subr.mxu0 0.0
    %3817 = vmatpush1.xpose.msra.mxu0 0.0
    %3818 = vmatprep.subr.mxu0 0.0
    %3819 = vmatpush1.xpose.msra.mxu0 0.0
    %3820 = vmatprep.subr.mxu0 0.0
    %3821 = vmatpush1.xpose.msra.mxu0 0.0
    %3822 = vmatprep.subr.mxu0 0.0
    %3823 = vmatpush1.xpose.msra.mxu0 0.0
    %3824 = vmatprep.subr.mxu0 0.0
    %3825 = vmatpush1.xpose.msra.mxu0 0.0
    %3826 = vmatprep.subr.mxu0 0.0
    %3827 = vmatpush1.xpose.msra.mxu0 0.0
    %3828 = vmatprep.subr.mxu0 0.0
    %3829 = vmatpush1.xpose.msra.mxu0 0.0
    %3830 = vmatprep.subr.mxu0 0.0
    %3831 = vmatpush1.xpose.msra.mxu0 0.0
    %3832 = vmatprep.subr.mxu0 0.0
    %3833 = vmatpush1.xpose.msra.mxu0 0.0
    %3834 = vmatprep.subr.mxu0 0.0
    %3835 = vmatpush1.xpose.msra.mxu0 0.0
    %3836 = vmatprep.subr.mxu0 0.0
    %3837 = vmatpush1.xpose.msra.mxu0 0.0
    %3838 = vmatprep.subr.mxu0 0.0
    %3839 = vmatpush1.xpose.msra.mxu0 0.0
    %3840 = vmatprep.subr.mxu0 0.0
    %3841 = vmatpush1.xpose.msra.mxu0 0.0
    %3842 = vmatprep.mubr.f32.mxu0 0.0
    %3843 = vmatmul.mubr.f32.gmra.mrb[0].mxu0 %v3767
    %v3844 = vpop.f32.mrb[0].mxu0
    %v3845 = vadd.f32 %v3763, %v3844
    %v3846 = vpop.f32.mrb[0].mxu0
    %3847 = vmatprep.mubr.f32.mxu0 0.0
    %3848 = vmatmul.mubr.f32.gmra.mrb[0].mxu0 %v3770
    %v3849 = vpop.f32.mrb[0].mxu0
    %v3850 = vadd.f32 %v3764, %v3849
    %v3851 = vpop.f32.mrb[0].mxu0
    %3852 = vdwg.mxu0
    %v3854 = vsel %vm3765, %v941, 0
    %v3857 = vsel %vm3765, %v1077, 0
    %v3860 = vsel %vm3765, %v2125, 0
    %v3863 = vsel %vm3765, %v2261, 0
    %3865 = vmatprep.subr.mxu0 0.0
    %3866 = vmatpush1.xpose.msra.mxu0 %v3860
    %3867 = vmatprep.subr.mxu0 0.0
    %3868 = vmatpush1.xpose.msra.mxu0 %v3863
    %3869 = vmatprep.subr.mxu0 0.0
    %3870 = vmatpush1.xpose.msra.mxu0 0.0
    %3871 = vmatprep.subr.mxu0 0.0
    %3872 = vmatpush1.xpose.msra.mxu0 0.0
    %3873 = vmatprep.subr.mxu0 0.0
    %3874 = vmatpush1.xpose.msra.mxu0 0.0
    %3875 = vmatprep.subr.mxu0 0.0
    %3876 = vmatpush1.xpose.msra.mxu0 0.0
    %3877 = vmatprep.subr.mxu0 0.0
    %3878 = vmatpush1.xpose.msra.mxu0 0.0
    %3879 = vmatprep.subr.mxu0 0.0
    %3880 = vmatpush1.xpose.msra.mxu0 0.0
    %3881 = vmatprep.subr.mxu0 0.0
    %3882 = vmatpush1.xpose.msra.mxu0 0.0
    %3883 = vmatprep.subr.mxu0 0.0
    %3884 = vmatpush1.xpose.msra.mxu0 0.0
    %3885 = vmatprep.subr.mxu0 0.0
    %3886 = vmatpush1.xpose.msra.mxu0 0.0
    %3887 = vmatprep.subr.mxu0 0.0
    %3888 = vmatpush1.xpose.msra.mxu0 0.0
    %3889 = vmatprep.subr.mxu0 0.0
    %3890 = vmatpush1.xpose.msra.mxu0 0.0
    %3891 = vmatprep.subr.mxu0 0.0
    %3892 = vmatpush1.xpose.msra.mxu0 0.0
    %3893 = vmatprep.subr.mxu0 0.0
    %3894 = vmatpush1.xpose.msra.mxu0 0.0
    %3895 = vmatprep.subr.mxu0 0.0
    %3896 = vmatpush1.xpose.msra.mxu0 0.0
    %3897 = vmatprep.subr.mxu0 0.0
    %3898 = vmatpush1.xpose.msra.mxu0 0.0
    %3899 = vmatprep.subr.mxu0 0.0
    %3900 = vmatpush1.xpose.msra.mxu0 0.0
    %3901 = vmatprep.subr.mxu0 0.0
    %3902 = vmatpush1.xpose.msra.mxu0 0.0
    %3903 = vmatprep.subr.mxu0 0.0
    %3904 = vmatpush1.xpose.msra.mxu0 0.0
    %3905 = vmatprep.subr.mxu0 0.0
    %3906 = vmatpush1.xpose.msra.mxu0 0.0
    %3907 = vmatprep.subr.mxu0 0.0
    %3908 = vmatpush1.xpose.msra.mxu0 0.0
    %3909 = vmatprep.subr.mxu0 0.0
    %3910 = vmatpush1.xpose.msra.mxu0 0.0
    %3911 = vmatprep.subr.mxu0 0.0
    %3912 = vmatpush1.xpose.msra.mxu0 0.0
    %3913 = vmatprep.subr.mxu0 0.0
    %3914 = vmatpush1.xpose.msra.mxu0 0.0
    %3915 = vmatprep.subr.mxu0 0.0
    %3916 = vmatpush1.xpose.msra.mxu0 0.0
    %3917 = vmatprep.subr.mxu0 0.0
    %3918 = vmatpush1.xpose.msra.mxu0 0.0
    %3919 = vmatprep.subr.mxu0 0.0
    %3920 = vmatpush1.xpose.msra.mxu0 0.0
    %3921 = vmatprep.subr.mxu0 0.0
    %3922 = vmatpush1.xpose.msra.mxu0 0.0
    %3923 = vmatprep.subr.mxu0 0.0
    %3924 = vmatpush1.xpose.msra.mxu0 0.0
    %3925 = vmatprep.subr.mxu0 0.0
    %3926 = vmatpush1.xpose.msra.mxu0 0.0
    %3927 = vmatprep.subr.mxu0 0.0
    %3928 = vmatpush1.xpose.msra.mxu0 0.0
    %3929 = vmatprep.mubr.f32.mxu0 0.0
    %3930 = vmatmul.mubr.f32.gmra.mrb[0].mxu0 %v3854
    %v3931 = vpop.f32.mrb[0].mxu0
    %v3932 = vadd.f32 %v3763, %v3931
    %v3933 = vpop.f32.mrb[0].mxu0
    %3934 = vmatprep.mubr.f32.mxu0 0.0
    %3935 = vmatmul.mubr.f32.gmra.mrb[0].mxu0 %v3857
    %v3936 = vpop.f32.mrb[0].mxu0
    %v3937 = vadd.f32 %v3764, %v3936
    %v3938 = vpop.f32.mrb[0].mxu0
    %3939 = vdwg.mxu0
    %v3941 = vsel %vm3765, %v942, 0
    %v3944 = vsel %vm3765, %v1078, 0
    %v3947 = vsel %vm3765, %v2126, 0
    %v3950 = vsel %vm3765, %v2262, 0
    %3952 = vmatprep.subr.mxu0 0.0
    %3953 = vmatpush1.xpose.msra.mxu0 %v3947
    %3954 = vmatprep.subr.mxu0 0.0
    %3955 = vmatpush1.xpose.msra.mxu0 %v3950
    %3956 = vmatprep.subr.mxu0 0.0
    %3957 = vmatpush1.xpose.msra.mxu0 0.0
    %3958 = vmatprep.subr.mxu0 0.0
    %3959 = vmatpush1.xpose.msra.mxu0 0.0
    %3960 = vmatprep.subr.mxu0 0.0
    %3961 = vmatpush1.xpose.msra.mxu0 0.0
    %3962 = vmatprep.subr.mxu0 0.0
    %3963 = vmatpush1.xpose.msra.mxu0 0.0
    %3964 = vmatprep.subr.mxu0 0.0
    %3965 = vmatpush1.xpose.msra.mxu0 0.0
    %3966 = vmatprep.subr.mxu0 0.0
    %3967 = vmatpush1.xpose.msra.mxu0 0.0
    %3968 = vmatprep.subr.mxu0 0.0
    %3969 = vmatpush1.xpose.msra.mxu0 0.0
    %3970 = vmatprep.subr.mxu0 0.0
    %3971 = vmatpush1.xpose.msra.mxu0 0.0
    %3972 = vmatprep.subr.mxu0 0.0
    %3973 = vmatpush1.xpose.msra.mxu0 0.0
    %3974 = vmatprep.subr.mxu0 0.0
    %3975 = vmatpush1.xpose.msra.mxu0 0.0
    %3976 = vmatprep.subr.mxu0 0.0
    %3977 = vmatpush1.xpose.msra.mxu0 0.0
    %3978 = vmatprep.subr.mxu0 0.0
    %3979 = vmatpush1.xpose.msra.mxu0 0.0
    %3980 = vmatprep.subr.mxu0 0.0
    %3981 = vmatpush1.xpose.msra.mxu0 0.0
    %3982 = vmatprep.subr.mxu0 0.0
    %3983 = vmatpush1.xpose.msra.mxu0 0.0
    %3984 = vmatprep.subr.mxu0 0.0
    %3985 = vmatpush1.xpose.msra.mxu0 0.0
    %3986 = vmatprep.subr.mxu0 0.0
    %3987 = vmatpush1.xpose.msra.mxu0 0.0
    %3988 = vmatprep.subr.mxu0 0.0
    %3989 = vmatpush1.xpose.msra.mxu0 0.0
    %3990 = vmatprep.subr.mxu0 0.0
    %3991 = vmatpush1.xpose.msra.mxu0 0.0
    %3992 = vmatprep.subr.mxu0 0.0
    %3993 = vmatpush1.xpose.msra.mxu0 0.0
    %3994 = vmatprep.subr.mxu0 0.0
    %3995 = vmatpush1.xpose.msra.mxu0 0.0
    %3996 = vmatprep.subr.mxu0 0.0
    %3997 = vmatpush1.xpose.msra.mxu0 0.0
    %3998 = vmatprep.subr.mxu0 0.0
    %3999 = vmatpush1.xpose.msra.mxu0 0.0
    %4000 = vmatprep.subr.mxu0 0.0
    %4001 = vmatpush1.xpose.msra.mxu0 0.0
    %4002 = vmatprep.subr.mxu0 0.0
    %4003 = vmatpush1.xpose.msra.mxu0 0.0
    %4004 = vmatprep.subr.mxu0 0.0
    %4005 = vmatpush1.xpose.msra.mxu0 0.0
    %4006 = vmatprep.subr.mxu0 0.0
    %4007 = vmatpush1.xpose.msra.mxu0 0.0
    %4008 = vmatprep.subr.mxu0 0.0
    %4009 = vmatpush1.xpose.msra.mxu0 0.0
    %4010 = vmatprep.subr.mxu0 0.0
    %4011 = vmatpush1.xpose.msra.mxu0 0.0
    %4012 = vmatprep.subr.mxu0 0.0
    %4013 = vmatpush1.xpose.msra.mxu0 0.0
    %4014 = vmatprep.subr.mxu0 0.0
    %4015 = vmatpush1.xpose.msra.mxu0 0.0
    %4016 = vmatprep.mubr.f32.mxu0 0.0
    %4017 = vmatmul.mubr.f32.gmra.mrb[0].mxu0 %v3941
    %v4018 = vpop.f32.mrb[0].mxu0
    %v4019 = vadd.f32 %v3763, %v4018
    %v4020 = vpop.f32.mrb[0].mxu0
    %4021 = vmatprep.mubr.f32.mxu0 0.0
    %4022 = vmatmul.mubr.f32.gmra.mrb[0].mxu0 %v3944
    %v4023 = vpop.f32.mrb[0].mxu0
    %v4024 = vadd.f32 %v3764, %v4023
    %v4025 = vpop.f32.mrb[0].mxu0
    %4026 = vdwg.mxu0
    %v4028 = vsel %vm3765, %v943, 0
    %v4031 = vsel %vm3765, %v1079, 0
    %v4034 = vsel %vm3765, %v2127, 0
    %v4037 = vsel %vm3765, %v2263, 0
    %4039 = vmatprep.subr.mxu0 0.0
    %4040 = vmatpush1.xpose.msra.mxu0 %v4034
    %4041 = vmatprep.subr.mxu0 0.0
    %4042 = vmatpush1.xpose.msra.mxu0 %v4037
    %4043 = vmatprep.subr.mxu0 0.0
    %4044 = vmatpush1.xpose.msra.mxu0 0.0
    %4045 = vmatprep.subr.mxu0 0.0
    %4046 = vmatpush1.xpose.msra.mxu0 0.0
    %4047 = vmatprep.subr.mxu0 0.0
    %4048 = vmatpush1.xpose.msra.mxu0 0.0
    %4049 = vmatprep.subr.mxu0 0.0
    %4050 = vmatpush1.xpose.msra.mxu0 0.0
    %4051 = vmatprep.subr.mxu0 0.0
    %4052 = vmatpush1.xpose.msra.mxu0 0.0
    %4053 = vmatprep.subr.mxu0 0.0
    %4054 = vmatpush1.xpose.msra.mxu0 0.0
    %4055 = vmatprep.subr.mxu0 0.0
    %4056 = vmatpush1.xpose.msra.mxu0 0.0
    %4057 = vmatprep.subr.mxu0 0.0
    %4058 = vmatpush1.xpose.msra.mxu0 0.0
    %4059 = vmatprep.subr.mxu0 0.0
    %4060 = vmatpush1.xpose.msra.mxu0 0.0
    %4061 = vmatprep.subr.mxu0 0.0
    %4062 = vmatpush1.xpose.msra.mxu0 0.0
    %4063 = vmatprep.subr.mxu0 0.0
    %4064 = vmatpush1.xpose.msra.mxu0 0.0
    %4065 = vmatprep.subr.mxu0 0.0
    %4066 = vmatpush1.xpose.msra.mxu0 0.0
    %4067 = vmatprep.subr.mxu0 0.0
    %4068 = vmatpush1.xpose.msra.mxu0 0.0
    %4069 = vmatprep.subr.mxu0 0.0
    %4070 = vmatpush1.xpose.msra.mxu0 0.0
    %4071 = vmatprep.subr.mxu0 0.0
    %4072 = vmatpush1.xpose.msra.mxu0 0.0
    %4073 = vmatprep.subr.mxu0 0.0
    %4074 = vmatpush1.xpose.msra.mxu0 0.0
    %4075 = vmatprep.subr.mxu0 0.0
    %4076 = vmatpush1.xpose.msra.mxu0 0.0
    %4077 = vmatprep.subr.mxu0 0.0
    %4078 = vmatpush1.xpose.msra.mxu0 0.0
    %4079 = vmatprep.subr.mxu0 0.0
    %4080 = vmatpush1.xpose.msra.mxu0 0.0
    %4081 = vmatprep.subr.mxu0 0.0
    %4082 = vmatpush1.xpose.msra.mxu0 0.0
    %4083 = vmatprep.subr.mxu0 0.0
    %4084 = vmatpush1.xpose.msra.mxu0 0.0
    %4085 = vmatprep.subr.mxu0 0.0
    %4086 = vmatpush1.xpose.msra.mxu0 0.0
    %4087 = vmatprep.subr.mxu0 0.0
    %4088 = vmatpush1.xpose.msra.mxu0 0.0
    %4089 = vmatprep.subr.mxu0 0.0
    %4090 = vmatpush1.xpose.msra.mxu0 0.0
    %4091 = vmatprep.subr.mxu0 0.0
    %4092 = vmatpush1.xpose.msra.mxu0 0.0
    %4093 = vmatprep.subr.mxu0 0.0
    %4094 = vmatpush1.xpose.msra.mxu0 0.0
    %4095 = vmatprep.subr.mxu0 0.0
    %4096 = vmatpush1.xpose.msra.mxu0 0.0
    %4097 = vmatprep.subr.mxu0 0.0
    %4098 = vmatpush1.xpose.msra.mxu0 0.0
    %4099 = vmatprep.subr.mxu0 0.0
    %4100 = vmatpush1.xpose.msra.mxu0 0.0
    %4101 = vmatprep.subr.mxu0 0.0
    %4102 = vmatpush1.xpose.msra.mxu0 0.0
    %4103 = vmatprep.mubr.f32.mxu0 0.0
    %4104 = vmatmul.mubr.f32.gmra.mrb[0].mxu0 %v4028
    %v4105 = vpop.f32.mrb[0].mxu0
    %v4106 = vadd.f32 %v3763, %v4105
    %v4107 = vpop.f32.mrb[0].mxu0
    %4108 = vmatprep.mubr.f32.mxu0 0.0
    %4109 = vmatmul.mubr.f32.gmra.mrb[0].mxu0 %v4031
    %v4110 = vpop.f32.mrb[0].mxu0
    %v4111 = vadd.f32 %v3764, %v4110
    %v4112 = vpop.f32.mrb[0].mxu0
    %4113 = vdwg.mxu0
    %v4115 = vsel %vm3765, %v944, 0
    %v4118 = vsel %vm3765, %v1080, 0
    %v4121 = vsel %vm3765, %v2128, 0
    %v4124 = vsel %vm3765, %v2264, 0
    %4126 = vmatprep.subr.mxu0 0.0
    %4127 = vmatpush1.xpose.msra.mxu0 %v4121
    %4128 = vmatprep.subr.mxu0 0.0
    %4129 = vmatpush1.xpose.msra.mxu0 %v4124
    %4130 = vmatprep.subr.mxu0 0.0
    %4131 = vmatpush1.xpose.msra.mxu0 0.0
    %4132 = vmatprep.subr.mxu0 0.0
    %4133 = vmatpush1.xpose.msra.mxu0 0.0
    %4134 = vmatprep.subr.mxu0 0.0
    %4135 = vmatpush1.xpose.msra.mxu0 0.0
    %4136 = vmatprep.subr.mxu0 0.0
    %4137 = vmatpush1.xpose.msra.mxu0 0.0
    %4138 = vmatprep.subr.mxu0 0.0
    %4139 = vmatpush1.xpose.msra.mxu0 0.0
    %4140 = vmatprep.subr.mxu0 0.0
    %4141 = vmatpush1.xpose.msra.mxu0 0.0
    %4142 = vmatprep.subr.mxu0 0.0
    %4143 = vmatpush1.xpose.msra.mxu0 0.0
    %4144 = vmatprep.subr.mxu0 0.0
    %4145 = vmatpush1.xpose.msra.mxu0 0.0
    %4146 = vmatprep.subr.mxu0 0.0
    %4147 = vmatpush1.xpose.msra.mxu0 0.0
    %4148 = vmatprep.subr.mxu0 0.0
    %4149 = vmatpush1.xpose.msra.mxu0 0.0
    %4150 = vmatprep.subr.mxu0 0.0
    %4151 = vmatpush1.xpose.msra.mxu0 0.0
    %4152 = vmatprep.subr.mxu0 0.0
    %4153 = vmatpush1.xpose.msra.mxu0 0.0
    %4154 = vmatprep.subr.mxu0 0.0
    %4155 = vmatpush1.xpose.msra.mxu0 0.0
    %4156 = vmatprep.subr.mxu0 0.0
    %4157 = vmatpush1.xpose.msra.mxu0 0.0
    %4158 = vmatprep.subr.mxu0 0.0
    %4159 = vmatpush1.xpose.msra.mxu0 0.0
    %4160 = vmatprep.subr.mxu0 0.0
    %4161 = vmatpush1.xpose.msra.mxu0 0.0
    %4162 = vmatprep.subr.mxu0 0.0
    %4163 = vmatpush1.xpose.msra.mxu0 0.0
    %4164 = vmatprep.subr.mxu0 0.0
    %4165 = vmatpush1.xpose.msra.mxu0 0.0
    %4166 = vmatprep.subr.mxu0 0.0
    %4167 = vmatpush1.xpose.msra.mxu0 0.0
    %4168 = vmatprep.subr.mxu0 0.0
    %4169 = vmatpush1.xpose.msra.mxu0 0.0
    %4170 = vmatprep.subr.mxu0 0.0
    %4171 = vmatpush1.xpose.msra.mxu0 0.0
    %4172 = vmatprep.subr.mxu0 0.0
    %4173 = vmatpush1.xpose.msra.mxu0 0.0
    %4174 = vmatprep.subr.mxu0 0.0
    %4175 = vmatpush1.xpose.msra.mxu0 0.0
    %4176 = vmatprep.subr.mxu0 0.0
    %4177 = vmatpush1.xpose.msra.mxu0 0.0
    %4178 = vmatprep.subr.mxu0 0.0
    %4179 = vmatpush1.xpose.msra.mxu0 0.0
    %4180 = vmatprep.subr.mxu0 0.0
    %4181 = vmatpush1.xpose.msra.mxu0 0.0
    %4182 = vmatprep.subr.mxu0 0.0
    %4183 = vmatpush1.xpose.msra.mxu0 0.0
    %4184 = vmatprep.subr.mxu0 0.0
    %4185 = vmatpush1.xpose.msra.mxu0 0.0
    %4186 = vmatprep.subr.mxu0 0.0
    %4187 = vmatpush1.xpose.msra.mxu0 0.0
    %4188 = vmatprep.subr.mxu0 0.0
    %4189 = vmatpush1.xpose.msra.mxu0 0.0
    %4190 = vmatprep.mubr.f32.mxu0 0.0
    %4191 = vmatmul.mubr.f32.gmra.mrb[0].mxu0 %v4115
    %v4192 = vpop.f32.mrb[0].mxu0
    %v4193 = vadd.f32 %v3763, %v4192
    %v4194 = vpop.f32.mrb[0].mxu0
    %4195 = vmatprep.mubr.f32.mxu0 0.0
    %4196 = vmatmul.mubr.f32.gmra.mrb[0].mxu0 %v4118
    %v4197 = vpop.f32.mrb[0].mxu0
    %v4198 = vadd.f32 %v3764, %v4197
    %v4199 = vpop.f32.mrb[0].mxu0
    %4200 = vdwg.mxu0
    %v4202 = vsel %vm3765, %v945, 0
    %v4205 = vsel %vm3765, %v1081, 0
    %v4208 = vsel %vm3765, %v2129, 0
    %v4211 = vsel %vm3765, %v2265, 0
    %4213 = vmatprep.subr.mxu0 0.0
    %4214 = vmatpush1.xpose.msra.mxu0 %v4208
    %4215 = vmatprep.subr.mxu0 0.0
    %4216 = vmatpush1.xpose.msra.mxu0 %v4211
    %4217 = vmatprep.subr.mxu0 0.0
    %4218 = vmatpush1.xpose.msra.mxu0 0.0
    %4219 = vmatprep.subr.mxu0 0.0
    %4220 = vmatpush1.xpose.msra.mxu0 0.0
    %4221 = vmatprep.subr.mxu0 0.0
    %4222 = vmatpush1.xpose.msra.mxu0 0.0
    %4223 = vmatprep.subr.mxu0 0.0
    %4224 = vmatpush1.xpose.msra.mxu0 0.0
    %4225 = vmatprep.subr.mxu0 0.0
    %4226 = vmatpush1.xpose.msra.mxu0 0.0
    %4227 = vmatprep.subr.mxu0 0.0
    %4228 = vmatpush1.xpose.msra.mxu0 0.0
    %4229 = vmatprep.subr.mxu0 0.0
    %4230 = vmatpush1.xpose.msra.mxu0 0.0
    %4231 = vmatprep.subr.mxu0 0.0
    %4232 = vmatpush1.xpose.msra.mxu0 0.0
    %4233 = vmatprep.subr.mxu0 0.0
    %4234 = vmatpush1.xpose.msra.mxu0 0.0
    %4235 = vmatprep.subr.mxu0 0.0
    %4236 = vmatpush1.xpose.msra.mxu0 0.0
    %4237 = vmatprep.subr.mxu0 0.0
    %4238 = vmatpush1.xpose.msra.mxu0 0.0
    %4239 = vmatprep.subr.mxu0 0.0
    %4240 = vmatpush1.xpose.msra.mxu0 0.0
    %4241 = vmatprep.subr.mxu0 0.0
    %4242 = vmatpush1.xpose.msra.mxu0 0.0
    %4243 = vmatprep.subr.mxu0 0.0
    %4244 = vmatpush1.xpose.msra.mxu0 0.0
    %4245 = vmatprep.subr.mxu0 0.0
    %4246 = vmatpush1.xpose.msra.mxu0 0.0
    %4247 = vmatprep.subr.mxu0 0.0
    %4248 = vmatpush1.xpose.msra.mxu0 0.0
    %4249 = vmatprep.subr.mxu0 0.0
    %4250 = vmatpush1.xpose.msra.mxu0 0.0
    %4251 = vmatprep.subr.mxu0 0.0
    %4252 = vmatpush1.xpose.msra.mxu0 0.0
    %4253 = vmatprep.subr.mxu0 0.0
    %4254 = vmatpush1.xpose.msra.mxu0 0.0
    %4255 = vmatprep.subr.mxu0 0.0
    %4256 = vmatpush1.xpose.msra.mxu0 0.0
    %4257 = vmatprep.subr.mxu0 0.0
    %4258 = vmatpush1.xpose.msra.mxu0 0.0
    %4259 = vmatprep.subr.mxu0 0.0
    %4260 = vmatpush1.xpose.msra.mxu0 0.0
    %4261 = vmatprep.subr.mxu0 0.0
    %4262 = vmatpush1.xpose.msra.mxu0 0.0
    %4263 = vmatprep.subr.mxu0 0.0
    %4264 = vmatpush1.xpose.msra.mxu0 0.0
    %4265 = vmatprep.subr.mxu0 0.0
    %4266 = vmatpush1.xpose.msra.mxu0 0.0
    %4267 = vmatprep.subr.mxu0 0.0
    %4268 = vmatpush1.xpose.msra.mxu0 0.0
    %4269 = vmatprep.subr.mxu0 0.0
    %4270 = vmatpush1.xpose.msra.mxu0 0.0
    %4271 = vmatprep.subr.mxu0 0.0
    %4272 = vmatpush1.xpose.msra.mxu0 0.0
    %4273 = vmatprep.subr.mxu0 0.0
    %4274 = vmatpush1.xpose.msra.mxu0 0.0
    %4275 = vmatprep.subr.mxu0 0.0
    %4276 = vmatpush1.xpose.msra.mxu0 0.0
    %4277 = vmatprep.mubr.f32.mxu0 0.0
    %4278 = vmatmul.mubr.f32.gmra.mrb[0].mxu0 %v4202
    %v4279 = vpop.f32.mrb[0].mxu0
    %v4280 = vadd.f32 %v3763, %v4279
    %v4281 = vpop.f32.mrb[0].mxu0
    %4282 = vmatprep.mubr.f32.mxu0 0.0
    %4283 = vmatmul.mubr.f32.gmra.mrb[0].mxu0 %v4205
    %v4284 = vpop.f32.mrb[0].mxu0
    %v4285 = vadd.f32 %v3764, %v4284
    %v4286 = vpop.f32.mrb[0].mxu0
    %4287 = vdwg.mxu0
    %v4289 = vsel %vm3765, %v946, 0
    %v4292 = vsel %vm3765, %v1082, 0
    %v4295 = vsel %vm3765, %v2130, 0
    %v4298 = vsel %vm3765, %v2266, 0
    %4300 = vmatprep.subr.mxu0 0.0
    %4301 = vmatpush1.xpose.msra.mxu0 %v4295
    %4302 = vmatprep.subr.mxu0 0.0
    %4303 = vmatpush1.xpose.msra.mxu0 %v4298
    %4304 = vmatprep.subr.mxu0 0.0
    %4305 = vmatpush1.xpose.msra.mxu0 0.0
    %4306 = vmatprep.subr.mxu0 0.0
    %4307 = vmatpush1.xpose.msra.mxu0 0.0
    %4308 = vmatprep.subr.mxu0 0.0
    %4309 = vmatpush1.xpose.msra.mxu0 0.0
    %4310 = vmatprep.subr.mxu0 0.0
    %4311 = vmatpush1.xpose.msra.mxu0 0.0
    %4312 = vmatprep.subr.mxu0 0.0
    %4313 = vmatpush1.xpose.msra.mxu0 0.0
    %4314 = vmatprep.subr.mxu0 0.0
    %4315 = vmatpush1.xpose.msra.mxu0 0.0
    %4316 = vmatprep.subr.mxu0 0.0
    %4317 = vmatpush1.xpose.msra.mxu0 0.0
    %4318 = vmatprep.subr.mxu0 0.0
    %4319 = vmatpush1.xpose.msra.mxu0 0.0
    %4320 = vmatprep.subr.mxu0 0.0
    %4321 = vmatpush1.xpose.msra.mxu0 0.0
    %4322 = vmatprep.subr.mxu0 0.0
    %4323 = vmatpush1.xpose.msra.mxu0 0.0
    %4324 = vmatprep.subr.mxu0 0.0
    %4325 = vmatpush1.xpose.msra.mxu0 0.0
    %4326 = vmatprep.subr.mxu0 0.0
    %4327 = vmatpush1.xpose.msra.mxu0 0.0
    %4328 = vmatprep.subr.mxu0 0.0
    %4329 = vmatpush1.xpose.msra.mxu0 0.0
    %4330 = vmatprep.subr.mxu0 0.0
    %4331 = vmatpush1.xpose.msra.mxu0 0.0
    %4332 = vmatprep.subr.mxu0 0.0
    %4333 = vmatpush1.xpose.msra.mxu0 0.0
    %4334 = vmatprep.subr.mxu0 0.0
    %4335 = vmatpush1.xpose.msra.mxu0 0.0
    %4336 = vmatprep.subr.mxu0 0.0
    %4337 = vmatpush1.xpose.msra.mxu0 0.0
    %4338 = vmatprep.subr.mxu0 0.0
    %4339 = vmatpush1.xpose.msra.mxu0 0.0
    %4340 = vmatprep.subr.mxu0 0.0
    %4341 = vmatpush1.xpose.msra.mxu0 0.0
    %4342 = vmatprep.subr.mxu0 0.0
    %4343 = vmatpush1.xpose.msra.mxu0 0.0
    %4344 = vmatprep.subr.mxu0 0.0
    %4345 = vmatpush1.xpose.msra.mxu0 0.0
    %4346 = vmatprep.subr.mxu0 0.0
    %4347 = vmatpush1.xpose.msra.mxu0 0.0
    %4348 = vmatprep.subr.mxu0 0.0
    %4349 = vmatpush1.xpose.msra.mxu0 0.0
    %4350 = vmatprep.subr.mxu0 0.0
    %4351 = vmatpush1.xpose.msra.mxu0 0.0
    %4352 = vmatprep.subr.mxu0 0.0
    %4353 = vmatpush1.xpose.msra.mxu0 0.0
    %4354 = vmatprep.subr.mxu0 0.0
    %4355 = vmatpush1.xpose.msra.mxu0 0.0
    %4356 = vmatprep.subr.mxu0 0.0
    %4357 = vmatpush1.xpose.msra.mxu0 0.0
    %4358 = vmatprep.subr.mxu0 0.0
    %4359 = vmatpush1.xpose.msra.mxu0 0.0
    %4360 = vmatprep.subr.mxu0 0.0
    %4361 = vmatpush1.xpose.msra.mxu0 0.0
    %4362 = vmatprep.subr.mxu0 0.0
    %4363 = vmatpush1.xpose.msra.mxu0 0.0
    %4364 = vmatprep.mubr.f32.mxu0 0.0
    %4365 = vmatmul.mubr.f32.gmra.mrb[0].mxu0 %v4289
    %v4366 = vpop.f32.mrb[0].mxu0
    %v4367 = vadd.f32 %v3763, %v4366
    %v4368 = vpop.f32.mrb[0].mxu0
    %4369 = vmatprep.mubr.f32.mxu0 0.0
    %4370 = vmatmul.mubr.f32.gmra.mrb[0].mxu0 %v4292
    %v4371 = vpop.f32.mrb[0].mxu0
    %v4372 = vadd.f32 %v3764, %v4371
    %v4373 = vpop.f32.mrb[0].mxu0
    %4374 = vdwg.mxu0
    %v4376 = vsel %vm3765, %v947, 0
    %v4379 = vsel %vm3765, %v1083, 0
    %v4382 = vsel %vm3765, %v2131, 0
    %v4385 = vsel %vm3765, %v2267, 0
    %4387 = vmatprep.subr.mxu0 0.0
    %4388 = vmatpush1.xpose.msra.mxu0 %v4382
    %4389 = vmatprep.subr.mxu0 0.0
    %4390 = vmatpush1.xpose.msra.mxu0 %v4385
    %4391 = vmatprep.subr.mxu0 0.0
    %4392 = vmatpush1.xpose.msra.mxu0 0.0
    %4393 = vmatprep.subr.mxu0 0.0
    %4394 = vmatpush1.xpose.msra.mxu0 0.0
    %4395 = vmatprep.subr.mxu0 0.0
    %4396 = vmatpush1.xpose.msra.mxu0 0.0
    %4397 = vmatprep.subr.mxu0 0.0
    %4398 = vmatpush1.xpose.msra.mxu0 0.0
    %4399 = vmatprep.subr.mxu0 0.0
    %4400 = vmatpush1.xpose.msra.mxu0 0.0
    %4401 = vmatprep.subr.mxu0 0.0
    %4402 = vmatpush1.xpose.msra.mxu0 0.0
    %4403 = vmatprep.subr.mxu0 0.0
    %4404 = vmatpush1.xpose.msra.mxu0 0.0
    %4405 = vmatprep.subr.mxu0 0.0
    %4406 = vmatpush1.xpose.msra.mxu0 0.0
    %4407 = vmatprep.subr.mxu0 0.0
    %4408 = vmatpush1.xpose.msra.mxu0 0.0
    %4409 = vmatprep.subr.mxu0 0.0
    %4410 = vmatpush1.xpose.msra.mxu0 0.0
    %4411 = vmatprep.subr.mxu0 0.0
    %4412 = vmatpush1.xpose.msra.mxu0 0.0
    %4413 = vmatprep.subr.mxu0 0.0
    %4414 = vmatpush1.xpose.msra.mxu0 0.0
    %4415 = vmatprep.subr.mxu0 0.0
    %4416 = vmatpush1.xpose.msra.mxu0 0.0
    %4417 = vmatprep.subr.mxu0 0.0
    %4418 = vmatpush1.xpose.msra.mxu0 0.0
    %4419 = vmatprep.subr.mxu0 0.0
    %4420 = vmatpush1.xpose.msra.mxu0 0.0
    %4421 = vmatprep.subr.mxu0 0.0
    %4422 = vmatpush1.xpose.msra.mxu0 0.0
    %4423 = vmatprep.subr.mxu0 0.0
    %4424 = vmatpush1.xpose.msra.mxu0 0.0
    %4425 = vmatprep.subr.mxu0 0.0
    %4426 = vmatpush1.xpose.msra.mxu0 0.0
    %4427 = vmatprep.subr.mxu0 0.0
    %4428 = vmatpush1.xpose.msra.mxu0 0.0
    %4429 = vmatprep.subr.mxu0 0.0
    %4430 = vmatpush1.xpose.msra.mxu0 0.0
    %4431 = vmatprep.subr.mxu0 0.0
    %4432 = vmatpush1.xpose.msra.mxu0 0.0
    %4433 = vmatprep.subr.mxu0 0.0
    %4434 = vmatpush1.xpose.msra.mxu0 0.0
    %4435 = vmatprep.subr.mxu0 0.0
    %4436 = vmatpush1.xpose.msra.mxu0 0.0
    %4437 = vmatprep.subr.mxu0 0.0
    %4438 = vmatpush1.xpose.msra.mxu0 0.0
    %4439 = vmatprep.subr.mxu0 0.0
    %4440 = vmatpush1.xpose.msra.mxu0 0.0
    %4441 = vmatprep.subr.mxu0 0.0
    %4442 = vmatpush1.xpose.msra.mxu0 0.0
    %4443 = vmatprep.subr.mxu0 0.0
    %4444 = vmatpush1.xpose.msra.mxu0 0.0
    %4445 = vmatprep.subr.mxu0 0.0
    %4446 = vmatpush1.xpose.msra.mxu0 0.0
    %4447 = vmatprep.subr.mxu0 0.0
    %4448 = vmatpush1.xpose.msra.mxu0 0.0
    %4449 = vmatprep.subr.mxu0 0.0
    %4450 = vmatpush1.xpose.msra.mxu0 0.0
    %4451 = vmatprep.mubr.f32.mxu0 0.0
    %4452 = vmatmul.mubr.f32.gmra.mrb[0].mxu0 %v4376
    %v4453 = vpop.f32.mrb[0].mxu0
    %v4454 = vadd.f32 %v3763, %v4453
    %v4455 = vpop.f32.mrb[0].mxu0
    %4456 = vmatprep.mubr.f32.mxu0 0.0
    %4457 = vmatmul.mubr.f32.gmra.mrb[0].mxu0 %v4379
    %v4458 = vpop.f32.mrb[0].mxu0
    %v4459 = vadd.f32 %v3764, %v4458
    %v4460 = vpop.f32.mrb[0].mxu0
    %4461 = vdwg.mxu0
    %v4463 = vsel %vm3765, %v1212, 0
    %v4466 = vsel %vm3765, %v1348, 0
    %v4469 = vsel %vm3765, %v2396, 0
    %v4472 = vsel %vm3765, %v2532, 0
    %4474 = vmatprep.subr.mxu0 0.0
    %4475 = vmatpush1.xpose.msra.mxu0 %v4469
    %4476 = vmatprep.subr.mxu0 0.0
    %4477 = vmatpush1.xpose.msra.mxu0 %v4472
    %4478 = vmatprep.subr.mxu0 0.0
    %4479 = vmatpush1.xpose.msra.mxu0 0.0
    %4480 = vmatprep.subr.mxu0 0.0
    %4481 = vmatpush1.xpose.msra.mxu0 0.0
    %4482 = vmatprep.subr.mxu0 0.0
    %4483 = vmatpush1.xpose.msra.mxu0 0.0
    %4484 = vmatprep.subr.mxu0 0.0
    %4485 = vmatpush1.xpose.msra.mxu0 0.0
    %4486 = vmatprep.subr.mxu0 0.0
    %4487 = vmatpush1.xpose.msra.mxu0 0.0
    %4488 = vmatprep.subr.mxu0 0.0
    %4489 = vmatpush1.xpose.msra.mxu0 0.0
    %4490 = vmatprep.subr.mxu0 0.0
    %4491 = vmatpush1.xpose.msra.mxu0 0.0
    %4492 = vmatprep.subr.mxu0 0.0
    %4493 = vmatpush1.xpose.msra.mxu0 0.0
    %4494 = vmatprep.subr.mxu0 0.0
    %4495 = vmatpush1.xpose.msra.mxu0 0.0
    %4496 = vmatprep.subr.mxu0 0.0
    %4497 = vmatpush1.xpose.msra.mxu0 0.0
    %4498 = vmatprep.subr.mxu0 0.0
    %4499 = vmatpush1.xpose.msra.mxu0 0.0
    %4500 = vmatprep.subr.mxu0 0.0
    %4501 = vmatpush1.xpose.msra.mxu0 0.0
    %4502 = vmatprep.subr.mxu0 0.0
    %4503 = vmatpush1.xpose.msra.mxu0 0.0
    %4504 = vmatprep.subr.mxu0 0.0
    %4505 = vmatpush1.xpose.msra.mxu0 0.0
    %4506 = vmatprep.subr.mxu0 0.0
    %4507 = vmatpush1.xpose.msra.mxu0 0.0
    %4508 = vmatprep.subr.mxu0 0.0
    %4509 = vmatpush1.xpose.msra.mxu0 0.0
    %4510 = vmatprep.subr.mxu0 0.0
    %4511 = vmatpush1.xpose.msra.mxu0 0.0
    %4512 = vmatprep.subr.mxu0 0.0
    %4513 = vmatpush1.xpose.msra.mxu0 0.0
    %4514 = vmatprep.subr.mxu0 0.0
    %4515 = vmatpush1.xpose.msra.mxu0 0.0
    %4516 = vmatprep.subr.mxu0 0.0
    %4517 = vmatpush1.xpose.msra.mxu0 0.0
    %4518 = vmatprep.subr.mxu0 0.0
    %4519 = vmatpush1.xpose.msra.mxu0 0.0
    %4520 = vmatprep.subr.mxu0 0.0
    %4521 = vmatpush1.xpose.msra.mxu0 0.0
    %4522 = vmatprep.subr.mxu0 0.0
    %4523 = vmatpush1.xpose.msra.mxu0 0.0
    %4524 = vmatprep.subr.mxu0 0.0
    %4525 = vmatpush1.xpose.msra.mxu0 0.0
    %4526 = vmatprep.subr.mxu0 0.0
    %4527 = vmatpush1.xpose.msra.mxu0 0.0
    %4528 = vmatprep.subr.mxu0 0.0
    %4529 = vmatpush1.xpose.msra.mxu0 0.0
    %4530 = vmatprep.subr.mxu0 0.0
    %4531 = vmatpush1.xpose.msra.mxu0 0.0
    %4532 = vmatprep.subr.mxu0 0.0
    %4533 = vmatpush1.xpose.msra.mxu0 0.0
    %4534 = vmatprep.subr.mxu0 0.0
    %4535 = vmatpush1.xpose.msra.mxu0 0.0
    %4536 = vmatprep.subr.mxu0 0.0
    %4537 = vmatpush1.xpose.msra.mxu0 0.0
    %4538 = vmatprep.mubr.f32.mxu0 0.0
    %4539 = vmatmul.mubr.f32.gmra.mrb[0].mxu0 %v4463
    %v4540 = vpop.f32.mrb[0].mxu0
    %v4541 = vadd.f32 %v3763, %v4540
    %v4542 = vpop.f32.mrb[0].mxu0
    %4543 = vmatprep.mubr.f32.mxu0 0.0
    %4544 = vmatmul.mubr.f32.gmra.mrb[0].mxu0 %v4466
    %v4545 = vpop.f32.mrb[0].mxu0
    %v4546 = vadd.f32 %v3764, %v4545
    %v4547 = vpop.f32.mrb[0].mxu0
    %4548 = vdwg.mxu0
    %v4550 = vsel %vm3765, %v1213, 0
    %v4553 = vsel %vm3765, %v1349, 0
    %v4556 = vsel %vm3765, %v2397, 0
    %v4559 = vsel %vm3765, %v2533, 0
    %4561 = vmatprep.subr.mxu0 0.0
    %4562 = vmatpush1.xpose.msra.mxu0 %v4556
    %4563 = vmatprep.subr.mxu0 0.0
    %4564 = vmatpush1.xpose.msra.mxu0 %v4559
    %4565 = vmatprep.subr.mxu0 0.0
    %4566 = vmatpush1.xpose.msra.mxu0 0.0
    %4567 = vmatprep.subr.mxu0 0.0
    %4568 = vmatpush1.xpose.msra.mxu0 0.0
    %4569 = vmatprep.subr.mxu0 0.0
    %4570 = vmatpush1.xpose.msra.mxu0 0.0
    %4571 = vmatprep.subr.mxu0 0.0
    %4572 = vmatpush1.xpose.msra.mxu0 0.0
    %4573 = vmatprep.subr.mxu0 0.0
    %4574 = vmatpush1.xpose.msra.mxu0 0.0
    %4575 = vmatprep.subr.mxu0 0.0
    %4576 = vmatpush1.xpose.msra.mxu0 0.0
    %4577 = vmatprep.subr.mxu0 0.0
    %4578 = vmatpush1.xpose.msra.mxu0 0.0
    %4579 = vmatprep.subr.mxu0 0.0
    %4580 = vmatpush1.xpose.msra.mxu0 0.0
    %4581 = vmatprep.subr.mxu0 0.0
    %4582 = vmatpush1.xpose.msra.mxu0 0.0
    %4583 = vmatprep.subr.mxu0 0.0
    %4584 = vmatpush1.xpose.msra.mxu0 0.0
    %4585 = vmatprep.subr.mxu0 0.0
    %4586 = vmatpush1.xpose.msra.mxu0 0.0
    %4587 = vmatprep.subr.mxu0 0.0
    %4588 = vmatpush1.xpose.msra.mxu0 0.0
    %4589 = vmatprep.subr.mxu0 0.0
    %4590 = vmatpush1.xpose.msra.mxu0 0.0
    %4591 = vmatprep.subr.mxu0 0.0
    %4592 = vmatpush1.xpose.msra.mxu0 0.0
    %4593 = vmatprep.subr.mxu0 0.0
    %4594 = vmatpush1.xpose.msra.mxu0 0.0
    %4595 = vmatprep.subr.mxu0 0.0
    %4596 = vmatpush1.xpose.msra.mxu0 0.0
    %4597 = vmatprep.subr.mxu0 0.0
    %4598 = vmatpush1.xpose.msra.mxu0 0.0
    %4599 = vmatprep.subr.mxu0 0.0
    %4600 = vmatpush1.xpose.msra.mxu0 0.0
    %4601 = vmatprep.subr.mxu0 0.0
    %4602 = vmatpush1.xpose.msra.mxu0 0.0
    %4603 = vmatprep.subr.mxu0 0.0
    %4604 = vmatpush1.xpose.msra.mxu0 0.0
    %4605 = vmatprep.subr.mxu0 0.0
    %4606 = vmatpush1.xpose.msra.mxu0 0.0
    %4607 = vmatprep.subr.mxu0 0.0
    %4608 = vmatpush1.xpose.msra.mxu0 0.0
    %4609 = vmatprep.subr.mxu0 0.0
    %4610 = vmatpush1.xpose.msra.mxu0 0.0
    %4611 = vmatprep.subr.mxu0 0.0
    %4612 = vmatpush1.xpose.msra.mxu0 0.0
    %4613 = vmatprep.subr.mxu0 0.0
    %4614 = vmatpush1.xpose.msra.mxu0 0.0
    %4615 = vmatprep.subr.mxu0 0.0
    %4616 = vmatpush1.xpose.msra.mxu0 0.0
    %4617 = vmatprep.subr.mxu0 0.0
    %4618 = vmatpush1.xpose.msra.mxu0 0.0
    %4619 = vmatprep.subr.mxu0 0.0
    %4620 = vmatpush1.xpose.msra.mxu0 0.0
    %4621 = vmatprep.subr.mxu0 0.0
    %4622 = vmatpush1.xpose.msra.mxu0 0.0
    %4623 = vmatprep.subr.mxu0 0.0
    %4624 = vmatpush1.xpose.msra.mxu0 0.0
    %4625 = vmatprep.mubr.f32.mxu0 0.0
    %4626 = vmatmul.mubr.f32.gmra.mrb[0].mxu0 %v4550
    %v4627 = vpop.f32.mrb[0].mxu0
    %v4628 = vadd.f32 %v3763, %v4627
    %v4629 = vpop.f32.mrb[0].mxu0
    %4630 = vmatprep.mubr.f32.mxu0 0.0
    %4631 = vmatmul.mubr.f32.gmra.mrb[0].mxu0 %v4553
    %v4632 = vpop.f32.mrb[0].mxu0
    %v4633 = vadd.f32 %v3764, %v4632
    %v4634 = vpop.f32.mrb[0].mxu0
    %4635 = vdwg.mxu0
    %v4637 = vsel %vm3765, %v1214, 0
    %v4640 = vsel %vm3765, %v1350, 0
    %v4643 = vsel %vm3765, %v2398, 0
    %v4646 = vsel %vm3765, %v2534, 0
    %4648 = vmatprep.subr.mxu0 0.0
    %4649 = vmatpush1.xpose.msra.mxu0 %v4643
    %4650 = vmatprep.subr.mxu0 0.0
    %4651 = vmatpush1.xpose.msra.mxu0 %v4646
    %4652 = vmatprep.subr.mxu0 0.0
    %4653 = vmatpush1.xpose.msra.mxu0 0.0
    %4654 = vmatprep.subr.mxu0 0.0
    %4655 = vmatpush1.xpose.msra.mxu0 0.0
    %4656 = vmatprep.subr.mxu0 0.0
    %4657 = vmatpush1.xpose.msra.mxu0 0.0
    %4658 = vmatprep.subr.mxu0 0.0
    %4659 = vmatpush1.xpose.msra.mxu0 0.0
    %4660 = vmatprep.subr.mxu0 0.0
    %4661 = vmatpush1.xpose.msra.mxu0 0.0
    %4662 = vmatprep.subr.mxu0 0.0
    %4663 = vmatpush1.xpose.msra.mxu0 0.0
    %4664 = vmatprep.subr.mxu0 0.0
    %4665 = vmatpush1.xpose.msra.mxu0 0.0
    %4666 = vmatprep.subr.mxu0 0.0
    %4667 = vmatpush1.xpose.msra.mxu0 0.0
    %4668 = vmatprep.subr.mxu0 0.0
    %4669 = vmatpush1.xpose.msra.mxu0 0.0
    %4670 = vmatprep.subr.mxu0 0.0
    %4671 = vmatpush1.xpose.msra.mxu0 0.0
    %4672 = vmatprep.subr.mxu0 0.0
    %4673 = vmatpush1.xpose.msra.mxu0 0.0
    %4674 = vmatprep.subr.mxu0 0.0
    %4675 = vmatpush1.xpose.msra.mxu0 0.0
    %4676 = vmatprep.subr.mxu0 0.0
    %4677 = vmatpush1.xpose.msra.mxu0 0.0
    %4678 = vmatprep.subr.mxu0 0.0
    %4679 = vmatpush1.xpose.msra.mxu0 0.0
    %4680 = vmatprep.subr.mxu0 0.0
    %4681 = vmatpush1.xpose.msra.mxu0 0.0
    %4682 = vmatprep.subr.mxu0 0.0
    %4683 = vmatpush1.xpose.msra.mxu0 0.0
    %4684 = vmatprep.subr.mxu0 0.0
    %4685 = vmatpush1.xpose.msra.mxu0 0.0
    %4686 = vmatprep.subr.mxu0 0.0
    %4687 = vmatpush1.xpose.msra.mxu0 0.0
    %4688 = vmatprep.subr.mxu0 0.0
    %4689 = vmatpush1.xpose.msra.mxu0 0.0
    %4690 = vmatprep.subr.mxu0 0.0
    %4691 = vmatpush1.xpose.msra.mxu0 0.0
    %4692 = vmatprep.subr.mxu0 0.0
    %4693 = vmatpush1.xpose.msra.mxu0 0.0
    %4694 = vmatprep.subr.mxu0 0.0
    %4695 = vmatpush1.xpose.msra.mxu0 0.0
    %4696 = vmatprep.subr.mxu0 0.0
    %4697 = vmatpush1.xpose.msra.mxu0 0.0
    %4698 = vmatprep.subr.mxu0 0.0
    %4699 = vmatpush1.xpose.msra.mxu0 0.0
    %4700 = vmatprep.subr.mxu0 0.0
    %4701 = vmatpush1.xpose.msra.mxu0 0.0
    %4702 = vmatprep.subr.mxu0 0.0
    %4703 = vmatpush1.xpose.msra.mxu0 0.0
    %4704 = vmatprep.subr.mxu0 0.0
    %4705 = vmatpush1.xpose.msra.mxu0 0.0
    %4706 = vmatprep.subr.mxu0 0.0
    %4707 = vmatpush1.xpose.msra.mxu0 0.0
    %4708 = vmatprep.subr.mxu0 0.0
    %4709 = vmatpush1.xpose.msra.mxu0 0.0
    %4710 = vmatprep.subr.mxu0 0.0
    %4711 = vmatpush1.xpose.msra.mxu0 0.0
    %4712 = vmatprep.mubr.f32.mxu0 0.0
    %4713 = vmatmul.mubr.f32.gmra.mrb[0].mxu0 %v4637
    %v4714 = vpop.f32.mrb[0].mxu0
    %v4715 = vadd.f32 %v3763, %v4714
    %v4716 = vpop.f32.mrb[0].mxu0
    %4717 = vmatprep.mubr.f32.mxu0 0.0
    %4718 = vmatmul.mubr.f32.gmra.mrb[0].mxu0 %v4640
    %v4719 = vpop.f32.mrb[0].mxu0
    %v4720 = vadd.f32 %v3764, %v4719
    %v4721 = vpop.f32.mrb[0].mxu0
    %4722 = vdwg.mxu0
    %v4724 = vsel %vm3765, %v1215, 0
    %v4727 = vsel %vm3765, %v1351, 0
    %v4730 = vsel %vm3765, %v2399, 0
    %v4733 = vsel %vm3765, %v2535, 0
    %4735 = vmatprep.subr.mxu0 0.0
    %4736 = vmatpush1.xpose.msra.mxu0 %v4730
    %4737 = vmatprep.subr.mxu0 0.0
    %4738 = vmatpush1.xpose.msra.mxu0 %v4733
    %4739 = vmatprep.subr.mxu0 0.0
    %4740 = vmatpush1.xpose.msra.mxu0 0.0
    %4741 = vmatprep.subr.mxu0 0.0
    %4742 = vmatpush1.xpose.msra.mxu0 0.0
    %4743 = vmatprep.subr.mxu0 0.0
    %4744 = vmatpush1.xpose.msra.mxu0 0.0
    %4745 = vmatprep.subr.mxu0 0.0
    %4746 = vmatpush1.xpose.msra.mxu0 0.0
    %4747 = vmatprep.subr.mxu0 0.0
    %4748 = vmatpush1.xpose.msra.mxu0 0.0
    %4749 = vmatprep.subr.mxu0 0.0
    %4750 = vmatpush1.xpose.msra.mxu0 0.0
    %4751 = vmatprep.subr.mxu0 0.0
    %4752 = vmatpush1.xpose.msra.mxu0 0.0
    %4753 = vmatprep.subr.mxu0 0.0
    %4754 = vmatpush1.xpose.msra.mxu0 0.0
    %4755 = vmatprep.subr.mxu0 0.0
    %4756 = vmatpush1.xpose.msra.mxu0 0.0
    %4757 = vmatprep.subr.mxu0 0.0
    %4758 = vmatpush1.xpose.msra.mxu0 0.0
    %4759 = vmatprep.subr.mxu0 0.0
    %4760 = vmatpush1.xpose.msra.mxu0 0.0
    %4761 = vmatprep.subr.mxu0 0.0
    %4762 = vmatpush1.xpose.msra.mxu0 0.0
    %4763 = vmatprep.subr.mxu0 0.0
    %4764 = vmatpush1.xpose.msra.mxu0 0.0
    %4765 = vmatprep.subr.mxu0 0.0
    %4766 = vmatpush1.xpose.msra.mxu0 0.0
    %4767 = vmatprep.subr.mxu0 0.0
    %4768 = vmatpush1.xpose.msra.mxu0 0.0
    %4769 = vmatprep.subr.mxu0 0.0
    %4770 = vmatpush1.xpose.msra.mxu0 0.0
    %4771 = vmatprep.subr.mxu0 0.0
    %4772 = vmatpush1.xpose.msra.mxu0 0.0
    %4773 = vmatprep.subr.mxu0 0.0
    %4774 = vmatpush1.xpose.msra.mxu0 0.0
    %4775 = vmatprep.subr.mxu0 0.0
    %4776 = vmatpush1.xpose.msra.mxu0 0.0
    %4777 = vmatprep.subr.mxu0 0.0
    %4778 = vmatpush1.xpose.msra.mxu0 0.0
    %4779 = vmatprep.subr.mxu0 0.0
    %4780 = vmatpush1.xpose.msra.mxu0 0.0
    %4781 = vmatprep.subr.mxu0 0.0
    %4782 = vmatpush1.xpose.msra.mxu0 0.0
    %4783 = vmatprep.subr.mxu0 0.0
    %4784 = vmatpush1.xpose.msra.mxu0 0.0
    %4785 = vmatprep.subr.mxu0 0.0
    %4786 = vmatpush1.xpose.msra.mxu0 0.0
    %4787 = vmatprep.subr.mxu0 0.0
    %4788 = vmatpush1.xpose.msra.mxu0 0.0
    %4789 = vmatprep.subr.mxu0 0.0
    %4790 = vmatpush1.xpose.msra.mxu0 0.0
    %4791 = vmatprep.subr.mxu0 0.0
    %4792 = vmatpush1.xpose.msra.mxu0 0.0
    %4793 = vmatprep.subr.mxu0 0.0
    %4794 = vmatpush1.xpose.msra.mxu0 0.0
    %4795 = vmatprep.subr.mxu0 0.0
    %4796 = vmatpush1.xpose.msra.mxu0 0.0
    %4797 = vmatprep.subr.mxu0 0.0
    %4798 = vmatpush1.xpose.msra.mxu0 0.0
    %4799 = vmatprep.mubr.f32.mxu0 0.0
    %4800 = vmatmul.mubr.f32.gmra.mrb[0].mxu0 %v4724
    %v4801 = vpop.f32.mrb[0].mxu0
    %v4802 = vadd.f32 %v3763, %v4801
    %v4803 = vpop.f32.mrb[0].mxu0
    %4804 = vmatprep.mubr.f32.mxu0 0.0
    %4805 = vmatmul.mubr.f32.gmra.mrb[0].mxu0 %v4727
    %v4806 = vpop.f32.mrb[0].mxu0
    %v4807 = vadd.f32 %v3764, %v4806
    %v4808 = vpop.f32.mrb[0].mxu0
    %4809 = vdwg.mxu0
    %v4811 = vsel %vm3765, %v1216, 0
    %v4814 = vsel %vm3765, %v1352, 0
    %v4817 = vsel %vm3765, %v2400, 0
    %v4820 = vsel %vm3765, %v2536, 0
    %4822 = vmatprep.subr.mxu0 0.0
    %4823 = vmatpush1.xpose.msra.mxu0 %v4817
    %4824 = vmatprep.subr.mxu0 0.0
    %4825 = vmatpush1.xpose.msra.mxu0 %v4820
    %4826 = vmatprep.subr.mxu0 0.0
    %4827 = vmatpush1.xpose.msra.mxu0 0.0
    %4828 = vmatprep.subr.mxu0 0.0
    %4829 = vmatpush1.xpose.msra.mxu0 0.0
    %4830 = vmatprep.subr.mxu0 0.0
    %4831 = vmatpush1.xpose.msra.mxu0 0.0
    %4832 = vmatprep.subr.mxu0 0.0
    %4833 = vmatpush1.xpose.msra.mxu0 0.0
    %4834 = vmatprep.subr.mxu0 0.0
    %4835 = vmatpush1.xpose.msra.mxu0 0.0
    %4836 = vmatprep.subr.mxu0 0.0
    %4837 = vmatpush1.xpose.msra.mxu0 0.0
    %4838 = vmatprep.subr.mxu0 0.0
    %4839 = vmatpush1.xpose.msra.mxu0 0.0
    %4840 = vmatprep.subr.mxu0 0.0
    %4841 = vmatpush1.xpose.msra.mxu0 0.0
    %4842 = vmatprep.subr.mxu0 0.0
    %4843 = vmatpush1.xpose.msra.mxu0 0.0
    %4844 = vmatprep.subr.mxu0 0.0
    %4845 = vmatpush1.xpose.msra.mxu0 0.0
    %4846 = vmatprep.subr.mxu0 0.0
    %4847 = vmatpush1.xpose.msra.mxu0 0.0
    %4848 = vmatprep.subr.mxu0 0.0
    %4849 = vmatpush1.xpose.msra.mxu0 0.0
    %4850 = vmatprep.subr.mxu0 0.0
    %4851 = vmatpush1.xpose.msra.mxu0 0.0
    %4852 = vmatprep.subr.mxu0 0.0
    %4853 = vmatpush1.xpose.msra.mxu0 0.0
    %4854 = vmatprep.subr.mxu0 0.0
    %4855 = vmatpush1.xpose.msra.mxu0 0.0
    %4856 = vmatprep.subr.mxu0 0.0
    %4857 = vmatpush1.xpose.msra.mxu0 0.0
    %4858 = vmatprep.subr.mxu0 0.0
    %4859 = vmatpush1.xpose.msra.mxu0 0.0
    %4860 = vmatprep.subr.mxu0 0.0
    %4861 = vmatpush1.xpose.msra.mxu0 0.0
    %4862 = vmatprep.subr.mxu0 0.0
    %4863 = vmatpush1.xpose.msra.mxu0 0.0
    %4864 = vmatprep.subr.mxu0 0.0
    %4865 = vmatpush1.xpose.msra.mxu0 0.0
    %4866 = vmatprep.subr.mxu0 0.0
    %4867 = vmatpush1.xpose.msra.mxu0 0.0
    %4868 = vmatprep.subr.mxu0 0.0
    %4869 = vmatpush1.xpose.msra.mxu0 0.0
    %4870 = vmatprep.subr.mxu0 0.0
    %4871 = vmatpush1.xpose.msra.mxu0 0.0
    %4872 = vmatprep.subr.mxu0 0.0
    %4873 = vmatpush1.xpose.msra.mxu0 0.0
    %4874 = vmatprep.subr.mxu0 0.0
    %4875 = vmatpush1.xpose.msra.mxu0 0.0
    %4876 = vmatprep.subr.mxu0 0.0
    %4877 = vmatpush1.xpose.msra.mxu0 0.0
    %4878 = vmatprep.subr.mxu0 0.0
    %4879 = vmatpush1.xpose.msra.mxu0 0.0
    %4880 = vmatprep.subr.mxu0 0.0
    %4881 = vmatpush1.xpose.msra.mxu0 0.0
    %4882 = vmatprep.subr.mxu0 0.0
    %4883 = vmatpush1.xpose.msra.mxu0 0.0
    %4884 = vmatprep.subr.mxu0 0.0
    %4885 = vmatpush1.xpose.msra.mxu0 0.0
    %4886 = vmatprep.mubr.f32.mxu0 0.0
    %4887 = vmatmul.mubr.f32.gmra.mrb[0].mxu0 %v4811
    %v4888 = vpop.f32.mrb[0].mxu0
    %v4889 = vadd.f32 %v3763, %v4888
    %v4890 = vpop.f32.mrb[0].mxu0
    %4891 = vmatprep.mubr.f32.mxu0 0.0
    %4892 = vmatmul.mubr.f32.gmra.mrb[0].mxu0 %v4814
    %v4893 = vpop.f32.mrb[0].mxu0
    %v4894 = vadd.f32 %v3764, %v4893
    %v4895 = vpop.f32.mrb[0].mxu0
    %4896 = vdwg.mxu0
    %v4898 = vsel %vm3765, %v1217, 0
    %v4901 = vsel %vm3765, %v1353, 0
    %v4904 = vsel %vm3765, %v2401, 0
    %v4907 = vsel %vm3765, %v2537, 0
    %4909 = vmatprep.subr.mxu0 0.0
    %4910 = vmatpush1.xpose.msra.mxu0 %v4904
    %4911 = vmatprep.subr.mxu0 0.0
    %4912 = vmatpush1.xpose.msra.mxu0 %v4907
    %4913 = vmatprep.subr.mxu0 0.0
    %4914 = vmatpush1.xpose.msra.mxu0 0.0
    %4915 = vmatprep.subr.mxu0 0.0
    %4916 = vmatpush1.xpose.msra.mxu0 0.0
    %4917 = vmatprep.subr.mxu0 0.0
    %4918 = vmatpush1.xpose.msra.mxu0 0.0
    %4919 = vmatprep.subr.mxu0 0.0
    %4920 = vmatpush1.xpose.msra.mxu0 0.0
    %4921 = vmatprep.subr.mxu0 0.0
    %4922 = vmatpush1.xpose.msra.mxu0 0.0
    %4923 = vmatprep.subr.mxu0 0.0
    %4924 = vmatpush1.xpose.msra.mxu0 0.0
    %4925 = vmatprep.subr.mxu0 0.0
    %4926 = vmatpush1.xpose.msra.mxu0 0.0
    %4927 = vmatprep.subr.mxu0 0.0
    %4928 = vmatpush1.xpose.msra.mxu0 0.0
    %4929 = vmatprep.subr.mxu0 0.0
    %4930 = vmatpush1.xpose.msra.mxu0 0.0
    %4931 = vmatprep.subr.mxu0 0.0
    %4932 = vmatpush1.xpose.msra.mxu0 0.0
    %4933 = vmatprep.subr.mxu0 0.0
    %4934 = vmatpush1.xpose.msra.mxu0 0.0
    %4935 = vmatprep.subr.mxu0 0.0
    %4936 = vmatpush1.xpose.msra.mxu0 0.0
    %4937 = vmatprep.subr.mxu0 0.0
    %4938 = vmatpush1.xpose.msra.mxu0 0.0
    %4939 = vmatprep.subr.mxu0 0.0
    %4940 = vmatpush1.xpose.msra.mxu0 0.0
    %4941 = vmatprep.subr.mxu0 0.0
    %4942 = vmatpush1.xpose.msra.mxu0 0.0
    %4943 = vmatprep.subr.mxu0 0.0
    %4944 = vmatpush1.xpose.msra.mxu0 0.0
    %4945 = vmatprep.subr.mxu0 0.0
    %4946 = vmatpush1.xpose.msra.mxu0 0.0
    %4947 = vmatprep.subr.mxu0 0.0
    %4948 = vmatpush1.xpose.msra.mxu0 0.0
    %4949 = vmatprep.subr.mxu0 0.0
    %4950 = vmatpush1.xpose.msra.mxu0 0.0
    %4951 = vmatprep.subr.mxu0 0.0
    %4952 = vmatpush1.xpose.msra.mxu0 0.0
    %4953 = vmatprep.subr.mxu0 0.0
    %4954 = vmatpush1.xpose.msra.mxu0 0.0
    %4955 = vmatprep.subr.mxu0 0.0
    %4956 = vmatpush1.xpose.msra.mxu0 0.0
    %4957 = vmatprep.subr.mxu0 0.0
    %4958 = vmatpush1.xpose.msra.mxu0 0.0
    %4959 = vmatprep.subr.mxu0 0.0
    %4960 = vmatpush1.xpose.msra.mxu0 0.0
    %4961 = vmatprep.subr.mxu0 0.0
    %4962 = vmatpush1.xpose.msra.mxu0 0.0
    %4963 = vmatprep.subr.mxu0 0.0
    %4964 = vmatpush1.xpose.msra.mxu0 0.0
    %4965 = vmatprep.subr.mxu0 0.0
    %4966 = vmatpush1.xpose.msra.mxu0 0.0
    %4967 = vmatprep.subr.mxu0 0.0
    %4968 = vmatpush1.xpose.msra.mxu0 0.0
    %4969 = vmatprep.subr.mxu0 0.0
    %4970 = vmatpush1.xpose.msra.mxu0 0.0
    %4971 = vmatprep.subr.mxu0 0.0
    %4972 = vmatpush1.xpose.msra.mxu0 0.0
    %4973 = vmatprep.mubr.f32.mxu0 0.0
    %4974 = vmatmul.mubr.f32.gmra.mrb[0].mxu0 %v4898
    %v4975 = vpop.f32.mrb[0].mxu0
    %v4976 = vadd.f32 %v3763, %v4975
    %v4977 = vpop.f32.mrb[0].mxu0
    %4978 = vmatprep.mubr.f32.mxu0 0.0
    %4979 = vmatmul.mubr.f32.gmra.mrb[0].mxu0 %v4901
    %v4980 = vpop.f32.mrb[0].mxu0
    %v4981 = vadd.f32 %v3764, %v4980
    %v4982 = vpop.f32.mrb[0].mxu0
    %4983 = vdwg.mxu0
    %v4985 = vsel %vm3765, %v1218, 0
    %v4988 = vsel %vm3765, %v1354, 0
    %v4991 = vsel %vm3765, %v2402, 0
    %v4994 = vsel %vm3765, %v2538, 0
    %4996 = vmatprep.subr.mxu0 0.0
    %4997 = vmatpush1.xpose.msra.mxu0 %v4991
    %4998 = vmatprep.subr.mxu0 0.0
    %4999 = vmatpush1.xpose.msra.mxu0 %v4994
    %5000 = vmatprep.subr.mxu0 0.0
    %5001 = vmatpush1.xpose.msra.mxu0 0.0
    %5002 = vmatprep.subr.mxu0 0.0
    %5003 = vmatpush1.xpose.msra.mxu0 0.0
    %5004 = vmatprep.subr.mxu0 0.0
    %5005 = vmatpush1.xpose.msra.mxu0 0.0
    %5006 = vmatprep.subr.mxu0 0.0
    %5007 = vmatpush1.xpose.msra.mxu0 0.0
    %5008 = vmatprep.subr.mxu0 0.0
    %5009 = vmatpush1.xpose.msra.mxu0 0.0
    %5010 = vmatprep.subr.mxu0 0.0
    %5011 = vmatpush1.xpose.msra.mxu0 0.0
    %5012 = vmatprep.subr.mxu0 0.0
    %5013 = vmatpush1.xpose.msra.mxu0 0.0
    %5014 = vmatprep.subr.mxu0 0.0
    %5015 = vmatpush1.xpose.msra.mxu0 0.0
    %5016 = vmatprep.subr.mxu0 0.0
    %5017 = vmatpush1.xpose.msra.mxu0 0.0
    %5018 = vmatprep.subr.mxu0 0.0
    %5019 = vmatpush1.xpose.msra.mxu0 0.0
    %5020 = vmatprep.subr.mxu0 0.0
    %5021 = vmatpush1.xpose.msra.mxu0 0.0
    %5022 = vmatprep.subr.mxu0 0.0
    %5023 = vmatpush1.xpose.msra.mxu0 0.0
    %5024 = vmatprep.subr.mxu0 0.0
    %5025 = vmatpush1.xpose.msra.mxu0 0.0
    %5026 = vmatprep.subr.mxu0 0.0
    %5027 = vmatpush1.xpose.msra.mxu0 0.0
    %5028 = vmatprep.subr.mxu0 0.0
    %5029 = vmatpush1.xpose.msra.mxu0 0.0
    %5030 = vmatprep.subr.mxu0 0.0
    %5031 = vmatpush1.xpose.msra.mxu0 0.0
    %5032 = vmatprep.subr.mxu0 0.0
    %5033 = vmatpush1.xpose.msra.mxu0 0.0
    %5034 = vmatprep.subr.mxu0 0.0
    %5035 = vmatpush1.xpose.msra.mxu0 0.0
    %5036 = vmatprep.subr.mxu0 0.0
    %5037 = vmatpush1.xpose.msra.mxu0 0.0
    %5038 = vmatprep.subr.mxu0 0.0
    %5039 = vmatpush1.xpose.msra.mxu0 0.0
    %5040 = vmatprep.subr.mxu0 0.0
    %5041 = vmatpush1.xpose.msra.mxu0 0.0
    %5042 = vmatprep.subr.mxu0 0.0
    %5043 = vmatpush1.xpose.msra.mxu0 0.0
    %5044 = vmatprep.subr.mxu0 0.0
    %5045 = vmatpush1.xpose.msra.mxu0 0.0
    %5046 = vmatprep.subr.mxu0 0.0
    %5047 = vmatpush1.xpose.msra.mxu0 0.0
    %5048 = vmatprep.subr.mxu0 0.0
    %5049 = vmatpush1.xpose.msra.mxu0 0.0
    %5050 = vmatprep.subr.mxu0 0.0
    %5051 = vmatpush1.xpose.msra.mxu0 0.0
    %5052 = vmatprep.subr.mxu0 0.0
    %5053 = vmatpush1.xpose.msra.mxu0 0.0
    %5054 = vmatprep.subr.mxu0 0.0
    %5055 = vmatpush1.xpose.msra.mxu0 0.0
    %5056 = vmatprep.subr.mxu0 0.0
    %5057 = vmatpush1.xpose.msra.mxu0 0.0
    %5058 = vmatprep.subr.mxu0 0.0
    %5059 = vmatpush1.xpose.msra.mxu0 0.0
    %5060 = vmatprep.mubr.f32.mxu0 0.0
    %5061 = vmatmul.mubr.f32.gmra.mrb[0].mxu0 %v4985
    %v5062 = vpop.f32.mrb[0].mxu0
    %v5063 = vadd.f32 %v3763, %v5062
    %v5064 = vpop.f32.mrb[0].mxu0
    %5065 = vmatprep.mubr.f32.mxu0 0.0
    %5066 = vmatmul.mubr.f32.gmra.mrb[0].mxu0 %v4988
    %v5067 = vpop.f32.mrb[0].mxu0
    %v5068 = vadd.f32 %v3764, %v5067
    %v5069 = vpop.f32.mrb[0].mxu0
    %5070 = vdwg.mxu0
    %v5072 = vsel %vm3765, %v1219, 0
    %v5075 = vsel %vm3765, %v1355, 0
    %v5078 = vsel %vm3765, %v2403, 0
    %v5081 = vsel %vm3765, %v2539, 0
    %5083 = vmatprep.subr.mxu0 0.0
    %5084 = vmatpush1.xpose.msra.mxu0 %v5078
    %5085 = vmatprep.subr.mxu0 0.0
    %5086 = vmatpush1.xpose.msra.mxu0 %v5081
    %5087 = vmatprep.subr.mxu0 0.0
    %5088 = vmatpush1.xpose.msra.mxu0 0.0
    %5089 = vmatprep.subr.mxu0 0.0
    %5090 = vmatpush1.xpose.msra.mxu0 0.0
    %5091 = vmatprep.subr.mxu0 0.0
    %5092 = vmatpush1.xpose.msra.mxu0 0.0
    %5093 = vmatprep.subr.mxu0 0.0
    %5094 = vmatpush1.xpose.msra.mxu0 0.0
    %5095 = vmatprep.subr.mxu0 0.0
    %5096 = vmatpush1.xpose.msra.mxu0 0.0
    %5097 = vmatprep.subr.mxu0 0.0
    %5098 = vmatpush1.xpose.msra.mxu0 0.0
    %5099 = vmatprep.subr.mxu0 0.0
    %5100 = vmatpush1.xpose.msra.mxu0 0.0
    %5101 = vmatprep.subr.mxu0 0.0
    %5102 = vmatpush1.xpose.msra.mxu0 0.0
    %5103 = vmatprep.subr.mxu0 0.0
    %5104 = vmatpush1.xpose.msra.mxu0 0.0
    %5105 = vmatprep.subr.mxu0 0.0
    %5106 = vmatpush1.xpose.msra.mxu0 0.0
    %5107 = vmatprep.subr.mxu0 0.0
    %5108 = vmatpush1.xpose.msra.mxu0 0.0
    %5109 = vmatprep.subr.mxu0 0.0
    %5110 = vmatpush1.xpose.msra.mxu0 0.0
    %5111 = vmatprep.subr.mxu0 0.0
    %5112 = vmatpush1.xpose.msra.mxu0 0.0
    %5113 = vmatprep.subr.mxu0 0.0
    %5114 = vmatpush1.xpose.msra.mxu0 0.0
    %5115 = vmatprep.subr.mxu0 0.0
    %5116 = vmatpush1.xpose.msra.mxu0 0.0
    %5117 = vmatprep.subr.mxu0 0.0
    %5118 = vmatpush1.xpose.msra.mxu0 0.0
    %5119 = vmatprep.subr.mxu0 0.0
    %5120 = vmatpush1.xpose.msra.mxu0 0.0
    %5121 = vmatprep.subr.mxu0 0.0
    %5122 = vmatpush1.xpose.msra.mxu0 0.0
    %5123 = vmatprep.subr.mxu0 0.0
    %5124 = vmatpush1.xpose.msra.mxu0 0.0
    %5125 = vmatprep.subr.mxu0 0.0
    %5126 = vmatpush1.xpose.msra.mxu0 0.0
    %5127 = vmatprep.subr.mxu0 0.0
    %5128 = vmatpush1.xpose.msra.mxu0 0.0
    %5129 = vmatprep.subr.mxu0 0.0
    %5130 = vmatpush1.xpose.msra.mxu0 0.0
    %5131 = vmatprep.subr.mxu0 0.0
    %5132 = vmatpush1.xpose.msra.mxu0 0.0
    %5133 = vmatprep.subr.mxu0 0.0
    %5134 = vmatpush1.xpose.msra.mxu0 0.0
    %5135 = vmatprep.subr.mxu0 0.0
    %5136 = vmatpush1.xpose.msra.mxu0 0.0
    %5137 = vmatprep.subr.mxu0 0.0
    %5138 = vmatpush1.xpose.msra.mxu0 0.0
    %5139 = vmatprep.subr.mxu0 0.0
    %5140 = vmatpush1.xpose.msra.mxu0 0.0
    %5141 = vmatprep.subr.mxu0 0.0
    %5142 = vmatpush1.xpose.msra.mxu0 0.0
    %5143 = vmatprep.subr.mxu0 0.0
    %5144 = vmatpush1.xpose.msra.mxu0 0.0
    %5145 = vmatprep.subr.mxu0 0.0
    %5146 = vmatpush1.xpose.msra.mxu0 0.0
    %5147 = vmatprep.mubr.f32.mxu0 0.0
    %5148 = vmatmul.mubr.f32.gmra.mrb[0].mxu0 %v5072
    %v5149 = vpop.f32.mrb[0].mxu0
    %v5150 = vadd.f32 %v3763, %v5149
    %v5151 = vpop.f32.mrb[0].mxu0
    %5152 = vmatprep.mubr.f32.mxu0 0.0
    %5153 = vmatmul.mubr.f32.gmra.mrb[0].mxu0 %v5075
    %v5154 = vpop.f32.mrb[0].mxu0
    %v5155 = vadd.f32 %v3764, %v5154
    %v5156 = vpop.f32.mrb[0].mxu0
    %5157 = vdwg.mxu0
    %vm5158 = vcmask 130048
    %v5159 = vsel %vm5158, %v3845, -inf
    %5160 = vmax.xlane.f32.xlu0 %v5159
    %v5161 = vpop.xlane.xlu0 %5160
    %v5162 = vsel %vm5158, %v3850, -inf
    %5163 = vmax.xlane.f32.xlu0 %v5162
    %v5164 = vpop.xlane.xlu0 %5163
    %v5165 = vsel %vm5158, %v3932, -inf
    %5166 = vmax.xlane.f32.xlu0 %v5165
    %v5167 = vpop.xlane.xlu0 %5166
    %v5168 = vsel %vm5158, %v3937, -inf
    %5169 = vmax.xlane.f32.xlu0 %v5168
    %v5170 = vpop.xlane.xlu0 %5169
    %v5171 = vsel %vm5158, %v4019, -inf
    %5172 = vmax.xlane.f32.xlu0 %v5171
    %v5173 = vpop.xlane.xlu0 %5172
    %v5174 = vsel %vm5158, %v4024, -inf
    %5175 = vmax.xlane.f32.xlu0 %v5174
    %v5176 = vpop.xlane.xlu0 %5175
    %v5177 = vsel %vm5158, %v4106, -inf
    %5178 = vmax.xlane.f32.xlu0 %v5177
    %v5179 = vpop.xlane.xlu0 %5178
    %v5180 = vsel %vm5158, %v4111, -inf
    %5181 = vmax.xlane.f32.xlu0 %v5180
    %v5182 = vpop.xlane.xlu0 %5181
    %v5183 = vsel %vm5158, %v4193, -inf
    %5184 = vmax.xlane.f32.xlu0 %v5183
    %v5185 = vpop.xlane.xlu0 %5184
    %v5186 = vsel %vm5158, %v4198, -inf
    %5187 = vmax.xlane.f32.xlu0 %v5186
    %v5188 = vpop.xlane.xlu0 %5187
    %v5189 = vsel %vm5158, %v4280, -inf
    %5190 = vmax.xlane.f32.xlu0 %v5189
    %v5191 = vpop.xlane.xlu0 %5190
    %v5192 = vsel %vm5158, %v4285, -inf
    %5193 = vmax.xlane.f32.xlu0 %v5192
    %v5194 = vpop.xlane.xlu0 %5193
    %v5195 = vsel %vm5158, %v4367, -inf
    %5196 = vmax.xlane.f32.xlu0 %v5195
    %v5197 = vpop.xlane.xlu0 %5196
    %v5198 = vsel %vm5158, %v4372, -inf
    %5199 = vmax.xlane.f32.xlu0 %v5198
    %v5200 = vpop.xlane.xlu0 %5199
    %v5201 = vsel %vm5158, %v4454, -inf
    %5202 = vmax.xlane.f32.xlu0 %v5201
    %v5203 = vpop.xlane.xlu0 %5202
    %v5204 = vsel %vm5158, %v4459, -inf
    %5205 = vmax.xlane.f32.xlu0 %v5204
    %v5206 = vpop.xlane.xlu0 %5205
    %v5207 = vsel %vm5158, %v4541, -inf
    %5208 = vmax.xlane.f32.xlu0 %v5207
    %v5209 = vpop.xlane.xlu0 %5208
    %v5210 = vsel %vm5158, %v4546, -inf
    %5211 = vmax.xlane.f32.xlu0 %v5210
    %v5212 = vpop.xlane.xlu0 %5211
    %v5213 = vsel %vm5158, %v4628, -inf
    %5214 = vmax.xlane.f32.xlu0 %v5213
    %v5215 = vpop.xlane.xlu0 %5214
    %v5216 = vsel %vm5158, %v4633, -inf
    %5217 = vmax.xlane.f32.xlu0 %v5216
    %v5218 = vpop.xlane.xlu0 %5217
    %v5219 = vsel %vm5158, %v4715, -inf
    %5220 = vmax.xlane.f32.xlu0 %v5219
    %v5221 = vpop.xlane.xlu0 %5220
    %v5222 = vsel %vm5158, %v4720, -inf
    %5223 = vmax.xlane.f32.xlu0 %v5222
    %v5224 = vpop.xlane.xlu0 %5223
    %v5225 = vsel %vm5158, %v4802, -inf
    %5226 = vmax.xlane.f32.xlu0 %v5225
    %v5227 = vpop.xlane.xlu0 %5226
    %v5228 = vsel %vm5158, %v4807, -inf
    %5229 = vmax.xlane.f32.xlu0 %v5228
    %v5230 = vpop.xlane.xlu0 %5229
    %v5231 = vsel %vm5158, %v4889, -inf
    %5232 = vmax.xlane.f32.xlu0 %v5231
    %v5233 = vpop.xlane.xlu0 %5232
    %v5234 = vsel %vm5158, %v4894, -inf
    %5235 = vmax.xlane.f32.xlu0 %v5234
    %v5236 = vpop.xlane.xlu0 %5235
    %v5237 = vsel %vm5158, %v4976, -inf
    %5238 = vmax.xlane.f32.xlu0 %v5237
    %v5239 = vpop.xlane.xlu0 %5238
    %v5240 = vsel %vm5158, %v4981, -inf
    %5241 = vmax.xlane.f32.xlu0 %v5240
    %v5242 = vpop.xlane.xlu0 %5241
    %v5243 = vsel %vm5158, %v5063, -inf
    %5244 = vmax.xlane.f32.xlu0 %v5243
    %v5245 = vpop.xlane.xlu0 %5244
    %v5246 = vsel %vm5158, %v5068, -inf
    %5247 = vmax.xlane.f32.xlu0 %v5246
    %v5248 = vpop.xlane.xlu0 %5247
    %v5249 = vsel %vm5158, %v5150, -inf
    %5250 = vmax.xlane.f32.xlu0 %v5249
    %v5251 = vpop.xlane.xlu0 %5250
    %v5252 = vsel %vm5158, %v5155, -inf
    %5253 = vmax.xlane.f32.xlu0 %v5252
    %v5254 = vpop.xlane.xlu0 %5253
    %v5255 = vsub.f32 %v3845, %v5161
    %v5256 = vsub.f32 %v3850, %v5164
    %v5257 = vsub.f32 %v3932, %v5167
    %v5258 = vsub.f32 %v3937, %v5170
    %v5259 = vsub.f32 %v4019, %v5173
    %v5260 = vsub.f32 %v4024, %v5176
    %v5261 = vsub.f32 %v4106, %v5179
    %v5262 = vsub.f32 %v4111, %v5182
    %v5263 = vsub.f32 %v4193, %v5185
    %v5264 = vsub.f32 %v4198, %v5188
    %v5265 = vsub.f32 %v4280, %v5191
    %v5266 = vsub.f32 %v4285, %v5194
    %v5267 = vsub.f32 %v4367, %v5197
    %v5268 = vsub.f32 %v4372, %v5200
    %v5269 = vsub.f32 %v4454, %v5203
    %v5270 = vsub.f32 %v4459, %v5206
    %v5271 = vsub.f32 %v4541, %v5209
    %v5272 = vsub.f32 %v4546, %v5212
    %v5273 = vsub.f32 %v4628, %v5215
    %v5274 = vsub.f32 %v4633, %v5218
    %v5275 = vsub.f32 %v4715, %v5221
    %v5276 = vsub.f32 %v4720, %v5224
    %v5277 = vsub.f32 %v4802, %v5227
    %v5278 = vsub.f32 %v4807, %v5230
    %v5279 = vsub.f32 %v4889, %v5233
    %v5280 = vsub.f32 %v4894, %v5236
    %v5281 = vsub.f32 %v4976, %v5239
    %v5282 = vsub.f32 %v4981, %v5242
    %v5283 = vsub.f32 %v5063, %v5245
    %v5284 = vsub.f32 %v5068, %v5248
    %v5285 = vsub.f32 %v5150, %v5251
    %v5286 = vsub.f32 %v5155, %v5254
    %v5287 = vmul.f32 %v5255, 1.442695
    %v5288 = vpow.pop %v5287
    %v5289 = vmul.f32 %v5256, 1.442695
    %v5290 = vpow.pop %v5289
    %v5291 = vmul.f32 %v5257, 1.442695
    %v5292 = vpow.pop %v5291
    %v5293 = vmul.f32 %v5258, 1.442695
    %v5294 = vpow.pop %v5293
    %v5295 = vmul.f32 %v5259, 1.442695
    %v5296 = vpow.pop %v5295
    %v5297 = vmul.f32 %v5260, 1.442695
    %v5298 = vpow.pop %v5297
    %v5299 = vmul.f32 %v5261, 1.442695
    %v5300 = vpow.pop %v5299
    %v5301 = vmul.f32 %v5262, 1.442695
    %v5302 = vpow.pop %v5301
    %v5303 = vmul.f32 %v5263, 1.442695
    %v5304 = vpow.pop %v5303
    %v5305 = vmul.f32 %v5264, 1.442695
    %v5306 = vpow.pop %v5305
    %v5307 = vmul.f32 %v5265, 1.442695
    %v5308 = vpow.pop %v5307
    %v5309 = vmul.f32 %v5266, 1.442695
    %v5310 = vpow.pop %v5309
    %v5311 = vmul.f32 %v5267, 1.442695
    %v5312 = vpow.pop %v5311
    %v5313 = vmul.f32 %v5268, 1.442695
    %v5314 = vpow.pop %v5313
    %v5315 = vmul.f32 %v5269, 1.442695
    %v5316 = vpow.pop %v5315
    %v5317 = vmul.f32 %v5270, 1.442695
    %v5318 = vpow.pop %v5317
    %v5319 = vmul.f32 %v5271, 1.442695
    %v5320 = vpow.pop %v5319
    %v5321 = vmul.f32 %v5272, 1.442695
    %v5322 = vpow.pop %v5321
    %v5323 = vmul.f32 %v5273, 1.442695
    %v5324 = vpow.pop %v5323
    %v5325 = vmul.f32 %v5274, 1.442695
    %v5326 = vpow.pop %v5325
    %v5327 = vmul.f32 %v5275, 1.442695
    %v5328 = vpow.pop %v5327
    %v5329 = vmul.f32 %v5276, 1.442695
    %v5330 = vpow.pop %v5329
    %v5331 = vmul.f32 %v5277, 1.442695
    %v5332 = vpow.pop %v5331
    %v5333 = vmul.f32 %v5278, 1.442695
    %v5334 = vpow.pop %v5333
    %v5335 = vmul.f32 %v5279, 1.442695
    %v5336 = vpow.pop %v5335
    %v5337 = vmul.f32 %v5280, 1.442695
    %v5338 = vpow.pop %v5337
    %v5339 = vmul.f32 %v5281, 1.442695
    %v5340 = vpow.pop %v5339
    %v5341 = vmul.f32 %v5282, 1.442695
    %v5342 = vpow.pop %v5341
    %v5343 = vmul.f32 %v5283, 1.442695
    %v5344 = vpow.pop %v5343
    %v5345 = vmul.f32 %v5284, 1.442695
    %v5346 = vpow.pop %v5345
    %v5347 = vmul.f32 %v5285, 1.442695
    %v5348 = vpow.pop %v5347
    %v5349 = vmul.f32 %v5286, 1.442695
    %v5350 = vpow.pop %v5349
    %v5351 = vsel %vm5158, %v5288, 0.0
    %5352 = vadd.xlane.f32.xlu0 %v5351
    %v5353 = vpop.xlane.xlu0 %5352
    %v5354 = vsel %vm5158, %v5290, 0.0
    %5355 = vadd.xlane.f32.xlu0 %v5354
    %v5356 = vpop.xlane.xlu0 %5355
    %v5357 = vsel %vm5158, %v5292, 0.0
    %5358 = vadd.xlane.f32.xlu0 %v5357
    %v5359 = vpop.xlane.xlu0 %5358
    %v5360 = vsel %vm5158, %v5294, 0.0
    %5361 = vadd.xlane.f32.xlu0 %v5360
    %v5362 = vpop.xlane.xlu0 %5361
    %v5363 = vsel %vm5158, %v5296, 0.0
    %5364 = vadd.xlane.f32.xlu0 %v5363
    %v5365 = vpop.xlane.xlu0 %5364
    %v5366 = vsel %vm5158, %v5298, 0.0
    %5367 = vadd.xlane.f32.xlu0 %v5366
    %v5368 = vpop.xlane.xlu0 %5367
    %v5369 = vsel %vm5158, %v5300, 0.0
    %5370 = vadd.xlane.f32.xlu0 %v5369
    %v5371 = vpop.xlane.xlu0 %5370
    %v5372 = vsel %vm5158, %v5302, 0.0
    %5373 = vadd.xlane.f32.xlu0 %v5372
    %v5374 = vpop.xlane.xlu0 %5373
    %v5375 = vsel %vm5158, %v5304, 0.0
    %5376 = vadd.xlane.f32.xlu0 %v5375
    %v5377 = vpop.xlane.xlu0 %5376
    %v5378 = vsel %vm5158, %v5306, 0.0
    %5379 = vadd.xlane.f32.xlu0 %v5378
    %v5380 = vpop.xlane.xlu0 %5379
    %v5381 = vsel %vm5158, %v5308, 0.0
    %5382 = vadd.xlane.f32.xlu0 %v5381
    %v5383 = vpop.xlane.xlu0 %5382
    %v5384 = vsel %vm5158, %v5310, 0.0
    %5385 = vadd.xlane.f32.xlu0 %v5384
    %v5386 = vpop.xlane.xlu0 %5385
    %v5387 = vsel %vm5158, %v5312, 0.0
    %5388 = vadd.xlane.f32.xlu0 %v5387
    %v5389 = vpop.xlane.xlu0 %5388
    %v5390 = vsel %vm5158, %v5314, 0.0
    %5391 = vadd.xlane.f32.xlu0 %v5390
    %v5392 = vpop.xlane.xlu0 %5391
    %v5393 = vsel %vm5158, %v5316, 0.0
    %5394 = vadd.xlane.f32.xlu0 %v5393
    %v5395 = vpop.xlane.xlu0 %5394
    %v5396 = vsel %vm5158, %v5318, 0.0
    %5397 = vadd.xlane.f32.xlu0 %v5396
    %v5398 = vpop.xlane.xlu0 %5397
    %v5399 = vsel %vm5158, %v5320, 0.0
    %5400 = vadd.xlane.f32.xlu0 %v5399
    %v5401 = vpop.xlane.xlu0 %5400
    %v5402 = vsel %vm5158, %v5322, 0.0
    %5403 = vadd.xlane.f32.xlu0 %v5402
    %v5404 = vpop.xlane.xlu0 %5403
    %v5405 = vsel %vm5158, %v5324, 0.0
    %5406 = vadd.xlane.f32.xlu0 %v5405
    %v5407 = vpop.xlane.xlu0 %5406
    %v5408 = vsel %vm5158, %v5326, 0.0
    %5409 = vadd.xlane.f32.xlu0 %v5408
    %v5410 = vpop.xlane.xlu0 %5409
    %v5411 = vsel %vm5158, %v5328, 0.0
    %5412 = vadd.xlane.f32.xlu0 %v5411
    %v5413 = vpop.xlane.xlu0 %5412
    %v5414 = vsel %vm5158, %v5330, 0.0
    %5415 = vadd.xlane.f32.xlu0 %v5414
    %v5416 = vpop.xlane.xlu0 %5415
    %v5417 = vsel %vm5158, %v5332, 0.0
    %5418 = vadd.xlane.f32.xlu0 %v5417
    %v5419 = vpop.xlane.xlu0 %5418
    %v5420 = vsel %vm5158, %v5334, 0.0
    %5421 = vadd.xlane.f32.xlu0 %v5420
    %v5422 = vpop.xlane.xlu0 %5421
    %v5423 = vsel %vm5158, %v5336, 0.0
    %5424 = vadd.xlane.f32.xlu0 %v5423
    %v5425 = vpop.xlane.xlu0 %5424
    %v5426 = vsel %vm5158, %v5338, 0.0
    %5427 = vadd.xlane.f32.xlu0 %v5426
    %v5428 = vpop.xlane.xlu0 %5427
    %v5429 = vsel %vm5158, %v5340, 0.0
    %5430 = vadd.xlane.f32.xlu0 %v5429
    %v5431 = vpop.xlane.xlu0 %5430
    %v5432 = vsel %vm5158, %v5342, 0.0
    %5433 = vadd.xlane.f32.xlu0 %v5432
    %v5434 = vpop.xlane.xlu0 %5433
    %v5435 = vsel %vm5158, %v5344, 0.0
    %5436 = vadd.xlane.f32.xlu0 %v5435
    %v5437 = vpop.xlane.xlu0 %5436
    %v5438 = vsel %vm5158, %v5346, 0.0
    %5439 = vadd.xlane.f32.xlu0 %v5438
    %v5440 = vpop.xlane.xlu0 %5439
    %v5441 = vsel %vm5158, %v5348, 0.0
    %5442 = vadd.xlane.f32.xlu0 %v5441
    %v5443 = vpop.xlane.xlu0 %5442
    %v5444 = vsel %vm5158, %v5350, 0.0
    %5445 = vadd.xlane.f32.xlu0 %v5444
    %v5446 = vpop.xlane.xlu0 %5445
    %v5447 = vrcp.pop %v5353
    %v5448 = vrcp.pop %v5356
    %v5449 = vrcp.pop %v5359
    %v5450 = vrcp.pop %v5362
    %v5451 = vrcp.pop %v5365
    %v5452 = vrcp.pop %v5368
    %v5453 = vrcp.pop %v5371
    %v5454 = vrcp.pop %v5374
    %v5455 = vrcp.pop %v5377
    %v5456 = vrcp.pop %v5380
    %v5457 = vrcp.pop %v5383
    %v5458 = vrcp.pop %v5386
    %v5459 = vrcp.pop %v5389
    %v5460 = vrcp.pop %v5392
    %v5461 = vrcp.pop %v5395
    %v5462 = vrcp.pop %v5398
    %v5463 = vrcp.pop %v5401
    %v5464 = vrcp.pop %v5404
    %v5465 = vrcp.pop %v5407
    %v5466 = vrcp.pop %v5410
    %v5467 = vrcp.pop %v5413
    %v5468 = vrcp.pop %v5416
    %v5469 = vrcp.pop %v5419
    %v5470 = vrcp.pop %v5422
    %v5471 = vrcp.pop %v5425
    %v5472 = vrcp.pop %v5428
    %v5473 = vrcp.pop %v5431
    %v5474 = vrcp.pop %v5434
    %v5475 = vrcp.pop %v5437
    %v5476 = vrcp.pop %v5440
    %v5477 = vrcp.pop %v5443
    %v5478 = vrcp.pop %v5446
    %v5479 = vmul.f32 %v5288, %v5447
    %v5480 = vmul.f32 %v5290, %v5448
    %v5481 = vmul.f32 %v5292, %v5449
    %v5482 = vmul.f32 %v5294, %v5450
    %v5483 = vmul.f32 %v5296, %v5451
    %v5484 = vmul.f32 %v5298, %v5452
    %v5485 = vmul.f32 %v5300, %v5453
    %v5486 = vmul.f32 %v5302, %v5454
    %v5487 = vmul.f32 %v5304, %v5455
    %v5488 = vmul.f32 %v5306, %v5456
    %v5489 = vmul.f32 %v5308, %v5457
    %v5490 = vmul.f32 %v5310, %v5458
    %v5491 = vmul.f32 %v5312, %v5459
    %v5492 = vmul.f32 %v5314, %v5460
    %v5493 = vmul.f32 %v5316, %v5461
    %v5494 = vmul.f32 %v5318, %v5462
    %v5495 = vmul.f32 %v5320, %v5463
    %v5496 = vmul.f32 %v5322, %v5464
    %v5497 = vmul.f32 %v5324, %v5465
    %v5498 = vmul.f32 %v5326, %v5466
    %v5499 = vmul.f32 %v5328, %v5467
    %v5500 = vmul.f32 %v5330, %v5468
    %v5501 = vmul.f32 %v5332, %v5469
    %v5502 = vmul.f32 %v5334, %v5470
    %v5503 = vmul.f32 %v5336, %v5471
    %v5504 = vmul.f32 %v5338, %v5472
    %v5505 = vmul.f32 %v5340, %v5473
    %v5506 = vmul.f32 %v5342, %v5474
    %v5507 = vmul.f32 %v5344, %v5475
    %v5508 = vmul.f32 %v5346, %v5476
    %v5509 = vmul.f32 %v5348, %v5477
    %v5510 = vmul.f32 %v5350, %v5478
    %v5512 = vsel %vm5158, %v5479, 0
    %v5515 = vsel %vm5158, %v5480, 0
    %5517 = vmatprep.subr.mxu0 0.0
    %5518 = vmatpush1.msra.mxu0 %v3304
    %5519 = vmatprep.subr.mxu0 0.0
    %5520 = vmatpush1.msra.mxu0 %v3440
    %5521 = vmatprep.subr.mxu0 0.0
    %5522 = vmatpush1.msra.mxu0 0.0
    %5523 = vmatprep.subr.mxu0 0.0
    %5524 = vmatpush1.msra.mxu0 0.0
    %5525 = vmatprep.subr.mxu0 0.0
    %5526 = vmatpush1.msra.mxu0 0.0
    %5527 = vmatprep.subr.mxu0 0.0
    %5528 = vmatpush1.msra.mxu0 0.0
    %5529 = vmatprep.subr.mxu0 0.0
    %5530 = vmatpush1.msra.mxu0 0.0
    %5531 = vmatprep.subr.mxu0 0.0
    %5532 = vmatpush1.msra.mxu0 0.0
    %5533 = vmatprep.subr.mxu0 0.0
    %5534 = vmatpush1.msra.mxu0 0.0
    %5535 = vmatprep.subr.mxu0 0.0
    %5536 = vmatpush1.msra.mxu0 0.0
    %5537 = vmatprep.subr.mxu0 0.0
    %5538 = vmatpush1.msra.mxu0 0.0
    %5539 = vmatprep.subr.mxu0 0.0
    %5540 = vmatpush1.msra.mxu0 0.0
    %5541 = vmatprep.subr.mxu0 0.0
    %5542 = vmatpush1.msra.mxu0 0.0
    %5543 = vmatprep.subr.mxu0 0.0
    %5544 = vmatpush1.msra.mxu0 0.0
    %5545 = vmatprep.subr.mxu0 0.0
    %5546 = vmatpush1.msra.mxu0 0.0
    %5547 = vmatprep.subr.mxu0 0.0
    %5548 = vmatpush1.msra.mxu0 0.0
    %5549 = vmatprep.subr.mxu0 0.0
    %5550 = vmatpush1.msra.mxu0 0.0
    %5551 = vmatprep.subr.mxu0 0.0
    %5552 = vmatpush1.msra.mxu0 0.0
    %5553 = vmatprep.subr.mxu0 0.0
    %5554 = vmatpush1.msra.mxu0 0.0
    %5555 = vmatprep.subr.mxu0 0.0
    %5556 = vmatpush1.msra.mxu0 0.0
    %5557 = vmatprep.subr.mxu0 0.0
    %5558 = vmatpush1.msra.mxu0 0.0
    %5559 = vmatprep.subr.mxu0 0.0
    %5560 = vmatpush1.msra.mxu0 0.0
    %5561 = vmatprep.subr.mxu0 0.0
    %5562 = vmatpush1.msra.mxu0 0.0
    %5563 = vmatprep.subr.mxu0 0.0
    %5564 = vmatpush1.msra.mxu0 0.0
    %5565 = vmatprep.subr.mxu0 0.0
    %5566 = vmatpush1.msra.mxu0 0.0
    %5567 = vmatprep.subr.mxu0 0.0
    %5568 = vmatpush1.msra.mxu0 0.0
    %5569 = vmatprep.subr.mxu0 0.0
    %5570 = vmatpush1.msra.mxu0 0.0
    %5571 = vmatprep.subr.mxu0 0.0
    %5572 = vmatpush1.msra.mxu0 0.0
    %5573 = vmatprep.subr.mxu0 0.0
    %5574 = vmatpush1.msra.mxu0 0.0
    %5575 = vmatprep.subr.mxu0 0.0
    %5576 = vmatpush1.msra.mxu0 0.0
    %5577 = vmatprep.subr.mxu0 0.0
    %5578 = vmatpush1.msra.mxu0 0.0
    %5579 = vmatprep.subr.mxu0 0.0
    %5580 = vmatpush1.msra.mxu0 0.0
    %5581 = vmatprep.mubr.f32.mxu0 0.0
    %5582 = vmatmul.mubr.f32.gmra.mrb[0].mxu0 %v5512
    %v5583 = vpop.f32.mrb[0].mxu0
    %v5584 = vadd.f32 0.0, %v5583
    %v5585 = vpop.f32.mrb[0].mxu0
    %5586 = vmatprep.mubr.f32.mxu0 0.0
    %5587 = vmatmul.mubr.f32.gmra.mrb[0].mxu0 %v5515
    %v5588 = vpop.f32.mrb[0].mxu0
    %v5589 = vadd.f32 0.0, %v5588
    %v5590 = vpop.f32.mrb[0].mxu0
    %5591 = vdwg.mxu0
    %v5593 = vsel %vm5158, %v5481, 0
    %v5596 = vsel %vm5158, %v5482, 0
    %5598 = vmatprep.subr.mxu0 0.0
    %5599 = vmatpush1.msra.mxu0 %v3305
    %5600 = vmatprep.subr.mxu0 0.0
    %5601 = vmatpush1.msra.mxu0 %v3441
    %5602 = vmatprep.subr.mxu0 0.0
    %5603 = vmatpush1.msra.mxu0 0.0
    %5604 = vmatprep.subr.mxu0 0.0
    %5605 = vmatpush1.msra.mxu0 0.0
    %5606 = vmatprep.subr.mxu0 0.0
    %5607 = vmatpush1.msra.mxu0 0.0
    %5608 = vmatprep.subr.mxu0 0.0
    %5609 = vmatpush1.msra.mxu0 0.0
    %5610 = vmatprep.subr.mxu0 0.0
    %5611 = vmatpush1.msra.mxu0 0.0
    %5612 = vmatprep.subr.mxu0 0.0
    %5613 = vmatpush1.msra.mxu0 0.0
    %5614 = vmatprep.subr.mxu0 0.0
    %5615 = vmatpush1.msra.mxu0 0.0
    %5616 = vmatprep.subr.mxu0 0.0
    %5617 = vmatpush1.msra.mxu0 0.0
    %5618 = vmatprep.subr.mxu0 0.0
    %5619 = vmatpush1.msra.mxu0 0.0
    %5620 = vmatprep.subr.mxu0 0.0
    %5621 = vmatpush1.msra.mxu0 0.0
    %5622 = vmatprep.subr.mxu0 0.0
    %5623 = vmatpush1.msra.mxu0 0.0
    %5624 = vmatprep.subr.mxu0 0.0
    %5625 = vmatpush1.msra.mxu0 0.0
    %5626 = vmatprep.subr.mxu0 0.0
    %5627 = vmatpush1.msra.mxu0 0.0
    %5628 = vmatprep.subr.mxu0 0.0
    %5629 = vmatpush1.msra.mxu0 0.0
    %5630 = vmatprep.subr.mxu0 0.0
    %5631 = vmatpush1.msra.mxu0 0.0
    %5632 = vmatprep.subr.mxu0 0.0
    %5633 = vmatpush1.msra.mxu0 0.0
    %5634 = vmatprep.subr.mxu0 0.0
    %5635 = vmatpush1.msra.mxu0 0.0
    %5636 = vmatprep.subr.mxu0 0.0
    %5637 = vmatpush1.msra.mxu0 0.0
    %5638 = vmatprep.subr.mxu0 0.0
    %5639 = vmatpush1.msra.mxu0 0.0
    %5640 = vmatprep.subr.mxu0 0.0
    %5641 = vmatpush1.msra.mxu0 0.0
    %5642 = vmatprep.subr.mxu0 0.0
    %5643 = vmatpush1.msra.mxu0 0.0
    %5644 = vmatprep.subr.mxu0 0.0
    %5645 = vmatpush1.msra.mxu0 0.0
    %5646 = vmatprep.subr.mxu0 0.0
    %5647 = vmatpush1.msra.mxu0 0.0
    %5648 = vmatprep.subr.mxu0 0.0
    %5649 = vmatpush1.msra.mxu0 0.0
    %5650 = vmatprep.subr.mxu0 0.0
    %5651 = vmatpush1.msra.mxu0 0.0
    %5652 = vmatprep.subr.mxu0 0.0
    %5653 = vmatpush1.msra.mxu0 0.0
    %5654 = vmatprep.subr.mxu0 0.0
    %5655 = vmatpush1.msra.mxu0 0.0
    %5656 = vmatprep.subr.mxu0 0.0
    %5657 = vmatpush1.msra.mxu0 0.0
    %5658 = vmatprep.subr.mxu0 0.0
    %5659 = vmatpush1.msra.mxu0 0.0
    %5660 = vmatprep.subr.mxu0 0.0
    %5661 = vmatpush1.msra.mxu0 0.0
    %5662 = vmatprep.mubr.f32.mxu0 0.0
    %5663 = vmatmul.mubr.f32.gmra.mrb[0].mxu0 %v5593
    %v5664 = vpop.f32.mrb[0].mxu0
    %v5665 = vadd.f32 0.0, %v5664
    %v5666 = vpop.f32.mrb[0].mxu0
    %5667 = vmatprep.mubr.f32.mxu0 0.0
    %5668 = vmatmul.mubr.f32.gmra.mrb[0].mxu0 %v5596
    %v5669 = vpop.f32.mrb[0].mxu0
    %v5670 = vadd.f32 0.0, %v5669
    %v5671 = vpop.f32.mrb[0].mxu0
    %5672 = vdwg.mxu0
    %v5674 = vsel %vm5158, %v5483, 0
    %v5677 = vsel %vm5158, %v5484, 0
    %5679 = vmatprep.subr.mxu0 0.0
    %5680 = vmatpush1.msra.mxu0 %v3306
    %5681 = vmatprep.subr.mxu0 0.0
    %5682 = vmatpush1.msra.mxu0 %v3442
    %5683 = vmatprep.subr.mxu0 0.0
    %5684 = vmatpush1.msra.mxu0 0.0
    %5685 = vmatprep.subr.mxu0 0.0
    %5686 = vmatpush1.msra.mxu0 0.0
    %5687 = vmatprep.subr.mxu0 0.0
    %5688 = vmatpush1.msra.mxu0 0.0
    %5689 = vmatprep.subr.mxu0 0.0
    %5690 = vmatpush1.msra.mxu0 0.0
    %5691 = vmatprep.subr.mxu0 0.0
    %5692 = vmatpush1.msra.mxu0 0.0
    %5693 = vmatprep.subr.mxu0 0.0
    %5694 = vmatpush1.msra.mxu0 0.0
    %5695 = vmatprep.subr.mxu0 0.0
    %5696 = vmatpush1.msra.mxu0 0.0
    %5697 = vmatprep.subr.mxu0 0.0
    %5698 = vmatpush1.msra.mxu0 0.0
    %5699 = vmatprep.subr.mxu0 0.0
    %5700 = vmatpush1.msra.mxu0 0.0
    %5701 = vmatprep.subr.mxu0 0.0
    %5702 = vmatpush1.msra.mxu0 0.0
    %5703 = vmatprep.subr.mxu0 0.0
    %5704 = vmatpush1.msra.mxu0 0.0
    %5705 = vmatprep.subr.mxu0 0.0
    %5706 = vmatpush1.msra.mxu0 0.0
    %5707 = vmatprep.subr.mxu0 0.0
    %5708 = vmatpush1.msra.mxu0 0.0
    %5709 = vmatprep.subr.mxu0 0.0
    %5710 = vmatpush1.msra.mxu0 0.0
    %5711 = vmatprep.subr.mxu0 0.0
    %5712 = vmatpush1.msra.mxu0 0.0
    %5713 = vmatprep.subr.mxu0 0.0
    %5714 = vmatpush1.msra.mxu0 0.0
    %5715 = vmatprep.subr.mxu0 0.0
    %5716 = vmatpush1.msra.mxu0 0.0
    %5717 = vmatprep.subr.mxu0 0.0
    %5718 = vmatpush1.msra.mxu0 0.0
    %5719 = vmatprep.subr.mxu0 0.0
    %5720 = vmatpush1.msra.mxu0 0.0
    %5721 = vmatprep.subr.mxu0 0.0
    %5722 = vmatpush1.msra.mxu0 0.0
    %5723 = vmatprep.subr.mxu0 0.0
    %5724 = vmatpush1.msra.mxu0 0.0
    %5725 = vmatprep.subr.mxu0 0.0
    %5726 = vmatpush1.msra.mxu0 0.0
    %5727 = vmatprep.subr.mxu0 0.0
    %5728 = vmatpush1.msra.mxu0 0.0
    %5729 = vmatprep.subr.mxu0 0.0
    %5730 = vmatpush1.msra.mxu0 0.0
    %5731 = vmatprep.subr.mxu0 0.0
    %5732 = vmatpush1.msra.mxu0 0.0
    %5733 = vmatprep.subr.mxu0 0.0
    %5734 = vmatpush1.msra.mxu0 0.0
    %5735 = vmatprep.subr.mxu0 0.0
    %5736 = vmatpush1.msra.mxu0 0.0
    %5737 = vmatprep.subr.mxu0 0.0
    %5738 = vmatpush1.msra.mxu0 0.0
    %5739 = vmatprep.subr.mxu0 0.0
    %5740 = vmatpush1.msra.mxu0 0.0
    %5741 = vmatprep.subr.mxu0 0.0
    %5742 = vmatpush1.msra.mxu0 0.0
    %5743 = vmatprep.mubr.f32.mxu0 0.0
    %5744 = vmatmul.mubr.f32.gmra.mrb[0].mxu0 %v5674
    %v5745 = vpop.f32.mrb[0].mxu0
    %v5746 = vadd.f32 0.0, %v5745
    %v5747 = vpop.f32.mrb[0].mxu0
    %5748 = vmatprep.mubr.f32.mxu0 0.0
    %5749 = vmatmul.mubr.f32.gmra.mrb[0].mxu0 %v5677
    %v5750 = vpop.f32.mrb[0].mxu0
    %v5751 = vadd.f32 0.0, %v5750
    %v5752 = vpop.f32.mrb[0].mxu0
    %5753 = vdwg.mxu0
    %v5755 = vsel %vm5158, %v5485, 0
    %v5758 = vsel %vm5158, %v5486, 0
    %5760 = vmatprep.subr.mxu0 0.0
    %5761 = vmatpush1.msra.mxu0 %v3307
    %5762 = vmatprep.subr.mxu0 0.0
    %5763 = vmatpush1.msra.mxu0 %v3443
    %5764 = vmatprep.subr.mxu0 0.0
    %5765 = vmatpush1.msra.mxu0 0.0
    %5766 = vmatprep.subr.mxu0 0.0
    %5767 = vmatpush1.msra.mxu0 0.0
    %5768 = vmatprep.subr.mxu0 0.0
    %5769 = vmatpush1.msra.mxu0 0.0
    %5770 = vmatprep.subr.mxu0 0.0
    %5771 = vmatpush1.msra.mxu0 0.0
    %5772 = vmatprep.subr.mxu0 0.0
    %5773 = vmatpush1.msra.mxu0 0.0
    %5774 = vmatprep.subr.mxu0 0.0
    %5775 = vmatpush1.msra.mxu0 0.0
    %5776 = vmatprep.subr.mxu0 0.0
    %5777 = vmatpush1.msra.mxu0 0.0
    %5778 = vmatprep.subr.mxu0 0.0
    %5779 = vmatpush1.msra.mxu0 0.0
    %5780 = vmatprep.subr.mxu0 0.0
    %5781 = vmatpush1.msra.mxu0 0.0
    %5782 = vmatprep.subr.mxu0 0.0
    %5783 = vmatpush1.msra.mxu0 0.0
    %5784 = vmatprep.subr.mxu0 0.0
    %5785 = vmatpush1.msra.mxu0 0.0
    %5786 = vmatprep.subr.mxu0 0.0
    %5787 = vmatpush1.msra.mxu0 0.0
    %5788 = vmatprep.subr.mxu0 0.0
    %5789 = vmatpush1.msra.mxu0 0.0
    %5790 = vmatprep.subr.mxu0 0.0
    %5791 = vmatpush1.msra.mxu0 0.0
    %5792 = vmatprep.subr.mxu0 0.0
    %5793 = vmatpush1.msra.mxu0 0.0
    %5794 = vmatprep.subr.mxu0 0.0
    %5795 = vmatpush1.msra.mxu0 0.0
    %5796 = vmatprep.subr.mxu0 0.0
    %5797 = vmatpush1.msra.mxu0 0.0
    %5798 = vmatprep.subr.mxu0 0.0
    %5799 = vmatpush1.msra.mxu0 0.0
    %5800 = vmatprep.subr.mxu0 0.0
    %5801 = vmatpush1.msra.mxu0 0.0
    %5802 = vmatprep.subr.mxu0 0.0
    %5803 = vmatpush1.msra.mxu0 0.0
    %5804 = vmatprep.subr.mxu0 0.0
    %5805 = vmatpush1.msra.mxu0 0.0
    %5806 = vmatprep.subr.mxu0 0.0
    %5807 = vmatpush1.msra.mxu0 0.0
    %5808 = vmatprep.subr.mxu0 0.0
    %5809 = vmatpush1.msra.mxu0 0.0
    %5810 = vmatprep.subr.mxu0 0.0
    %5811 = vmatpush1.msra.mxu0 0.0
    %5812 = vmatprep.subr.mxu0 0.0
    %5813 = vmatpush1.msra.mxu0 0.0
    %5814 = vmatprep.subr.mxu0 0.0
    %5815 = vmatpush1.msra.mxu0 0.0
    %5816 = vmatprep.subr.mxu0 0.0
    %5817 = vmatpush1.msra.mxu0 0.0
    %5818 = vmatprep.subr.mxu0 0.0
    %5819 = vmatpush1.msra.mxu0 0.0
    %5820 = vmatprep.subr.mxu0 0.0
    %5821 = vmatpush1.msra.mxu0 0.0
    %5822 = vmatprep.subr.mxu0 0.0
    %5823 = vmatpush1.msra.mxu0 0.0
    %5824 = vmatprep.mubr.f32.mxu0 0.0
    %5825 = vmatmul.mubr.f32.gmra.mrb[0].mxu0 %v5755
    %v5826 = vpop.f32.mrb[0].mxu0
    %v5827 = vadd.f32 0.0, %v5826
    %v5828 = vpop.f32.mrb[0].mxu0
    %5829 = vmatprep.mubr.f32.mxu0 0.0
    %5830 = vmatmul.mubr.f32.gmra.mrb[0].mxu0 %v5758
    %v5831 = vpop.f32.mrb[0].mxu0
    %v5832 = vadd.f32 0.0, %v5831
    %v5833 = vpop.f32.mrb[0].mxu0
    %5834 = vdwg.mxu0
    %v5836 = vsel %vm5158, %v5487, 0
    %v5839 = vsel %vm5158, %v5488, 0
    %5841 = vmatprep.subr.mxu0 0.0
    %5842 = vmatpush1.msra.mxu0 %v3308
    %5843 = vmatprep.subr.mxu0 0.0
    %5844 = vmatpush1.msra.mxu0 %v3444
    %5845 = vmatprep.subr.mxu0 0.0
    %5846 = vmatpush1.msra.mxu0 0.0
    %5847 = vmatprep.subr.mxu0 0.0
    %5848 = vmatpush1.msra.mxu0 0.0
    %5849 = vmatprep.subr.mxu0 0.0
    %5850 = vmatpush1.msra.mxu0 0.0
    %5851 = vmatprep.subr.mxu0 0.0
    %5852 = vmatpush1.msra.mxu0 0.0
    %5853 = vmatprep.subr.mxu0 0.0
    %5854 = vmatpush1.msra.mxu0 0.0
    %5855 = vmatprep.subr.mxu0 0.0
    %5856 = vmatpush1.msra.mxu0 0.0
    %5857 = vmatprep.subr.mxu0 0.0
    %5858 = vmatpush1.msra.mxu0 0.0
    %5859 = vmatprep.subr.mxu0 0.0
    %5860 = vmatpush1.msra.mxu0 0.0
    %5861 = vmatprep.subr.mxu0 0.0
    %5862 = vmatpush1.msra.mxu0 0.0
    %5863 = vmatprep.subr.mxu0 0.0
    %5864 = vmatpush1.msra.mxu0 0.0
    %5865 = vmatprep.subr.mxu0 0.0
    %5866 = vmatpush1.msra.mxu0 0.0
    %5867 = vmatprep.subr.mxu0 0.0
    %5868 = vmatpush1.msra.mxu0 0.0
    %5869 = vmatprep.subr.mxu0 0.0
    %5870 = vmatpush1.msra.mxu0 0.0
    %5871 = vmatprep.subr.mxu0 0.0
    %5872 = vmatpush1.msra.mxu0 0.0
    %5873 = vmatprep.subr.mxu0 0.0
    %5874 = vmatpush1.msra.mxu0 0.0
    %5875 = vmatprep.subr.mxu0 0.0
    %5876 = vmatpush1.msra.mxu0 0.0
    %5877 = vmatprep.subr.mxu0 0.0
    %5878 = vmatpush1.msra.mxu0 0.0
    %5879 = vmatprep.subr.mxu0 0.0
    %5880 = vmatpush1.msra.mxu0 0.0
    %5881 = vmatprep.subr.mxu0 0.0
    %5882 = vmatpush1.msra.mxu0 0.0
    %5883 = vmatprep.subr.mxu0 0.0
    %5884 = vmatpush1.msra.mxu0 0.0
    %5885 = vmatprep.subr.mxu0 0.0
    %5886 = vmatpush1.msra.mxu0 0.0
    %5887 = vmatprep.subr.mxu0 0.0
    %5888 = vmatpush1.msra.mxu0 0.0
    %5889 = vmatprep.subr.mxu0 0.0
    %5890 = vmatpush1.msra.mxu0 0.0
    %5891 = vmatprep.subr.mxu0 0.0
    %5892 = vmatpush1.msra.mxu0 0.0
    %5893 = vmatprep.subr.mxu0 0.0
    %5894 = vmatpush1.msra.mxu0 0.0
    %5895 = vmatprep.subr.mxu0 0.0
    %5896 = vmatpush1.msra.mxu0 0.0
    %5897 = vmatprep.subr.mxu0 0.0
    %5898 = vmatpush1.msra.mxu0 0.0
    %5899 = vmatprep.subr.mxu0 0.0
    %5900 = vmatpush1.msra.mxu0 0.0
    %5901 = vmatprep.subr.mxu0 0.0
    %5902 = vmatpush1.msra.mxu0 0.0
    %5903 = vmatprep.subr.mxu0 0.0
    %5904 = vmatpush1.msra.mxu0 0.0
    %5905 = vmatprep.mubr.f32.mxu0 0.0
    %5906 = vmatmul.mubr.f32.gmra.mrb[0].mxu0 %v5836
    %v5907 = vpop.f32.mrb[0].mxu0
    %v5908 = vadd.f32 0.0, %v5907
    %v5909 = vpop.f32.mrb[0].mxu0
    %5910 = vmatprep.mubr.f32.mxu0 0.0
    %5911 = vmatmul.mubr.f32.gmra.mrb[0].mxu0 %v5839
    %v5912 = vpop.f32.mrb[0].mxu0
    %v5913 = vadd.f32 0.0, %v5912
    %v5914 = vpop.f32.mrb[0].mxu0
    %5915 = vdwg.mxu0
    %v5917 = vsel %vm5158, %v5489, 0
    %v5920 = vsel %vm5158, %v5490, 0
    %5922 = vmatprep.subr.mxu0 0.0
    %5923 = vmatpush1.msra.mxu0 %v3309
    %5924 = vmatprep.subr.mxu0 0.0
    %5925 = vmatpush1.msra.mxu0 %v3445
    %5926 = vmatprep.subr.mxu0 0.0
    %5927 = vmatpush1.msra.mxu0 0.0
    %5928 = vmatprep.subr.mxu0 0.0
    %5929 = vmatpush1.msra.mxu0 0.0
    %5930 = vmatprep.subr.mxu0 0.0
    %5931 = vmatpush1.msra.mxu0 0.0
    %5932 = vmatprep.subr.mxu0 0.0
    %5933 = vmatpush1.msra.mxu0 0.0
    %5934 = vmatprep.subr.mxu0 0.0
    %5935 = vmatpush1.msra.mxu0 0.0
    %5936 = vmatprep.subr.mxu0 0.0
    %5937 = vmatpush1.msra.mxu0 0.0
    %5938 = vmatprep.subr.mxu0 0.0
    %5939 = vmatpush1.msra.mxu0 0.0
    %5940 = vmatprep.subr.mxu0 0.0
    %5941 = vmatpush1.msra.mxu0 0.0
    %5942 = vmatprep.subr.mxu0 0.0
    %5943 = vmatpush1.msra.mxu0 0.0
    %5944 = vmatprep.subr.mxu0 0.0
    %5945 = vmatpush1.msra.mxu0 0.0
    %5946 = vmatprep.subr.mxu0 0.0
    %5947 = vmatpush1.msra.mxu0 0.0
    %5948 = vmatprep.subr.mxu0 0.0
    %5949 = vmatpush1.msra.mxu0 0.0
    %5950 = vmatprep.subr.mxu0 0.0
    %5951 = vmatpush1.msra.mxu0 0.0
    %5952 = vmatprep.subr.mxu0 0.0
    %5953 = vmatpush1.msra.mxu0 0.0
    %5954 = vmatprep.subr.mxu0 0.0
    %5955 = vmatpush1.msra.mxu0 0.0
    %5956 = vmatprep.subr.mxu0 0.0
    %5957 = vmatpush1.msra.mxu0 0.0
    %5958 = vmatprep.subr.mxu0 0.0
    %5959 = vmatpush1.msra.mxu0 0.0
    %5960 = vmatprep.subr.mxu0 0.0
    %5961 = vmatpush1.msra.mxu0 0.0
    %5962 = vmatprep.subr.mxu0 0.0
    %5963 = vmatpush1.msra.mxu0 0.0
    %5964 = vmatprep.subr.mxu0 0.0
    %5965 = vmatpush1.msra.mxu0 0.0
    %5966 = vmatprep.subr.mxu0 0.0
    %5967 = vmatpush1.msra.mxu0 0.0
    %5968 = vmatprep.subr.mxu0 0.0
    %5969 = vmatpush1.msra.mxu0 0.0
    %5970 = vmatprep.subr.mxu0 0.0
    %5971 = vmatpush1.msra.mxu0 0.0
    %5972 = vmatprep.subr.mxu0 0.0
    %5973 = vmatpush1.msra.mxu0 0.0
    %5974 = vmatprep.subr.mxu0 0.0
    %5975 = vmatpush1.msra.mxu0 0.0
    %5976 = vmatprep.subr.mxu0 0.0
    %5977 = vmatpush1.msra.mxu0 0.0
    %5978 = vmatprep.subr.mxu0 0.0
    %5979 = vmatpush1.msra.mxu0 0.0
    %5980 = vmatprep.subr.mxu0 0.0
    %5981 = vmatpush1.msra.mxu0 0.0
    %5982 = vmatprep.subr.mxu0 0.0
    %5983 = vmatpush1.msra.mxu0 0.0
    %5984 = vmatprep.subr.mxu0 0.0
    %5985 = vmatpush1.msra.mxu0 0.0
    %5986 = vmatprep.mubr.f32.mxu0 0.0
    %5987 = vmatmul.mubr.f32.gmra.mrb[0].mxu0 %v5917
    %v5988 = vpop.f32.mrb[0].mxu0
    %v5989 = vadd.f32 0.0, %v5988
    %v5990 = vpop.f32.mrb[0].mxu0
    %5991 = vmatprep.mubr.f32.mxu0 0.0
    %5992 = vmatmul.mubr.f32.gmra.mrb[0].mxu0 %v5920
    %v5993 = vpop.f32.mrb[0].mxu0
    %v5994 = vadd.f32 0.0, %v5993
    %v5995 = vpop.f32.mrb[0].mxu0
    %5996 = vdwg.mxu0
    %v5998 = vsel %vm5158, %v5491, 0
    %v6001 = vsel %vm5158, %v5492, 0
    %6003 = vmatprep.subr.mxu0 0.0
    %6004 = vmatpush1.msra.mxu0 %v3310
    %6005 = vmatprep.subr.mxu0 0.0
    %6006 = vmatpush1.msra.mxu0 %v3446
    %6007 = vmatprep.subr.mxu0 0.0
    %6008 = vmatpush1.msra.mxu0 0.0
    %6009 = vmatprep.subr.mxu0 0.0
    %6010 = vmatpush1.msra.mxu0 0.0
    %6011 = vmatprep.subr.mxu0 0.0
    %6012 = vmatpush1.msra.mxu0 0.0
    %6013 = vmatprep.subr.mxu0 0.0
    %6014 = vmatpush1.msra.mxu0 0.0
    %6015 = vmatprep.subr.mxu0 0.0
    %6016 = vmatpush1.msra.mxu0 0.0
    %6017 = vmatprep.subr.mxu0 0.0
    %6018 = vmatpush1.msra.mxu0 0.0
    %6019 = vmatprep.subr.mxu0 0.0
    %6020 = vmatpush1.msra.mxu0 0.0
    %6021 = vmatprep.subr.mxu0 0.0
    %6022 = vmatpush1.msra.mxu0 0.0
    %6023 = vmatprep.subr.mxu0 0.0
    %6024 = vmatpush1.msra.mxu0 0.0
    %6025 = vmatprep.subr.mxu0 0.0
    %6026 = vmatpush1.msra.mxu0 0.0
    %6027 = vmatprep.subr.mxu0 0.0
    %6028 = vmatpush1.msra.mxu0 0.0
    %6029 = vmatprep.subr.mxu0 0.0
    %6030 = vmatpush1.msra.mxu0 0.0
    %6031 = vmatprep.subr.mxu0 0.0
    %6032 = vmatpush1.msra.mxu0 0.0
    %6033 = vmatprep.subr.mxu0 0.0
    %6034 = vmatpush1.msra.mxu0 0.0
    %6035 = vmatprep.subr.mxu0 0.0
    %6036 = vmatpush1.msra.mxu0 0.0
    %6037 = vmatprep.subr.mxu0 0.0
    %6038 = vmatpush1.msra.mxu0 0.0
    %6039 = vmatprep.subr.mxu0 0.0
    %6040 = vmatpush1.msra.mxu0 0.0
    %6041 = vmatprep.subr.mxu0 0.0
    %6042 = vmatpush1.msra.mxu0 0.0
    %6043 = vmatprep.subr.mxu0 0.0
    %6044 = vmatpush1.msra.mxu0 0.0
    %6045 = vmatprep.subr.mxu0 0.0
    %6046 = vmatpush1.msra.mxu0 0.0
    %6047 = vmatprep.subr.mxu0 0.0
    %6048 = vmatpush1.msra.mxu0 0.0
    %6049 = vmatprep.subr.mxu0 0.0
    %6050 = vmatpush1.msra.mxu0 0.0
    %6051 = vmatprep.subr.mxu0 0.0
    %6052 = vmatpush1.msra.mxu0 0.0
    %6053 = vmatprep.subr.mxu0 0.0
    %6054 = vmatpush1.msra.mxu0 0.0
    %6055 = vmatprep.subr.mxu0 0.0
    %6056 = vmatpush1.msra.mxu0 0.0
    %6057 = vmatprep.subr.mxu0 0.0
    %6058 = vmatpush1.msra.mxu0 0.0
    %6059 = vmatprep.subr.mxu0 0.0
    %6060 = vmatpush1.msra.mxu0 0.0
    %6061 = vmatprep.subr.mxu0 0.0
    %6062 = vmatpush1.msra.mxu0 0.0
    %6063 = vmatprep.subr.mxu0 0.0
    %6064 = vmatpush1.msra.mxu0 0.0
    %6065 = vmatprep.subr.mxu0 0.0
    %6066 = vmatpush1.msra.mxu0 0.0
    %6067 = vmatprep.mubr.f32.mxu0 0.0
    %6068 = vmatmul.mubr.f32.gmra.mrb[0].mxu0 %v5998
    %v6069 = vpop.f32.mrb[0].mxu0
    %v6070 = vadd.f32 0.0, %v6069
    %v6071 = vpop.f32.mrb[0].mxu0
    %6072 = vmatprep.mubr.f32.mxu0 0.0
    %6073 = vmatmul.mubr.f32.gmra.mrb[0].mxu0 %v6001
    %v6074 = vpop.f32.mrb[0].mxu0
    %v6075 = vadd.f32 0.0, %v6074
    %v6076 = vpop.f32.mrb[0].mxu0
    %6077 = vdwg.mxu0
    %v6079 = vsel %vm5158, %v5493, 0
    %v6082 = vsel %vm5158, %v5494, 0
    %6084 = vmatprep.subr.mxu0 0.0
    %6085 = vmatpush1.msra.mxu0 %v3311
    %6086 = vmatprep.subr.mxu0 0.0
    %6087 = vmatpush1.msra.mxu0 %v3447
    %6088 = vmatprep.subr.mxu0 0.0
    %6089 = vmatpush1.msra.mxu0 0.0
    %6090 = vmatprep.subr.mxu0 0.0
    %6091 = vmatpush1.msra.mxu0 0.0
    %6092 = vmatprep.subr.mxu0 0.0
    %6093 = vmatpush1.msra.mxu0 0.0
    %6094 = vmatprep.subr.mxu0 0.0
    %6095 = vmatpush1.msra.mxu0 0.0
    %6096 = vmatprep.subr.mxu0 0.0
    %6097 = vmatpush1.msra.mxu0 0.0
    %6098 = vmatprep.subr.mxu0 0.0
    %6099 = vmatpush1.msra.mxu0 0.0
    %6100 = vmatprep.subr.mxu0 0.0
    %6101 = vmatpush1.msra.mxu0 0.0
    %6102 = vmatprep.subr.mxu0 0.0
    %6103 = vmatpush1.msra.mxu0 0.0
    %6104 = vmatprep.subr.mxu0 0.0
    %6105 = vmatpush1.msra.mxu0 0.0
    %6106 = vmatprep.subr.mxu0 0.0
    %6107 = vmatpush1.msra.mxu0 0.0
    %6108 = vmatprep.subr.mxu0 0.0
    %6109 = vmatpush1.msra.mxu0 0.0
    %6110 = vmatprep.subr.mxu0 0.0
    %6111 = vmatpush1.msra.mxu0 0.0
    %6112 = vmatprep.subr.mxu0 0.0
    %6113 = vmatpush1.msra.mxu0 0.0
    %6114 = vmatprep.subr.mxu0 0.0
    %6115 = vmatpush1.msra.mxu0 0.0
    %6116 = vmatprep.subr.mxu0 0.0
    %6117 = vmatpush1.msra.mxu0 0.0
    %6118 = vmatprep.subr.mxu0 0.0
    %6119 = vmatpush1.msra.mxu0 0.0
    %6120 = vmatprep.subr.mxu0 0.0
    %6121 = vmatpush1.msra.mxu0 0.0
    %6122 = vmatprep.subr.mxu0 0.0
    %6123 = vmatpush1.msra.mxu0 0.0
    %6124 = vmatprep.subr.mxu0 0.0
    %6125 = vmatpush1.msra.mxu0 0.0
    %6126 = vmatprep.subr.mxu0 0.0
    %6127 = vmatpush1.msra.mxu0 0.0
    %6128 = vmatprep.subr.mxu0 0.0
    %6129 = vmatpush1.msra.mxu0 0.0
    %6130 = vmatprep.subr.mxu0 0.0
    %6131 = vmatpush1.msra.mxu0 0.0
    %6132 = vmatprep.subr.mxu0 0.0
    %6133 = vmatpush1.msra.mxu0 0.0
    %6134 = vmatprep.subr.mxu0 0.0
    %6135 = vmatpush1.msra.mxu0 0.0
    %6136 = vmatprep.subr.mxu0 0.0
    %6137 = vmatpush1.msra.mxu0 0.0
    %6138 = vmatprep.subr.mxu0 0.0
    %6139 = vmatpush1.msra.mxu0 0.0
    %6140 = vmatprep.subr.mxu0 0.0
    %6141 = vmatpush1.msra.mxu0 0.0
    %6142 = vmatprep.subr.mxu0 0.0
    %6143 = vmatpush1.msra.mxu0 0.0
    %6144 = vmatprep.subr.mxu0 0.0
    %6145 = vmatpush1.msra.mxu0 0.0
    %6146 = vmatprep.subr.mxu0 0.0
    %6147 = vmatpush1.msra.mxu0 0.0
    %6148 = vmatprep.mubr.f32.mxu0 0.0
    %6149 = vmatmul.mubr.f32.gmra.mrb[0].mxu0 %v6079
    %v6150 = vpop.f32.mrb[0].mxu0
    %v6151 = vadd.f32 0.0, %v6150
    %v6152 = vpop.f32.mrb[0].mxu0
    %6153 = vmatprep.mubr.f32.mxu0 0.0
    %6154 = vmatmul.mubr.f32.gmra.mrb[0].mxu0 %v6082
    %v6155 = vpop.f32.mrb[0].mxu0
    %v6156 = vadd.f32 0.0, %v6155
    %v6157 = vpop.f32.mrb[0].mxu0
    %6158 = vdwg.mxu0
    %v6160 = vsel %vm5158, %v5495, 0
    %v6163 = vsel %vm5158, %v5496, 0
    %6165 = vmatprep.subr.mxu0 0.0
    %6166 = vmatpush1.msra.mxu0 %v3576
    %6167 = vmatprep.subr.mxu0 0.0
    %6168 = vmatpush1.msra.mxu0 %v3712
    %6169 = vmatprep.subr.mxu0 0.0
    %6170 = vmatpush1.msra.mxu0 0.0
    %6171 = vmatprep.subr.mxu0 0.0
    %6172 = vmatpush1.msra.mxu0 0.0
    %6173 = vmatprep.subr.mxu0 0.0
    %6174 = vmatpush1.msra.mxu0 0.0
    %6175 = vmatprep.subr.mxu0 0.0
    %6176 = vmatpush1.msra.mxu0 0.0
    %6177 = vmatprep.subr.mxu0 0.0
    %6178 = vmatpush1.msra.mxu0 0.0
    %6179 = vmatprep.subr.mxu0 0.0
    %6180 = vmatpush1.msra.mxu0 0.0
    %6181 = vmatprep.subr.mxu0 0.0
    %6182 = vmatpush1.msra.mxu0 0.0
    %6183 = vmatprep.subr.mxu0 0.0
    %6184 = vmatpush1.msra.mxu0 0.0
    %6185 = vmatprep.subr.mxu0 0.0
    %6186 = vmatpush1.msra.mxu0 0.0
    %6187 = vmatprep.subr.mxu0 0.0
    %6188 = vmatpush1.msra.mxu0 0.0
    %6189 = vmatprep.subr.mxu0 0.0
    %6190 = vmatpush1.msra.mxu0 0.0
    %6191 = vmatprep.subr.mxu0 0.0
    %6192 = vmatpush1.msra.mxu0 0.0
    %6193 = vmatprep.subr.mxu0 0.0
    %6194 = vmatpush1.msra.mxu0 0.0
    %6195 = vmatprep.subr.mxu0 0.0
    %6196 = vmatpush1.msra.mxu0 0.0
    %6197 = vmatprep.subr.mxu0 0.0
    %6198 = vmatpush1.msra.mxu0 0.0
    %6199 = vmatprep.subr.mxu0 0.0
    %6200 = vmatpush1.msra.mxu0 0.0
    %6201 = vmatprep.subr.mxu0 0.0
    %6202 = vmatpush1.msra.mxu0 0.0
    %6203 = vmatprep.subr.mxu0 0.0
    %6204 = vmatpush1.msra.mxu0 0.0
    %6205 = vmatprep.subr.mxu0 0.0
    %6206 = vmatpush1.msra.mxu0 0.0
    %6207 = vmatprep.subr.mxu0 0.0
    %6208 = vmatpush1.msra.mxu0 0.0
    %6209 = vmatprep.subr.mxu0 0.0
    %6210 = vmatpush1.msra.mxu0 0.0
    %6211 = vmatprep.subr.mxu0 0.0
    %6212 = vmatpush1.msra.mxu0 0.0
    %6213 = vmatprep.subr.mxu0 0.0
    %6214 = vmatpush1.msra.mxu0 0.0
    %6215 = vmatprep.subr.mxu0 0.0
    %6216 = vmatpush1.msra.mxu0 0.0
    %6217 = vmatprep.subr.mxu0 0.0
    %6218 = vmatpush1.msra.mxu0 0.0
    %6219 = vmatprep.subr.mxu0 0.0
    %6220 = vmatpush1.msra.mxu0 0.0
    %6221 = vmatprep.subr.mxu0 0.0
    %6222 = vmatpush1.msra.mxu0 0.0
    %6223 = vmatprep.subr.mxu0 0.0
    %6224 = vmatpush1.msra.mxu0 0.0
    %6225 = vmatprep.subr.mxu0 0.0
    %6226 = vmatpush1.msra.mxu0 0.0
    %6227 = vmatprep.subr.mxu0 0.0
    %6228 = vmatpush1.msra.mxu0 0.0
    %6229 = vmatprep.mubr.f32.mxu0 0.0
    %6230 = vmatmul.mubr.f32.gmra.mrb[0].mxu0 %v6160
    %v6231 = vpop.f32.mrb[0].mxu0
    %v6232 = vadd.f32 0.0, %v6231
    %v6233 = vpop.f32.mrb[0].mxu0
    %6234 = vmatprep.mubr.f32.mxu0 0.0
    %6235 = vmatmul.mubr.f32.gmra.mrb[0].mxu0 %v6163
    %v6236 = vpop.f32.mrb[0].mxu0
    %v6237 = vadd.f32 0.0, %v6236
    %v6238 = vpop.f32.mrb[0].mxu0
    %6239 = vdwg.mxu0
    %v6241 = vsel %vm5158, %v5497, 0
    %v6244 = vsel %vm5158, %v5498, 0
    %6246 = vmatprep.subr.mxu0 0.0
    %6247 = vmatpush1.msra.mxu0 %v3577
    %6248 = vmatprep.subr.mxu0 0.0
    %6249 = vmatpush1.msra.mxu0 %v3713
    %6250 = vmatprep.subr.mxu0 0.0
    %6251 = vmatpush1.msra.mxu0 0.0
    %6252 = vmatprep.subr.mxu0 0.0
    %6253 = vmatpush1.msra.mxu0 0.0
    %6254 = vmatprep.subr.mxu0 0.0
    %6255 = vmatpush1.msra.mxu0 0.0
    %6256 = vmatprep.subr.mxu0 0.0
    %6257 = vmatpush1.msra.mxu0 0.0
    %6258 = vmatprep.subr.mxu0 0.0
    %6259 = vmatpush1.msra.mxu0 0.0
    %6260 = vmatprep.subr.mxu0 0.0
    %6261 = vmatpush1.msra.mxu0 0.0
    %6262 = vmatprep.subr.mxu0 0.0
    %6263 = vmatpush1.msra.mxu0 0.0
    %6264 = vmatprep.subr.mxu0 0.0
    %6265 = vmatpush1.msra.mxu0 0.0
    %6266 = vmatprep.subr.mxu0 0.0
    %6267 = vmatpush1.msra.mxu0 0.0
    %6268 = vmatprep.subr.mxu0 0.0
    %6269 = vmatpush1.msra.mxu0 0.0
    %6270 = vmatprep.subr.mxu0 0.0
    %6271 = vmatpush1.msra.mxu0 0.0
    %6272 = vmatprep.subr.mxu0 0.0
    %6273 = vmatpush1.msra.mxu0 0.0
    %6274 = vmatprep.subr.mxu0 0.0
    %6275 = vmatpush1.msra.mxu0 0.0
    %6276 = vmatprep.subr.mxu0 0.0
    %6277 = vmatpush1.msra.mxu0 0.0
    %6278 = vmatprep.subr.mxu0 0.0
    %6279 = vmatpush1.msra.mxu0 0.0
    %6280 = vmatprep.subr.mxu0 0.0
    %6281 = vmatpush1.msra.mxu0 0.0
    %6282 = vmatprep.subr.mxu0 0.0
    %6283 = vmatpush1.msra.mxu0 0.0
    %6284 = vmatprep.subr.mxu0 0.0
    %6285 = vmatpush1.msra.mxu0 0.0
    %6286 = vmatprep.subr.mxu0 0.0
    %6287 = vmatpush1.msra.mxu0 0.0
    %6288 = vmatprep.subr.mxu0 0.0
    %6289 = vmatpush1.msra.mxu0 0.0
    %6290 = vmatprep.subr.mxu0 0.0
    %6291 = vmatpush1.msra.mxu0 0.0
    %6292 = vmatprep.subr.mxu0 0.0
    %6293 = vmatpush1.msra.mxu0 0.0
    %6294 = vmatprep.subr.mxu0 0.0
    %6295 = vmatpush1.msra.mxu0 0.0
    %6296 = vmatprep.subr.mxu0 0.0
    %6297 = vmatpush1.msra.mxu0 0.0
    %6298 = vmatprep.subr.mxu0 0.0
    %6299 = vmatpush1.msra.mxu0 0.0
    %6300 = vmatprep.subr.mxu0 0.0
    %6301 = vmatpush1.msra.mxu0 0.0
    %6302 = vmatprep.subr.mxu0 0.0
    %6303 = vmatpush1.msra.mxu0 0.0
    %6304 = vmatprep.subr.mxu0 0.0
    %6305 = vmatpush1.msra.mxu0 0.0
    %6306 = vmatprep.subr.mxu0 0.0
    %6307 = vmatpush1.msra.mxu0 0.0
    %6308 = vmatprep.subr.mxu0 0.0
    %6309 = vmatpush1.msra.mxu0 0.0
    %6310 = vmatprep.mubr.f32.mxu0 0.0
    %6311 = vmatmul.mubr.f32.gmra.mrb[0].mxu0 %v6241
    %v6312 = vpop.f32.mrb[0].mxu0
    %v6313 = vadd.f32 0.0, %v6312
    %v6314 = vpop.f32.mrb[0].mxu0
    %6315 = vmatprep.mubr.f32.mxu0 0.0
    %6316 = vmatmul.mubr.f32.gmra.mrb[0].mxu0 %v6244
    %v6317 = vpop.f32.mrb[0].mxu0
    %v6318 = vadd.f32 0.0, %v6317
    %v6319 = vpop.f32.mrb[0].mxu0
    %6320 = vdwg.mxu0
    %v6322 = vsel %vm5158, %v5499, 0
    %v6325 = vsel %vm5158, %v5500, 0
    %6327 = vmatprep.subr.mxu0 0.0
    %6328 = vmatpush1.msra.mxu0 %v3578
    %6329 = vmatprep.subr.mxu0 0.0
    %6330 = vmatpush1.msra.mxu0 %v3714
    %6331 = vmatprep.subr.mxu0 0.0
    %6332 = vmatpush1.msra.mxu0 0.0
    %6333 = vmatprep.subr.mxu0 0.0
    %6334 = vmatpush1.msra.mxu0 0.0
    %6335 = vmatprep.subr.mxu0 0.0
    %6336 = vmatpush1.msra.mxu0 0.0
    %6337 = vmatprep.subr.mxu0 0.0
    %6338 = vmatpush1.msra.mxu0 0.0
    %6339 = vmatprep.subr.mxu0 0.0
    %6340 = vmatpush1.msra.mxu0 0.0
    %6341 = vmatprep.subr.mxu0 0.0
    %6342 = vmatpush1.msra.mxu0 0.0
    %6343 = vmatprep.subr.mxu0 0.0
    %6344 = vmatpush1.msra.mxu0 0.0
    %6345 = vmatprep.subr.mxu0 0.0
    %6346 = vmatpush1.msra.mxu0 0.0
    %6347 = vmatprep.subr.mxu0 0.0
    %6348 = vmatpush1.msra.mxu0 0.0
    %6349 = vmatprep.subr.mxu0 0.0
    %6350 = vmatpush1.msra.mxu0 0.0
    %6351 = vmatprep.subr.mxu0 0.0
    %6352 = vmatpush1.msra.mxu0 0.0
    %6353 = vmatprep.subr.mxu0 0.0
    %6354 = vmatpush1.msra.mxu0 0.0
    %6355 = vmatprep.subr.mxu0 0.0
    %6356 = vmatpush1.msra.mxu0 0.0
    %6357 = vmatprep.subr.mxu0 0.0
    %6358 = vmatpush1.msra.mxu0 0.0
    %6359 = vmatprep.subr.mxu0 0.0
    %6360 = vmatpush1.msra.mxu0 0.0
    %6361 = vmatprep.subr.mxu0 0.0
    %6362 = vmatpush1.msra.mxu0 0.0
    %6363 = vmatprep.subr.mxu0 0.0
    %6364 = vmatpush1.msra.mxu0 0.0
    %6365 = vmatprep.subr.mxu0 0.0
    %6366 = vmatpush1.msra.mxu0 0.0
    %6367 = vmatprep.subr.mxu0 0.0
    %6368 = vmatpush1.msra.mxu0 0.0
    %6369 = vmatprep.subr.mxu0 0.0
    %6370 = vmatpush1.msra.mxu0 0.0
    %6371 = vmatprep.subr.mxu0 0.0
    %6372 = vmatpush1.msra.mxu0 0.0
    %6373 = vmatprep.subr.mxu0 0.0
    %6374 = vmatpush1.msra.mxu0 0.0
    %6375 = vmatprep.subr.mxu0 0.0
    %6376 = vmatpush1.msra.mxu0 0.0
    %6377 = vmatprep.subr.mxu0 0.0
    %6378 = vmatpush1.msra.mxu0 0.0
    %6379 = vmatprep.subr.mxu0 0.0
    %6380 = vmatpush1.msra.mxu0 0.0
    %6381 = vmatprep.subr.mxu0 0.0
    %6382 = vmatpush1.msra.mxu0 0.0
    %6383 = vmatprep.subr.mxu0 0.0
    %6384 = vmatpush1.msra.mxu0 0.0
    %6385 = vmatprep.subr.mxu0 0.0
    %6386 = vmatpush1.msra.mxu0 0.0
    %6387 = vmatprep.subr.mxu0 0.0
    %6388 = vmatpush1.msra.mxu0 0.0
    %6389 = vmatprep.subr.mxu0 0.0
    %6390 = vmatpush1.msra.mxu0 0.0
    %6391 = vmatprep.mubr.f32.mxu0 0.0
    %6392 = vmatmul.mubr.f32.gmra.mrb[0].mxu0 %v6322
    %v6393 = vpop.f32.mrb[0].mxu0
    %v6394 = vadd.f32 0.0, %v6393
    %v6395 = vpop.f32.mrb[0].mxu0
    %6396 = vmatprep.mubr.f32.mxu0 0.0
    %6397 = vmatmul.mubr.f32.gmra.mrb[0].mxu0 %v6325
    %v6398 = vpop.f32.mrb[0].mxu0
    %v6399 = vadd.f32 0.0, %v6398
    %v6400 = vpop.f32.mrb[0].mxu0
    %6401 = vdwg.mxu0
    %v6403 = vsel %vm5158, %v5501, 0
    %v6406 = vsel %vm5158, %v5502, 0
    %6408 = vmatprep.subr.mxu0 0.0
    %6409 = vmatpush1.msra.mxu0 %v3579
    %6410 = vmatprep.subr.mxu0 0.0
    %6411 = vmatpush1.msra.mxu0 %v3715
    %6412 = vmatprep.subr.mxu0 0.0
    %6413 = vmatpush1.msra.mxu0 0.0
    %6414 = vmatprep.subr.mxu0 0.0
    %6415 = vmatpush1.msra.mxu0 0.0
    %6416 = vmatprep.subr.mxu0 0.0
    %6417 = vmatpush1.msra.mxu0 0.0
    %6418 = vmatprep.subr.mxu0 0.0
    %6419 = vmatpush1.msra.mxu0 0.0
    %6420 = vmatprep.subr.mxu0 0.0
    %6421 = vmatpush1.msra.mxu0 0.0
    %6422 = vmatprep.subr.mxu0 0.0
    %6423 = vmatpush1.msra.mxu0 0.0
    %6424 = vmatprep.subr.mxu0 0.0
    %6425 = vmatpush1.msra.mxu0 0.0
    %6426 = vmatprep.subr.mxu0 0.0
    %6427 = vmatpush1.msra.mxu0 0.0
    %6428 = vmatprep.subr.mxu0 0.0
    %6429 = vmatpush1.msra.mxu0 0.0
    %6430 = vmatprep.subr.mxu0 0.0
    %6431 = vmatpush1.msra.mxu0 0.0
    %6432 = vmatprep.subr.mxu0 0.0
    %6433 = vmatpush1.msra.mxu0 0.0
    %6434 = vmatprep.subr.mxu0 0.0
    %6435 = vmatpush1.msra.mxu0 0.0
    %6436 = vmatprep.subr.mxu0 0.0
    %6437 = vmatpush1.msra.mxu0 0.0
    %6438 = vmatprep.subr.mxu0 0.0
    %6439 = vmatpush1.msra.mxu0 0.0
    %6440 = vmatprep.subr.mxu0 0.0
    %6441 = vmatpush1.msra.mxu0 0.0
    %6442 = vmatprep.subr.mxu0 0.0
    %6443 = vmatpush1.msra.mxu0 0.0
    %6444 = vmatprep.subr.mxu0 0.0
    %6445 = vmatpush1.msra.mxu0 0.0
    %6446 = vmatprep.subr.mxu0 0.0
    %6447 = vmatpush1.msra.mxu0 0.0
    %6448 = vmatprep.subr.mxu0 0.0
    %6449 = vmatpush1.msra.mxu0 0.0
    %6450 = vmatprep.subr.mxu0 0.0
    %6451 = vmatpush1.msra.mxu0 0.0
    %6452 = vmatprep.subr.mxu0 0.0
    %6453 = vmatpush1.msra.mxu0 0.0
    %6454 = vmatprep.subr.mxu0 0.0
    %6455 = vmatpush1.msra.mxu0 0.0
    %6456 = vmatprep.subr.mxu0 0.0
    %6457 = vmatpush1.msra.mxu0 0.0
    %6458 = vmatprep.subr.mxu0 0.0
    %6459 = vmatpush1.msra.mxu0 0.0
    %6460 = vmatprep.subr.mxu0 0.0
    %6461 = vmatpush1.msra.mxu0 0.0
    %6462 = vmatprep.subr.mxu0 0.0
    %6463 = vmatpush1.msra.mxu0 0.0
    %6464 = vmatprep.subr.mxu0 0.0
    %6465 = vmatpush1.msra.mxu0 0.0
    %6466 = vmatprep.subr.mxu0 0.0
    %6467 = vmatpush1.msra.mxu0 0.0
    %6468 = vmatprep.subr.mxu0 0.0
    %6469 = vmatpush1.msra.mxu0 0.0
    %6470 = vmatprep.subr.mxu0 0.0
    %6471 = vmatpush1.msra.mxu0 0.0
    %6472 = vmatprep.mubr.f32.mxu0 0.0
    %6473 = vmatmul.mubr.f32.gmra.mrb[0].mxu0 %v6403
    %v6474 = vpop.f32.mrb[0].mxu0
    %v6475 = vadd.f32 0.0, %v6474
    %v6476 = vpop.f32.mrb[0].mxu0
    %6477 = vmatprep.mubr.f32.mxu0 0.0
    %6478 = vmatmul.mubr.f32.gmra.mrb[0].mxu0 %v6406
    %v6479 = vpop.f32.mrb[0].mxu0
    %v6480 = vadd.f32 0.0, %v6479
    %v6481 = vpop.f32.mrb[0].mxu0
    %6482 = vdwg.mxu0
    %v6484 = vsel %vm5158, %v5503, 0
    %v6487 = vsel %vm5158, %v5504, 0
    %6489 = vmatprep.subr.mxu0 0.0
    %6490 = vmatpush1.msra.mxu0 %v3580
    %6491 = vmatprep.subr.mxu0 0.0
    %6492 = vmatpush1.msra.mxu0 %v3716
    %6493 = vmatprep.subr.mxu0 0.0
    %6494 = vmatpush1.msra.mxu0 0.0
    %6495 = vmatprep.subr.mxu0 0.0
    %6496 = vmatpush1.msra.mxu0 0.0
    %6497 = vmatprep.subr.mxu0 0.0
    %6498 = vmatpush1.msra.mxu0 0.0
    %6499 = vmatprep.subr.mxu0 0.0
    %6500 = vmatpush1.msra.mxu0 0.0
    %6501 = vmatprep.subr.mxu0 0.0
    %6502 = vmatpush1.msra.mxu0 0.0
    %6503 = vmatprep.subr.mxu0 0.0
    %6504 = vmatpush1.msra.mxu0 0.0
    %6505 = vmatprep.subr.mxu0 0.0
    %6506 = vmatpush1.msra.mxu0 0.0
    %6507 = vmatprep.subr.mxu0 0.0
    %6508 = vmatpush1.msra.mxu0 0.0
    %6509 = vmatprep.subr.mxu0 0.0
    %6510 = vmatpush1.msra.mxu0 0.0
    %6511 = vmatprep.subr.mxu0 0.0
    %6512 = vmatpush1.msra.mxu0 0.0
    %6513 = vmatprep.subr.mxu0 0.0
    %6514 = vmatpush1.msra.mxu0 0.0
    %6515 = vmatprep.subr.mxu0 0.0
    %6516 = vmatpush1.msra.mxu0 0.0
    %6517 = vmatprep.subr.mxu0 0.0
    %6518 = vmatpush1.msra.mxu0 0.0
    %6519 = vmatprep.subr.mxu0 0.0
    %6520 = vmatpush1.msra.mxu0 0.0
    %6521 = vmatprep.subr.mxu0 0.0
    %6522 = vmatpush1.msra.mxu0 0.0
    %6523 = vmatprep.subr.mxu0 0.0
    %6524 = vmatpush1.msra.mxu0 0.0
    %6525 = vmatprep.subr.mxu0 0.0
    %6526 = vmatpush1.msra.mxu0 0.0
    %6527 = vmatprep.subr.mxu0 0.0
    %6528 = vmatpush1.msra.mxu0 0.0
    %6529 = vmatprep.subr.mxu0 0.0
    %6530 = vmatpush1.msra.mxu0 0.0
    %6531 = vmatprep.subr.mxu0 0.0
    %6532 = vmatpush1.msra.mxu0 0.0
    %6533 = vmatprep.subr.mxu0 0.0
    %6534 = vmatpush1.msra.mxu0 0.0
    %6535 = vmatprep.subr.mxu0 0.0
    %6536 = vmatpush1.msra.mxu0 0.0
    %6537 = vmatprep.subr.mxu0 0.0
    %6538 = vmatpush1.msra.mxu0 0.0
    %6539 = vmatprep.subr.mxu0 0.0
    %6540 = vmatpush1.msra.mxu0 0.0
    %6541 = vmatprep.subr.mxu0 0.0
    %6542 = vmatpush1.msra.mxu0 0.0
    %6543 = vmatprep.subr.mxu0 0.0
    %6544 = vmatpush1.msra.mxu0 0.0
    %6545 = vmatprep.subr.mxu0 0.0
    %6546 = vmatpush1.msra.mxu0 0.0
    %6547 = vmatprep.subr.mxu0 0.0
    %6548 = vmatpush1.msra.mxu0 0.0
    %6549 = vmatprep.subr.mxu0 0.0
    %6550 = vmatpush1.msra.mxu0 0.0
    %6551 = vmatprep.subr.mxu0 0.0
    %6552 = vmatpush1.msra.mxu0 0.0
    %6553 = vmatprep.mubr.f32.mxu0 0.0
    %6554 = vmatmul.mubr.f32.gmra.mrb[0].mxu0 %v6484
    %v6555 = vpop.f32.mrb[0].mxu0
    %v6556 = vadd.f32 0.0, %v6555
    %v6557 = vpop.f32.mrb[0].mxu0
    %6558 = vmatprep.mubr.f32.mxu0 0.0
    %6559 = vmatmul.mubr.f32.gmra.mrb[0].mxu0 %v6487
    %v6560 = vpop.f32.mrb[0].mxu0
    %v6561 = vadd.f32 0.0, %v6560
    %v6562 = vpop.f32.mrb[0].mxu0
    %6563 = vdwg.mxu0
    %v6565 = vsel %vm5158, %v5505, 0
    %v6568 = vsel %vm5158, %v5506, 0
    %6570 = vmatprep.subr.mxu0 0.0
    %6571 = vmatpush1.msra.mxu0 %v3581
    %6572 = vmatprep.subr.mxu0 0.0
    %6573 = vmatpush1.msra.mxu0 %v3717
    %6574 = vmatprep.subr.mxu0 0.0
    %6575 = vmatpush1.msra.mxu0 0.0
    %6576 = vmatprep.subr.mxu0 0.0
    %6577 = vmatpush1.msra.mxu0 0.0
    %6578 = vmatprep.subr.mxu0 0.0
    %6579 = vmatpush1.msra.mxu0 0.0
    %6580 = vmatprep.subr.mxu0 0.0
    %6581 = vmatpush1.msra.mxu0 0.0
    %6582 = vmatprep.subr.mxu0 0.0
    %6583 = vmatpush1.msra.mxu0 0.0
    %6584 = vmatprep.subr.mxu0 0.0
    %6585 = vmatpush1.msra.mxu0 0.0
    %6586 = vmatprep.subr.mxu0 0.0
    %6587 = vmatpush1.msra.mxu0 0.0
    %6588 = vmatprep.subr.mxu0 0.0
    %6589 = vmatpush1.msra.mxu0 0.0
    %6590 = vmatprep.subr.mxu0 0.0
    %6591 = vmatpush1.msra.mxu0 0.0
    %6592 = vmatprep.subr.mxu0 0.0
    %6593 = vmatpush1.msra.mxu0 0.0
    %6594 = vmatprep.subr.mxu0 0.0
    %6595 = vmatpush1.msra.mxu0 0.0
    %6596 = vmatprep.subr.mxu0 0.0
    %6597 = vmatpush1.msra.mxu0 0.0
    %6598 = vmatprep.subr.mxu0 0.0
    %6599 = vmatpush1.msra.mxu0 0.0
    %6600 = vmatprep.subr.mxu0 0.0
    %6601 = vmatpush1.msra.mxu0 0.0
    %6602 = vmatprep.subr.mxu0 0.0
    %6603 = vmatpush1.msra.mxu0 0.0
    %6604 = vmatprep.subr.mxu0 0.0
    %6605 = vmatpush1.msra.mxu0 0.0
    %6606 = vmatprep.subr.mxu0 0.0
    %6607 = vmatpush1.msra.mxu0 0.0
    %6608 = vmatprep.subr.mxu0 0.0
    %6609 = vmatpush1.msra.mxu0 0.0
    %6610 = vmatprep.subr.mxu0 0.0
    %6611 = vmatpush1.msra.mxu0 0.0
    %6612 = vmatprep.subr.mxu0 0.0
    %6613 = vmatpush1.msra.mxu0 0.0
    %6614 = vmatprep.subr.mxu0 0.0
    %6615 = vmatpush1.msra.mxu0 0.0
    %6616 = vmatprep.subr.mxu0 0.0
    %6617 = vmatpush1.msra.mxu0 0.0
    %6618 = vmatprep.subr.mxu0 0.0
    %6619 = vmatpush1.msra.mxu0 0.0
    %6620 = vmatprep.subr.mxu0 0.0
    %6621 = vmatpush1.msra.mxu0 0.0
    %6622 = vmatprep.subr.mxu0 0.0
    %6623 = vmatpush1.msra.mxu0 0.0
    %6624 = vmatprep.subr.mxu0 0.0
    %6625 = vmatpush1.msra.mxu0 0.0
    %6626 = vmatprep.subr.mxu0 0.0
    %6627 = vmatpush1.msra.mxu0 0.0
    %6628 = vmatprep.subr.mxu0 0.0
    %6629 = vmatpush1.msra.mxu0 0.0
    %6630 = vmatprep.subr.mxu0 0.0
    %6631 = vmatpush1.msra.mxu0 0.0
    %6632 = vmatprep.subr.mxu0 0.0
    %6633 = vmatpush1.msra.mxu0 0.0
    %6634 = vmatprep.mubr.f32.mxu0 0.0
    %6635 = vmatmul.mubr.f32.gmra.mrb[0].mxu0 %v6565
    %v6636 = vpop.f32.mrb[0].mxu0
    %v6637 = vadd.f32 0.0, %v6636
    %v6638 = vpop.f32.mrb[0].mxu0
    %6639 = vmatprep.mubr.f32.mxu0 0.0
    %6640 = vmatmul.mubr.f32.gmra.mrb[0].mxu0 %v6568
    %v6641 = vpop.f32.mrb[0].mxu0
    %v6642 = vadd.f32 0.0, %v6641
    %v6643 = vpop.f32.mrb[0].mxu0
    %6644 = vdwg.mxu0
    %v6646 = vsel %vm5158, %v5507, 0
    %v6649 = vsel %vm5158, %v5508, 0
    %6651 = vmatprep.subr.mxu0 0.0
    %6652 = vmatpush1.msra.mxu0 %v3582
    %6653 = vmatprep.subr.mxu0 0.0
    %6654 = vmatpush1.msra.mxu0 %v3718
    %6655 = vmatprep.subr.mxu0 0.0
    %6656 = vmatpush1.msra.mxu0 0.0
    %6657 = vmatprep.subr.mxu0 0.0
    %6658 = vmatpush1.msra.mxu0 0.0
    %6659 = vmatprep.subr.mxu0 0.0
    %6660 = vmatpush1.msra.mxu0 0.0
    %6661 = vmatprep.subr.mxu0 0.0
    %6662 = vmatpush1.msra.mxu0 0.0
    %6663 = vmatprep.subr.mxu0 0.0
    %6664 = vmatpush1.msra.mxu0 0.0
    %6665 = vmatprep.subr.mxu0 0.0
    %6666 = vmatpush1.msra.mxu0 0.0
    %6667 = vmatprep.subr.mxu0 0.0
    %6668 = vmatpush1.msra.mxu0 0.0
    %6669 = vmatprep.subr.mxu0 0.0
    %6670 = vmatpush1.msra.mxu0 0.0
    %6671 = vmatprep.subr.mxu0 0.0
    %6672 = vmatpush1.msra.mxu0 0.0
    %6673 = vmatprep.subr.mxu0 0.0
    %6674 = vmatpush1.msra.mxu0 0.0
    %6675 = vmatprep.subr.mxu0 0.0
    %6676 = vmatpush1.msra.mxu0 0.0
    %6677 = vmatprep.subr.mxu0 0.0
    %6678 = vmatpush1.msra.mxu0 0.0
    %6679 = vmatprep.subr.mxu0 0.0
    %6680 = vmatpush1.msra.mxu0 0.0
    %6681 = vmatprep.subr.mxu0 0.0
    %6682 = vmatpush1.msra.mxu0 0.0
    %6683 = vmatprep.subr.mxu0 0.0
    %6684 = vmatpush1.msra.mxu0 0.0
    %6685 = vmatprep.subr.mxu0 0.0
    %6686 = vmatpush1.msra.mxu0 0.0
    %6687 = vmatprep.subr.mxu0 0.0
    %6688 = vmatpush1.msra.mxu0 0.0
    %6689 = vmatprep.subr.mxu0 0.0
    %6690 = vmatpush1.msra.mxu0 0.0
    %6691 = vmatprep.subr.mxu0 0.0
    %6692 = vmatpush1.msra.mxu0 0.0
    %6693 = vmatprep.subr.mxu0 0.0
    %6694 = vmatpush1.msra.mxu0 0.0
    %6695 = vmatprep.subr.mxu0 0.0
    %6696 = vmatpush1.msra.mxu0 0.0
    %6697 = vmatprep.subr.mxu0 0.0
    %6698 = vmatpush1.msra.mxu0 0.0
    %6699 = vmatprep.subr.mxu0 0.0
    %6700 = vmatpush1.msra.mxu0 0.0
    %6701 = vmatprep.subr.mxu0 0.0
    %6702 = vmatpush1.msra.mxu0 0.0
    %6703 = vmatprep.subr.mxu0 0.0
    %6704 = vmatpush1.msra.mxu0 0.0
    %6705 = vmatprep.subr.mxu0 0.0
    %6706 = vmatpush1.msra.mxu0 0.0
    %6707 = vmatprep.subr.mxu0 0.0
    %6708 = vmatpush1.msra.mxu0 0.0
    %6709 = vmatprep.subr.mxu0 0.0
    %6710 = vmatpush1.msra.mxu0 0.0
    %6711 = vmatprep.subr.mxu0 0.0
    %6712 = vmatpush1.msra.mxu0 0.0
    %6713 = vmatprep.subr.mxu0 0.0
    %6714 = vmatpush1.msra.mxu0 0.0
    %6715 = vmatprep.mubr.f32.mxu0 0.0
    %6716 = vmatmul.mubr.f32.gmra.mrb[0].mxu0 %v6646
    %v6717 = vpop.f32.mrb[0].mxu0
    %v6718 = vadd.f32 0.0, %v6717
    %v6719 = vpop.f32.mrb[0].mxu0
    %6720 = vmatprep.mubr.f32.mxu0 0.0
    %6721 = vmatmul.mubr.f32.gmra.mrb[0].mxu0 %v6649
    %v6722 = vpop.f32.mrb[0].mxu0
    %v6723 = vadd.f32 0.0, %v6722
    %v6724 = vpop.f32.mrb[0].mxu0
    %6725 = vdwg.mxu0
    %v6727 = vsel %vm5158, %v5509, 0
    %v6730 = vsel %vm5158, %v5510, 0
    %6732 = vmatprep.subr.mxu0 0.0
    %6733 = vmatpush1.msra.mxu0 %v3583
    %6734 = vmatprep.subr.mxu0 0.0
    %6735 = vmatpush1.msra.mxu0 %v3719
    %6736 = vmatprep.subr.mxu0 0.0
    %6737 = vmatpush1.msra.mxu0 0.0
    %6738 = vmatprep.subr.mxu0 0.0
    %6739 = vmatpush1.msra.mxu0 0.0
    %6740 = vmatprep.subr.mxu0 0.0
    %6741 = vmatpush1.msra.mxu0 0.0
    %6742 = vmatprep.subr.mxu0 0.0
    %6743 = vmatpush1.msra.mxu0 0.0
    %6744 = vmatprep.subr.mxu0 0.0
    %6745 = vmatpush1.msra.mxu0 0.0
    %6746 = vmatprep.subr.mxu0 0.0
    %6747 = vmatpush1.msra.mxu0 0.0
    %6748 = vmatprep.subr.mxu0 0.0
    %6749 = vmatpush1.msra.mxu0 0.0
    %6750 = vmatprep.subr.mxu0 0.0
    %6751 = vmatpush1.msra.mxu0 0.0
    %6752 = vmatprep.subr.mxu0 0.0
    %6753 = vmatpush1.msra.mxu0 0.0
    %6754 = vmatprep.subr.mxu0 0.0
    %6755 = vmatpush1.msra.mxu0 0.0
    %6756 = vmatprep.subr.mxu0 0.0
    %6757 = vmatpush1.msra.mxu0 0.0
    %6758 = vmatprep.subr.mxu0 0.0
    %6759 = vmatpush1.msra.mxu0 0.0
    %6760 = vmatprep.subr.mxu0 0.0
    %6761 = vmatpush1.msra.mxu0 0.0
    %6762 = vmatprep.subr.mxu0 0.0
    %6763 = vmatpush1.msra.mxu0 0.0
    %6764 = vmatprep.subr.mxu0 0.0
    %6765 = vmatpush1.msra.mxu0 0.0
    %6766 = vmatprep.subr.mxu0 0.0
    %6767 = vmatpush1.msra.mxu0 0.0
    %6768 = vmatprep.subr.mxu0 0.0
    %6769 = vmatpush1.msra.mxu0 0.0
    %6770 = vmatprep.subr.mxu0 0.0
    %6771 = vmatpush1.msra.mxu0 0.0
    %6772 = vmatprep.subr.mxu0 0.0
    %6773 = vmatpush1.msra.mxu0 0.0
    %6774 = vmatprep.subr.mxu0 0.0
    %6775 = vmatpush1.msra.mxu0 0.0
    %6776 = vmatprep.subr.mxu0 0.0
    %6777 = vmatpush1.msra.mxu0 0.0
    %6778 = vmatprep.subr.mxu0 0.0
    %6779 = vmatpush1.msra.mxu0 0.0
    %6780 = vmatprep.subr.mxu0 0.0
    %6781 = vmatpush1.msra.mxu0 0.0
    %6782 = vmatprep.subr.mxu0 0.0
    %6783 = vmatpush1.msra.mxu0 0.0
    %6784 = vmatprep.subr.mxu0 0.0
    %6785 = vmatpush1.msra.mxu0 0.0
    %6786 = vmatprep.subr.mxu0 0.0
    %6787 = vmatpush1.msra.mxu0 0.0
    %6788 = vmatprep.subr.mxu0 0.0
    %6789 = vmatpush1.msra.mxu0 0.0
    %6790 = vmatprep.subr.mxu0 0.0
    %6791 = vmatpush1.msra.mxu0 0.0
    %6792 = vmatprep.subr.mxu0 0.0
    %6793 = vmatpush1.msra.mxu0 0.0
    %6794 = vmatprep.subr.mxu0 0.0
    %6795 = vmatpush1.msra.mxu0 0.0
    %6796 = vmatprep.mubr.f32.mxu0 0.0
    %6797 = vmatmul.mubr.f32.gmra.mrb[0].mxu0 %v6727
    %v6798 = vpop.f32.mrb[0].mxu0
    %v6799 = vadd.f32 0.0, %v6798
    %v6800 = vpop.f32.mrb[0].mxu0
    %6801 = vmatprep.mubr.f32.mxu0 0.0
    %6802 = vmatmul.mubr.f32.gmra.mrb[0].mxu0 %v6730
    %v6803 = vpop.f32.mrb[0].mxu0
    %v6804 = vadd.f32 0.0, %v6803
    %v6805 = vpop.f32.mrb[0].mxu0
    %6806 = vdwg.mxu0
    %v6807 = vcombine.low %v5584, %v5746
    %v6808 = vcombine.high %v5584, %v5746
    %v6810 = vunpack.c.l.s4 1983009808
    %v6811 = vunpack.c.0.s8 %v6810
    %v6812 = vlaneseq
    %v6813 = vshrl.u32 %v6812, 7
    %v6814 = vsub.s32 %v6811, %v6813
    %v6815 = vrot.slane %v6807, %v6814
    %v6817 = vunpack.c.l.s4 1983009808
    %v6818 = vunpack.c.0.s8 %v6817
    %v6819 = vlaneseq
    %v6820 = vshrl.u32 %v6819, 7
    %v6821 = vsub.s32 %v6818, %v6820
    %v6822 = vrot.slane %v6808, %v6821
    %v6823 = vcombine.low %v5665, %v5827
    %v6824 = vcombine.high %v5665, %v5827
    %v6826 = vunpack.c.l.s4 1983009808
    %v6827 = vunpack.c.0.s8 %v6826
    %v6828 = vlaneseq
    %v6829 = vshrl.u32 %v6828, 7
    %v6830 = vsub.s32 %v6827, %v6829
    %v6831 = vrot.slane %v6823, %v6830
    %v6833 = vunpack.c.l.s4 1983009808
    %v6834 = vunpack.c.0.s8 %v6833
    %v6835 = vlaneseq
    %v6836 = vshrl.u32 %v6835, 7
    %v6837 = vsub.s32 %v6834, %v6836
    %v6838 = vrot.slane %v6824, %v6837
    %v6839 = vcombine.low %v5908, %v6070
    %v6840 = vcombine.high %v5908, %v6070
    %v6842 = vunpack.c.l.s4 1983009808
    %v6843 = vunpack.c.0.s8 %v6842
    %v6844 = vlaneseq
    %v6845 = vshrl.u32 %v6844, 7
    %v6846 = vsub.s32 %v6843, %v6845
    %v6847 = vrot.slane %v6839, %v6846
    %v6849 = vunpack.c.l.s4 1983009808
    %v6850 = vunpack.c.0.s8 %v6849
    %v6851 = vlaneseq
    %v6852 = vshrl.u32 %v6851, 7
    %v6853 = vsub.s32 %v6850, %v6852
    %v6854 = vrot.slane %v6840, %v6853
    %v6855 = vcombine.low %v5989, %v6151
    %v6856 = vcombine.high %v5989, %v6151
    %v6858 = vunpack.c.l.s4 1983009808
    %v6859 = vunpack.c.0.s8 %v6858
    %v6860 = vlaneseq
    %v6861 = vshrl.u32 %v6860, 7
    %v6862 = vsub.s32 %v6859, %v6861
    %v6863 = vrot.slane %v6855, %v6862
    %v6865 = vunpack.c.l.s4 1983009808
    %v6866 = vunpack.c.0.s8 %v6865
    %v6867 = vlaneseq
    %v6868 = vshrl.u32 %v6867, 7
    %v6869 = vsub.s32 %v6866, %v6868
    %v6870 = vrot.slane %v6856, %v6869
    %v6871 = vcombine.low %v6815, %v6831
    %v6872 = vcombine.high %v6815, %v6831
    %v6874 = vunpack.c.l.s4 1934713408
    %v6875 = vunpack.c.0.s8 %v6874
    %v6876 = vlaneseq
    %v6877 = vshrl.u32 %v6876, 7
    %v6878 = vsub.s32 %v6875, %v6877
    %v6879 = vrot.slane %v6871, %v6878
    %v6881 = vunpack.c.l.s4 1934713408
    %v6882 = vunpack.c.0.s8 %v6881
    %v6883 = vlaneseq
    %v6884 = vshrl.u32 %v6883, 7
    %v6885 = vsub.s32 %v6882, %v6884
    %v6886 = vrot.slane %v6872, %v6885
    %v6887 = vcombine.low %v6822, %v6838
    %v6888 = vcombine.high %v6822, %v6838
    %v6890 = vunpack.c.l.s4 1934713408
    %v6891 = vunpack.c.0.s8 %v6890
    %v6892 = vlaneseq
    %v6893 = vshrl.u32 %v6892, 7
    %v6894 = vsub.s32 %v6891, %v6893
    %v6895 = vrot.slane %v6887, %v6894
    %v6897 = vunpack.c.l.s4 1934713408
    %v6898 = vunpack.c.0.s8 %v6897
    %v6899 = vlaneseq
    %v6900 = vshrl.u32 %v6899, 7
    %v6901 = vsub.s32 %v6898, %v6900
    %v6902 = vrot.slane %v6888, %v6901
    %v6903 = vcombine.low %v6847, %v6863
    %v6904 = vcombine.high %v6847, %v6863
    %v6906 = vunpack.c.l.s4 1934713408
    %v6907 = vunpack.c.0.s8 %v6906
    %v6908 = vlaneseq
    %v6909 = vshrl.u32 %v6908, 7
    %v6910 = vsub.s32 %v6907, %v6909
    %v6911 = vrot.slane %v6903, %v6910
    %v6913 = vunpack.c.l.s4 1934713408
    %v6914 = vunpack.c.0.s8 %v6913
    %v6915 = vlaneseq
    %v6916 = vshrl.u32 %v6915, 7
    %v6917 = vsub.s32 %v6914, %v6916
    %v6918 = vrot.slane %v6904, %v6917
    %v6919 = vcombine.low %v6854, %v6870
    %v6920 = vcombine.high %v6854, %v6870
    %v6922 = vunpack.c.l.s4 1934713408
    %v6923 = vunpack.c.0.s8 %v6922
    %v6924 = vlaneseq
    %v6925 = vshrl.u32 %v6924, 7
    %v6926 = vsub.s32 %v6923, %v6925
    %v6927 = vrot.slane %v6919, %v6926
    %v6929 = vunpack.c.l.s4 1934713408
    %v6930 = vunpack.c.0.s8 %v6929
    %v6931 = vlaneseq
    %v6932 = vshrl.u32 %v6931, 7
    %v6933 = vsub.s32 %v6930, %v6932
    %v6934 = vrot.slane %v6920, %v6933
    %v6935 = vcombine.low %v6879, %v6911
    %v6936 = vcombine.high %v6879, %v6911
    %v6937 = vcombine.low %v6886, %v6918
    %v6938 = vcombine.high %v6886, %v6918
    %v6939 = vcombine.low %v6895, %v6927
    %v6940 = vcombine.high %v6895, %v6927
    %v6941 = vcombine.low %v6902, %v6934
    %v6942 = vcombine.high %v6902, %v6934
    %v6943 = vcombine.low %v6232, %v6394
    %v6944 = vcombine.high %v6232, %v6394
    %v6946 = vunpack.c.l.s4 1983009808
    %v6947 = vunpack.c.0.s8 %v6946
    %v6948 = vlaneseq
    %v6949 = vshrl.u32 %v6948, 7
    %v6950 = vsub.s32 %v6947, %v6949
    %v6951 = vrot.slane %v6943, %v6950
    %v6953 = vunpack.c.l.s4 1983009808
    %v6954 = vunpack.c.0.s8 %v6953
    %v6955 = vlaneseq
    %v6956 = vshrl.u32 %v6955, 7
    %v6957 = vsub.s32 %v6954, %v6956
    %v6958 = vrot.slane %v6944, %v6957
    %v6959 = vcombine.low %v6313, %v6475
    %v6960 = vcombine.high %v6313, %v6475
    %v6962 = vunpack.c.l.s4 1983009808
    %v6963 = vunpack.c.0.s8 %v6962
    %v6964 = vlaneseq
    %v6965 = vshrl.u32 %v6964, 7
    %v6966 = vsub.s32 %v6963, %v6965
    %v6967 = vrot.slane %v6959, %v6966
    %v6969 = vunpack.c.l.s4 1983009808
    %v6970 = vunpack.c.0.s8 %v6969
    %v6971 = vlaneseq
    %v6972 = vshrl.u32 %v6971, 7
    %v6973 = vsub.s32 %v6970, %v6972
    %v6974 = vrot.slane %v6960, %v6973
    %v6975 = vcombine.low %v6556, %v6718
    %v6976 = vcombine.high %v6556, %v6718
    %v6978 = vunpack.c.l.s4 1983009808
    %v6979 = vunpack.c.0.s8 %v6978
    %v6980 = vlaneseq
    %v6981 = vshrl.u32 %v6980, 7
    %v6982 = vsub.s32 %v6979, %v6981
    %v6983 = vrot.slane %v6975, %v6982
    %v6985 = vunpack.c.l.s4 1983009808
    %v6986 = vunpack.c.0.s8 %v6985
    %v6987 = vlaneseq
    %v6988 = vshrl.u32 %v6987, 7
    %v6989 = vsub.s32 %v6986, %v6988
    %v6990 = vrot.slane %v6976, %v6989
    %v6991 = vcombine.low %v6637, %v6799
    %v6992 = vcombine.high %v6637, %v6799
    %v6994 = vunpack.c.l.s4 1983009808
    %v6995 = vunpack.c.0.s8 %v6994
    %v6996 = vlaneseq
    %v6997 = vshrl.u32 %v6996, 7
    %v6998 = vsub.s32 %v6995, %v6997
    %v6999 = vrot.slane %v6991, %v6998
    %v7001 = vunpack.c.l.s4 1983009808
    %v7002 = vunpack.c.0.s8 %v7001
    %v7003 = vlaneseq
    %v7004 = vshrl.u32 %v7003, 7
    %v7005 = vsub.s32 %v7002, %v7004
    %v7006 = vrot.slane %v6992, %v7005
    %v7007 = vcombine.low %v6951, %v6967
    %v7008 = vcombine.high %v6951, %v6967
    %v7010 = vunpack.c.l.s4 1934713408
    %v7011 = vunpack.c.0.s8 %v7010
    %v7012 = vlaneseq
    %v7013 = vshrl.u32 %v7012, 7
    %v7014 = vsub.s32 %v7011, %v7013
    %v7015 = vrot.slane %v7007, %v7014
    %v7017 = vunpack.c.l.s4 1934713408
    %v7018 = vunpack.c.0.s8 %v7017
    %v7019 = vlaneseq
    %v7020 = vshrl.u32 %v7019, 7
    %v7021 = vsub.s32 %v7018, %v7020
    %v7022 = vrot.slane %v7008, %v7021
    %v7023 = vcombine.low %v6958, %v6974
    %v7024 = vcombine.high %v6958, %v6974
    %v7026 = vunpack.c.l.s4 1934713408
    %v7027 = vunpack.c.0.s8 %v7026
    %v7028 = vlaneseq
    %v7029 = vshrl.u32 %v7028, 7
    %v7030 = vsub.s32 %v7027, %v7029
    %v7031 = vrot.slane %v7023, %v7030
    %v7033 = vunpack.c.l.s4 1934713408
    %v7034 = vunpack.c.0.s8 %v7033
    %v7035 = vlaneseq
    %v7036 = vshrl.u32 %v7035, 7
    %v7037 = vsub.s32 %v7034, %v7036
    %v7038 = vrot.slane %v7024, %v7037
    %v7039 = vcombine.low %v6983, %v6999
    %v7040 = vcombine.high %v6983, %v6999
    %v7042 = vunpack.c.l.s4 1934713408
    %v7043 = vunpack.c.0.s8 %v7042
    %v7044 = vlaneseq
    %v7045 = vshrl.u32 %v7044, 7
    %v7046 = vsub.s32 %v7043, %v7045
    %v7047 = vrot.slane %v7039, %v7046
    %v7049 = vunpack.c.l.s4 1934713408
    %v7050 = vunpack.c.0.s8 %v7049
    %v7051 = vlaneseq
    %v7052 = vshrl.u32 %v7051, 7
    %v7053 = vsub.s32 %v7050, %v7052
    %v7054 = vrot.slane %v7040, %v7053
    %v7055 = vcombine.low %v6990, %v7006
    %v7056 = vcombine.high %v6990, %v7006
    %v7058 = vunpack.c.l.s4 1934713408
    %v7059 = vunpack.c.0.s8 %v7058
    %v7060 = vlaneseq
    %v7061 = vshrl.u32 %v7060, 7
    %v7062 = vsub.s32 %v7059, %v7061
    %v7063 = vrot.slane %v7055, %v7062
    %v7065 = vunpack.c.l.s4 1934713408
    %v7066 = vunpack.c.0.s8 %v7065
    %v7067 = vlaneseq
    %v7068 = vshrl.u32 %v7067, 7
    %v7069 = vsub.s32 %v7066, %v7068
    %v7070 = vrot.slane %v7056, %v7069
    %v7071 = vcombine.low %v7015, %v7047
    %v7072 = vcombine.high %v7015, %v7047
    %v7073 = vcombine.low %v7022, %v7054
    %v7074 = vcombine.high %v7022, %v7054
    %v7075 = vcombine.low %v7031, %v7063
    %v7076 = vcombine.high %v7031, %v7063
    %v7077 = vcombine.low %v7038, %v7070
    %v7078 = vcombine.high %v7038, %v7070
    %v7079 = vcombine.low %v5589, %v5751
    %v7080 = vcombine.high %v5589, %v5751
    %v7082 = vunpack.c.l.s4 1983009808
    %v7083 = vunpack.c.0.s8 %v7082
    %v7084 = vlaneseq
    %v7085 = vshrl.u32 %v7084, 7
    %v7086 = vsub.s32 %v7083, %v7085
    %v7087 = vrot.slane %v7079, %v7086
    %v7089 = vunpack.c.l.s4 1983009808
    %v7090 = vunpack.c.0.s8 %v7089
    %v7091 = vlaneseq
    %v7092 = vshrl.u32 %v7091, 7
    %v7093 = vsub.s32 %v7090, %v7092
    %v7094 = vrot.slane %v7080, %v7093
    %v7095 = vcombine.low %v5670, %v5832
    %v7096 = vcombine.high %v5670, %v5832
    %v7098 = vunpack.c.l.s4 1983009808
    %v7099 = vunpack.c.0.s8 %v7098
    %v7100 = vlaneseq
    %v7101 = vshrl.u32 %v7100, 7
    %v7102 = vsub.s32 %v7099, %v7101
    %v7103 = vrot.slane %v7095, %v7102
    %v7105 = vunpack.c.l.s4 1983009808
    %v7106 = vunpack.c.0.s8 %v7105
    %v7107 = vlaneseq
    %v7108 = vshrl.u32 %v7107, 7
    %v7109 = vsub.s32 %v7106, %v7108
    %v7110 = vrot.slane %v7096, %v7109
    %v7111 = vcombine.low %v5913, %v6075
    %v7112 = vcombine.high %v5913, %v6075
    %v7114 = vunpack.c.l.s4 1983009808
    %v7115 = vunpack.c.0.s8 %v7114
    %v7116 = vlaneseq
    %v7117 = vshrl.u32 %v7116, 7
    %v7118 = vsub.s32 %v7115, %v7117
    %v7119 = vrot.slane %v7111, %v7118
    %v7121 = vunpack.c.l.s4 1983009808
    %v7122 = vunpack.c.0.s8 %v7121
    %v7123 = vlaneseq
    %v7124 = vshrl.u32 %v7123, 7
    %v7125 = vsub.s32 %v7122, %v7124
    %v7126 = vrot.slane %v7112, %v7125
    %v7127 = vcombine.low %v5994, %v6156
    %v7128 = vcombine.high %v5994, %v6156
    %v7130 = vunpack.c.l.s4 1983009808
    %v7131 = vunpack.c.0.s8 %v7130
    %v7132 = vlaneseq
    %v7133 = vshrl.u32 %v7132, 7
    %v7134 = vsub.s32 %v7131, %v7133
    %v7135 = vrot.slane %v7127, %v7134
    %v7137 = vunpack.c.l.s4 1983009808
    %v7138 = vunpack.c.0.s8 %v7137
    %v7139 = vlaneseq
    %v7140 = vshrl.u32 %v7139, 7
    %v7141 = vsub.s32 %v7138, %v7140
    %v7142 = vrot.slane %v7128, %v7141
    %v7143 = vcombine.low %v7087, %v7103
    %v7144 = vcombine.high %v7087, %v7103
    %v7146 = vunpack.c.l.s4 1934713408
    %v7147 = vunpack.c.0.s8 %v7146
    %v7148 = vlaneseq
    %v7149 = vshrl.u32 %v7148, 7
    %v7150 = vsub.s32 %v7147, %v7149
    %v7151 = vrot.slane %v7143, %v7150
    %v7153 = vunpack.c.l.s4 1934713408
    %v7154 = vunpack.c.0.s8 %v7153
    %v7155 = vlaneseq
    %v7156 = vshrl.u32 %v7155, 7
    %v7157 = vsub.s32 %v7154, %v7156
    %v7158 = vrot.slane %v7144, %v7157
    %v7159 = vcombine.low %v7094, %v7110
    %v7160 = vcombine.high %v7094, %v7110
    %v7162 = vunpack.c.l.s4 1934713408
    %v7163 = vunpack.c.0.s8 %v7162
    %v7164 = vlaneseq
    %v7165 = vshrl.u32 %v7164, 7
    %v7166 = vsub.s32 %v7163, %v7165
    %v7167 = vrot.slane %v7159, %v7166
    %v7169 = vunpack.c.l.s4 1934713408
    %v7170 = vunpack.c.0.s8 %v7169
    %v7171 = vlaneseq
    %v7172 = vshrl.u32 %v7171, 7
    %v7173 = vsub.s32 %v7170, %v7172
    %v7174 = vrot.slane %v7160, %v7173
    %v7175 = vcombine.low %v7119, %v7135
    %v7176 = vcombine.high %v7119, %v7135
    %v7178 = vunpack.c.l.s4 1934713408
    %v7179 = vunpack.c.0.s8 %v7178
    %v7180 = vlaneseq
    %v7181 = vshrl.u32 %v7180, 7
    %v7182 = vsub.s32 %v7179, %v7181
    %v7183 = vrot.slane %v7175, %v7182
    %v7185 = vunpack.c.l.s4 1934713408
    %v7186 = vunpack.c.0.s8 %v7185
    %v7187 = vlaneseq
    %v7188 = vshrl.u32 %v7187, 7
    %v7189 = vsub.s32 %v7186, %v7188
    %v7190 = vrot.slane %v7176, %v7189
    %v7191 = vcombine.low %v7126, %v7142
    %v7192 = vcombine.high %v7126, %v7142
    %v7194 = vunpack.c.l.s4 1934713408
    %v7195 = vunpack.c.0.s8 %v7194
    %v7196 = vlaneseq
    %v7197 = vshrl.u32 %v7196, 7
    %v7198 = vsub.s32 %v7195, %v7197
    %v7199 = vrot.slane %v7191, %v7198
    %v7201 = vunpack.c.l.s4 1934713408
    %v7202 = vunpack.c.0.s8 %v7201
    %v7203 = vlaneseq
    %v7204 = vshrl.u32 %v7203, 7
    %v7205 = vsub.s32 %v7202, %v7204
    %v7206 = vrot.slane %v7192, %v7205
    %v7207 = vcombine.low %v7151, %v7183
    %v7208 = vcombine.high %v7151, %v7183
    %v7209 = vcombine.low %v7158, %v7190
    %v7210 = vcombine.high %v7158, %v7190
    %v7211 = vcombine.low %v7167, %v7199
    %v7212 = vcombine.high %v7167, %v7199
    %v7213 = vcombine.low %v7174, %v7206
    %v7214 = vcombine.high %v7174, %v7206
    %v7215 = vcombine.low %v6237, %v6399
    %v7216 = vcombine.high %v6237, %v6399
    %v7218 = vunpack.c.l.s4 1983009808
    %v7219 = vunpack.c.0.s8 %v7218
    %v7220 = vlaneseq
    %v7221 = vshrl.u32 %v7220, 7
    %v7222 = vsub.s32 %v7219, %v7221
    %v7223 = vrot.slane %v7215, %v7222
    %v7225 = vunpack.c.l.s4 1983009808
    %v7226 = vunpack.c.0.s8 %v7225
    %v7227 = vlaneseq
    %v7228 = vshrl.u32 %v7227, 7
    %v7229 = vsub.s32 %v7226, %v7228
    %v7230 = vrot.slane %v7216, %v7229
    %v7231 = vcombine.low %v6318, %v6480
    %v7232 = vcombine.high %v6318, %v6480
    %v7234 = vunpack.c.l.s4 1983009808
    %v7235 = vunpack.c.0.s8 %v7234
    %v7236 = vlaneseq
    %v7237 = vshrl.u32 %v7236, 7
    %v7238 = vsub.s32 %v7235, %v7237
    %v7239 = vrot.slane %v7231, %v7238
    %v7241 = vunpack.c.l.s4 1983009808
    %v7242 = vunpack.c.0.s8 %v7241
    %v7243 = vlaneseq
    %v7244 = vshrl.u32 %v7243, 7
    %v7245 = vsub.s32 %v7242, %v7244
    %v7246 = vrot.slane %v7232, %v7245
    %v7247 = vcombine.low %v6561, %v6723
    %v7248 = vcombine.high %v6561, %v6723
    %v7250 = vunpack.c.l.s4 1983009808
    %v7251 = vunpack.c.0.s8 %v7250
    %v7252 = vlaneseq
    %v7253 = vshrl.u32 %v7252, 7
    %v7254 = vsub.s32 %v7251, %v7253
    %v7255 = vrot.slane %v7247, %v7254
    %v7257 = vunpack.c.l.s4 1983009808
    %v7258 = vunpack.c.0.s8 %v7257
    %v7259 = vlaneseq
    %v7260 = vshrl.u32 %v7259, 7
    %v7261 = vsub.s32 %v7258, %v7260
    %v7262 = vrot.slane %v7248, %v7261
    %v7263 = vcombine.low %v6642, %v6804
    %v7264 = vcombine.high %v6642, %v6804
    %v7266 = vunpack.c.l.s4 1983009808
    %v7267 = vunpack.c.0.s8 %v7266
    %v7268 = vlaneseq
    %v7269 = vshrl.u32 %v7268, 7
    %v7270 = vsub.s32 %v7267, %v7269
    %v7271 = vrot.slane %v7263, %v7270
    %v7273 = vunpack.c.l.s4 1983009808
    %v7274 = vunpack.c.0.s8 %v7273
    %v7275 = vlaneseq
    %v7276 = vshrl.u32 %v7275, 7
    %v7277 = vsub.s32 %v7274, %v7276
    %v7278 = vrot.slane %v7264, %v7277
    %v7279 = vcombine.low %v7223, %v7239
    %v7280 = vcombine.high %v7223, %v7239
    %v7282 = vunpack.c.l.s4 1934713408
    %v7283 = vunpack.c.0.s8 %v7282
    %v7284 = vlaneseq
    %v7285 = vshrl.u32 %v7284, 7
    %v7286 = vsub.s32 %v7283, %v7285
    %v7287 = vrot.slane %v7279, %v7286
    %v7289 = vunpack.c.l.s4 1934713408
    %v7290 = vunpack.c.0.s8 %v7289
    %v7291 = vlaneseq
    %v7292 = vshrl.u32 %v7291, 7
    %v7293 = vsub.s32 %v7290, %v7292
    %v7294 = vrot.slane %v7280, %v7293
    %v7295 = vcombine.low %v7230, %v7246
    %v7296 = vcombine.high %v7230, %v7246
    %v7298 = vunpack.c.l.s4 1934713408
    %v7299 = vunpack.c.0.s8 %v7298
    %v7300 = vlaneseq
    %v7301 = vshrl.u32 %v7300, 7
    %v7302 = vsub.s32 %v7299, %v7301
    %v7303 = vrot.slane %v7295, %v7302
    %v7305 = vunpack.c.l.s4 1934713408
    %v7306 = vunpack.c.0.s8 %v7305
    %v7307 = vlaneseq
    %v7308 = vshrl.u32 %v7307, 7
    %v7309 = vsub.s32 %v7306, %v7308
    %v7310 = vrot.slane %v7296, %v7309
    %v7311 = vcombine.low %v7255, %v7271
    %v7312 = vcombine.high %v7255, %v7271
    %v7314 = vunpack.c.l.s4 1934713408
    %v7315 = vunpack.c.0.s8 %v7314
    %v7316 = vlaneseq
    %v7317 = vshrl.u32 %v7316, 7
    %v7318 = vsub.s32 %v7315, %v7317
    %v7319 = vrot.slane %v7311, %v7318
    %v7321 = vunpack.c.l.s4 1934713408
    %v7322 = vunpack.c.0.s8 %v7321
    %v7323 = vlaneseq
    %v7324 = vshrl.u32 %v7323, 7
    %v7325 = vsub.s32 %v7322, %v7324
    %v7326 = vrot.slane %v7312, %v7325
    %v7327 = vcombine.low %v7262, %v7278
    %v7328 = vcombine.high %v7262, %v7278
    %v7330 = vunpack.c.l.s4 1934713408
    %v7331 = vunpack.c.0.s8 %v7330
    %v7332 = vlaneseq
    %v7333 = vshrl.u32 %v7332, 7
    %v7334 = vsub.s32 %v7331, %v7333
    %v7335 = vrot.slane %v7327, %v7334
    %v7337 = vunpack.c.l.s4 1934713408
    %v7338 = vunpack.c.0.s8 %v7337
    %v7339 = vlaneseq
    %v7340 = vshrl.u32 %v7339, 7
    %v7341 = vsub.s32 %v7338, %v7340
    %v7342 = vrot.slane %v7328, %v7341
    %v7343 = vcombine.low %v7287, %v7319
    %v7344 = vcombine.high %v7287, %v7319
    %v7345 = vcombine.low %v7294, %v7326
    %v7346 = vcombine.high %v7294, %v7326
    %v7347 = vcombine.low %v7303, %v7335
    %v7348 = vcombine.high %v7303, %v7335
    %v7349 = vcombine.low %v7310, %v7342
    %v7350 = vcombine.high %v7310, %v7342
    %v7351 = vcombine.low %v6935, %v6937
    %v7352 = vcombine.high %v6935, %v6937
    %v7354 = vunpack.c.l.s4 1983009808
    %v7355 = vunpack.c.0.s8 %v7354
    %v7356 = vlaneseq
    %v7357 = vshrl.u32 %v7356, 7
    %v7358 = vsub.s32 %v7355, %v7357
    %v7359 = vrot.slane %v7351, %v7358
    %v7361 = vunpack.c.l.s4 1983009808
    %v7362 = vunpack.c.0.s8 %v7361
    %v7363 = vlaneseq
    %v7364 = vshrl.u32 %v7363, 7
    %v7365 = vsub.s32 %v7362, %v7364
    %v7366 = vrot.slane %v7352, %v7365
    %v7367 = vcombine.low %v6936, %v6938
    %v7368 = vcombine.high %v6936, %v6938
    %v7370 = vunpack.c.l.s4 1983009808
    %v7371 = vunpack.c.0.s8 %v7370
    %v7372 = vlaneseq
    %v7373 = vshrl.u32 %v7372, 7
    %v7374 = vsub.s32 %v7371, %v7373
    %v7375 = vrot.slane %v7367, %v7374
    %v7377 = vunpack.c.l.s4 1983009808
    %v7378 = vunpack.c.0.s8 %v7377
    %v7379 = vlaneseq
    %v7380 = vshrl.u32 %v7379, 7
    %v7381 = vsub.s32 %v7378, %v7380
    %v7382 = vrot.slane %v7368, %v7381
    %v7383 = vcombine.low %v6939, %v6941
    %v7384 = vcombine.high %v6939, %v6941
    %v7386 = vunpack.c.l.s4 1983009808
    %v7387 = vunpack.c.0.s8 %v7386
    %v7388 = vlaneseq
    %v7389 = vshrl.u32 %v7388, 7
    %v7390 = vsub.s32 %v7387, %v7389
    %v7391 = vrot.slane %v7383, %v7390
    %v7393 = vunpack.c.l.s4 1983009808
    %v7394 = vunpack.c.0.s8 %v7393
    %v7395 = vlaneseq
    %v7396 = vshrl.u32 %v7395, 7
    %v7397 = vsub.s32 %v7394, %v7396
    %v7398 = vrot.slane %v7384, %v7397
    %v7399 = vcombine.low %v6940, %v6942
    %v7400 = vcombine.high %v6940, %v6942
    %v7402 = vunpack.c.l.s4 1983009808
    %v7403 = vunpack.c.0.s8 %v7402
    %v7404 = vlaneseq
    %v7405 = vshrl.u32 %v7404, 7
    %v7406 = vsub.s32 %v7403, %v7405
    %v7407 = vrot.slane %v7399, %v7406
    %v7409 = vunpack.c.l.s4 1983009808
    %v7410 = vunpack.c.0.s8 %v7409
    %v7411 = vlaneseq
    %v7412 = vshrl.u32 %v7411, 7
    %v7413 = vsub.s32 %v7410, %v7412
    %v7414 = vrot.slane %v7400, %v7413
    %v7415 = vcombine.low %v7359, %v7375
    %v7416 = vcombine.high %v7359, %v7375
    %v7418 = vunpack.c.l.s4 1934713408
    %v7419 = vunpack.c.0.s8 %v7418
    %v7420 = vlaneseq
    %v7421 = vshrl.u32 %v7420, 7
    %v7422 = vsub.s32 %v7419, %v7421
    %v7423 = vrot.slane %v7415, %v7422
    %v7425 = vunpack.c.l.s4 1934713408
    %v7426 = vunpack.c.0.s8 %v7425
    %v7427 = vlaneseq
    %v7428 = vshrl.u32 %v7427, 7
    %v7429 = vsub.s32 %v7426, %v7428
    %v7430 = vrot.slane %v7416, %v7429
    %v7431 = vcombine.low %v7366, %v7382
    %v7432 = vcombine.high %v7366, %v7382
    %v7434 = vunpack.c.l.s4 1934713408
    %v7435 = vunpack.c.0.s8 %v7434
    %v7436 = vlaneseq
    %v7437 = vshrl.u32 %v7436, 7
    %v7438 = vsub.s32 %v7435, %v7437
    %v7439 = vrot.slane %v7431, %v7438
    %v7441 = vunpack.c.l.s4 1934713408
    %v7442 = vunpack.c.0.s8 %v7441
    %v7443 = vlaneseq
    %v7444 = vshrl.u32 %v7443, 7
    %v7445 = vsub.s32 %v7442, %v7444
    %v7446 = vrot.slane %v7432, %v7445
    %v7447 = vcombine.low %v7391, %v7407
    %v7448 = vcombine.high %v7391, %v7407
    %v7450 = vunpack.c.l.s4 1934713408
    %v7451 = vunpack.c.0.s8 %v7450
    %v7452 = vlaneseq
    %v7453 = vshrl.u32 %v7452, 7
    %v7454 = vsub.s32 %v7451, %v7453
    %v7455 = vrot.slane %v7447, %v7454
    %v7457 = vunpack.c.l.s4 1934713408
    %v7458 = vunpack.c.0.s8 %v7457
    %v7459 = vlaneseq
    %v7460 = vshrl.u32 %v7459, 7
    %v7461 = vsub.s32 %v7458, %v7460
    %v7462 = vrot.slane %v7448, %v7461
    %v7463 = vcombine.low %v7398, %v7414
    %v7464 = vcombine.high %v7398, %v7414
    %v7466 = vunpack.c.l.s4 1934713408
    %v7467 = vunpack.c.0.s8 %v7466
    %v7468 = vlaneseq
    %v7469 = vshrl.u32 %v7468, 7
    %v7470 = vsub.s32 %v7467, %v7469
    %v7471 = vrot.slane %v7463, %v7470
    %v7473 = vunpack.c.l.s4 1934713408
    %v7474 = vunpack.c.0.s8 %v7473
    %v7475 = vlaneseq
    %v7476 = vshrl.u32 %v7475, 7
    %v7477 = vsub.s32 %v7474, %v7476
    %v7478 = vrot.slane %v7464, %v7477
    %v7479 = vcombine.low %v7423, %v7455
    %v7480 = vcombine.high %v7423, %v7455
    %v7481 = vcombine.low %v7430, %v7462
    %v7482 = vcombine.high %v7430, %v7462
    %v7483 = vcombine.low %v7439, %v7471
    %v7484 = vcombine.high %v7439, %v7471
    %v7485 = vcombine.low %v7446, %v7478
    %v7486 = vcombine.high %v7446, %v7478
    %v7487 = vcombine.low %v7207, %v7209
    %v7488 = vcombine.high %v7207, %v7209
    %v7490 = vunpack.c.l.s4 1983009808
    %v7491 = vunpack.c.0.s8 %v7490
    %v7492 = vlaneseq
    %v7493 = vshrl.u32 %v7492, 7
    %v7494 = vsub.s32 %v7491, %v7493
    %v7495 = vrot.slane %v7487, %v7494
    %v7497 = vunpack.c.l.s4 1983009808
    %v7498 = vunpack.c.0.s8 %v7497
    %v7499 = vlaneseq
    %v7500 = vshrl.u32 %v7499, 7
    %v7501 = vsub.s32 %v7498, %v7500
    %v7502 = vrot.slane %v7488, %v7501
    %v7503 = vcombine.low %v7208, %v7210
    %v7504 = vcombine.high %v7208, %v7210
    %v7506 = vunpack.c.l.s4 1983009808
    %v7507 = vunpack.c.0.s8 %v7506
    %v7508 = vlaneseq
    %v7509 = vshrl.u32 %v7508, 7
    %v7510 = vsub.s32 %v7507, %v7509
    %v7511 = vrot.slane %v7503, %v7510
    %v7513 = vunpack.c.l.s4 1983009808
    %v7514 = vunpack.c.0.s8 %v7513
    %v7515 = vlaneseq
    %v7516 = vshrl.u32 %v7515, 7
    %v7517 = vsub.s32 %v7514, %v7516
    %v7518 = vrot.slane %v7504, %v7517
    %v7519 = vcombine.low %v7211, %v7213
    %v7520 = vcombine.high %v7211, %v7213
    %v7522 = vunpack.c.l.s4 1983009808
    %v7523 = vunpack.c.0.s8 %v7522
    %v7524 = vlaneseq
    %v7525 = vshrl.u32 %v7524, 7
    %v7526 = vsub.s32 %v7523, %v7525
    %v7527 = vrot.slane %v7519, %v7526
    %v7529 = vunpack.c.l.s4 1983009808
    %v7530 = vunpack.c.0.s8 %v7529
    %v7531 = vlaneseq
    %v7532 = vshrl.u32 %v7531, 7
    %v7533 = vsub.s32 %v7530, %v7532
    %v7534 = vrot.slane %v7520, %v7533
    %v7535 = vcombine.low %v7212, %v7214
    %v7536 = vcombine.high %v7212, %v7214
    %v7538 = vunpack.c.l.s4 1983009808
    %v7539 = vunpack.c.0.s8 %v7538
    %v7540 = vlaneseq
    %v7541 = vshrl.u32 %v7540, 7
    %v7542 = vsub.s32 %v7539, %v7541
    %v7543 = vrot.slane %v7535, %v7542
    %v7545 = vunpack.c.l.s4 1983009808
    %v7546 = vunpack.c.0.s8 %v7545
    %v7547 = vlaneseq
    %v7548 = vshrl.u32 %v7547, 7
    %v7549 = vsub.s32 %v7546, %v7548
    %v7550 = vrot.slane %v7536, %v7549
    %v7551 = vcombine.low %v7495, %v7511
    %v7552 = vcombine.high %v7495, %v7511
    %v7554 = vunpack.c.l.s4 1934713408
    %v7555 = vunpack.c.0.s8 %v7554
    %v7556 = vlaneseq
    %v7557 = vshrl.u32 %v7556, 7
    %v7558 = vsub.s32 %v7555, %v7557
    %v7559 = vrot.slane %v7551, %v7558
    %v7561 = vunpack.c.l.s4 1934713408
    %v7562 = vunpack.c.0.s8 %v7561
    %v7563 = vlaneseq
    %v7564 = vshrl.u32 %v7563, 7
    %v7565 = vsub.s32 %v7562, %v7564
    %v7566 = vrot.slane %v7552, %v7565
    %v7567 = vcombine.low %v7502, %v7518
    %v7568 = vcombine.high %v7502, %v7518
    %v7570 = vunpack.c.l.s4 1934713408
    %v7571 = vunpack.c.0.s8 %v7570
    %v7572 = vlaneseq
    %v7573 = vshrl.u32 %v7572, 7
    %v7574 = vsub.s32 %v7571, %v7573
    %v7575 = vrot.slane %v7567, %v7574
    %v7577 = vunpack.c.l.s4 1934713408
    %v7578 = vunpack.c.0.s8 %v7577
    %v7579 = vlaneseq
    %v7580 = vshrl.u32 %v7579, 7
    %v7581 = vsub.s32 %v7578, %v7580
    %v7582 = vrot.slane %v7568, %v7581
    %v7583 = vcombine.low %v7527, %v7543
    %v7584 = vcombine.high %v7527, %v7543
    %v7586 = vunpack.c.l.s4 1934713408
    %v7587 = vunpack.c.0.s8 %v7586
    %v7588 = vlaneseq
    %v7589 = vshrl.u32 %v7588, 7
    %v7590 = vsub.s32 %v7587, %v7589
    %v7591 = vrot.slane %v7583, %v7590
    %v7593 = vunpack.c.l.s4 1934713408
    %v7594 = vunpack.c.0.s8 %v7593
    %v7595 = vlaneseq
    %v7596 = vshrl.u32 %v7595, 7
    %v7597 = vsub.s32 %v7594, %v7596
    %v7598 = vrot.slane %v7584, %v7597
    %v7599 = vcombine.low %v7534, %v7550
    %v7600 = vcombine.high %v7534, %v7550
    %v7602 = vunpack.c.l.s4 1934713408
    %v7603 = vunpack.c.0.s8 %v7602
    %v7604 = vlaneseq
    %v7605 = vshrl.u32 %v7604, 7
    %v7606 = vsub.s32 %v7603, %v7605
    %v7607 = vrot.slane %v7599, %v7606
    %v7609 = vunpack.c.l.s4 1934713408
    %v7610 = vunpack.c.0.s8 %v7609
    %v7611 = vlaneseq
    %v7612 = vshrl.u32 %v7611, 7
    %v7613 = vsub.s32 %v7610, %v7612
    %v7614 = vrot.slane %v7600, %v7613
    %v7615 = vcombine.low %v7559, %v7591
    %v7616 = vcombine.high %v7559, %v7591
    %v7617 = vcombine.low %v7566, %v7598
    %v7618 = vcombine.high %v7566, %v7598
    %v7619 = vcombine.low %v7575, %v7607
    %v7620 = vcombine.high %v7575, %v7607
    %v7621 = vcombine.low %v7582, %v7614
    %v7622 = vcombine.high %v7582, %v7614
    %v7623 = vcombine.low %v7071, %v7073
    %v7624 = vcombine.high %v7071, %v7073
    %v7626 = vunpack.c.l.s4 1983009808
    %v7627 = vunpack.c.0.s8 %v7626
    %v7628 = vlaneseq
    %v7629 = vshrl.u32 %v7628, 7
    %v7630 = vsub.s32 %v7627, %v7629
    %v7631 = vrot.slane %v7623, %v7630
    %v7633 = vunpack.c.l.s4 1983009808
    %v7634 = vunpack.c.0.s8 %v7633
    %v7635 = vlaneseq
    %v7636 = vshrl.u32 %v7635, 7
    %v7637 = vsub.s32 %v7634, %v7636
    %v7638 = vrot.slane %v7624, %v7637
    %v7639 = vcombine.low %v7072, %v7074
    %v7640 = vcombine.high %v7072, %v7074
    %v7642 = vunpack.c.l.s4 1983009808
    %v7643 = vunpack.c.0.s8 %v7642
    %v7644 = vlaneseq
    %v7645 = vshrl.u32 %v7644, 7
    %v7646 = vsub.s32 %v7643, %v7645
    %v7647 = vrot.slane %v7639, %v7646
    %v7649 = vunpack.c.l.s4 1983009808
    %v7650 = vunpack.c.0.s8 %v7649
    %v7651 = vlaneseq
    %v7652 = vshrl.u32 %v7651, 7
    %v7653 = vsub.s32 %v7650, %v7652
    %v7654 = vrot.slane %v7640, %v7653
    %v7655 = vcombine.low %v7075, %v7077
    %v7656 = vcombine.high %v7075, %v7077
    %v7658 = vunpack.c.l.s4 1983009808
    %v7659 = vunpack.c.0.s8 %v7658
    %v7660 = vlaneseq
    %v7661 = vshrl.u32 %v7660, 7
    %v7662 = vsub.s32 %v7659, %v7661
    %v7663 = vrot.slane %v7655, %v7662
    %v7665 = vunpack.c.l.s4 1983009808
    %v7666 = vunpack.c.0.s8 %v7665
    %v7667 = vlaneseq
    %v7668 = vshrl.u32 %v7667, 7
    %v7669 = vsub.s32 %v7666, %v7668
    %v7670 = vrot.slane %v7656, %v7669
    %v7671 = vcombine.low %v7076, %v7078
    %v7672 = vcombine.high %v7076, %v7078
    %v7674 = vunpack.c.l.s4 1983009808
    %v7675 = vunpack.c.0.s8 %v7674
    %v7676 = vlaneseq
    %v7677 = vshrl.u32 %v7676, 7
    %v7678 = vsub.s32 %v7675, %v7677
    %v7679 = vrot.slane %v7671, %v7678
    %v7681 = vunpack.c.l.s4 1983009808
    %v7682 = vunpack.c.0.s8 %v7681
    %v7683 = vlaneseq
    %v7684 = vshrl.u32 %v7683, 7
    %v7685 = vsub.s32 %v7682, %v7684
    %v7686 = vrot.slane %v7672, %v7685
    %v7687 = vcombine.low %v7631, %v7647
    %v7688 = vcombine.high %v7631, %v7647
    %v7690 = vunpack.c.l.s4 1934713408
    %v7691 = vunpack.c.0.s8 %v7690
    %v7692 = vlaneseq
    %v7693 = vshrl.u32 %v7692, 7
    %v7694 = vsub.s32 %v7691, %v7693
    %v7695 = vrot.slane %v7687, %v7694
    %v7697 = vunpack.c.l.s4 1934713408
    %v7698 = vunpack.c.0.s8 %v7697
    %v7699 = vlaneseq
    %v7700 = vshrl.u32 %v7699, 7
    %v7701 = vsub.s32 %v7698, %v7700
    %v7702 = vrot.slane %v7688, %v7701
    %v7703 = vcombine.low %v7638, %v7654
    %v7704 = vcombine.high %v7638, %v7654
    %v7706 = vunpack.c.l.s4 1934713408
    %v7707 = vunpack.c.0.s8 %v7706
    %v7708 = vlaneseq
    %v7709 = vshrl.u32 %v7708, 7
    %v7710 = vsub.s32 %v7707, %v7709
    %v7711 = vrot.slane %v7703, %v7710
    %v7713 = vunpack.c.l.s4 1934713408
    %v7714 = vunpack.c.0.s8 %v7713
    %v7715 = vlaneseq
    %v7716 = vshrl.u32 %v7715, 7
    %v7717 = vsub.s32 %v7714, %v7716
    %v7718 = vrot.slane %v7704, %v7717
    %v7719 = vcombine.low %v7663, %v7679
    %v7720 = vcombine.high %v7663, %v7679
    %v7722 = vunpack.c.l.s4 1934713408
    %v7723 = vunpack.c.0.s8 %v7722
    %v7724 = vlaneseq
    %v7725 = vshrl.u32 %v7724, 7
    %v7726 = vsub.s32 %v7723, %v7725
    %v7727 = vrot.slane %v7719, %v7726
    %v7729 = vunpack.c.l.s4 1934713408
    %v7730 = vunpack.c.0.s8 %v7729
    %v7731 = vlaneseq
    %v7732 = vshrl.u32 %v7731, 7
    %v7733 = vsub.s32 %v7730, %v7732
    %v7734 = vrot.slane %v7720, %v7733
    %v7735 = vcombine.low %v7670, %v7686
    %v7736 = vcombine.high %v7670, %v7686
    %v7738 = vunpack.c.l.s4 1934713408
    %v7739 = vunpack.c.0.s8 %v7738
    %v7740 = vlaneseq
    %v7741 = vshrl.u32 %v7740, 7
    %v7742 = vsub.s32 %v7739, %v7741
    %v7743 = vrot.slane %v7735, %v7742
    %v7745 = vunpack.c.l.s4 1934713408
    %v7746 = vunpack.c.0.s8 %v7745
    %v7747 = vlaneseq
    %v7748 = vshrl.u32 %v7747, 7
    %v7749 = vsub.s32 %v7746, %v7748
    %v7750 = vrot.slane %v7736, %v7749
    %v7751 = vcombine.low %v7695, %v7727
    %v7752 = vcombine.high %v7695, %v7727
    %v7753 = vcombine.low %v7702, %v7734
    %v7754 = vcombine.high %v7702, %v7734
    %v7755 = vcombine.low %v7711, %v7743
    %v7756 = vcombine.high %v7711, %v7743
    %v7757 = vcombine.low %v7718, %v7750
    %v7758 = vcombine.high %v7718, %v7750
    %v7759 = vcombine.low %v7343, %v7345
    %v7760 = vcombine.high %v7343, %v7345
    %v7762 = vunpack.c.l.s4 1983009808
    %v7763 = vunpack.c.0.s8 %v7762
    %v7764 = vlaneseq
    %v7765 = vshrl.u32 %v7764, 7
    %v7766 = vsub.s32 %v7763, %v7765
    %v7767 = vrot.slane %v7759, %v7766
    %v7769 = vunpack.c.l.s4 1983009808
    %v7770 = vunpack.c.0.s8 %v7769
    %v7771 = vlaneseq
    %v7772 = vshrl.u32 %v7771, 7
    %v7773 = vsub.s32 %v7770, %v7772
    %v7774 = vrot.slane %v7760, %v7773
    %v7775 = vcombine.low %v7344, %v7346
    %v7776 = vcombine.high %v7344, %v7346
    %v7778 = vunpack.c.l.s4 1983009808
    %v7779 = vunpack.c.0.s8 %v7778
    %v7780 = vlaneseq
    %v7781 = vshrl.u32 %v7780, 7
    %v7782 = vsub.s32 %v7779, %v7781
    %v7783 = vrot.slane %v7775, %v7782
    %v7785 = vunpack.c.l.s4 1983009808
    %v7786 = vunpack.c.0.s8 %v7785
    %v7787 = vlaneseq
    %v7788 = vshrl.u32 %v7787, 7
    %v7789 = vsub.s32 %v7786, %v7788
    %v7790 = vrot.slane %v7776, %v7789
    %v7791 = vcombine.low %v7347, %v7349
    %v7792 = vcombine.high %v7347, %v7349
    %v7794 = vunpack.c.l.s4 1983009808
    %v7795 = vunpack.c.0.s8 %v7794
    %v7796 = vlaneseq
    %v7797 = vshrl.u32 %v7796, 7
    %v7798 = vsub.s32 %v7795, %v7797
    %v7799 = vrot.slane %v7791, %v7798
    %v7801 = vunpack.c.l.s4 1983009808
    %v7802 = vunpack.c.0.s8 %v7801
    %v7803 = vlaneseq
    %v7804 = vshrl.u32 %v7803, 7
    %v7805 = vsub.s32 %v7802, %v7804
    %v7806 = vrot.slane %v7792, %v7805
    %v7807 = vcombine.low %v7348, %v7350
    %v7808 = vcombine.high %v7348, %v7350
    %v7810 = vunpack.c.l.s4 1983009808
    %v7811 = vunpack.c.0.s8 %v7810
    %v7812 = vlaneseq
    %v7813 = vshrl.u32 %v7812, 7
    %v7814 = vsub.s32 %v7811, %v7813
    %v7815 = vrot.slane %v7807, %v7814
    %v7817 = vunpack.c.l.s4 1983009808
    %v7818 = vunpack.c.0.s8 %v7817
    %v7819 = vlaneseq
    %v7820 = vshrl.u32 %v7819, 7
    %v7821 = vsub.s32 %v7818, %v7820
    %v7822 = vrot.slane %v7808, %v7821
    %v7823 = vcombine.low %v7767, %v7783
    %v7824 = vcombine.high %v7767, %v7783
    %v7826 = vunpack.c.l.s4 1934713408
    %v7827 = vunpack.c.0.s8 %v7826
    %v7828 = vlaneseq
    %v7829 = vshrl.u32 %v7828, 7
    %v7830 = vsub.s32 %v7827, %v7829
    %v7831 = vrot.slane %v7823, %v7830
    %v7833 = vunpack.c.l.s4 1934713408
    %v7834 = vunpack.c.0.s8 %v7833
    %v7835 = vlaneseq
    %v7836 = vshrl.u32 %v7835, 7
    %v7837 = vsub.s32 %v7834, %v7836
    %v7838 = vrot.slane %v7824, %v7837
    %v7839 = vcombine.low %v7774, %v7790
    %v7840 = vcombine.high %v7774, %v7790
    %v7842 = vunpack.c.l.s4 1934713408
    %v7843 = vunpack.c.0.s8 %v7842
    %v7844 = vlaneseq
    %v7845 = vshrl.u32 %v7844, 7
    %v7846 = vsub.s32 %v7843, %v7845
    %v7847 = vrot.slane %v7839, %v7846
    %v7849 = vunpack.c.l.s4 1934713408
    %v7850 = vunpack.c.0.s8 %v7849
    %v7851 = vlaneseq
    %v7852 = vshrl.u32 %v7851, 7
    %v7853 = vsub.s32 %v7850, %v7852
    %v7854 = vrot.slane %v7840, %v7853
    %v7855 = vcombine.low %v7799, %v7815
    %v7856 = vcombine.high %v7799, %v7815
    %v7858 = vunpack.c.l.s4 1934713408
    %v7859 = vunpack.c.0.s8 %v7858
    %v7860 = vlaneseq
    %v7861 = vshrl.u32 %v7860, 7
    %v7862 = vsub.s32 %v7859, %v7861
    %v7863 = vrot.slane %v7855, %v7862
    %v7865 = vunpack.c.l.s4 1934713408
    %v7866 = vunpack.c.0.s8 %v7865
    %v7867 = vlaneseq
    %v7868 = vshrl.u32 %v7867, 7
    %v7869 = vsub.s32 %v7866, %v7868
    %v7870 = vrot.slane %v7856, %v7869
    %v7871 = vcombine.low %v7806, %v7822
    %v7872 = vcombine.high %v7806, %v7822
    %v7874 = vunpack.c.l.s4 1934713408
    %v7875 = vunpack.c.0.s8 %v7874
    %v7876 = vlaneseq
    %v7877 = vshrl.u32 %v7876, 7
    %v7878 = vsub.s32 %v7875, %v7877
    %v7879 = vrot.slane %v7871, %v7878
    %v7881 = vunpack.c.l.s4 1934713408
    %v7882 = vunpack.c.0.s8 %v7881
    %v7883 = vlaneseq
    %v7884 = vshrl.u32 %v7883, 7
    %v7885 = vsub.s32 %v7882, %v7884
    %v7886 = vrot.slane %v7872, %v7885
    %v7887 = vcombine.low %v7831, %v7863
    %v7888 = vcombine.high %v7831, %v7863
    %v7889 = vcombine.low %v7838, %v7870
    %v7890 = vcombine.high %v7838, %v7870
    %v7891 = vcombine.low %v7847, %v7879
    %v7892 = vcombine.high %v7847, %v7879
    %v7893 = vcombine.low %v7854, %v7886
    %v7894 = vcombine.high %v7854, %v7886
    %7897 = vrot.lane.b32.xlu0 %v7480, 4
    %v7898 = vpop.permute.xlu0 %7897
    %7899 = vrot.lane.b32.xlu0 %v7616, 4
    %v7900 = vpop.permute.xlu0 %7899
    %7905 = vrot.lane.b32.xlu0 %v7481, 8
    %v7906 = vpop.permute.xlu0 %7905
    %7907 = vrot.lane.b32.xlu0 %v7617, 8
    %v7908 = vpop.permute.xlu0 %7907
    %7913 = vrot.lane.b32.xlu0 %v7482, 12
    %v7914 = vpop.permute.xlu0 %7913
    %7915 = vrot.lane.b32.xlu0 %v7618, 12
    %v7916 = vpop.permute.xlu0 %7915
    %7921 = vrot.lane.b32.xlu0 %v7483, 16
    %v7922 = vpop.permute.xlu0 %7921
    %7923 = vrot.lane.b32.xlu0 %v7619, 16
    %v7924 = vpop.permute.xlu0 %7923
    %7929 = vrot.lane.b32.xlu0 %v7484, 20
    %v7930 = vpop.permute.xlu0 %7929
    %7931 = vrot.lane.b32.xlu0 %v7620, 20
    %v7932 = vpop.permute.xlu0 %7931
    %7937 = vrot.lane.b32.xlu0 %v7485, 24
    %v7938 = vpop.permute.xlu0 %7937
    %7939 = vrot.lane.b32.xlu0 %v7621, 24
    %v7940 = vpop.permute.xlu0 %7939
    %7945 = vrot.lane.b32.xlu0 %v7486, 28
    %v7946 = vpop.permute.xlu0 %7945
    %7947 = vrot.lane.b32.xlu0 %v7622, 28
    %v7948 = vpop.permute.xlu0 %7947
    %7953 = vrot.lane.b32.xlu0 %v7751, 32
    %v7954 = vpop.permute.xlu0 %7953
    %7955 = vrot.lane.b32.xlu0 %v7887, 32
    %v7956 = vpop.permute.xlu0 %7955
    %7961 = vrot.lane.b32.xlu0 %v7752, 36
    %v7962 = vpop.permute.xlu0 %7961
    %7963 = vrot.lane.b32.xlu0 %v7888, 36
    %v7964 = vpop.permute.xlu0 %7963
    %7969 = vrot.lane.b32.xlu0 %v7753, 40
    %v7970 = vpop.permute.xlu0 %7969
    %7971 = vrot.lane.b32.xlu0 %v7889, 40
    %v7972 = vpop.permute.xlu0 %7971
    %7977 = vrot.lane.b32.xlu0 %v7754, 44
    %v7978 = vpop.permute.xlu0 %7977
    %7979 = vrot.lane.b32.xlu0 %v7890, 44
    %v7980 = vpop.permute.xlu0 %7979
    %7985 = vrot.lane.b32.xlu0 %v7755, 48
    %v7986 = vpop.permute.xlu0 %7985
    %7987 = vrot.lane.b32.xlu0 %v7891, 48
    %v7988 = vpop.permute.xlu0 %7987
    %7993 = vrot.lane.b32.xlu0 %v7756, 52
    %v7994 = vpop.permute.xlu0 %7993
    %7995 = vrot.lane.b32.xlu0 %v7892, 52
    %v7996 = vpop.permute.xlu0 %7995
    %8001 = vrot.lane.b32.xlu0 %v7757, 56
    %v8002 = vpop.permute.xlu0 %8001
    %8003 = vrot.lane.b32.xlu0 %v7893, 56
    %v8004 = vpop.permute.xlu0 %8003
    %8009 = vrot.lane.b32.xlu0 %v7758, 60
    %v8010 = vpop.permute.xlu0 %8009
    %8011 = vrot.lane.b32.xlu0 %v7894, 60
    %v8012 = vpop.permute.xlu0 %8011
    %v8015 = vsel %vm3765, %v7479, %v7898
    %v8016 = vsel %vm3765, %v7615, %v7900
    %vm8017 = vcmask 64512
    %v8018 = vsel %vm8017, %v8015, %v7906
    %v8019 = vsel %vm8017, %v8016, %v7908
    %vm8020 = vcmask 97280
    %v8021 = vsel %vm8020, %v8018, %v7914
    %v8022 = vsel %vm8020, %v8019, %v7916
    %v8023 = vsel %vm5158, %v8021, %v7922
    %v8024 = vsel %vm5158, %v8022, %v7924
    %vm8025 = vcmask 162816
    %v8026 = vsel %vm8025, %v8023, %v7930
    %v8027 = vsel %vm8025, %v8024, %v7932
    %vm8028 = vcmask 195584
    %v8029 = vsel %vm8028, %v8026, %v7938
    %v8030 = vsel %vm8028, %v8027, %v7940
    %vm8031 = vcmask 228352
    %v8032 = vsel %vm8031, %v8029, %v7946
    %v8033 = vsel %vm8031, %v8030, %v7948
    %vm8034 = vcmask 261120
    %v8035 = vsel %vm8034, %v8032, %v7954
    %v8036 = vsel %vm8034, %v8033, %v7956
    %vm8037 = vcmask 293888
    %v8038 = vsel %vm8037, %v8035, %v7962
    %v8039 = vsel %vm8037, %v8036, %v7964
    %vm8040 = vcmask 326656
    %v8041 = vsel %vm8040, %v8038, %v7970
    %v8042 = vsel %vm8040, %v8039, %v7972
    %vm8043 = vcmask 359424
    %v8044 = vsel %vm8043, %v8041, %v7978
    %v8045 = vsel %vm8043, %v8042, %v7980
    %vm8046 = vcmask 392192
    %v8047 = vsel %vm8046, %v8044, %v7986
    %v8048 = vsel %vm8046, %v8045, %v7988
    %vm8049 = vcmask 424960
    %v8050 = vsel %vm8049, %v8047, %v7994
    %v8051 = vsel %vm8049, %v8048, %v7996
    %vm8052 = vcmask 457728
    %v8053 = vsel %vm8052, %v8050, %v8002
    %v8054 = vsel %vm8052, %v8051, %v8004
    %vm8055 = vcmask 490496
    %v8056 = vsel %vm8055, %v8053, %v8010
    %v8057 = vsel %vm8055, %v8054, %v8012
    %v8058 = vld [vmem:[#allocation7] sm:$0xff]
    %v8059 = vld [vmem:[#allocation7 + $0x8] sm:$0xff]
    %v8060 = vld [vmem:[#allocation7 + $0x10] sm:$0xff]
    %v8061 = vld [vmem:[#allocation7 + $0x18] sm:$0xff]
    %v8062 = vld [vmem:[#allocation7 + $0x20] sm:$0xff]
    %v8063 = vld [vmem:[#allocation7 + $0x28] sm:$0xff]
    %v8064 = vld [vmem:[#allocation7 + $0x30] sm:$0xff]
    %v8065 = vld [vmem:[#allocation7 + $0x38] sm:$0xff]
    %v8066 = vld [vmem:[%s4] sm:$0x1]
    %v8068 = vlaneseq
    %v8069 = vshrl.u32 %v8068, 7
    %v8070 = vsub.s32 0, %v8069
    %v8071 = vrot.slane %v8066, %v8070
    %v8074 = vsel %vm92, %v8056, 0
    %v8077 = vsel %vm92, %v8057, 0
    %8079 = vmatprep.subr.mxu0 0.0
    %8080 = vmatpush1.msra.mxu0 %v8058
    %8081 = vmatprep.subr.mxu0 0.0
    %8082 = vmatpush1.msra.mxu0 %v8059
    %8083 = vmatprep.subr.mxu0 0.0
    %8084 = vmatpush1.msra.mxu0 %v8060
    %8085 = vmatprep.subr.mxu0 0.0
    %8086 = vmatpush1.msra.mxu0 %v8061
    %8087 = vmatprep.subr.mxu0 0.0
    %8088 = vmatpush1.msra.mxu0 %v8062
    %8089 = vmatprep.subr.mxu0 0.0
    %8090 = vmatpush1.msra.mxu0 %v8063
    %8091 = vmatprep.subr.mxu0 0.0
    %8092 = vmatpush1.msra.mxu0 %v8064
    %8093 = vmatprep.subr.mxu0 0.0
    %8094 = vmatpush1.msra.mxu0 %v8065
    %8095 = vmatprep.subr.mxu0 0.0
    %8096 = vmatpush1.msra.mxu0 0.0
    %8097 = vmatprep.subr.mxu0 0.0
    %8098 = vmatpush1.msra.mxu0 0.0
    %8099 = vmatprep.subr.mxu0 0.0
    %8100 = vmatpush1.msra.mxu0 0.0
    %8101 = vmatprep.subr.mxu0 0.0
    %8102 = vmatpush1.msra.mxu0 0.0
    %8103 = vmatprep.subr.mxu0 0.0
    %8104 = vmatpush1.msra.mxu0 0.0
    %8105 = vmatprep.subr.mxu0 0.0
    %8106 = vmatpush1.msra.mxu0 0.0
    %8107 = vmatprep.subr.mxu0 0.0
    %8108 = vmatpush1.msra.mxu0 0.0
    %8109 = vmatprep.subr.mxu0 0.0
    %8110 = vmatpush1.msra.mxu0 0.0
    %8111 = vmatprep.subr.mxu0 0.0
    %8112 = vmatpush1.msra.mxu0 0.0
    %8113 = vmatprep.subr.mxu0 0.0
    %8114 = vmatpush1.msra.mxu0 0.0
    %8115 = vmatprep.subr.mxu0 0.0
    %8116 = vmatpush1.msra.mxu0 0.0
    %8117 = vmatprep.subr.mxu0 0.0
    %8118 = vmatpush1.msra.mxu0 0.0
    %8119 = vmatprep.subr.mxu0 0.0
    %8120 = vmatpush1.msra.mxu0 0.0
    %8121 = vmatprep.subr.mxu0 0.0
    %8122 = vmatpush1.msra.mxu0 0.0
    %8123 = vmatprep.subr.mxu0 0.0
    %8124 = vmatpush1.msra.mxu0 0.0
    %8125 = vmatprep.subr.mxu0 0.0
    %8126 = vmatpush1.msra.mxu0 0.0
    %8127 = vmatprep.subr.mxu0 0.0
    %8128 = vmatpush1.msra.mxu0 0.0
    %8129 = vmatprep.subr.mxu0 0.0
    %8130 = vmatpush1.msra.mxu0 0.0
    %8131 = vmatprep.subr.mxu0 0.0
    %8132 = vmatpush1.msra.mxu0 0.0
    %8133 = vmatprep.subr.mxu0 0.0
    %8134 = vmatpush1.msra.mxu0 0.0
    %8135 = vmatprep.subr.mxu0 0.0
    %8136 = vmatpush1.msra.mxu0 0.0
    %8137 = vmatprep.subr.mxu0 0.0
    %8138 = vmatpush1.msra.mxu0 0.0
    %8139 = vmatprep.subr.mxu0 0.0
    %8140 = vmatpush1.msra.mxu0 0.0
    %8141 = vmatprep.subr.mxu0 0.0
    %8142 = vmatpush1.msra.mxu0 0.0
    %8143 = vmatprep.mubr.f32.mxu0 0.0
    %8144 = vmatmul.mubr.f32.gmra.mrb[0].mxu0 %v8074
    %v8145 = vpop.f32.mrb[0].mxu0
    %v8146 = vadd.f32 %v8071, %v8145
    %v8147 = vpop.f32.mrb[0].mxu0
    %8148 = vmatprep.mubr.f32.mxu0 0.0
    %8149 = vmatmul.mubr.f32.gmra.mrb[0].mxu0 %v8077
    %v8150 = vpop.f32.mrb[0].mxu0
    %v8151 = vadd.f32 %v8071, %v8150
    %v8152 = vpop.f32.mrb[0].mxu0
    %8153 = vdwg.mxu0
    %8154 = vst.msk [vmem:[#allocation8] sm:$0xff] %vm92, %v8146
    %8155 = vst.msk [vmem:[#allocation8 + $0x8] sm:$0xff] %vm92, %v8151
    // Predicated region
    $region34: #{attention_forward.1} parent=1 // pred_check
      _
    $region35: #{attention_forward.1} parent=1 // pred_check_branch
      %8157 = sbr.rel (0) target = $region37
    $region36: #{attention_forward.1} parent=1 // pred_region
      %s8159 = ssub.s32 256, 256
      %8160 = vsyncadd [#allocation4], %s8159
      %s8161 = sshll.u32 [#allocation8], 4
      %s8162 = int_to_ptr.vmem [resolvable:$true] %s8161
      %8167 = dma.vmem_to_hbm [thread:$0]  %s8162, 256, %s5, [#allocation4], 128, 128, 8
    $region37: #{attention_forward.1} parent=1 // pred_fallthru
      _
    // Predicated region
    $region38: #{attention_forward.1} parent=1 // pred_check
      _
    $region39: #{attention_forward.1} parent=1 // pred_check_branch
      %8169 = sbr.rel (0) target = $region41
    $region40: #{attention_forward.1} parent=1 // pred_region
      %8170 = dma.done [#allocation4], 256
    $region41: #{attention_forward.1} parent=1 // pred_fallthru
      _
    %8171 = vsyncpa [#allocation3], 1
    %8172 = vsyncpa [#allocation6], 1
    %8173 = vsyncpa [#allocation4], 1

// kernel: attention_forward.1
$region0: #{attention_forward.1}
  #allocation0 [shape = 'u32[]', space=smem, size = 0x4, offset = 0x4, fixed_abs, tag = 'smem constant byte address 0x4 - core index']
  #allocation1 [shape = 'u32[144,128]{1,0:T(1,128)}', space=vmem, size = 0x12000, scoped, tag = 'internal scratch']
  %s0 = inlined_call_operand.hbm [shape: f32[16,64], index: 0, kind: input, shape index: {}]
  %s1 = inlined_call_operand.hbm [shape: f32[64,192], index: 1, kind: input, shape index: {}]
  %s2 = inlined_call_operand.vmem [shape: f32[1,192], index: 2, kind: input, shape index: {}]
  %s3 = inlined_call_operand.hbm [shape: f32[64,64], index: 3, kind: input, shape index: {}]
  %s4 = inlined_call_operand.vmem [shape: f32[1,64], index: 4, kind: input, shape index: {}]
  %s5 = inlined_call_operand.hbm [shape: f32[16,64], index: 5, kind: output, shape index: {}]
  %s6 = sld [smem:[#allocation0]]
  $region42: #{attention_forward.1} parent=0
    _
  %s8 = ssub.s32 1, %s6
  %s9 = scalar_select 0, %s8, %s6
  $region1: #{attention_forward.1} parent=0
    #allocation2 [shape = 'u8[8192]{0}', space=vmem, size = 0x2000, scoped, tag = 'input window, operand 0, single buffered']
    #allocation3 [shape = 's32[1]{0}', space=sflag, size = 0x4, scoped, tag = 'scoped memory for attention_forward.1']
    #allocation4 [shape = 's32[1]{0}', space=sflag, size = 0x4, scoped, tag = 'scoped memory for attention_forward.1']
    #allocation5 [shape = 'u8[65536]{0}', space=vmem, size = 0x10000, scoped, tag = 'input window, operand 1, single buffered']
    #allocation6 [shape = 's32[1]{0}', space=sflag, size = 0x4, scoped, tag = 'scoped memory for attention_forward.1']
    #allocation7 [shape = 'u8[32768]{0}', space=vmem, size = 0x8000, scoped, tag = 'input window, operand 3, single buffered']
    #allocation8 [shape = 'u8[8192]{0}', space=vmem, size = 0x2000, scoped, tag = 'output window, operand 0, single buffered']
    %10 = vsyncpa [#allocation3], 0
    %11 = vsyncpa [#allocation6], 0
    %12 = vsyncpa [#allocation4], 0
    // Predicated region
    $region2: #{attention_forward.1} parent=1 // pred_check
      _
    $region3: #{attention_forward.1} parent=1 // pred_check_branch
      %14 = sbr.rel (0) target = $region5
    $region4: #{attention_forward.1} parent=1 // pred_region
      %s16 = ssub.s32 256, 256
      %17 = vsyncadd [#allocation3], %s16
      %s18 = sshll.u32 [#allocation2], 4
      %s19 = int_to_ptr.vmem [resolvable:$true] %s18
      %24 = dma.hbm_to_vmem [thread:$0]  %s0, 256, %s19, [#allocation3], 128, 128, 8
    $region5: #{attention_forward.1} parent=1 // pred_fallthru
      _
    // Predicated region
    $region6: #{attention_forward.1} parent=1 // pred_check
      _
    $region7: #{attention_forward.1} parent=1 // pred_check_branch
      %26 = sbr.rel (0) target = $region9
    $region8: #{attention_forward.1} parent=1 // pred_region
      %s28 = ssub.s32 2048, 2048
      %29 = vsyncadd [#allocation6], %s28
      %s30 = sshll.u32 [#allocation5], 4
      %s31 = int_to_ptr.vmem [resolvable:$true] %s30
      %36 = dma.hbm_to_vmem [thread:$0]  %s1, 2048, %s31, [#allocation6], 256, 256, 16
    $region9: #{attention_forward.1} parent=1 // pred_fallthru
      _
    // Predicated region
    $region10: #{attention_forward.1} parent=1 // pred_check
      _
    $region11: #{attention_forward.1} parent=1 // pred_check_branch
      %38 = sbr.rel (0) target = $region13
    $region12: #{attention_forward.1} parent=1 // pred_region
      _
    $region13: #{attention_forward.1} parent=1 // pred_fallthru
      _
    // Predicated region
    $region14: #{attention_forward.1} parent=1 // pred_check
      _
    $region15: #{attention_forward.1} parent=1 // pred_check_branch
      %40 = sbr.rel (0) target = $region17
    $region16: #{attention_forward.1} parent=1 // pred_region
      %s42 = ssub.s32 1024, 1024
      %43 = vsyncadd [#allocation6], %s42
      %s44 = sshll.u32 [#allocation7], 4
      %s45 = int_to_ptr.vmem [resolvable:$true] %s44
      %50 = dma.hbm_to_vmem [thread:$0]  %s3, 1024, %s45, [#allocation6], 128, 128, 8
    $region17: #{attention_forward.1} parent=1 // pred_fallthru
      _
    // Predicated region
    $region18: #{attention_forward.1} parent=1 // pred_check
      _
    $region19: #{attention_forward.1} parent=1 // pred_check_branch
      %52 = sbr.rel (0) target = $region21
    $region20: #{attention_forward.1} parent=1 // pred_region
      _
    $region21: #{attention_forward.1} parent=1 // pred_fallthru
      _
    // Predicated region
    $region22: #{attention_forward.1} parent=1 // pred_check
      _
    $region23: #{attention_forward.1} parent=1 // pred_check_branch
      %54 = sbr.rel (0) target = $region25
    $region24: #{attention_forward.1} parent=1 // pred_region
      %55 = dma.done [#allocation3], 256
    $region25: #{attention_forward.1} parent=1 // pred_fallthru
      _
    // Predicated region
    $region26: #{attention_forward.1} parent=1 // pred_check
      _
    $region27: #{attention_forward.1} parent=1 // pred_check_branch
      %57 = sbr.rel (0) target = $region29
    $region28: #{attention_forward.1} parent=1 // pred_region
      %58 = dma.done [#allocation6], 2048
    $region29: #{attention_forward.1} parent=1 // pred_fallthru
      _
    // Predicated region
    $region30: #{attention_forward.1} parent=1 // pred_check
      _
    $region31: #{attention_forward.1} parent=1 // pred_check_branch
      %60 = sbr.rel (0) target = $region33
    $region32: #{attention_forward.1} parent=1 // pred_region
      %61 = dma.done [#allocation6], 1024
    $region33: #{attention_forward.1} parent=1 // pred_fallthru
      _
    %v62 = vld [vmem:[#allocation2] sm:$0xff]
    %v63 = vld [vmem:[#allocation2 + $0x8] sm:$0xff]
    %v64 = vld [vmem:[#allocation5] sm:$0xff]
    %v65 = vld [vmem:[#allocation5 + $0x8] sm:$0xff]
    %v66 = vld [vmem:[#allocation5 + $0x10] sm:$0xff]
    %v67 = vld [vmem:[#allocation5 + $0x18] sm:$0xff]
    %v68 = vld [vmem:[#allocation5 + $0x20] sm:$0xff]
    %v69 = vld [vmem:[#allocation5 + $0x28] sm:$0xff]
    %v70 = vld [vmem:[#allocation5 + $0x30] sm:$0xff]
    %v71 = vld [vmem:[#allocation5 + $0x38] sm:$0xff]
    %v72 = vld [vmem:[#allocation5 + $0x40] sm:$0xff]
    %v73 = vld [vmem:[#allocation5 + $0x48] sm:$0xff]
    %v74 = vld [vmem:[#allocation5 + $0x50] sm:$0xff]
    %v75 = vld [vmem:[#allocation5 + $0x58] sm:$0xff]
    %v76 = vld [vmem:[#allocation5 + $0x60] sm:$0xff]
    %v77 = vld [vmem:[#allocation5 + $0x68] sm:$0xff]
    %v78 = vld [vmem:[#allocation5 + $0x70] sm:$0xff]
    %v79 = vld [vmem:[#allocation5 + $0x78] sm:$0xff]
    %v80 = vld [vmem:[%s2] sm:$0x3]
    %v82 = vlaneseq
    %v83 = vshrl.u32 %v82, 7
    %v84 = vsub.s32 0, %v83
    %v85 = vrot.slane %v80, %v84
    %v86 = vlaneseq
    %v87 = vshrl.u32 %v86, 7
    %v88 = vsub.s32 1, %v87
    %v89 = vrot.slane %v80, %v88
    %vm92 = vcmask 523264
    %v94 = vsel %vm92, %v62, 0
    %v97 = vsel %vm92, %v63, 0
    %99 = vmatprep.subr.mxu0 %v65
    %100 = vmatpush1.msra.mxu0 %v64
    %101 = vmatprep.subr.mxu0 %v67
    %102 = vmatpush1.msra.mxu0 %v66
    %103 = vmatprep.subr.mxu0 %v69
    %104 = vmatpush1.msra.mxu0 %v68
    %105 = vmatprep.subr.mxu0 %v71
    %106 = vmatpush1.msra.mxu0 %v70
    %107 = vmatprep.subr.mxu0 %v73
    %108 = vmatpush1.msra.mxu0 %v72
    %109 = vmatprep.subr.mxu0 %v75
    %110 = vmatpush1.msra.mxu0 %v74
    %111 = vmatprep.subr.mxu0 %v77
    %112 = vmatpush1.msra.mxu0 %v76
    %113 = vmatprep.subr.mxu0 %v79
    %114 = vmatpush1.msra.mxu0 %v78
    %115 = vmatprep.subr.mxu0 0.0
    %116 = vmatpush1.msra.mxu0 0.0
    %117 = vmatprep.subr.mxu0 0.0
    %118 = vmatpush1.msra.mxu0 0.0
    %119 = vmatprep.subr.mxu0 0.0
    %120 = vmatpush1.msra.mxu0 0.0
    %121 = vmatprep.subr.mxu0 0.0
    %122 = vmatpush1.msra.mxu0 0.0
    %123 = vmatprep.subr.mxu0 0.0
    %124 = vmatpush1.msra.mxu0 0.0
    %125 = vmatprep.subr.mxu0 0.0
    %126 = vmatpush1.msra.mxu0 0.0
    %127 = vmatprep.subr.mxu0 0.0
    %128 = vmatpush1.msra.mxu0 0.0
    %129 = vmatprep.subr.mxu0 0.0
    %130 = vmatpush1.msra.mxu0 0.0
    %131 = vmatprep.subr.mxu0 0.0
    %132 = vmatpush1.msra.mxu0 0.0
    %133 = vmatprep.subr.mxu0 0.0
    %134 = vmatpush1.msra.mxu0 0.0
    %135 = vmatprep.subr.mxu0 0.0
    %136 = vmatpush1.msra.mxu0 0.0
    %137 = vmatprep.subr.mxu0 0.0
    %138 = vmatpush1.msra.mxu0 0.0
    %139 = vmatprep.subr.mxu0 0.0
    %140 = vmatpush1.msra.mxu0 0.0
    %141 = vmatprep.subr.mxu0 0.0
    %142 = vmatpush1.msra.mxu0 0.0
    %143 = vmatprep.subr.mxu0 0.0
    %144 = vmatpush1.msra.mxu0 0.0
    %145 = vmatprep.subr.mxu0 0.0
    %146 = vmatpush1.msra.mxu0 0.0
    %147 = vmatprep.subr.mxu0 0.0
    %148 = vmatpush1.msra.mxu0 0.0
    %149 = vmatprep.subr.mxu0 0.0
    %150 = vmatpush1.msra.mxu0 0.0
    %151 = vmatprep.subr.mxu0 0.0
    %152 = vmatpush1.msra.mxu0 0.0
    %153 = vmatprep.subr.mxu0 0.0
    %154 = vmatpush1.msra.mxu0 0.0
    %155 = vmatprep.subr.mxu0 0.0
    %156 = vmatpush1.msra.mxu0 0.0
    %157 = vmatprep.subr.mxu0 0.0
    %158 = vmatpush1.msra.mxu0 0.0
    %159 = vmatprep.subr.mxu0 0.0
    %160 = vmatpush1.msra.mxu0 0.0
    %161 = vmatprep.subr.mxu0 0.0
    %162 = vmatpush1.msra.mxu0 0.0
    %163 = vmatprep.mubr.f32.mxu0 0.0
    %164 = vmatmul.mubr.f32.gmra.mrb[0].mxu0 %v94
    %v165 = vpop.f32.mrb[0].mxu0
    %v166 = vadd.f32 %v85, %v165
    %v167 = vpop.f32.mrb[0].mxu0
    %v168 = vadd.f32 %v89, %v167
    %169 = vmatprep.mubr.f32.mxu0 0.0
    %170 = vmatmul.mubr.f32.gmra.mrb[0].mxu0 %v97
    %v171 = vpop.f32.mrb[0].mxu0
    %v172 = vadd.f32 %v85, %v171
    %v173 = vpop.f32.mrb[0].mxu0
    %v174 = vadd.f32 %v89, %v173
    %175 = vdwg.mxu0
    %178 = vrot.lane.b32.xlu0 %v166, 124
    %v179 = vpop.permute.xlu0 %178
    %180 = vrot.lane.b32.xlu0 %v172, 124
    %v181 = vpop.permute.xlu0 %180
    %182 = vrot.lane.b32.xlu0 %v166, 120
    %v183 = vpop.permute.xlu0 %182
    %184 = vrot.lane.b32.xlu0 %v172, 120
    %v185 = vpop.permute.xlu0 %184
    %186 = vrot.lane.b32.xlu0 %v166, 116
    %v187 = vpop.permute.xlu0 %186
    %188 = vrot.lane.b32.xlu0 %v172, 116
    %v189 = vpop.permute.xlu0 %188
    %190 = vrot.lane.b32.xlu0 %v166, 112
    %v191 = vpop.permute.xlu0 %190
    %192 = vrot.lane.b32.xlu0 %v172, 112
    %v193 = vpop.permute.xlu0 %192
    %194 = vrot.lane.b32.xlu0 %v166, 108
    %v195 = vpop.permute.xlu0 %194
    %196 = vrot.lane.b32.xlu0 %v172, 108
    %v197 = vpop.permute.xlu0 %196
    %198 = vrot.lane.b32.xlu0 %v166, 104
    %v199 = vpop.permute.xlu0 %198
    %200 = vrot.lane.b32.xlu0 %v172, 104
    %v201 = vpop.permute.xlu0 %200
    %202 = vrot.lane.b32.xlu0 %v166, 100
    %v203 = vpop.permute.xlu0 %202
    %204 = vrot.lane.b32.xlu0 %v172, 100
    %v205 = vpop.permute.xlu0 %204
    %206 = vrot.lane.b32.xlu0 %v166, 96
    %v207 = vpop.permute.xlu0 %206
    %208 = vrot.lane.b32.xlu0 %v172, 96
    %v209 = vpop.permute.xlu0 %208
    %210 = vrot.lane.b32.xlu0 %v166, 92
    %v211 = vpop.permute.xlu0 %210
    %212 = vrot.lane.b32.xlu0 %v172, 92
    %v213 = vpop.permute.xlu0 %212
    %214 = vrot.lane.b32.xlu0 %v166, 88
    %v215 = vpop.permute.xlu0 %214
    %216 = vrot.lane.b32.xlu0 %v172, 88
    %v217 = vpop.permute.xlu0 %216
    %218 = vrot.lane.b32.xlu0 %v166, 84
    %v219 = vpop.permute.xlu0 %218
    %220 = vrot.lane.b32.xlu0 %v172, 84
    %v221 = vpop.permute.xlu0 %220
    %222 = vrot.lane.b32.xlu0 %v166, 80
    %v223 = vpop.permute.xlu0 %222
    %224 = vrot.lane.b32.xlu0 %v172, 80
    %v225 = vpop.permute.xlu0 %224
    %226 = vrot.lane.b32.xlu0 %v166, 76
    %v227 = vpop.permute.xlu0 %226
    %228 = vrot.lane.b32.xlu0 %v172, 76
    %v229 = vpop.permute.xlu0 %228
    %230 = vrot.lane.b32.xlu0 %v166, 72
    %v231 = vpop.permute.xlu0 %230
    %232 = vrot.lane.b32.xlu0 %v172, 72
    %v233 = vpop.permute.xlu0 %232
    %234 = vrot.lane.b32.xlu0 %v166, 68
    %v235 = vpop.permute.xlu0 %234
    %236 = vrot.lane.b32.xlu0 %v172, 68
    %v237 = vpop.permute.xlu0 %236
    %240 = vrot.lane.b32.xlu0 %v168, 124
    %v241 = vpop.permute.xlu0 %240
    %242 = vrot.lane.b32.xlu0 %v174, 124
    %v243 = vpop.permute.xlu0 %242
    %246 = vrot.lane.b32.xlu0 %v168, 120
    %v247 = vpop.permute.xlu0 %246
    %248 = vrot.lane.b32.xlu0 %v174, 120
    %v249 = vpop.permute.xlu0 %248
    %252 = vrot.lane.b32.xlu0 %v168, 116
    %v253 = vpop.permute.xlu0 %252
    %254 = vrot.lane.b32.xlu0 %v174, 116
    %v255 = vpop.permute.xlu0 %254
    %258 = vrot.lane.b32.xlu0 %v168, 112
    %v259 = vpop.permute.xlu0 %258
    %260 = vrot.lane.b32.xlu0 %v174, 112
    %v261 = vpop.permute.xlu0 %260
    %264 = vrot.lane.b32.xlu0 %v168, 108
    %v265 = vpop.permute.xlu0 %264
    %266 = vrot.lane.b32.xlu0 %v174, 108
    %v267 = vpop.permute.xlu0 %266
    %270 = vrot.lane.b32.xlu0 %v168, 104
    %v271 = vpop.permute.xlu0 %270
    %272 = vrot.lane.b32.xlu0 %v174, 104
    %v273 = vpop.permute.xlu0 %272
    %276 = vrot.lane.b32.xlu0 %v168, 100
    %v277 = vpop.permute.xlu0 %276
    %278 = vrot.lane.b32.xlu0 %v174, 100
    %v279 = vpop.permute.xlu0 %278
    %282 = vrot.lane.b32.xlu0 %v168, 96
    %v283 = vpop.permute.xlu0 %282
    %284 = vrot.lane.b32.xlu0 %v174, 96
    %v285 = vpop.permute.xlu0 %284
    %288 = vrot.lane.b32.xlu0 %v168, 92
    %v289 = vpop.permute.xlu0 %288
    %290 = vrot.lane.b32.xlu0 %v174, 92
    %v291 = vpop.permute.xlu0 %290
    %294 = vrot.lane.b32.xlu0 %v168, 88
    %v295 = vpop.permute.xlu0 %294
    %296 = vrot.lane.b32.xlu0 %v174, 88
    %v297 = vpop.permute.xlu0 %296
    %300 = vrot.lane.b32.xlu0 %v168, 84
    %v301 = vpop.permute.xlu0 %300
    %302 = vrot.lane.b32.xlu0 %v174, 84
    %v303 = vpop.permute.xlu0 %302
    %306 = vrot.lane.b32.xlu0 %v168, 80
    %v307 = vpop.permute.xlu0 %306
    %308 = vrot.lane.b32.xlu0 %v174, 80
    %v309 = vpop.permute.xlu0 %308
    %312 = vrot.lane.b32.xlu0 %v168, 76
    %v313 = vpop.permute.xlu0 %312
    %314 = vrot.lane.b32.xlu0 %v174, 76
    %v315 = vpop.permute.xlu0 %314
    %318 = vrot.lane.b32.xlu0 %v168, 72
    %v319 = vpop.permute.xlu0 %318
    %320 = vrot.lane.b32.xlu0 %v174, 72
    %v321 = vpop.permute.xlu0 %320
    %324 = vrot.lane.b32.xlu0 %v168, 68
    %v325 = vpop.permute.xlu0 %324
    %326 = vrot.lane.b32.xlu0 %v174, 68
    %v327 = vpop.permute.xlu0 %326
    %v330 = vlaneseq
    %v331 = vshrl.u32 %v330, 7
    %v332 = vadd.s32 %v331, 8
    %v333 = vlaneseq
    %v334 = vand.u32 %v333, 127
    %vm335 = vcmp.lt.s32.totalorder %v331, 0
    %v336 = vsub.s32 0, %v331
    %v337 = vsel %vm335, %v336, %v331
    %v338 = vshrl.u32 %v337, 1
    %v339 = vand.u32 %v337, 1
    %v340 = vsub.s32 0, %v339
    %v341 = vsel %vm335, %v340, %v339
    %vm342 = vcmp.lt.s32.totalorder %v332, 0
    %v343 = vsub.s32 0, %v332
    %v344 = vsel %vm342, %v343, %v332
    %v345 = vshrl.u32 %v344, 1
    %v346 = vand.u32 %v344, 1
    %v347 = vsub.s32 0, %v346
    %v348 = vsel %vm342, %v347, %v346
    %vm349 = vcmp.ne.s32.totalorder %v341, 0
    %vm350 = vcmp.ne.s32.totalorder %v348, 0
    %vm351 = vcmp.lt.s32.totalorder %v341, 0
    %vm352 = vcmp.lt.s32.totalorder %v348, 0
    %vm353 = vmand %vm351, %vm349
    %vm354 = vmand %vm352, %vm350
    %v355 = vadd.s32 %v341, 2
    %v356 = vadd.s32 %v348, 2
    %v357 = vsel %vm353, %v355, %v341
    %v358 = vsel %vm354, %v356, %v348
    %vm359 = vcmp.lt.s32.totalorder %v334, 0
    %v360 = vsub.s32 0, %v334
    %v361 = vsel %vm359, %v360, %v334
    %v362 = vshrl.u32 %v361, 1
    %v363 = vand.u32 %v361, 1
    %v364 = vsub.s32 0, %v363
    %v365 = vsel %vm359, %v364, %v363
    %vm366 = vcmp.ne.s32.totalorder %v365, 0
    %vm367 = vcmp.lt.s32.totalorder %v365, 0
    %vm368 = vmand %vm367, %vm366
    %v369 = vadd.s32 %v365, 2
    %v370 = vsel %vm368, %v369, %v365
    %vm371 = vcmp.eq.s32.totalorder %v357, %v370
    %vm372 = vcmp.eq.s32.totalorder %v358, %v370
    %v373 = vsel %vm371, 0.0, -1e+30
    %v374 = vsel %vm372, 0.0, -1e+30
    %375 = vrot.lane.b32.xlu0 %v166, 64
    %v376 = vpop.permute.xlu0 %375
    %377 = vrot.lane.b32.xlu0 %v172, 64
    %v378 = vpop.permute.xlu0 %377
    %vm379 = vcmask 31744
    %v380 = vsel %vm379, %v166, 0
    %v382 = vsel %vm379, %v172, 0
    %v384 = vsel %vm379, %v376, 0
    %v386 = vsel %vm379, %v378, 0
    %388 = vmatprep.subr.mxu0 0.0
    %389 = vmatpush1.xpose.msra.mxu0 %v384
    %390 = vmatprep.subr.mxu0 0.0
    %391 = vmatpush1.xpose.msra.mxu0 %v386
    %392 = vmatprep.subr.mxu0 0.0
    %393 = vmatpush1.xpose.msra.mxu0 0.0
    %394 = vmatprep.subr.mxu0 0.0
    %395 = vmatpush1.xpose.msra.mxu0 0.0
    %396 = vmatprep.subr.mxu0 0.0
    %397 = vmatpush1.xpose.msra.mxu0 0.0
    %398 = vmatprep.subr.mxu0 0.0
    %399 = vmatpush1.xpose.msra.mxu0 0.0
    %400 = vmatprep.subr.mxu0 0.0
    %401 = vmatpush1.xpose.msra.mxu0 0.0
    %402 = vmatprep.subr.mxu0 0.0
    %403 = vmatpush1.xpose.msra.mxu0 0.0
    %404 = vmatprep.subr.mxu0 0.0
    %405 = vmatpush1.xpose.msra.mxu0 0.0
    %406 = vmatprep.subr.mxu0 0.0
    %407 = vmatpush1.xpose.msra.mxu0 0.0
    %408 = vmatprep.subr.mxu0 0.0
    %409 = vmatpush1.xpose.msra.mxu0 0.0
    %410 = vmatprep.subr.mxu0 0.0
    %411 = vmatpush1.xpose.msra.mxu0 0.0
    %412 = vmatprep.subr.mxu0 0.0
    %413 = vmatpush1.xpose.msra.mxu0 0.0
    %414 = vmatprep.subr.mxu0 0.0
    %415 = vmatpush1.xpose.msra.mxu0 0.0
    %416 = vmatprep.subr.mxu0 0.0
    %417 = vmatpush1.xpose.msra.mxu0 0.0
    %418 = vmatprep.subr.mxu0 0.0
    %419 = vmatpush1.xpose.msra.mxu0 0.0
    %420 = vmatprep.subr.mxu0 0.0
    %421 = vmatpush1.xpose.msra.mxu0 0.0
    %422 = vmatprep.subr.mxu0 0.0
    %423 = vmatpush1.xpose.msra.mxu0 0.0
    %424 = vmatprep.subr.mxu0 0.0
    %425 = vmatpush1.xpose.msra.mxu0 0.0
    %426 = vmatprep.subr.mxu0 0.0
    %427 = vmatpush1.xpose.msra.mxu0 0.0
    %428 = vmatprep.subr.mxu0 0.0
    %429 = vmatpush1.xpose.msra.mxu0 0.0
    %430 = vmatprep.subr.mxu0 0.0
    %431 = vmatpush1.xpose.msra.mxu0 0.0
    %432 = vmatprep.subr.mxu0 0.0
    %433 = vmatpush1.xpose.msra.mxu0 0.0
    %434 = vmatprep.subr.mxu0 0.0
    %435 = vmatpush1.xpose.msra.mxu0 0.0
    %436 = vmatprep.subr.mxu0 0.0
    %437 = vmatpush1.xpose.msra.mxu0 0.0
    %438 = vmatprep.subr.mxu0 0.0
    %439 = vmatpush1.xpose.msra.mxu0 0.0
    %440 = vmatprep.subr.mxu0 0.0
    %441 = vmatpush1.xpose.msra.mxu0 0.0
    %442 = vmatprep.subr.mxu0 0.0
    %443 = vmatpush1.xpose.msra.mxu0 0.0
    %444 = vmatprep.subr.mxu0 0.0
    %445 = vmatpush1.xpose.msra.mxu0 0.0
    %446 = vmatprep.subr.mxu0 0.0
    %447 = vmatpush1.xpose.msra.mxu0 0.0
    %448 = vmatprep.subr.mxu0 0.0
    %449 = vmatpush1.xpose.msra.mxu0 0.0
    %450 = vmatprep.subr.mxu0 0.0
    %451 = vmatpush1.xpose.msra.mxu0 0.0
    %452 = vmatprep.mubr.f32.mxu0 0.0
    %453 = vmatmul.mubr.f32.gmra.mrb[0].mxu0 %v380
    %v454 = vpop.f32.mrb[0].mxu0
    %v455 = vadd.f32 %v373, %v454
    %v456 = vpop.f32.mrb[0].mxu0
    %457 = vmatprep.mubr.f32.mxu0 0.0
    %458 = vmatmul.mubr.f32.gmra.mrb[0].mxu0 %v382
    %v459 = vpop.f32.mrb[0].mxu0
    %v460 = vadd.f32 %v374, %v459
    %v461 = vpop.f32.mrb[0].mxu0
    %462 = vdwg.mxu0
    %463 = vrot.lane.b32.xlu0 %v179, 64
    %v464 = vpop.permute.xlu0 %463
    %465 = vrot.lane.b32.xlu0 %v181, 64
    %v466 = vpop.permute.xlu0 %465
    %v467 = vsel %vm379, %v179, 0
    %v469 = vsel %vm379, %v181, 0
    %v471 = vsel %vm379, %v464, 0
    %v473 = vsel %vm379, %v466, 0
    %475 = vmatprep.subr.mxu0 0.0
    %476 = vmatpush1.xpose.msra.mxu0 %v471
    %477 = vmatprep.subr.mxu0 0.0
    %478 = vmatpush1.xpose.msra.mxu0 %v473
    %479 = vmatprep.subr.mxu0 0.0
    %480 = vmatpush1.xpose.msra.mxu0 0.0
    %481 = vmatprep.subr.mxu0 0.0
    %482 = vmatpush1.xpose.msra.mxu0 0.0
    %483 = vmatprep.subr.mxu0 0.0
    %484 = vmatpush1.xpose.msra.mxu0 0.0
    %485 = vmatprep.subr.mxu0 0.0
    %486 = vmatpush1.xpose.msra.mxu0 0.0
    %487 = vmatprep.subr.mxu0 0.0
    %488 = vmatpush1.xpose.msra.mxu0 0.0
    %489 = vmatprep.subr.mxu0 0.0
    %490 = vmatpush1.xpose.msra.mxu0 0.0
    %491 = vmatprep.subr.mxu0 0.0
    %492 = vmatpush1.xpose.msra.mxu0 0.0
    %493 = vmatprep.subr.mxu0 0.0
    %494 = vmatpush1.xpose.msra.mxu0 0.0
    %495 = vmatprep.subr.mxu0 0.0
    %496 = vmatpush1.xpose.msra.mxu0 0.0
    %497 = vmatprep.subr.mxu0 0.0
    %498 = vmatpush1.xpose.msra.mxu0 0.0
    %499 = vmatprep.subr.mxu0 0.0
    %500 = vmatpush1.xpose.msra.mxu0 0.0
    %501 = vmatprep.subr.mxu0 0.0
    %502 = vmatpush1.xpose.msra.mxu0 0.0
    %503 = vmatprep.subr.mxu0 0.0
    %504 = vmatpush1.xpose.msra.mxu0 0.0
    %505 = vmatprep.subr.mxu0 0.0
    %506 = vmatpush1.xpose.msra.mxu0 0.0
    %507 = vmatprep.subr.mxu0 0.0
    %508 = vmatpush1.xpose.msra.mxu0 0.0
    %509 = vmatprep.subr.mxu0 0.0
    %510 = vmatpush1.xpose.msra.mxu0 0.0
    %511 = vmatprep.subr.mxu0 0.0
    %512 = vmatpush1.xpose.msra.mxu0 0.0
    %513 = vmatprep.subr.mxu0 0.0
    %514 = vmatpush1.xpose.msra.mxu0 0.0
    %515 = vmatprep.subr.mxu0 0.0
    %516 = vmatpush1.xpose.msra.mxu0 0.0
    %517 = vmatprep.subr.mxu0 0.0
    %518 = vmatpush1.xpose.msra.mxu0 0.0
    %519 = vmatprep.subr.mxu0 0.0
    %520 = vmatpush1.xpose.msra.mxu0 0.0
    %521 = vmatprep.subr.mxu0 0.0
    %522 = vmatpush1.xpose.msra.mxu0 0.0
    %523 = vmatprep.subr.mxu0 0.0
    %524 = vmatpush1.xpose.msra.mxu0 0.0
    %525 = vmatprep.subr.mxu0 0.0
    %526 = vmatpush1.xpose.msra.mxu0 0.0
    %527 = vmatprep.subr.mxu0 0.0
    %528 = vmatpush1.xpose.msra.mxu0 0.0
    %529 = vmatprep.subr.mxu0 0.0
    %530 = vmatpush1.xpose.msra.mxu0 0.0
    %531 = vmatprep.subr.mxu0 0.0
    %532 = vmatpush1.xpose.msra.mxu0 0.0
    %533 = vmatprep.subr.mxu0 0.0
    %534 = vmatpush1.xpose.msra.mxu0 0.0
    %535 = vmatprep.subr.mxu0 0.0
    %536 = vmatpush1.xpose.msra.mxu0 0.0
    %537 = vmatprep.subr.mxu0 0.0
    %538 = vmatpush1.xpose.msra.mxu0 0.0
    %539 = vmatprep.mubr.f32.mxu0 0.0
    %540 = vmatmul.mubr.f32.gmra.mrb[0].mxu0 %v467
    %v541 = vpop.f32.mrb[0].mxu0
    %v542 = vadd.f32 %v373, %v541
    %v543 = vpop.f32.mrb[0].mxu0
    %544 = vmatprep.mubr.f32.mxu0 0.0
    %545 = vmatmul.mubr.f32.gmra.mrb[0].mxu0 %v469
    %v546 = vpop.f32.mrb[0].mxu0
    %v547 = vadd.f32 %v374, %v546
    %v548 = vpop.f32.mrb[0].mxu0
    %549 = vdwg.mxu0
    %550 = vrot.lane.b32.xlu0 %v183, 64
    %v551 = vpop.permute.xlu0 %550
    %552 = vrot.lane.b32.xlu0 %v185, 64
    %v553 = vpop.permute.xlu0 %552
    %v554 = vsel %vm379, %v183, 0
    %v556 = vsel %vm379, %v185, 0
    %v558 = vsel %vm379, %v551, 0
    %v560 = vsel %vm379, %v553, 0
    %562 = vmatprep.subr.mxu0 0.0
    %563 = vmatpush1.xpose.msra.mxu0 %v558
    %564 = vmatprep.subr.mxu0 0.0
    %565 = vmatpush1.xpose.msra.mxu0 %v560
    %566 = vmatprep.subr.mxu0 0.0
    %567 = vmatpush1.xpose.msra.mxu0 0.0
    %568 = vmatprep.subr.mxu0 0.0
    %569 = vmatpush1.xpose.msra.mxu0 0.0
    %570 = vmatprep.subr.mxu0 0.0
    %571 = vmatpush1.xpose.msra.mxu0 0.0
    %572 = vmatprep.subr.mxu0 0.0
    %573 = vmatpush1.xpose.msra.mxu0 0.0
    %574 = vmatprep.subr.mxu0 0.0
    %575 = vmatpush1.xpose.msra.mxu0 0.0
    %576 = vmatprep.subr.mxu0 0.0
    %577 = vmatpush1.xpose.msra.mxu0 0.0
    %578 = vmatprep.subr.mxu0 0.0
    %579 = vmatpush1.xpose.msra.mxu0 0.0
    %580 = vmatprep.subr.mxu0 0.0
    %581 = vmatpush1.xpose.msra.mxu0 0.0
    %582 = vmatprep.subr.mxu0 0.0
    %583 = vmatpush1.xpose.msra.mxu0 0.0
    %584 = vmatprep.subr.mxu0 0.0
    %585 = vmatpush1.xpose.msra.mxu0 0.0
    %586 = vmatprep.subr.mxu0 0.0
    %587 = vmatpush1.xpose.msra.mxu0 0.0
    %588 = vmatprep.subr.mxu0 0.0
    %589 = vmatpush1.xpose.msra.mxu0 0.0
    %590 = vmatprep.subr.mxu0 0.0
    %591 = vmatpush1.xpose.msra.mxu0 0.0
    %592 = vmatprep.subr.mxu0 0.0
    %593 = vmatpush1.xpose.msra.mxu0 0.0
    %594 = vmatprep.subr.mxu0 0.0
    %595 = vmatpush1.xpose.msra.mxu0 0.0
    %596 = vmatprep.subr.mxu0 0.0
    %597 = vmatpush1.xpose.msra.mxu0 0.0
    %598 = vmatprep.subr.mxu0 0.0
    %599 = vmatpush1.xpose.msra.mxu0 0.0
    %600 = vmatprep.subr.mxu0 0.0
    %601 = vmatpush1.xpose.msra.mxu0 0.0
    %602 = vmatprep.subr.mxu0 0.0
    %603 = vmatpush1.xpose.msra.mxu0 0.0
    %604 = vmatprep.subr.mxu0 0.0
    %605 = vmatpush1.xpose.msra.mxu0 0.0
    %606 = vmatprep.subr.mxu0 0.0
    %607 = vmatpush1.xpose.msra.mxu0 0.0
    %608 = vmatprep.subr.mxu0 0.0
    %609 = vmatpush1.xpose.msra.mxu0 0.0
    %610 = vmatprep.subr.mxu0 0.0
    %611 = vmatpush1.xpose.msra.mxu0 0.0
    %612 = vmatprep.subr.mxu0 0.0
    %613 = vmatpush1.xpose.msra.mxu0 0.0
    %614 = vmatprep.subr.mxu0 0.0
    %615 = vmatpush1.xpose.msra.mxu0 0.0
    %616 = vmatprep.subr.mxu0 0.0
    %617 = vmatpush1.xpose.msra.mxu0 0.0
    %618 = vmatprep.subr.mxu0 0.0
    %619 = vmatpush1.xpose.msra.mxu0 0.0
    %620 = vmatprep.subr.mxu0 0.0
    %621 = vmatpush1.xpose.msra.mxu0 0.0
    %622 = vmatprep.subr.mxu0 0.0
    %623 = vmatpush1.xpose.msra.mxu0 0.0
    %624 = vmatprep.subr.mxu0 0.0
    %625 = vmatpush1.xpose.msra.mxu0 0.0
    %626 = vmatprep.mubr.f32.mxu0 0.0
    %627 = vmatmul.mubr.f32.gmra.mrb[0].mxu0 %v554
    %v628 = vpop.f32.mrb[0].mxu0
    %v629 = vadd.f32 %v373, %v628
    %v630 = vpop.f32.mrb[0].mxu0
    %631 = vmatprep.mubr.f32.mxu0 0.0
    %632 = vmatmul.mubr.f32.gmra.mrb[0].mxu0 %v556
    %v633 = vpop.f32.mrb[0].mxu0
    %v634 = vadd.f32 %v374, %v633
    %v635 = vpop.f32.mrb[0].mxu0
    %636 = vdwg.mxu0
    %637 = vrot.lane.b32.xlu0 %v187, 64
    %v638 = vpop.permute.xlu0 %637
    %639 = vrot.lane.b32.xlu0 %v189, 64
    %v640 = vpop.permute.xlu0 %639
    %v641 = vsel %vm379, %v187, 0
    %v643 = vsel %vm379, %v189, 0
    %v645 = vsel %vm379, %v638, 0
    %v647 = vsel %vm379, %v640, 0
    %649 = vmatprep.subr.mxu0 0.0
    %650 = vmatpush1.xpose.msra.mxu0 %v645
    %651 = vmatprep.subr.mxu0 0.0
    %652 = vmatpush1.xpose.msra.mxu0 %v647
    %653 = vmatprep.subr.mxu0 0.0
    %654 = vmatpush1.xpose.msra.mxu0 0.0
    %655 = vmatprep.subr.mxu0 0.0
    %656 = vmatpush1.xpose.msra.mxu0 0.0
    %657 = vmatprep.subr.mxu0 0.0
    %658 = vmatpush1.xpose.msra.mxu0 0.0
    %659 = vmatprep.subr.mxu0 0.0
    %660 = vmatpush1.xpose.msra.mxu0 0.0
    %661 = vmatprep.subr.mxu0 0.0
    %662 = vmatpush1.xpose.msra.mxu0 0.0
    %663 = vmatprep.subr.mxu0 0.0
    %664 = vmatpush1.xpose.msra.mxu0 0.0
    %665 = vmatprep.subr.mxu0 0.0
    %666 = vmatpush1.xpose.msra.mxu0 0.0
    %667 = vmatprep.subr.mxu0 0.0
    %668 = vmatpush1.xpose.msra.mxu0 0.0
    %669 = vmatprep.subr.mxu0 0.0
    %670 = vmatpush1.xpose.msra.mxu0 0.0
    %671 = vmatprep.subr.mxu0 0.0
    %672 = vmatpush1.xpose.msra.mxu0 0.0
    %673 = vmatprep.subr.mxu0 0.0
    %674 = vmatpush1.xpose.msra.mxu0 0.0
    %675 = vmatprep.subr.mxu0 0.0
    %676 = vmatpush1.xpose.msra.mxu0 0.0
    %677 = vmatprep.subr.mxu0 0.0
    %678 = vmatpush1.xpose.msra.mxu0 0.0
    %679 = vmatprep.subr.mxu0 0.0
    %680 = vmatpush1.xpose.msra.mxu0 0.0
    %681 = vmatprep.subr.mxu0 0.0
    %682 = vmatpush1.xpose.msra.mxu0 0.0
    %683 = vmatprep.subr.mxu0 0.0
    %684 = vmatpush1.xpose.msra.mxu0 0.0
    %685 = vmatprep.subr.mxu0 0.0
    %686 = vmatpush1.xpose.msra.mxu0 0.0
    %687 = vmatprep.subr.mxu0 0.0
    %688 = vmatpush1.xpose.msra.mxu0 0.0
    %689 = vmatprep.subr.mxu0 0.0
    %690 = vmatpush1.xpose.msra.mxu0 0.0
    %691 = vmatprep.subr.mxu0 0.0
    %692 = vmatpush1.xpose.msra.mxu0 0.0
    %693 = vmatprep.subr.mxu0 0.0
    %694 = vmatpush1.xpose.msra.mxu0 0.0
    %695 = vmatprep.subr.mxu0 0.0
    %696 = vmatpush1.xpose.msra.mxu0 0.0
    %697 = vmatprep.subr.mxu0 0.0
    %698 = vmatpush1.xpose.msra.mxu0 0.0
    %699 = vmatprep.subr.mxu0 0.0
    %700 = vmatpush1.xpose.msra.mxu0 0.0
    %701 = vmatprep.subr.mxu0 0.0
    %702 = vmatpush1.xpose.msra.mxu0 0.0
    %703 = vmatprep.subr.mxu0 0.0
    %704 = vmatpush1.xpose.msra.mxu0 0.0
    %705 = vmatprep.subr.mxu0 0.0
    %706 = vmatpush1.xpose.msra.mxu0 0.0
    %707 = vmatprep.subr.mxu0 0.0
    %708 = vmatpush1.xpose.msra.mxu0 0.0
    %709 = vmatprep.subr.mxu0 0.0
    %710 = vmatpush1.xpose.msra.mxu0 0.0
    %711 = vmatprep.subr.mxu0 0.0
    %712 = vmatpush1.xpose.msra.mxu0 0.0
    %713 = vmatprep.mubr.f32.mxu0 0.0
    %714 = vmatmul.mubr.f32.gmra.mrb[0].mxu0 %v641
    %v715 = vpop.f32.mrb[0].mxu0
    %v716 = vadd.f32 %v373, %v715
    %v717 = vpop.f32.mrb[0].mxu0
    %718 = vmatprep.mubr.f32.mxu0 0.0
    %719 = vmatmul.mubr.f32.gmra.mrb[0].mxu0 %v643
    %v720 = vpop.f32.mrb[0].mxu0
    %v721 = vadd.f32 %v374, %v720
    %v722 = vpop.f32.mrb[0].mxu0
    %723 = vdwg.mxu0
    %724 = vrot.lane.b32.xlu0 %v191, 64
    %v725 = vpop.permute.xlu0 %724
    %726 = vrot.lane.b32.xlu0 %v193, 64
    %v727 = vpop.permute.xlu0 %726
    %v728 = vsel %vm379, %v191, 0
    %v730 = vsel %vm379, %v193, 0
    %v732 = vsel %vm379, %v725, 0
    %v734 = vsel %vm379, %v727, 0
    %736 = vmatprep.subr.mxu0 0.0
    %737 = vmatpush1.xpose.msra.mxu0 %v732
    %738 = vmatprep.subr.mxu0 0.0
    %739 = vmatpush1.xpose.msra.mxu0 %v734
    %740 = vmatprep.subr.mxu0 0.0
    %741 = vmatpush1.xpose.msra.mxu0 0.0
    %742 = vmatprep.subr.mxu0 0.0
    %743 = vmatpush1.xpose.msra.mxu0 0.0
    %744 = vmatprep.subr.mxu0 0.0
    %745 = vmatpush1.xpose.msra.mxu0 0.0
    %746 = vmatprep.subr.mxu0 0.0
    %747 = vmatpush1.xpose.msra.mxu0 0.0
    %748 = vmatprep.subr.mxu0 0.0
    %749 = vmatpush1.xpose.msra.mxu0 0.0
    %750 = vmatprep.subr.mxu0 0.0
    %751 = vmatpush1.xpose.msra.mxu0 0.0
    %752 = vmatprep.subr.mxu0 0.0
    %753 = vmatpush1.xpose.msra.mxu0 0.0
    %754 = vmatprep.subr.mxu0 0.0
    %755 = vmatpush1.xpose.msra.mxu0 0.0
    %756 = vmatprep.subr.mxu0 0.0
    %757 = vmatpush1.xpose.msra.mxu0 0.0
    %758 = vmatprep.subr.mxu0 0.0
    %759 = vmatpush1.xpose.msra.mxu0 0.0
    %760 = vmatprep.subr.mxu0 0.0
    %761 = vmatpush1.xpose.msra.mxu0 0.0
    %762 = vmatprep.subr.mxu0 0.0
    %763 = vmatpush1.xpose.msra.mxu0 0.0
    %764 = vmatprep.subr.mxu0 0.0
    %765 = vmatpush1.xpose.msra.mxu0 0.0
    %766 = vmatprep.subr.mxu0 0.0
    %767 = vmatpush1.xpose.msra.mxu0 0.0
    %768 = vmatprep.subr.mxu0 0.0
    %769 = vmatpush1.xpose.msra.mxu0 0.0
    %770 = vmatprep.subr.mxu0 0.0
    %771 = vmatpush1.xpose.msra.mxu0 0.0
    %772 = vmatprep.subr.mxu0 0.0
    %773 = vmatpush1.xpose.msra.mxu0 0.0
    %774 = vmatprep.subr.mxu0 0.0
    %775 = vmatpush1.xpose.msra.mxu0 0.0
    %776 = vmatprep.subr.mxu0 0.0
    %777 = vmatpush1.xpose.msra.mxu0 0.0
    %778 = vmatprep.subr.mxu0 0.0
    %779 = vmatpush1.xpose.msra.mxu0 0.0
    %780 = vmatprep.subr.mxu0 0.0
    %781 = vmatpush1.xpose.msra.mxu0 0.0
    %782 = vmatprep.subr.mxu0 0.0
    %783 = vmatpush1.xpose.msra.mxu0 0.0
    %784 = vmatprep.subr.mxu0 0.0
    %785 = vmatpush1.xpose.msra.mxu0 0.0
    %786 = vmatprep.subr.mxu0 0.0
    %787 = vmatpush1.xpose.msra.mxu0 0.0
    %788 = vmatprep.subr.mxu0 0.0
    %789 = vmatpush1.xpose.msra.mxu0 0.0
    %790 = vmatprep.subr.mxu0 0.0
    %791 = vmatpush1.xpose.msra.mxu0 0.0
    %792 = vmatprep.subr.mxu0 0.0
    %793 = vmatpush1.xpose.msra.mxu0 0.0
    %794 = vmatprep.subr.mxu0 0.0
    %795 = vmatpush1.xpose.msra.mxu0 0.0
    %796 = vmatprep.subr.mxu0 0.0
    %797 = vmatpush1.xpose.msra.mxu0 0.0
    %798 = vmatprep.subr.mxu0 0.0
    %799 = vmatpush1.xpose.msra.mxu0 0.0
    %800 = vmatprep.mubr.f32.mxu0 0.0
    %801 = vmatmul.mubr.f32.gmra.mrb[0].mxu0 %v728
    %v802 = vpop.f32.mrb[0].mxu0
    %v803 = vadd.f32 %v373, %v802
    %v804 = vpop.f32.mrb[0].mxu0
    %805 = vmatprep.mubr.f32.mxu0 0.0
    %806 = vmatmul.mubr.f32.gmra.mrb[0].mxu0 %v730
    %v807 = vpop.f32.mrb[0].mxu0
    %v808 = vadd.f32 %v374, %v807
    %v809 = vpop.f32.mrb[0].mxu0
    %810 = vdwg.mxu0
    %811 = vrot.lane.b32.xlu0 %v195, 64
    %v812 = vpop.permute.xlu0 %811
    %813 = vrot.lane.b32.xlu0 %v197, 64
    %v814 = vpop.permute.xlu0 %813
    %v815 = vsel %vm379, %v195, 0
    %v817 = vsel %vm379, %v197, 0
    %v819 = vsel %vm379, %v812, 0
    %v821 = vsel %vm379, %v814, 0
    %823 = vmatprep.subr.mxu0 0.0
    %824 = vmatpush1.xpose.msra.mxu0 %v819
    %825 = vmatprep.subr.mxu0 0.0
    %826 = vmatpush1.xpose.msra.mxu0 %v821
    %827 = vmatprep.subr.mxu0 0.0
    %828 = vmatpush1.xpose.msra.mxu0 0.0
    %829 = vmatprep.subr.mxu0 0.0
    %830 = vmatpush1.xpose.msra.mxu0 0.0
    %831 = vmatprep.subr.mxu0 0.0
    %832 = vmatpush1.xpose.msra.mxu0 0.0
    %833 = vmatprep.subr.mxu0 0.0
    %834 = vmatpush1.xpose.msra.mxu0 0.0
    %835 = vmatprep.subr.mxu0 0.0
    %836 = vmatpush1.xpose.msra.mxu0 0.0
    %837 = vmatprep.subr.mxu0 0.0
    %838 = vmatpush1.xpose.msra.mxu0 0.0
    %839 = vmatprep.subr.mxu0 0.0
    %840 = vmatpush1.xpose.msra.mxu0 0.0
    %841 = vmatprep.subr.mxu0 0.0
    %842 = vmatpush1.xpose.msra.mxu0 0.0
    %843 = vmatprep.subr.mxu0 0.0
    %844 = vmatpush1.xpose.msra.mxu0 0.0
    %845 = vmatprep.subr.mxu0 0.0
    %846 = vmatpush1.xpose.msra.mxu0 0.0
    %847 = vmatprep.subr.mxu0 0.0
    %848 = vmatpush1.xpose.msra.mxu0 0.0
    %849 = vmatprep.subr.mxu0 0.0
    %850 = vmatpush1.xpose.msra.mxu0 0.0
    %851 = vmatprep.subr.mxu0 0.0
    %852 = vmatpush1.xpose.msra.mxu0 0.0
    %853 = vmatprep.subr.mxu0 0.0
    %854 = vmatpush1.xpose.msra.mxu0 0.0
    %855 = vmatprep.subr.mxu0 0.0
    %856 = vmatpush1.xpose.msra.mxu0 0.0
    %857 = vmatprep.subr.mxu0 0.0
    %858 = vmatpush1.xpose.msra.mxu0 0.0
    %859 = vmatprep.subr.mxu0 0.0
    %860 = vmatpush1.xpose.msra.mxu0 0.0
    %861 = vmatprep.subr.mxu0 0.0
    %862 = vmatpush1.xpose.msra.mxu0 0.0
    %863 = vmatprep.subr.mxu0 0.0
    %864 = vmatpush1.xpose.msra.mxu0 0.0
    %865 = vmatprep.subr.mxu0 0.0
    %866 = vmatpush1.xpose.msra.mxu0 0.0
    %867 = vmatprep.subr.mxu0 0.0
    %868 = vmatpush1.xpose.msra.mxu0 0.0
    %869 = vmatprep.subr.mxu0 0.0
    %870 = vmatpush1.xpose.msra.mxu0 0.0
    %871 = vmatprep.subr.mxu0 0.0
    %872 = vmatpush1.xpose.msra.mxu0 0.0
    %873 = vmatprep.subr.mxu0 0.0
    %874 = vmatpush1.xpose.msra.mxu0 0.0
    %875 = vmatprep.subr.mxu0 0.0
    %876 = vmatpush1.xpose.msra.mxu0 0.0
    %877 = vmatprep.subr.mxu0 0.0
    %878 = vmatpush1.xpose.msra.mxu0 0.0
    %879 = vmatprep.subr.mxu0 0.0
    %880 = vmatpush1.xpose.msra.mxu0 0.0
    %881 = vmatprep.subr.mxu0 0.0
    %882 = vmatpush1.xpose.msra.mxu0 0.0
    %883 = vmatprep.subr.mxu0 0.0
    %884 = vmatpush1.xpose.msra.mxu0 0.0
    %885 = vmatprep.subr.mxu0 0.0
    %886 = vmatpush1.xpose.msra.mxu0 0.0
    %887 = vmatprep.mubr.f32.mxu0 0.0
    %888 = vmatmul.mubr.f32.gmra.mrb[0].mxu0 %v815
    %v889 = vpop.f32.mrb[0].mxu0
    %v890 = vadd.f32 %v373, %v889
    %v891 = vpop.f32.mrb[0].mxu0
    %892 = vmatprep.mubr.f32.mxu0 0.0
    %893 = vmatmul.mubr.f32.gmra.mrb[0].mxu0 %v817
    %v894 = vpop.f32.mrb[0].mxu0
    %v895 = vadd.f32 %v374, %v894
    %v896 = vpop.f32.mrb[0].mxu0
    %897 = vdwg.mxu0
    %898 = vrot.lane.b32.xlu0 %v199, 64
    %v899 = vpop.permute.xlu0 %898
    %900 = vrot.lane.b32.xlu0 %v201, 64
    %v901 = vpop.permute.xlu0 %900
    %v902 = vsel %vm379, %v199, 0
    %v904 = vsel %vm379, %v201, 0
    %v906 = vsel %vm379, %v899, 0
    %v908 = vsel %vm379, %v901, 0
    %910 = vmatprep.subr.mxu0 0.0
    %911 = vmatpush1.xpose.msra.mxu0 %v906
    %912 = vmatprep.subr.mxu0 0.0
    %913 = vmatpush1.xpose.msra.mxu0 %v908
    %914 = vmatprep.subr.mxu0 0.0
    %915 = vmatpush1.xpose.msra.mxu0 0.0
    %916 = vmatprep.subr.mxu0 0.0
    %917 = vmatpush1.xpose.msra.mxu0 0.0
    %918 = vmatprep.subr.mxu0 0.0
    %919 = vmatpush1.xpose.msra.mxu0 0.0
    %920 = vmatprep.subr.mxu0 0.0
    %921 = vmatpush1.xpose.msra.mxu0 0.0
    %922 = vmatprep.subr.mxu0 0.0
    %923 = vmatpush1.xpose.msra.mxu0 0.0
    %924 = vmatprep.subr.mxu0 0.0
    %925 = vmatpush1.xpose.msra.mxu0 0.0
    %926 = vmatprep.subr.mxu0 0.0
    %927 = vmatpush1.xpose.msra.mxu0 0.0
    %928 = vmatprep.subr.mxu0 0.0
    %929 = vmatpush1.xpose.msra.mxu0 0.0
    %930 = vmatprep.subr.mxu0 0.0
    %931 = vmatpush1.xpose.msra.mxu0 0.0
    %932 = vmatprep.subr.mxu0 0.0
    %933 = vmatpush1.xpose.msra.mxu0 0.0
    %934 = vmatprep.subr.mxu0 0.0
    %935 = vmatpush1.xpose.msra.mxu0 0.0
    %936 = vmatprep.subr.mxu0 0.0
    %937 = vmatpush1.xpose.msra.mxu0 0.0
    %938 = vmatprep.subr.mxu0 0.0
    %939 = vmatpush1.xpose.msra.mxu0 0.0
    %940 = vmatprep.subr.mxu0 0.0
    %941 = vmatpush1.xpose.msra.mxu0 0.0
    %942 = vmatprep.subr.mxu0 0.0
    %943 = vmatpush1.xpose.msra.mxu0 0.0
    %944 = vmatprep.subr.mxu0 0.0
    %945 = vmatpush1.xpose.msra.mxu0 0.0
    %946 = vmatprep.subr.mxu0 0.0
    %947 = vmatpush1.xpose.msra.mxu0 0.0
    %948 = vmatprep.subr.mxu0 0.0
    %949 = vmatpush1.xpose.msra.mxu0 0.0
    %950 = vmatprep.subr.mxu0 0.0
    %951 = vmatpush1.xpose.msra.mxu0 0.0
    %952 = vmatprep.subr.mxu0 0.0
    %953 = vmatpush1.xpose.msra.mxu0 0.0
    %954 = vmatprep.subr.mxu0 0.0
    %955 = vmatpush1.xpose.msra.mxu0 0.0
    %956 = vmatprep.subr.mxu0 0.0
    %957 = vmatpush1.xpose.msra.mxu0 0.0
    %958 = vmatprep.subr.mxu0 0.0
    %959 = vmatpush1.xpose.msra.mxu0 0.0
    %960 = vmatprep.subr.mxu0 0.0
    %961 = vmatpush1.xpose.msra.mxu0 0.0
    %962 = vmatprep.subr.mxu0 0.0
    %963 = vmatpush1.xpose.msra.mxu0 0.0
    %964 = vmatprep.subr.mxu0 0.0
    %965 = vmatpush1.xpose.msra.mxu0 0.0
    %966 = vmatprep.subr.mxu0 0.0
    %967 = vmatpush1.xpose.msra.mxu0 0.0
    %968 = vmatprep.subr.mxu0 0.0
    %969 = vmatpush1.xpose.msra.mxu0 0.0
    %970 = vmatprep.subr.mxu0 0.0
    %971 = vmatpush1.xpose.msra.mxu0 0.0
    %972 = vmatprep.subr.mxu0 0.0
    %973 = vmatpush1.xpose.msra.mxu0 0.0
    %974 = vmatprep.mubr.f32.mxu0 0.0
    %975 = vmatmul.mubr.f32.gmra.mrb[0].mxu0 %v902
    %v976 = vpop.f32.mrb[0].mxu0
    %v977 = vadd.f32 %v373, %v976
    %v978 = vpop.f32.mrb[0].mxu0
    %979 = vmatprep.mubr.f32.mxu0 0.0
    %980 = vmatmul.mubr.f32.gmra.mrb[0].mxu0 %v904
    %v981 = vpop.f32.mrb[0].mxu0
    %v982 = vadd.f32 %v374, %v981
    %v983 = vpop.f32.mrb[0].mxu0
    %984 = vdwg.mxu0
    %985 = vrot.lane.b32.xlu0 %v203, 64
    %v986 = vpop.permute.xlu0 %985
    %987 = vrot.lane.b32.xlu0 %v205, 64
    %v988 = vpop.permute.xlu0 %987
    %v989 = vsel %vm379, %v203, 0
    %v991 = vsel %vm379, %v205, 0
    %v993 = vsel %vm379, %v986, 0
    %v995 = vsel %vm379, %v988, 0
    %997 = vmatprep.subr.mxu0 0.0
    %998 = vmatpush1.xpose.msra.mxu0 %v993
    %999 = vmatprep.subr.mxu0 0.0
    %1000 = vmatpush1.xpose.msra.mxu0 %v995
    %1001 = vmatprep.subr.mxu0 0.0
    %1002 = vmatpush1.xpose.msra.mxu0 0.0
    %1003 = vmatprep.subr.mxu0 0.0
    %1004 = vmatpush1.xpose.msra.mxu0 0.0
    %1005 = vmatprep.subr.mxu0 0.0
    %1006 = vmatpush1.xpose.msra.mxu0 0.0
    %1007 = vmatprep.subr.mxu0 0.0
    %1008 = vmatpush1.xpose.msra.mxu0 0.0
    %1009 = vmatprep.subr.mxu0 0.0
    %1010 = vmatpush1.xpose.msra.mxu0 0.0
    %1011 = vmatprep.subr.mxu0 0.0
    %1012 = vmatpush1.xpose.msra.mxu0 0.0
    %1013 = vmatprep.subr.mxu0 0.0
    %1014 = vmatpush1.xpose.msra.mxu0 0.0
    %1015 = vmatprep.subr.mxu0 0.0
    %1016 = vmatpush1.xpose.msra.mxu0 0.0
    %1017 = vmatprep.subr.mxu0 0.0
    %1018 = vmatpush1.xpose.msra.mxu0 0.0
    %1019 = vmatprep.subr.mxu0 0.0
    %1020 = vmatpush1.xpose.msra.mxu0 0.0
    %1021 = vmatprep.subr.mxu0 0.0
    %1022 = vmatpush1.xpose.msra.mxu0 0.0
    %1023 = vmatprep.subr.mxu0 0.0
    %1024 = vmatpush1.xpose.msra.mxu0 0.0
    %1025 = vmatprep.subr.mxu0 0.0
    %1026 = vmatpush1.xpose.msra.mxu0 0.0
    %1027 = vmatprep.subr.mxu0 0.0
    %1028 = vmatpush1.xpose.msra.mxu0 0.0
    %1029 = vmatprep.subr.mxu0 0.0
    %1030 = vmatpush1.xpose.msra.mxu0 0.0
    %1031 = vmatprep.subr.mxu0 0.0
    %1032 = vmatpush1.xpose.msra.mxu0 0.0
    %1033 = vmatprep.subr.mxu0 0.0
    %1034 = vmatpush1.xpose.msra.mxu0 0.0
    %1035 = vmatprep.subr.mxu0 0.0
    %1036 = vmatpush1.xpose.msra.mxu0 0.0
    %1037 = vmatprep.subr.mxu0 0.0
    %1038 = vmatpush1.xpose.msra.mxu0 0.0
    %1039 = vmatprep.subr.mxu0 0.0
    %1040 = vmatpush1.xpose.msra.mxu0 0.0
    %1041 = vmatprep.subr.mxu0 0.0
    %1042 = vmatpush1.xpose.msra.mxu0 0.0
    %1043 = vmatprep.subr.mxu0 0.0
    %1044 = vmatpush1.xpose.msra.mxu0 0.0
    %1045 = vmatprep.subr.mxu0 0.0
    %1046 = vmatpush1.xpose.msra.mxu0 0.0
    %1047 = vmatprep.subr.mxu0 0.0
    %1048 = vmatpush1.xpose.msra.mxu0 0.0
    %1049 = vmatprep.subr.mxu0 0.0
    %1050 = vmatpush1.xpose.msra.mxu0 0.0
    %1051 = vmatprep.subr.mxu0 0.0
    %1052 = vmatpush1.xpose.msra.mxu0 0.0
    %1053 = vmatprep.subr.mxu0 0.0
    %1054 = vmatpush1.xpose.msra.mxu0 0.0
    %1055 = vmatprep.subr.mxu0 0.0
    %1056 = vmatpush1.xpose.msra.mxu0 0.0
    %1057 = vmatprep.subr.mxu0 0.0
    %1058 = vmatpush1.xpose.msra.mxu0 0.0
    %1059 = vmatprep.subr.mxu0 0.0
    %1060 = vmatpush1.xpose.msra.mxu0 0.0
    %1061 = vmatprep.mubr.f32.mxu0 0.0
    %1062 = vmatmul.mubr.f32.gmra.mrb[0].mxu0 %v989
    %v1063 = vpop.f32.mrb[0].mxu0
    %v1064 = vadd.f32 %v373, %v1063
    %v1065 = vpop.f32.mrb[0].mxu0
    %1066 = vmatprep.mubr.f32.mxu0 0.0
    %1067 = vmatmul.mubr.f32.gmra.mrb[0].mxu0 %v991
    %v1068 = vpop.f32.mrb[0].mxu0
    %v1069 = vadd.f32 %v374, %v1068
    %v1070 = vpop.f32.mrb[0].mxu0
    %1071 = vdwg.mxu0
    %1072 = vrot.lane.b32.xlu0 %v207, 64
    %v1073 = vpop.permute.xlu0 %1072
    %1074 = vrot.lane.b32.xlu0 %v209, 64
    %v1075 = vpop.permute.xlu0 %1074
    %v1076 = vsel %vm379, %v207, 0
    %v1078 = vsel %vm379, %v209, 0
    %v1080 = vsel %vm379, %v1073, 0
    %v1082 = vsel %vm379, %v1075, 0
    %1084 = vmatprep.subr.mxu0 0.0
    %1085 = vmatpush1.xpose.msra.mxu0 %v1080
    %1086 = vmatprep.subr.mxu0 0.0
    %1087 = vmatpush1.xpose.msra.mxu0 %v1082
    %1088 = vmatprep.subr.mxu0 0.0
    %1089 = vmatpush1.xpose.msra.mxu0 0.0
    %1090 = vmatprep.subr.mxu0 0.0
    %1091 = vmatpush1.xpose.msra.mxu0 0.0
    %1092 = vmatprep.subr.mxu0 0.0
    %1093 = vmatpush1.xpose.msra.mxu0 0.0
    %1094 = vmatprep.subr.mxu0 0.0
    %1095 = vmatpush1.xpose.msra.mxu0 0.0
    %1096 = vmatprep.subr.mxu0 0.0
    %1097 = vmatpush1.xpose.msra.mxu0 0.0
    %1098 = vmatprep.subr.mxu0 0.0
    %1099 = vmatpush1.xpose.msra.mxu0 0.0
    %1100 = vmatprep.subr.mxu0 0.0
    %1101 = vmatpush1.xpose.msra.mxu0 0.0
    %1102 = vmatprep.subr.mxu0 0.0
    %1103 = vmatpush1.xpose.msra.mxu0 0.0
    %1104 = vmatprep.subr.mxu0 0.0
    %1105 = vmatpush1.xpose.msra.mxu0 0.0
    %1106 = vmatprep.subr.mxu0 0.0
    %1107 = vmatpush1.xpose.msra.mxu0 0.0
    %1108 = vmatprep.subr.mxu0 0.0
    %1109 = vmatpush1.xpose.msra.mxu0 0.0
    %1110 = vmatprep.subr.mxu0 0.0
    %1111 = vmatpush1.xpose.msra.mxu0 0.0
    %1112 = vmatprep.subr.mxu0 0.0
    %1113 = vmatpush1.xpose.msra.mxu0 0.0
    %1114 = vmatprep.subr.mxu0 0.0
    %1115 = vmatpush1.xpose.msra.mxu0 0.0
    %1116 = vmatprep.subr.mxu0 0.0
    %1117 = vmatpush1.xpose.msra.mxu0 0.0
    %1118 = vmatprep.subr.mxu0 0.0
    %1119 = vmatpush1.xpose.msra.mxu0 0.0
    %1120 = vmatprep.subr.mxu0 0.0
    %1121 = vmatpush1.xpose.msra.mxu0 0.0
    %1122 = vmatprep.subr.mxu0 0.0
    %1123 = vmatpush1.xpose.msra.mxu0 0.0
    %1124 = vmatprep.subr.mxu0 0.0
    %1125 = vmatpush1.xpose.msra.mxu0 0.0
    %1126 = vmatprep.subr.mxu0 0.0
    %1127 = vmatpush1.xpose.msra.mxu0 0.0
    %1128 = vmatprep.subr.mxu0 0.0
    %1129 = vmatpush1.xpose.msra.mxu0 0.0
    %1130 = vmatprep.subr.mxu0 0.0
    %1131 = vmatpush1.xpose.msra.mxu0 0.0
    %1132 = vmatprep.subr.mxu0 0.0
    %1133 = vmatpush1.xpose.msra.mxu0 0.0
    %1134 = vmatprep.subr.mxu0 0.0
    %1135 = vmatpush1.xpose.msra.mxu0 0.0
    %1136 = vmatprep.subr.mxu0 0.0
    %1137 = vmatpush1.xpose.msra.mxu0 0.0
    %1138 = vmatprep.subr.mxu0 0.0
    %1139 = vmatpush1.xpose.msra.mxu0 0.0
    %1140 = vmatprep.subr.mxu0 0.0
    %1141 = vmatpush1.xpose.msra.mxu0 0.0
    %1142 = vmatprep.subr.mxu0 0.0
    %1143 = vmatpush1.xpose.msra.mxu0 0.0
    %1144 = vmatprep.subr.mxu0 0.0
    %1145 = vmatpush1.xpose.msra.mxu0 0.0
    %1146 = vmatprep.subr.mxu0 0.0
    %1147 = vmatpush1.xpose.msra.mxu0 0.0
    %1148 = vmatprep.mubr.f32.mxu0 0.0
    %1149 = vmatmul.mubr.f32.gmra.mrb[0].mxu0 %v1076
    %v1150 = vpop.f32.mrb[0].mxu0
    %v1151 = vadd.f32 %v373, %v1150
    %v1152 = vpop.f32.mrb[0].mxu0
    %1153 = vmatprep.mubr.f32.mxu0 0.0
    %1154 = vmatmul.mubr.f32.gmra.mrb[0].mxu0 %v1078
    %v1155 = vpop.f32.mrb[0].mxu0
    %v1156 = vadd.f32 %v374, %v1155
    %v1157 = vpop.f32.mrb[0].mxu0
    %1158 = vdwg.mxu0
    %1159 = vrot.lane.b32.xlu0 %v211, 64
    %v1160 = vpop.permute.xlu0 %1159
    %1161 = vrot.lane.b32.xlu0 %v213, 64
    %v1162 = vpop.permute.xlu0 %1161
    %v1163 = vsel %vm379, %v211, 0
    %v1165 = vsel %vm379, %v213, 0
    %v1167 = vsel %vm379, %v1160, 0
    %v1169 = vsel %vm379, %v1162, 0
    %1171 = vmatprep.subr.mxu0 0.0
    %1172 = vmatpush1.xpose.msra.mxu0 %v1167
    %1173 = vmatprep.subr.mxu0 0.0
    %1174 = vmatpush1.xpose.msra.mxu0 %v1169
    %1175 = vmatprep.subr.mxu0 0.0
    %1176 = vmatpush1.xpose.msra.mxu0 0.0
    %1177 = vmatprep.subr.mxu0 0.0
    %1178 = vmatpush1.xpose.msra.mxu0 0.0
    %1179 = vmatprep.subr.mxu0 0.0
    %1180 = vmatpush1.xpose.msra.mxu0 0.0
    %1181 = vmatprep.subr.mxu0 0.0
    %1182 = vmatpush1.xpose.msra.mxu0 0.0
    %1183 = vmatprep.subr.mxu0 0.0
    %1184 = vmatpush1.xpose.msra.mxu0 0.0
    %1185 = vmatprep.subr.mxu0 0.0
    %1186 = vmatpush1.xpose.msra.mxu0 0.0
    %1187 = vmatprep.subr.mxu0 0.0
    %1188 = vmatpush1.xpose.msra.mxu0 0.0
    %1189 = vmatprep.subr.mxu0 0.0
    %1190 = vmatpush1.xpose.msra.mxu0 0.0
    %1191 = vmatprep.subr.mxu0 0.0
    %1192 = vmatpush1.xpose.msra.mxu0 0.0
    %1193 = vmatprep.subr.mxu0 0.0
    %1194 = vmatpush1.xpose.msra.mxu0 0.0
    %1195 = vmatprep.subr.mxu0 0.0
    %1196 = vmatpush1.xpose.msra.mxu0 0.0
    %1197 = vmatprep.subr.mxu0 0.0
    %1198 = vmatpush1.xpose.msra.mxu0 0.0
    %1199 = vmatprep.subr.mxu0 0.0
    %1200 = vmatpush1.xpose.msra.mxu0 0.0
    %1201 = vmatprep.subr.mxu0 0.0
    %1202 = vmatpush1.xpose.msra.mxu0 0.0
    %1203 = vmatprep.subr.mxu0 0.0
    %1204 = vmatpush1.xpose.msra.mxu0 0.0
    %1205 = vmatprep.subr.mxu0 0.0
    %1206 = vmatpush1.xpose.msra.mxu0 0.0
    %1207 = vmatprep.subr.mxu0 0.0
    %1208 = vmatpush1.xpose.msra.mxu0 0.0
    %1209 = vmatprep.subr.mxu0 0.0
    %1210 = vmatpush1.xpose.msra.mxu0 0.0
    %1211 = vmatprep.subr.mxu0 0.0
    %1212 = vmatpush1.xpose.msra.mxu0 0.0
    %1213 = vmatprep.subr.mxu0 0.0
    %1214 = vmatpush1.xpose.msra.mxu0 0.0
    %1215 = vmatprep.subr.mxu0 0.0
    %1216 = vmatpush1.xpose.msra.mxu0 0.0
    %1217 = vmatprep.subr.mxu0 0.0
    %1218 = vmatpush1.xpose.msra.mxu0 0.0
    %1219 = vmatprep.subr.mxu0 0.0
    %1220 = vmatpush1.xpose.msra.mxu0 0.0
    %1221 = vmatprep.subr.mxu0 0.0
    %1222 = vmatpush1.xpose.msra.mxu0 0.0
    %1223 = vmatprep.subr.mxu0 0.0
    %1224 = vmatpush1.xpose.msra.mxu0 0.0
    %1225 = vmatprep.subr.mxu0 0.0
    %1226 = vmatpush1.xpose.msra.mxu0 0.0
    %1227 = vmatprep.subr.mxu0 0.0
    %1228 = vmatpush1.xpose.msra.mxu0 0.0
    %1229 = vmatprep.subr.mxu0 0.0
    %1230 = vmatpush1.xpose.msra.mxu0 0.0
    %1231 = vmatprep.subr.mxu0 0.0
    %1232 = vmatpush1.xpose.msra.mxu0 0.0
    %1233 = vmatprep.subr.mxu0 0.0
    %1234 = vmatpush1.xpose.msra.mxu0 0.0
    %1235 = vmatprep.mubr.f32.mxu0 0.0
    %1236 = vmatmul.mubr.f32.gmra.mrb[0].mxu0 %v1163
    %v1237 = vpop.f32.mrb[0].mxu0
    %v1238 = vadd.f32 %v373, %v1237
    %v1239 = vpop.f32.mrb[0].mxu0
    %1240 = vmatprep.mubr.f32.mxu0 0.0
    %1241 = vmatmul.mubr.f32.gmra.mrb[0].mxu0 %v1165
    %v1242 = vpop.f32.mrb[0].mxu0
    %v1243 = vadd.f32 %v374, %v1242
    %v1244 = vpop.f32.mrb[0].mxu0
    %1245 = vdwg.mxu0
    %1246 = vrot.lane.b32.xlu0 %v215, 64
    %v1247 = vpop.permute.xlu0 %1246
    %1248 = vrot.lane.b32.xlu0 %v217, 64
    %v1249 = vpop.permute.xlu0 %1248
    %v1250 = vsel %vm379, %v215, 0
    %v1252 = vsel %vm379, %v217, 0
    %v1254 = vsel %vm379, %v1247, 0
    %v1256 = vsel %vm379, %v1249, 0
    %1258 = vmatprep.subr.mxu0 0.0
    %1259 = vmatpush1.xpose.msra.mxu0 %v1254
    %1260 = vmatprep.subr.mxu0 0.0
    %1261 = vmatpush1.xpose.msra.mxu0 %v1256
    %1262 = vmatprep.subr.mxu0 0.0
    %1263 = vmatpush1.xpose.msra.mxu0 0.0
    %1264 = vmatprep.subr.mxu0 0.0
    %1265 = vmatpush1.xpose.msra.mxu0 0.0
    %1266 = vmatprep.subr.mxu0 0.0
    %1267 = vmatpush1.xpose.msra.mxu0 0.0
    %1268 = vmatprep.subr.mxu0 0.0
    %1269 = vmatpush1.xpose.msra.mxu0 0.0
    %1270 = vmatprep.subr.mxu0 0.0
    %1271 = vmatpush1.xpose.msra.mxu0 0.0
    %1272 = vmatprep.subr.mxu0 0.0
    %1273 = vmatpush1.xpose.msra.mxu0 0.0
    %1274 = vmatprep.subr.mxu0 0.0
    %1275 = vmatpush1.xpose.msra.mxu0 0.0
    %1276 = vmatprep.subr.mxu0 0.0
    %1277 = vmatpush1.xpose.msra.mxu0 0.0
    %1278 = vmatprep.subr.mxu0 0.0
    %1279 = vmatpush1.xpose.msra.mxu0 0.0
    %1280 = vmatprep.subr.mxu0 0.0
    %1281 = vmatpush1.xpose.msra.mxu0 0.0
    %1282 = vmatprep.subr.mxu0 0.0
    %1283 = vmatpush1.xpose.msra.mxu0 0.0
    %1284 = vmatprep.subr.mxu0 0.0
    %1285 = vmatpush1.xpose.msra.mxu0 0.0
    %1286 = vmatprep.subr.mxu0 0.0
    %1287 = vmatpush1.xpose.msra.mxu0 0.0
    %1288 = vmatprep.subr.mxu0 0.0
    %1289 = vmatpush1.xpose.msra.mxu0 0.0
    %1290 = vmatprep.subr.mxu0 0.0
    %1291 = vmatpush1.xpose.msra.mxu0 0.0
    %1292 = vmatprep.subr.mxu0 0.0
    %1293 = vmatpush1.xpose.msra.mxu0 0.0
    %1294 = vmatprep.subr.mxu0 0.0
    %1295 = vmatpush1.xpose.msra.mxu0 0.0
    %1296 = vmatprep.subr.mxu0 0.0
    %1297 = vmatpush1.xpose.msra.mxu0 0.0
    %1298 = vmatprep.subr.mxu0 0.0
    %1299 = vmatpush1.xpose.msra.mxu0 0.0
    %1300 = vmatprep.subr.mxu0 0.0
    %1301 = vmatpush1.xpose.msra.mxu0 0.0
    %1302 = vmatprep.subr.mxu0 0.0
    %1303 = vmatpush1.xpose.msra.mxu0 0.0
    %1304 = vmatprep.subr.mxu0 0.0
    %1305 = vmatpush1.xpose.msra.mxu0 0.0
    %1306 = vmatprep.subr.mxu0 0.0
    %1307 = vmatpush1.xpose.msra.mxu0 0.0
    %1308 = vmatprep.subr.mxu0 0.0
    %1309 = vmatpush1.xpose.msra.mxu0 0.0
    %1310 = vmatprep.subr.mxu0 0.0
    %1311 = vmatpush1.xpose.msra.mxu0 0.0
    %1312 = vmatprep.subr.mxu0 0.0
    %1313 = vmatpush1.xpose.msra.mxu0 0.0
    %1314 = vmatprep.subr.mxu0 0.0
    %1315 = vmatpush1.xpose.msra.mxu0 0.0
    %1316 = vmatprep.subr.mxu0 0.0
    %1317 = vmatpush1.xpose.msra.mxu0 0.0
    %1318 = vmatprep.subr.mxu0 0.0
    %1319 = vmatpush1.xpose.msra.mxu0 0.0
    %1320 = vmatprep.subr.mxu0 0.0
    %1321 = vmatpush1.xpose.msra.mxu0 0.0
    %1322 = vmatprep.mubr.f32.mxu0 0.0
    %1323 = vmatmul.mubr.f32.gmra.mrb[0].mxu0 %v1250
    %v1324 = vpop.f32.mrb[0].mxu0
    %v1325 = vadd.f32 %v373, %v1324
    %v1326 = vpop.f32.mrb[0].mxu0
    %1327 = vmatprep.mubr.f32.mxu0 0.0
    %1328 = vmatmul.mubr.f32.gmra.mrb[0].mxu0 %v1252
    %v1329 = vpop.f32.mrb[0].mxu0
    %v1330 = vadd.f32 %v374, %v1329
    %v1331 = vpop.f32.mrb[0].mxu0
    %1332 = vdwg.mxu0
    %1333 = vrot.lane.b32.xlu0 %v219, 64
    %v1334 = vpop.permute.xlu0 %1333
    %1335 = vrot.lane.b32.xlu0 %v221, 64
    %v1336 = vpop.permute.xlu0 %1335
    %v1337 = vsel %vm379, %v219, 0
    %v1339 = vsel %vm379, %v221, 0
    %v1341 = vsel %vm379, %v1334, 0
    %v1343 = vsel %vm379, %v1336, 0
    %1345 = vmatprep.subr.mxu0 0.0
    %1346 = vmatpush1.xpose.msra.mxu0 %v1341
    %1347 = vmatprep.subr.mxu0 0.0
    %1348 = vmatpush1.xpose.msra.mxu0 %v1343
    %1349 = vmatprep.subr.mxu0 0.0
    %1350 = vmatpush1.xpose.msra.mxu0 0.0
    %1351 = vmatprep.subr.mxu0 0.0
    %1352 = vmatpush1.xpose.msra.mxu0 0.0
    %1353 = vmatprep.subr.mxu0 0.0
    %1354 = vmatpush1.xpose.msra.mxu0 0.0
    %1355 = vmatprep.subr.mxu0 0.0
    %1356 = vmatpush1.xpose.msra.mxu0 0.0
    %1357 = vmatprep.subr.mxu0 0.0
    %1358 = vmatpush1.xpose.msra.mxu0 0.0
    %1359 = vmatprep.subr.mxu0 0.0
    %1360 = vmatpush1.xpose.msra.mxu0 0.0
    %1361 = vmatprep.subr.mxu0 0.0
    %1362 = vmatpush1.xpose.msra.mxu0 0.0
    %1363 = vmatprep.subr.mxu0 0.0
    %1364 = vmatpush1.xpose.msra.mxu0 0.0
    %1365 = vmatprep.subr.mxu0 0.0
    %1366 = vmatpush1.xpose.msra.mxu0 0.0
    %1367 = vmatprep.subr.mxu0 0.0
    %1368 = vmatpush1.xpose.msra.mxu0 0.0
    %1369 = vmatprep.subr.mxu0 0.0
    %1370 = vmatpush1.xpose.msra.mxu0 0.0
    %1371 = vmatprep.subr.mxu0 0.0
    %1372 = vmatpush1.xpose.msra.mxu0 0.0
    %1373 = vmatprep.subr.mxu0 0.0
    %1374 = vmatpush1.xpose.msra.mxu0 0.0
    %1375 = vmatprep.subr.mxu0 0.0
    %1376 = vmatpush1.xpose.msra.mxu0 0.0
    %1377 = vmatprep.subr.mxu0 0.0
    %1378 = vmatpush1.xpose.msra.mxu0 0.0
    %1379 = vmatprep.subr.mxu0 0.0
    %1380 = vmatpush1.xpose.msra.mxu0 0.0
    %1381 = vmatprep.subr.mxu0 0.0
    %1382 = vmatpush1.xpose.msra.mxu0 0.0
    %1383 = vmatprep.subr.mxu0 0.0
    %1384 = vmatpush1.xpose.msra.mxu0 0.0
    %1385 = vmatprep.subr.mxu0 0.0
    %1386 = vmatpush1.xpose.msra.mxu0 0.0
    %1387 = vmatprep.subr.mxu0 0.0
    %1388 = vmatpush1.xpose.msra.mxu0 0.0
    %1389 = vmatprep.subr.mxu0 0.0
    %1390 = vmatpush1.xpose.msra.mxu0 0.0
    %1391 = vmatprep.subr.mxu0 0.0
    %1392 = vmatpush1.xpose.msra.mxu0 0.0
    %1393 = vmatprep.subr.mxu0 0.0
    %1394 = vmatpush1.xpose.msra.mxu0 0.0
    %1395 = vmatprep.subr.mxu0 0.0
    %1396 = vmatpush1.xpose.msra.mxu0 0.0
    %1397 = vmatprep.subr.mxu0 0.0
    %1398 = vmatpush1.xpose.msra.mxu0 0.0
    %1399 = vmatprep.subr.mxu0 0.0
    %1400 = vmatpush1.xpose.msra.mxu0 0.0
    %1401 = vmatprep.subr.mxu0 0.0
    %1402 = vmatpush1.xpose.msra.mxu0 0.0
    %1403 = vmatprep.subr.mxu0 0.0
    %1404 = vmatpush1.xpose.msra.mxu0 0.0
    %1405 = vmatprep.subr.mxu0 0.0
    %1406 = vmatpush1.xpose.msra.mxu0 0.0
    %1407 = vmatprep.subr.mxu0 0.0
    %1408 = vmatpush1.xpose.msra.mxu0 0.0
    %1409 = vmatprep.mubr.f32.mxu0 0.0
    %1410 = vmatmul.mubr.f32.gmra.mrb[0].mxu0 %v1337
    %v1411 = vpop.f32.mrb[0].mxu0
    %v1412 = vadd.f32 %v373, %v1411
    %v1413 = vpop.f32.mrb[0].mxu0
    %1414 = vmatprep.mubr.f32.mxu0 0.0
    %1415 = vmatmul.mubr.f32.gmra.mrb[0].mxu0 %v1339
    %v1416 = vpop.f32.mrb[0].mxu0
    %v1417 = vadd.f32 %v374, %v1416
    %v1418 = vpop.f32.mrb[0].mxu0
    %1419 = vdwg.mxu0
    %1420 = vrot.lane.b32.xlu0 %v223, 64
    %v1421 = vpop.permute.xlu0 %1420
    %1422 = vrot.lane.b32.xlu0 %v225, 64
    %v1423 = vpop.permute.xlu0 %1422
    %v1424 = vsel %vm379, %v223, 0
    %v1426 = vsel %vm379, %v225, 0
    %v1428 = vsel %vm379, %v1421, 0
    %v1430 = vsel %vm379, %v1423, 0
    %1432 = vmatprep.subr.mxu0 0.0
    %1433 = vmatpush1.xpose.msra.mxu0 %v1428
    %1434 = vmatprep.subr.mxu0 0.0
    %1435 = vmatpush1.xpose.msra.mxu0 %v1430
    %1436 = vmatprep.subr.mxu0 0.0
    %1437 = vmatpush1.xpose.msra.mxu0 0.0
    %1438 = vmatprep.subr.mxu0 0.0
    %1439 = vmatpush1.xpose.msra.mxu0 0.0
    %1440 = vmatprep.subr.mxu0 0.0
    %1441 = vmatpush1.xpose.msra.mxu0 0.0
    %1442 = vmatprep.subr.mxu0 0.0
    %1443 = vmatpush1.xpose.msra.mxu0 0.0
    %1444 = vmatprep.subr.mxu0 0.0
    %1445 = vmatpush1.xpose.msra.mxu0 0.0
    %1446 = vmatprep.subr.mxu0 0.0
    %1447 = vmatpush1.xpose.msra.mxu0 0.0
    %1448 = vmatprep.subr.mxu0 0.0
    %1449 = vmatpush1.xpose.msra.mxu0 0.0
    %1450 = vmatprep.subr.mxu0 0.0
    %1451 = vmatpush1.xpose.msra.mxu0 0.0
    %1452 = vmatprep.subr.mxu0 0.0
    %1453 = vmatpush1.xpose.msra.mxu0 0.0
    %1454 = vmatprep.subr.mxu0 0.0
    %1455 = vmatpush1.xpose.msra.mxu0 0.0
    %1456 = vmatprep.subr.mxu0 0.0
    %1457 = vmatpush1.xpose.msra.mxu0 0.0
    %1458 = vmatprep.subr.mxu0 0.0
    %1459 = vmatpush1.xpose.msra.mxu0 0.0
    %1460 = vmatprep.subr.mxu0 0.0
    %1461 = vmatpush1.xpose.msra.mxu0 0.0
    %1462 = vmatprep.subr.mxu0 0.0
    %1463 = vmatpush1.xpose.msra.mxu0 0.0
    %1464 = vmatprep.subr.mxu0 0.0
    %1465 = vmatpush1.xpose.msra.mxu0 0.0
    %1466 = vmatprep.subr.mxu0 0.0
    %1467 = vmatpush1.xpose.msra.mxu0 0.0
    %1468 = vmatprep.subr.mxu0 0.0
    %1469 = vmatpush1.xpose.msra.mxu0 0.0
    %1470 = vmatprep.subr.mxu0 0.0
    %1471 = vmatpush1.xpose.msra.mxu0 0.0
    %1472 = vmatprep.subr.mxu0 0.0
    %1473 = vmatpush1.xpose.msra.mxu0 0.0
    %1474 = vmatprep.subr.mxu0 0.0
    %1475 = vmatpush1.xpose.msra.mxu0 0.0
    %1476 = vmatprep.subr.mxu0 0.0
    %1477 = vmatpush1.xpose.msra.mxu0 0.0
    %1478 = vmatprep.subr.mxu0 0.0
    %1479 = vmatpush1.xpose.msra.mxu0 0.0
    %1480 = vmatprep.subr.mxu0 0.0
    %1481 = vmatpush1.xpose.msra.mxu0 0.0
    %1482 = vmatprep.subr.mxu0 0.0
    %1483 = vmatpush1.xpose.msra.mxu0 0.0
    %1484 = vmatprep.subr.mxu0 0.0
    %1485 = vmatpush1.xpose.msra.mxu0 0.0
    %1486 = vmatprep.subr.mxu0 0.0
    %1487 = vmatpush1.xpose.msra.mxu0 0.0
    %1488 = vmatprep.subr.mxu0 0.0
    %1489 = vmatpush1.xpose.msra.mxu0 0.0
    %1490 = vmatprep.subr.mxu0 0.0
    %1491 = vmatpush1.xpose.msra.mxu0 0.0
    %1492 = vmatprep.subr.mxu0 0.0
    %1493 = vmatpush1.xpose.msra.mxu0 0.0
    %1494 = vmatprep.subr.mxu0 0.0
    %1495 = vmatpush1.xpose.msra.mxu0 0.0
    %1496 = vmatprep.mubr.f32.mxu0 0.0
    %1497 = vmatmul.mubr.f32.gmra.mrb[0].mxu0 %v1424
    %v1498 = vpop.f32.mrb[0].mxu0
    %v1499 = vadd.f32 %v373, %v1498
    %v1500 = vpop.f32.mrb[0].mxu0
    %1501 = vmatprep.mubr.f32.mxu0 0.0
    %1502 = vmatmul.mubr.f32.gmra.mrb[0].mxu0 %v1426
    %v1503 = vpop.f32.mrb[0].mxu0
    %v1504 = vadd.f32 %v374, %v1503
    %v1505 = vpop.f32.mrb[0].mxu0
    %1506 = vdwg.mxu0
    %1507 = vrot.lane.b32.xlu0 %v227, 64
    %v1508 = vpop.permute.xlu0 %1507
    %1509 = vrot.lane.b32.xlu0 %v229, 64
    %v1510 = vpop.permute.xlu0 %1509
    %v1511 = vsel %vm379, %v227, 0
    %v1513 = vsel %vm379, %v229, 0
    %v1515 = vsel %vm379, %v1508, 0
    %v1517 = vsel %vm379, %v1510, 0
    %1519 = vmatprep.subr.mxu0 0.0
    %1520 = vmatpush1.xpose.msra.mxu0 %v1515
    %1521 = vmatprep.subr.mxu0 0.0
    %1522 = vmatpush1.xpose.msra.mxu0 %v1517
    %1523 = vmatprep.subr.mxu0 0.0
    %1524 = vmatpush1.xpose.msra.mxu0 0.0
    %1525 = vmatprep.subr.mxu0 0.0
    %1526 = vmatpush1.xpose.msra.mxu0 0.0
    %1527 = vmatprep.subr.mxu0 0.0
    %1528 = vmatpush1.xpose.msra.mxu0 0.0
    %1529 = vmatprep.subr.mxu0 0.0
    %1530 = vmatpush1.xpose.msra.mxu0 0.0
    %1531 = vmatprep.subr.mxu0 0.0
    %1532 = vmatpush1.xpose.msra.mxu0 0.0
    %1533 = vmatprep.subr.mxu0 0.0
    %1534 = vmatpush1.xpose.msra.mxu0 0.0
    %1535 = vmatprep.subr.mxu0 0.0
    %1536 = vmatpush1.xpose.msra.mxu0 0.0
    %1537 = vmatprep.subr.mxu0 0.0
    %1538 = vmatpush1.xpose.msra.mxu0 0.0
    %1539 = vmatprep.subr.mxu0 0.0
    %1540 = vmatpush1.xpose.msra.mxu0 0.0
    %1541 = vmatprep.subr.mxu0 0.0
    %1542 = vmatpush1.xpose.msra.mxu0 0.0
    %1543 = vmatprep.subr.mxu0 0.0
    %1544 = vmatpush1.xpose.msra.mxu0 0.0
    %1545 = vmatprep.subr.mxu0 0.0
    %1546 = vmatpush1.xpose.msra.mxu0 0.0
    %1547 = vmatprep.subr.mxu0 0.0
    %1548 = vmatpush1.xpose.msra.mxu0 0.0
    %1549 = vmatprep.subr.mxu0 0.0
    %1550 = vmatpush1.xpose.msra.mxu0 0.0
    %1551 = vmatprep.subr.mxu0 0.0
    %1552 = vmatpush1.xpose.msra.mxu0 0.0
    %1553 = vmatprep.subr.mxu0 0.0
    %1554 = vmatpush1.xpose.msra.mxu0 0.0
    %1555 = vmatprep.subr.mxu0 0.0
    %1556 = vmatpush1.xpose.msra.mxu0 0.0
    %1557 = vmatprep.subr.mxu0 0.0
    %1558 = vmatpush1.xpose.msra.mxu0 0.0
    %1559 = vmatprep.subr.mxu0 0.0
    %1560 = vmatpush1.xpose.msra.mxu0 0.0
    %1561 = vmatprep.subr.mxu0 0.0
    %1562 = vmatpush1.xpose.msra.mxu0 0.0
    %1563 = vmatprep.subr.mxu0 0.0
    %1564 = vmatpush1.xpose.msra.mxu0 0.0
    %1565 = vmatprep.subr.mxu0 0.0
    %1566 = vmatpush1.xpose.msra.mxu0 0.0
    %1567 = vmatprep.subr.mxu0 0.0
    %1568 = vmatpush1.xpose.msra.mxu0 0.0
    %1569 = vmatprep.subr.mxu0 0.0
    %1570 = vmatpush1.xpose.msra.mxu0 0.0
    %1571 = vmatprep.subr.mxu0 0.0
    %1572 = vmatpush1.xpose.msra.mxu0 0.0
    %1573 = vmatprep.subr.mxu0 0.0
    %1574 = vmatpush1.xpose.msra.mxu0 0.0
    %1575 = vmatprep.subr.mxu0 0.0
    %1576 = vmatpush1.xpose.msra.mxu0 0.0
    %1577 = vmatprep.subr.mxu0 0.0
    %1578 = vmatpush1.xpose.msra.mxu0 0.0
    %1579 = vmatprep.subr.mxu0 0.0
    %1580 = vmatpush1.xpose.msra.mxu0 0.0
    %1581 = vmatprep.subr.mxu0 0.0
    %1582 = vmatpush1.xpose.msra.mxu0 0.0
    %1583 = vmatprep.mubr.f32.mxu0 0.0
    %1584 = vmatmul.mubr.f32.gmra.mrb[0].mxu0 %v1511
    %v1585 = vpop.f32.mrb[0].mxu0
    %v1586 = vadd.f32 %v373, %v1585
    %v1587 = vpop.f32.mrb[0].mxu0
    %1588 = vmatprep.mubr.f32.mxu0 0.0
    %1589 = vmatmul.mubr.f32.gmra.mrb[0].mxu0 %v1513
    %v1590 = vpop.f32.mrb[0].mxu0
    %v1591 = vadd.f32 %v374, %v1590
    %v1592 = vpop.f32.mrb[0].mxu0
    %1593 = vdwg.mxu0
    %1594 = vrot.lane.b32.xlu0 %v231, 64
    %v1595 = vpop.permute.xlu0 %1594
    %1596 = vrot.lane.b32.xlu0 %v233, 64
    %v1597 = vpop.permute.xlu0 %1596
    %v1598 = vsel %vm379, %v231, 0
    %v1600 = vsel %vm379, %v233, 0
    %v1602 = vsel %vm379, %v1595, 0
    %v1604 = vsel %vm379, %v1597, 0
    %1606 = vmatprep.subr.mxu0 0.0
    %1607 = vmatpush1.xpose.msra.mxu0 %v1602
    %1608 = vmatprep.subr.mxu0 0.0
    %1609 = vmatpush1.xpose.msra.mxu0 %v1604
    %1610 = vmatprep.subr.mxu0 0.0
    %1611 = vmatpush1.xpose.msra.mxu0 0.0
    %1612 = vmatprep.subr.mxu0 0.0
    %1613 = vmatpush1.xpose.msra.mxu0 0.0
    %1614 = vmatprep.subr.mxu0 0.0
    %1615 = vmatpush1.xpose.msra.mxu0 0.0
    %1616 = vmatprep.subr.mxu0 0.0
    %1617 = vmatpush1.xpose.msra.mxu0 0.0
    %1618 = vmatprep.subr.mxu0 0.0
    %1619 = vmatpush1.xpose.msra.mxu0 0.0
    %1620 = vmatprep.subr.mxu0 0.0
    %1621 = vmatpush1.xpose.msra.mxu0 0.0
    %1622 = vmatprep.subr.mxu0 0.0
    %1623 = vmatpush1.xpose.msra.mxu0 0.0
    %1624 = vmatprep.subr.mxu0 0.0
    %1625 = vmatpush1.xpose.msra.mxu0 0.0
    %1626 = vmatprep.subr.mxu0 0.0
    %1627 = vmatpush1.xpose.msra.mxu0 0.0
    %1628 = vmatprep.subr.mxu0 0.0
    %1629 = vmatpush1.xpose.msra.mxu0 0.0
    %1630 = vmatprep.subr.mxu0 0.0
    %1631 = vmatpush1.xpose.msra.mxu0 0.0
    %1632 = vmatprep.subr.mxu0 0.0
    %1633 = vmatpush1.xpose.msra.mxu0 0.0
    %1634 = vmatprep.subr.mxu0 0.0
    %1635 = vmatpush1.xpose.msra.mxu0 0.0
    %1636 = vmatprep.subr.mxu0 0.0
    %1637 = vmatpush1.xpose.msra.mxu0 0.0
    %1638 = vmatprep.subr.mxu0 0.0
    %1639 = vmatpush1.xpose.msra.mxu0 0.0
    %1640 = vmatprep.subr.mxu0 0.0
    %1641 = vmatpush1.xpose.msra.mxu0 0.0
    %1642 = vmatprep.subr.mxu0 0.0
    %1643 = vmatpush1.xpose.msra.mxu0 0.0
    %1644 = vmatprep.subr.mxu0 0.0
    %1645 = vmatpush1.xpose.msra.mxu0 0.0
    %1646 = vmatprep.subr.mxu0 0.0
    %1647 = vmatpush1.xpose.msra.mxu0 0.0
    %1648 = vmatprep.subr.mxu0 0.0
    %1649 = vmatpush1.xpose.msra.mxu0 0.0
    %1650 = vmatprep.subr.mxu0 0.0
    %1651 = vmatpush1.xpose.msra.mxu0 0.0
    %1652 = vmatprep.subr.mxu0 0.0
    %1653 = vmatpush1.xpose.msra.mxu0 0.0
    %1654 = vmatprep.subr.mxu0 0.0
    %1655 = vmatpush1.xpose.msra.mxu0 0.0
    %1656 = vmatprep.subr.mxu0 0.0
    %1657 = vmatpush1.xpose.msra.mxu0 0.0
    %1658 = vmatprep.subr.mxu0 0.0
    %1659 = vmatpush1.xpose.msra.mxu0 0.0
    %1660 = vmatprep.subr.mxu0 0.0
    %1661 = vmatpush1.xpose.msra.mxu0 0.0
    %1662 = vmatprep.subr.mxu0 0.0
    %1663 = vmatpush1.xpose.msra.mxu0 0.0
    %1664 = vmatprep.subr.mxu0 0.0
    %1665 = vmatpush1.xpose.msra.mxu0 0.0
    %1666 = vmatprep.subr.mxu0 0.0
    %1667 = vmatpush1.xpose.msra.mxu0 0.0
    %1668 = vmatprep.subr.mxu0 0.0
    %1669 = vmatpush1.xpose.msra.mxu0 0.0
    %1670 = vmatprep.mubr.f32.mxu0 0.0
    %1671 = vmatmul.mubr.f32.gmra.mrb[0].mxu0 %v1598
    %v1672 = vpop.f32.mrb[0].mxu0
    %v1673 = vadd.f32 %v373, %v1672
    %v1674 = vpop.f32.mrb[0].mxu0
    %1675 = vmatprep.mubr.f32.mxu0 0.0
    %1676 = vmatmul.mubr.f32.gmra.mrb[0].mxu0 %v1600
    %v1677 = vpop.f32.mrb[0].mxu0
    %v1678 = vadd.f32 %v374, %v1677
    %v1679 = vpop.f32.mrb[0].mxu0
    %1680 = vdwg.mxu0
    %1681 = vrot.lane.b32.xlu0 %v235, 64
    %v1682 = vpop.permute.xlu0 %1681
    %1683 = vrot.lane.b32.xlu0 %v237, 64
    %v1684 = vpop.permute.xlu0 %1683
    %v1685 = vsel %vm379, %v235, 0
    %v1687 = vsel %vm379, %v237, 0
    %v1689 = vsel %vm379, %v1682, 0
    %v1691 = vsel %vm379, %v1684, 0
    %1693 = vmatprep.subr.mxu0 0.0
    %1694 = vmatpush1.xpose.msra.mxu0 %v1689
    %1695 = vmatprep.subr.mxu0 0.0
    %1696 = vmatpush1.xpose.msra.mxu0 %v1691
    %1697 = vmatprep.subr.mxu0 0.0
    %1698 = vmatpush1.xpose.msra.mxu0 0.0
    %1699 = vmatprep.subr.mxu0 0.0
    %1700 = vmatpush1.xpose.msra.mxu0 0.0
    %1701 = vmatprep.subr.mxu0 0.0
    %1702 = vmatpush1.xpose.msra.mxu0 0.0
    %1703 = vmatprep.subr.mxu0 0.0
    %1704 = vmatpush1.xpose.msra.mxu0 0.0
    %1705 = vmatprep.subr.mxu0 0.0
    %1706 = vmatpush1.xpose.msra.mxu0 0.0
    %1707 = vmatprep.subr.mxu0 0.0
    %1708 = vmatpush1.xpose.msra.mxu0 0.0
    %1709 = vmatprep.subr.mxu0 0.0
    %1710 = vmatpush1.xpose.msra.mxu0 0.0
    %1711 = vmatprep.subr.mxu0 0.0
    %1712 = vmatpush1.xpose.msra.mxu0 0.0
    %1713 = vmatprep.subr.mxu0 0.0
    %1714 = vmatpush1.xpose.msra.mxu0 0.0
    %1715 = vmatprep.subr.mxu0 0.0
    %1716 = vmatpush1.xpose.msra.mxu0 0.0
    %1717 = vmatprep.subr.mxu0 0.0
    %1718 = vmatpush1.xpose.msra.mxu0 0.0
    %1719 = vmatprep.subr.mxu0 0.0
    %1720 = vmatpush1.xpose.msra.mxu0 0.0
    %1721 = vmatprep.subr.mxu0 0.0
    %1722 = vmatpush1.xpose.msra.mxu0 0.0
    %1723 = vmatprep.subr.mxu0 0.0
    %1724 = vmatpush1.xpose.msra.mxu0 0.0
    %1725 = vmatprep.subr.mxu0 0.0
    %1726 = vmatpush1.xpose.msra.mxu0 0.0
    %1727 = vmatprep.subr.mxu0 0.0
    %1728 = vmatpush1.xpose.msra.mxu0 0.0
    %1729 = vmatprep.subr.mxu0 0.0
    %1730 = vmatpush1.xpose.msra.mxu0 0.0
    %1731 = vmatprep.subr.mxu0 0.0
    %1732 = vmatpush1.xpose.msra.mxu0 0.0
    %1733 = vmatprep.subr.mxu0 0.0
    %1734 = vmatpush1.xpose.msra.mxu0 0.0
    %1735 = vmatprep.subr.mxu0 0.0
    %1736 = vmatpush1.xpose.msra.mxu0 0.0
    %1737 = vmatprep.subr.mxu0 0.0
    %1738 = vmatpush1.xpose.msra.mxu0 0.0
    %1739 = vmatprep.subr.mxu0 0.0
    %1740 = vmatpush1.xpose.msra.mxu0 0.0
    %1741 = vmatprep.subr.mxu0 0.0
    %1742 = vmatpush1.xpose.msra.mxu0 0.0
    %1743 = vmatprep.subr.mxu0 0.0
    %1744 = vmatpush1.xpose.msra.mxu0 0.0
    %1745 = vmatprep.subr.mxu0 0.0
    %1746 = vmatpush1.xpose.msra.mxu0 0.0
    %1747 = vmatprep.subr.mxu0 0.0
    %1748 = vmatpush1.xpose.msra.mxu0 0.0
    %1749 = vmatprep.subr.mxu0 0.0
    %1750 = vmatpush1.xpose.msra.mxu0 0.0
    %1751 = vmatprep.subr.mxu0 0.0
    %1752 = vmatpush1.xpose.msra.mxu0 0.0
    %1753 = vmatprep.subr.mxu0 0.0
    %1754 = vmatpush1.xpose.msra.mxu0 0.0
    %1755 = vmatprep.subr.mxu0 0.0
    %1756 = vmatpush1.xpose.msra.mxu0 0.0
    %1757 = vmatprep.mubr.f32.mxu0 0.0
    %1758 = vmatmul.mubr.f32.gmra.mrb[0].mxu0 %v1685
    %v1759 = vpop.f32.mrb[0].mxu0
    %v1760 = vadd.f32 %v373, %v1759
    %v1761 = vpop.f32.mrb[0].mxu0
    %1762 = vmatprep.mubr.f32.mxu0 0.0
    %1763 = vmatmul.mubr.f32.gmra.mrb[0].mxu0 %v1687
    %v1764 = vpop.f32.mrb[0].mxu0
    %v1765 = vadd.f32 %v374, %v1764
    %v1766 = vpop.f32.mrb[0].mxu0
    %1767 = vdwg.mxu0
    %vm1768 = vcmask 130048
    %v1769 = vsel %vm1768, %v455, -inf
    %1770 = vmax.xlane.f32.xlu0 %v1769
    %v1771 = vpop.xlane.xlu0 %1770
    %v1772 = vsel %vm1768, %v460, -inf
    %1773 = vmax.xlane.f32.xlu0 %v1772
    %v1774 = vpop.xlane.xlu0 %1773
    %v1775 = vsel %vm1768, %v542, -inf
    %1776 = vmax.xlane.f32.xlu0 %v1775
    %v1777 = vpop.xlane.xlu0 %1776
    %v1778 = vsel %vm1768, %v547, -inf
    %1779 = vmax.xlane.f32.xlu0 %v1778
    %v1780 = vpop.xlane.xlu0 %1779
    %v1781 = vsel %vm1768, %v629, -inf
    %1782 = vmax.xlane.f32.xlu0 %v1781
    %v1783 = vpop.xlane.xlu0 %1782
    %v1784 = vsel %vm1768, %v634, -inf
    %1785 = vmax.xlane.f32.xlu0 %v1784
    %v1786 = vpop.xlane.xlu0 %1785
    %v1787 = vsel %vm1768, %v716, -inf
    %1788 = vmax.xlane.f32.xlu0 %v1787
    %v1789 = vpop.xlane.xlu0 %1788
    %v1790 = vsel %vm1768, %v721, -inf
    %1791 = vmax.xlane.f32.xlu0 %v1790
    %v1792 = vpop.xlane.xlu0 %1791
    %v1793 = vsel %vm1768, %v803, -inf
    %1794 = vmax.xlane.f32.xlu0 %v1793
    %v1795 = vpop.xlane.xlu0 %1794
    %v1796 = vsel %vm1768, %v808, -inf
    %1797 = vmax.xlane.f32.xlu0 %v1796
    %v1798 = vpop.xlane.xlu0 %1797
    %v1799 = vsel %vm1768, %v890, -inf
    %1800 = vmax.xlane.f32.xlu0 %v1799
    %v1801 = vpop.xlane.xlu0 %1800
    %v1802 = vsel %vm1768, %v895, -inf
    %1803 = vmax.xlane.f32.xlu0 %v1802
    %v1804 = vpop.xlane.xlu0 %1803
    %v1805 = vsel %vm1768, %v977, -inf
    %1806 = vmax.xlane.f32.xlu0 %v1805
    %v1807 = vpop.xlane.xlu0 %1806
    %v1808 = vsel %vm1768, %v982, -inf
    %1809 = vmax.xlane.f32.xlu0 %v1808
    %v1810 = vpop.xlane.xlu0 %1809
    %v1811 = vsel %vm1768, %v1064, -inf
    %1812 = vmax.xlane.f32.xlu0 %v1811
    %v1813 = vpop.xlane.xlu0 %1812
    %v1814 = vsel %vm1768, %v1069, -inf
    %1815 = vmax.xlane.f32.xlu0 %v1814
    %v1816 = vpop.xlane.xlu0 %1815
    %v1817 = vsel %vm1768, %v1151, -inf
    %1818 = vmax.xlane.f32.xlu0 %v1817
    %v1819 = vpop.xlane.xlu0 %1818
    %v1820 = vsel %vm1768, %v1156, -inf
    %1821 = vmax.xlane.f32.xlu0 %v1820
    %v1822 = vpop.xlane.xlu0 %1821
    %v1823 = vsel %vm1768, %v1238, -inf
    %1824 = vmax.xlane.f32.xlu0 %v1823
    %v1825 = vpop.xlane.xlu0 %1824
    %v1826 = vsel %vm1768, %v1243, -inf
    %1827 = vmax.xlane.f32.xlu0 %v1826
    %v1828 = vpop.xlane.xlu0 %1827
    %v1829 = vsel %vm1768, %v1325, -inf
    %1830 = vmax.xlane.f32.xlu0 %v1829
    %v1831 = vpop.xlane.xlu0 %1830
    %v1832 = vsel %vm1768, %v1330, -inf
    %1833 = vmax.xlane.f32.xlu0 %v1832
    %v1834 = vpop.xlane.xlu0 %1833
    %v1835 = vsel %vm1768, %v1412, -inf
    %1836 = vmax.xlane.f32.xlu0 %v1835
    %v1837 = vpop.xlane.xlu0 %1836
    %v1838 = vsel %vm1768, %v1417, -inf
    %1839 = vmax.xlane.f32.xlu0 %v1838
    %v1840 = vpop.xlane.xlu0 %1839
    %v1841 = vsel %vm1768, %v1499, -inf
    %1842 = vmax.xlane.f32.xlu0 %v1841
    %v1843 = vpop.xlane.xlu0 %1842
    %v1844 = vsel %vm1768, %v1504, -inf
    %1845 = vmax.xlane.f32.xlu0 %v1844
    %v1846 = vpop.xlane.xlu0 %1845
    %v1847 = vsel %vm1768, %v1586, -inf
    %1848 = vmax.xlane.f32.xlu0 %v1847
    %v1849 = vpop.xlane.xlu0 %1848
    %v1850 = vsel %vm1768, %v1591, -inf
    %1851 = vmax.xlane.f32.xlu0 %v1850
    %v1852 = vpop.xlane.xlu0 %1851
    %v1853 = vsel %vm1768, %v1673, -inf
    %1854 = vmax.xlane.f32.xlu0 %v1853
    %v1855 = vpop.xlane.xlu0 %1854
    %v1856 = vsel %vm1768, %v1678, -inf
    %1857 = vmax.xlane.f32.xlu0 %v1856
    %v1858 = vpop.xlane.xlu0 %1857
    %v1859 = vsel %vm1768, %v1760, -inf
    %1860 = vmax.xlane.f32.xlu0 %v1859
    %v1861 = vpop.xlane.xlu0 %1860
    %v1862 = vsel %vm1768, %v1765, -inf
    %1863 = vmax.xlane.f32.xlu0 %v1862
    %v1864 = vpop.xlane.xlu0 %1863
    %v1865 = vsub.f32 %v455, %v1771
    %v1866 = vsub.f32 %v460, %v1774
    %v1867 = vsub.f32 %v542, %v1777
    %v1868 = vsub.f32 %v547, %v1780
    %v1869 = vsub.f32 %v629, %v1783
    %v1870 = vsub.f32 %v634, %v1786
    %v1871 = vsub.f32 %v716, %v1789
    %v1872 = vsub.f32 %v721, %v1792
    %v1873 = vsub.f32 %v803, %v1795
    %v1874 = vsub.f32 %v808, %v1798
    %v1875 = vsub.f32 %v890, %v1801
    %v1876 = vsub.f32 %v895, %v1804
    %v1877 = vsub.f32 %v977, %v1807
    %v1878 = vsub.f32 %v982, %v1810
    %v1879 = vsub.f32 %v1064, %v1813
    %v1880 = vsub.f32 %v1069, %v1816
    %v1881 = vsub.f32 %v1151, %v1819
    %v1882 = vsub.f32 %v1156, %v1822
    %v1883 = vsub.f32 %v1238, %v1825
    %v1884 = vsub.f32 %v1243, %v1828
    %v1885 = vsub.f32 %v1325, %v1831
    %v1886 = vsub.f32 %v1330, %v1834
    %v1887 = vsub.f32 %v1412, %v1837
    %v1888 = vsub.f32 %v1417, %v1840
    %v1889 = vsub.f32 %v1499, %v1843
    %v1890 = vsub.f32 %v1504, %v1846
    %v1891 = vsub.f32 %v1586, %v1849
    %v1892 = vsub.f32 %v1591, %v1852
    %v1893 = vsub.f32 %v1673, %v1855
    %v1894 = vsub.f32 %v1678, %v1858
    %v1895 = vsub.f32 %v1760, %v1861
    %v1896 = vsub.f32 %v1765, %v1864
    %v1897 = vmul.f32 %v1865, 1.442695
    %v1898 = vpow.pop %v1897
    %v1899 = vmul.f32 %v1866, 1.442695
    %v1900 = vpow.pop %v1899
    %v1901 = vmul.f32 %v1867, 1.442695
    %v1902 = vpow.pop %v1901
    %v1903 = vmul.f32 %v1868, 1.442695
    %v1904 = vpow.pop %v1903
    %v1905 = vmul.f32 %v1869, 1.442695
    %v1906 = vpow.pop %v1905
    %v1907 = vmul.f32 %v1870, 1.442695
    %v1908 = vpow.pop %v1907
    %v1909 = vmul.f32 %v1871, 1.442695
    %v1910 = vpow.pop %v1909
    %v1911 = vmul.f32 %v1872, 1.442695
    %v1912 = vpow.pop %v1911
    %v1913 = vmul.f32 %v1873, 1.442695
    %v1914 = vpow.pop %v1913
    %v1915 = vmul.f32 %v1874, 1.442695
    %v1916 = vpow.pop %v1915
    %v1917 = vmul.f32 %v1875, 1.442695
    %v1918 = vpow.pop %v1917
    %v1919 = vmul.f32 %v1876, 1.442695
    %v1920 = vpow.pop %v1919
    %v1921 = vmul.f32 %v1877, 1.442695
    %v1922 = vpow.pop %v1921
    %v1923 = vmul.f32 %v1878, 1.442695
    %v1924 = vpow.pop %v1923
    %v1925 = vmul.f32 %v1879, 1.442695
    %v1926 = vpow.pop %v1925
    %v1927 = vmul.f32 %v1880, 1.442695
    %v1928 = vpow.pop %v1927
    %v1929 = vmul.f32 %v1881, 1.442695
    %v1930 = vpow.pop %v1929
    %v1931 = vmul.f32 %v1882, 1.442695
    %v1932 = vpow.pop %v1931
    %v1933 = vmul.f32 %v1883, 1.442695
    %v1934 = vpow.pop %v1933
    %v1935 = vmul.f32 %v1884, 1.442695
    %v1936 = vpow.pop %v1935
    %v1937 = vmul.f32 %v1885, 1.442695
    %v1938 = vpow.pop %v1937
    %v1939 = vmul.f32 %v1886, 1.442695
    %v1940 = vpow.pop %v1939
    %v1941 = vmul.f32 %v1887, 1.442695
    %v1942 = vpow.pop %v1941
    %v1943 = vmul.f32 %v1888, 1.442695
    %v1944 = vpow.pop %v1943
    %v1945 = vmul.f32 %v1889, 1.442695
    %v1946 = vpow.pop %v1945
    %v1947 = vmul.f32 %v1890, 1.442695
    %v1948 = vpow.pop %v1947
    %v1949 = vmul.f32 %v1891, 1.442695
    %v1950 = vpow.pop %v1949
    %v1951 = vmul.f32 %v1892, 1.442695
    %v1952 = vpow.pop %v1951
    %v1953 = vmul.f32 %v1893, 1.442695
    %v1954 = vpow.pop %v1953
    %v1955 = vmul.f32 %v1894, 1.442695
    %v1956 = vpow.pop %v1955
    %v1957 = vmul.f32 %v1895, 1.442695
    %v1958 = vpow.pop %v1957
    %v1959 = vmul.f32 %v1896, 1.442695
    %v1960 = vpow.pop %v1959
    %v1961 = vsel %vm1768, %v1898, 0.0
    %1962 = vadd.xlane.f32.xlu0 %v1961
    %v1963 = vpop.xlane.xlu0 %1962
    %v1964 = vsel %vm1768, %v1900, 0.0
    %1965 = vadd.xlane.f32.xlu0 %v1964
    %v1966 = vpop.xlane.xlu0 %1965
    %v1967 = vsel %vm1768, %v1902, 0.0
    %1968 = vadd.xlane.f32.xlu0 %v1967
    %v1969 = vpop.xlane.xlu0 %1968
    %v1970 = vsel %vm1768, %v1904, 0.0
    %1971 = vadd.xlane.f32.xlu0 %v1970
    %v1972 = vpop.xlane.xlu0 %1971
    %v1973 = vsel %vm1768, %v1906, 0.0
    %1974 = vadd.xlane.f32.xlu0 %v1973
    %v1975 = vpop.xlane.xlu0 %1974
    %v1976 = vsel %vm1768, %v1908, 0.0
    %1977 = vadd.xlane.f32.xlu0 %v1976
    %v1978 = vpop.xlane.xlu0 %1977
    %v1979 = vsel %vm1768, %v1910, 0.0
    %1980 = vadd.xlane.f32.xlu0 %v1979
    %v1981 = vpop.xlane.xlu0 %1980
    %v1982 = vsel %vm1768, %v1912, 0.0
    %1983 = vadd.xlane.f32.xlu0 %v1982
    %v1984 = vpop.xlane.xlu0 %1983
    %v1985 = vsel %vm1768, %v1914, 0.0
    %1986 = vadd.xlane.f32.xlu0 %v1985
    %v1987 = vpop.xlane.xlu0 %1986
    %v1988 = vsel %vm1768, %v1916, 0.0
    %1989 = vadd.xlane.f32.xlu0 %v1988
    %v1990 = vpop.xlane.xlu0 %1989
    %v1991 = vsel %vm1768, %v1918, 0.0
    %1992 = vadd.xlane.f32.xlu0 %v1991
    %v1993 = vpop.xlane.xlu0 %1992
    %v1994 = vsel %vm1768, %v1920, 0.0
    %1995 = vadd.xlane.f32.xlu0 %v1994
    %v1996 = vpop.xlane.xlu0 %1995
    %v1997 = vsel %vm1768, %v1922, 0.0
    %1998 = vadd.xlane.f32.xlu0 %v1997
    %v1999 = vpop.xlane.xlu0 %1998
    %v2000 = vsel %vm1768, %v1924, 0.0
    %2001 = vadd.xlane.f32.xlu0 %v2000
    %v2002 = vpop.xlane.xlu0 %2001
    %v2003 = vsel %vm1768, %v1926, 0.0
    %2004 = vadd.xlane.f32.xlu0 %v2003
    %v2005 = vpop.xlane.xlu0 %2004
    %v2006 = vsel %vm1768, %v1928, 0.0
    %2007 = vadd.xlane.f32.xlu0 %v2006
    %v2008 = vpop.xlane.xlu0 %2007
    %v2009 = vsel %vm1768, %v1930, 0.0
    %2010 = vadd.xlane.f32.xlu0 %v2009
    %v2011 = vpop.xlane.xlu0 %2010
    %v2012 = vsel %vm1768, %v1932, 0.0
    %2013 = vadd.xlane.f32.xlu0 %v2012
    %v2014 = vpop.xlane.xlu0 %2013
    %v2015 = vsel %vm1768, %v1934, 0.0
    %2016 = vadd.xlane.f32.xlu0 %v2015
    %v2017 = vpop.xlane.xlu0 %2016
    %v2018 = vsel %vm1768, %v1936, 0.0
    %2019 = vadd.xlane.f32.xlu0 %v2018
    %v2020 = vpop.xlane.xlu0 %2019
    %v2021 = vsel %vm1768, %v1938, 0.0
    %2022 = vadd.xlane.f32.xlu0 %v2021
    %v2023 = vpop.xlane.xlu0 %2022
    %v2024 = vsel %vm1768, %v1940, 0.0
    %2025 = vadd.xlane.f32.xlu0 %v2024
    %v2026 = vpop.xlane.xlu0 %2025
    %v2027 = vsel %vm1768, %v1942, 0.0
    %2028 = vadd.xlane.f32.xlu0 %v2027
    %v2029 = vpop.xlane.xlu0 %2028
    %v2030 = vsel %vm1768, %v1944, 0.0
    %2031 = vadd.xlane.f32.xlu0 %v2030
    %v2032 = vpop.xlane.xlu0 %2031
    %v2033 = vsel %vm1768, %v1946, 0.0
    %2034 = vadd.xlane.f32.xlu0 %v2033
    %v2035 = vpop.xlane.xlu0 %2034
    %v2036 = vsel %vm1768, %v1948, 0.0
    %2037 = vadd.xlane.f32.xlu0 %v2036
    %v2038 = vpop.xlane.xlu0 %2037
    %v2039 = vsel %vm1768, %v1950, 0.0
    %2040 = vadd.xlane.f32.xlu0 %v2039
    %v2041 = vpop.xlane.xlu0 %2040
    %v2042 = vsel %vm1768, %v1952, 0.0
    %2043 = vadd.xlane.f32.xlu0 %v2042
    %v2044 = vpop.xlane.xlu0 %2043
    %v2045 = vsel %vm1768, %v1954, 0.0
    %2046 = vadd.xlane.f32.xlu0 %v2045
    %v2047 = vpop.xlane.xlu0 %2046
    %v2048 = vsel %vm1768, %v1956, 0.0
    %2049 = vadd.xlane.f32.xlu0 %v2048
    %v2050 = vpop.xlane.xlu0 %2049
    %v2051 = vsel %vm1768, %v1958, 0.0
    %2052 = vadd.xlane.f32.xlu0 %v2051
    %v2053 = vpop.xlane.xlu0 %2052
    %v2054 = vsel %vm1768, %v1960, 0.0
    %2055 = vadd.xlane.f32.xlu0 %v2054
    %v2056 = vpop.xlane.xlu0 %2055
    %v2057 = vrcp.pop %v1963
    %v2058 = vrcp.pop %v1966
    %v2059 = vrcp.pop %v1969
    %v2060 = vrcp.pop %v1972
    %v2061 = vrcp.pop %v1975
    %v2062 = vrcp.pop %v1978
    %v2063 = vrcp.pop %v1981
    %v2064 = vrcp.pop %v1984
    %v2065 = vrcp.pop %v1987
    %v2066 = vrcp.pop %v1990
    %v2067 = vrcp.pop %v1993
    %v2068 = vrcp.pop %v1996
    %v2069 = vrcp.pop %v1999
    %v2070 = vrcp.pop %v2002
    %v2071 = vrcp.pop %v2005
    %v2072 = vrcp.pop %v2008
    %v2073 = vrcp.pop %v2011
    %v2074 = vrcp.pop %v2014
    %v2075 = vrcp.pop %v2017
    %v2076 = vrcp.pop %v2020
    %v2077 = vrcp.pop %v2023
    %v2078 = vrcp.pop %v2026
    %v2079 = vrcp.pop %v2029
    %v2080 = vrcp.pop %v2032
    %v2081 = vrcp.pop %v2035
    %v2082 = vrcp.pop %v2038
    %v2083 = vrcp.pop %v2041
    %v2084 = vrcp.pop %v2044
    %v2085 = vrcp.pop %v2047
    %v2086 = vrcp.pop %v2050
    %v2087 = vrcp.pop %v2053
    %v2088 = vrcp.pop %v2056
    %v2089 = vmul.f32 %v1898, %v2057
    %v2090 = vmul.f32 %v1900, %v2058
    %v2091 = vmul.f32 %v1902, %v2059
    %v2092 = vmul.f32 %v1904, %v2060
    %v2093 = vmul.f32 %v1906, %v2061
    %v2094 = vmul.f32 %v1908, %v2062
    %v2095 = vmul.f32 %v1910, %v2063
    %v2096 = vmul.f32 %v1912, %v2064
    %v2097 = vmul.f32 %v1914, %v2065
    %v2098 = vmul.f32 %v1916, %v2066
    %v2099 = vmul.f32 %v1918, %v2067
    %v2100 = vmul.f32 %v1920, %v2068
    %v2101 = vmul.f32 %v1922, %v2069
    %v2102 = vmul.f32 %v1924, %v2070
    %v2103 = vmul.f32 %v1926, %v2071
    %v2104 = vmul.f32 %v1928, %v2072
    %v2105 = vmul.f32 %v1930, %v2073
    %v2106 = vmul.f32 %v1932, %v2074
    %v2107 = vmul.f32 %v1934, %v2075
    %v2108 = vmul.f32 %v1936, %v2076
    %v2109 = vmul.f32 %v1938, %v2077
    %v2110 = vmul.f32 %v1940, %v2078
    %v2111 = vmul.f32 %v1942, %v2079
    %v2112 = vmul.f32 %v1944, %v2080
    %v2113 = vmul.f32 %v1946, %v2081
    %v2114 = vmul.f32 %v1948, %v2082
    %v2115 = vmul.f32 %v1950, %v2083
    %v2116 = vmul.f32 %v1952, %v2084
    %v2117 = vmul.f32 %v1954, %v2085
    %v2118 = vmul.f32 %v1956, %v2086
    %v2119 = vmul.f32 %v1958, %v2087
    %v2120 = vmul.f32 %v1960, %v2088
    %v2122 = vsel %vm1768, %v2089, 0
    %v2125 = vsel %vm1768, %v2090, 0
    %2127 = vmatprep.subr.mxu0 0.0
    %2128 = vmatpush1.msra.mxu0 %v168
    %2129 = vmatprep.subr.mxu0 0.0
    %2130 = vmatpush1.msra.mxu0 %v174
    %2131 = vmatprep.subr.mxu0 0.0
    %2132 = vmatpush1.msra.mxu0 0.0
    %2133 = vmatprep.subr.mxu0 0.0
    %2134 = vmatpush1.msra.mxu0 0.0
    %2135 = vmatprep.subr.mxu0 0.0
    %2136 = vmatpush1.msra.mxu0 0.0
    %2137 = vmatprep.subr.mxu0 0.0
    %2138 = vmatpush1.msra.mxu0 0.0
    %2139 = vmatprep.subr.mxu0 0.0
    %2140 = vmatpush1.msra.mxu0 0.0
    %2141 = vmatprep.subr.mxu0 0.0
    %2142 = vmatpush1.msra.mxu0 0.0
    %2143 = vmatprep.subr.mxu0 0.0
    %2144 = vmatpush1.msra.mxu0 0.0
    %2145 = vmatprep.subr.mxu0 0.0
    %2146 = vmatpush1.msra.mxu0 0.0
    %2147 = vmatprep.subr.mxu0 0.0
    %2148 = vmatpush1.msra.mxu0 0.0
    %2149 = vmatprep.subr.mxu0 0.0
    %2150 = vmatpush1.msra.mxu0 0.0
    %2151 = vmatprep.subr.mxu0 0.0
    %2152 = vmatpush1.msra.mxu0 0.0
    %2153 = vmatprep.subr.mxu0 0.0
    %2154 = vmatpush1.msra.mxu0 0.0
    %2155 = vmatprep.subr.mxu0 0.0
    %2156 = vmatpush1.msra.mxu0 0.0
    %2157 = vmatprep.subr.mxu0 0.0
    %2158 = vmatpush1.msra.mxu0 0.0
    %2159 = vmatprep.subr.mxu0 0.0
    %2160 = vmatpush1.msra.mxu0 0.0
    %2161 = vmatprep.subr.mxu0 0.0
    %2162 = vmatpush1.msra.mxu0 0.0
    %2163 = vmatprep.subr.mxu0 0.0
    %2164 = vmatpush1.msra.mxu0 0.0
    %2165 = vmatprep.subr.mxu0 0.0
    %2166 = vmatpush1.msra.mxu0 0.0
    %2167 = vmatprep.subr.mxu0 0.0
    %2168 = vmatpush1.msra.mxu0 0.0
    %2169 = vmatprep.subr.mxu0 0.0
    %2170 = vmatpush1.msra.mxu0 0.0
    %2171 = vmatprep.subr.mxu0 0.0
    %2172 = vmatpush1.msra.mxu0 0.0
    %2173 = vmatprep.subr.mxu0 0.0
    %2174 = vmatpush1.msra.mxu0 0.0
    %2175 = vmatprep.subr.mxu0 0.0
    %2176 = vmatpush1.msra.mxu0 0.0
    %2177 = vmatprep.subr.mxu0 0.0
    %2178 = vmatpush1.msra.mxu0 0.0
    %2179 = vmatprep.subr.mxu0 0.0
    %2180 = vmatpush1.msra.mxu0 0.0
    %2181 = vmatprep.subr.mxu0 0.0
    %2182 = vmatpush1.msra.mxu0 0.0
    %2183 = vmatprep.subr.mxu0 0.0
    %2184 = vmatpush1.msra.mxu0 0.0
    %2185 = vmatprep.subr.mxu0 0.0
    %2186 = vmatpush1.msra.mxu0 0.0
    %2187 = vmatprep.subr.mxu0 0.0
    %2188 = vmatpush1.msra.mxu0 0.0
    %2189 = vmatprep.subr.mxu0 0.0
    %2190 = vmatpush1.msra.mxu0 0.0
    %2191 = vmatprep.mubr.f32.mxu0 0.0
    %2192 = vmatmul.mubr.f32.gmra.mrb[0].mxu0 %v2122
    %v2193 = vpop.f32.mrb[0].mxu0
    %v2194 = vadd.f32 0.0, %v2193
    %v2195 = vpop.f32.mrb[0].mxu0
    %2196 = vmatprep.mubr.f32.mxu0 0.0
    %2197 = vmatmul.mubr.f32.gmra.mrb[0].mxu0 %v2125
    %v2198 = vpop.f32.mrb[0].mxu0
    %v2199 = vadd.f32 0.0, %v2198
    %v2200 = vpop.f32.mrb[0].mxu0
    %2201 = vdwg.mxu0
    %v2203 = vsel %vm1768, %v2091, 0
    %v2206 = vsel %vm1768, %v2092, 0
    %2208 = vmatprep.subr.mxu0 0.0
    %2209 = vmatpush1.msra.mxu0 %v241
    %2210 = vmatprep.subr.mxu0 0.0
    %2211 = vmatpush1.msra.mxu0 %v243
    %2212 = vmatprep.subr.mxu0 0.0
    %2213 = vmatpush1.msra.mxu0 0.0
    %2214 = vmatprep.subr.mxu0 0.0
    %2215 = vmatpush1.msra.mxu0 0.0
    %2216 = vmatprep.subr.mxu0 0.0
    %2217 = vmatpush1.msra.mxu0 0.0
    %2218 = vmatprep.subr.mxu0 0.0
    %2219 = vmatpush1.msra.mxu0 0.0
    %2220 = vmatprep.subr.mxu0 0.0
    %2221 = vmatpush1.msra.mxu0 0.0
    %2222 = vmatprep.subr.mxu0 0.0
    %2223 = vmatpush1.msra.mxu0 0.0
    %2224 = vmatprep.subr.mxu0 0.0
    %2225 = vmatpush1.msra.mxu0 0.0
    %2226 = vmatprep.subr.mxu0 0.0
    %2227 = vmatpush1.msra.mxu0 0.0
    %2228 = vmatprep.subr.mxu0 0.0
    %2229 = vmatpush1.msra.mxu0 0.0
    %2230 = vmatprep.subr.mxu0 0.0
    %2231 = vmatpush1.msra.mxu0 0.0
    %2232 = vmatprep.subr.mxu0 0.0
    %2233 = vmatpush1.msra.mxu0 0.0
    %2234 = vmatprep.subr.mxu0 0.0
    %2235 = vmatpush1.msra.mxu0 0.0
    %2236 = vmatprep.subr.mxu0 0.0
    %2237 = vmatpush1.msra.mxu0 0.0
    %2238 = vmatprep.subr.mxu0 0.0
    %2239 = vmatpush1.msra.mxu0 0.0
    %2240 = vmatprep.subr.mxu0 0.0
    %2241 = vmatpush1.msra.mxu0 0.0
    %2242 = vmatprep.subr.mxu0 0.0
    %2243 = vmatpush1.msra.mxu0 0.0
    %2244 = vmatprep.subr.mxu0 0.0
    %2245 = vmatpush1.msra.mxu0 0.0
    %2246 = vmatprep.subr.mxu0 0.0
    %2247 = vmatpush1.msra.mxu0 0.0
    %2248 = vmatprep.subr.mxu0 0.0
    %2249 = vmatpush1.msra.mxu0 0.0
    %2250 = vmatprep.subr.mxu0 0.0
    %2251 = vmatpush1.msra.mxu0 0.0
    %2252 = vmatprep.subr.mxu0 0.0
    %2253 = vmatpush1.msra.mxu0 0.0
    %2254 = vmatprep.subr.mxu0 0.0
    %2255 = vmatpush1.msra.mxu0 0.0
    %2256 = vmatprep.subr.mxu0 0.0
    %2257 = vmatpush1.msra.mxu0 0.0
    %2258 = vmatprep.subr.mxu0 0.0
    %2259 = vmatpush1.msra.mxu0 0.0
    %2260 = vmatprep.subr.mxu0 0.0
    %2261 = vmatpush1.msra.mxu0 0.0
    %2262 = vmatprep.subr.mxu0 0.0
    %2263 = vmatpush1.msra.mxu0 0.0
    %2264 = vmatprep.subr.mxu0 0.0
    %2265 = vmatpush1.msra.mxu0 0.0
    %2266 = vmatprep.subr.mxu0 0.0
    %2267 = vmatpush1.msra.mxu0 0.0
    %2268 = vmatprep.subr.mxu0 0.0
    %2269 = vmatpush1.msra.mxu0 0.0
    %2270 = vmatprep.subr.mxu0 0.0
    %2271 = vmatpush1.msra.mxu0 0.0
    %2272 = vmatprep.mubr.f32.mxu0 0.0
    %2273 = vmatmul.mubr.f32.gmra.mrb[0].mxu0 %v2203
    %v2274 = vpop.f32.mrb[0].mxu0
    %v2275 = vadd.f32 0.0, %v2274
    %v2276 = vpop.f32.mrb[0].mxu0
    %2277 = vmatprep.mubr.f32.mxu0 0.0
    %2278 = vmatmul.mubr.f32.gmra.mrb[0].mxu0 %v2206
    %v2279 = vpop.f32.mrb[0].mxu0
    %v2280 = vadd.f32 0.0, %v2279
    %v2281 = vpop.f32.mrb[0].mxu0
    %2282 = vdwg.mxu0
    %v2284 = vsel %vm1768, %v2093, 0
    %v2287 = vsel %vm1768, %v2094, 0
    %2289 = vmatprep.subr.mxu0 0.0
    %2290 = vmatpush1.msra.mxu0 %v247
    %2291 = vmatprep.subr.mxu0 0.0
    %2292 = vmatpush1.msra.mxu0 %v249
    %2293 = vmatprep.subr.mxu0 0.0
    %2294 = vmatpush1.msra.mxu0 0.0
    %2295 = vmatprep.subr.mxu0 0.0
    %2296 = vmatpush1.msra.mxu0 0.0
    %2297 = vmatprep.subr.mxu0 0.0
    %2298 = vmatpush1.msra.mxu0 0.0
    %2299 = vmatprep.subr.mxu0 0.0
    %2300 = vmatpush1.msra.mxu0 0.0
    %2301 = vmatprep.subr.mxu0 0.0
    %2302 = vmatpush1.msra.mxu0 0.0
    %2303 = vmatprep.subr.mxu0 0.0
    %2304 = vmatpush1.msra.mxu0 0.0
    %2305 = vmatprep.subr.mxu0 0.0
    %2306 = vmatpush1.msra.mxu0 0.0
    %2307 = vmatprep.subr.mxu0 0.0
    %2308 = vmatpush1.msra.mxu0 0.0
    %2309 = vmatprep.subr.mxu0 0.0
    %2310 = vmatpush1.msra.mxu0 0.0
    %2311 = vmatprep.subr.mxu0 0.0
    %2312 = vmatpush1.msra.mxu0 0.0
    %2313 = vmatprep.subr.mxu0 0.0
    %2314 = vmatpush1.msra.mxu0 0.0
    %2315 = vmatprep.subr.mxu0 0.0
    %2316 = vmatpush1.msra.mxu0 0.0
    %2317 = vmatprep.subr.mxu0 0.0
    %2318 = vmatpush1.msra.mxu0 0.0
    %2319 = vmatprep.subr.mxu0 0.0
    %2320 = vmatpush1.msra.mxu0 0.0
    %2321 = vmatprep.subr.mxu0 0.0
    %2322 = vmatpush1.msra.mxu0 0.0
    %2323 = vmatprep.subr.mxu0 0.0
    %2324 = vmatpush1.msra.mxu0 0.0
    %2325 = vmatprep.subr.mxu0 0.0
    %2326 = vmatpush1.msra.mxu0 0.0
    %2327 = vmatprep.subr.mxu0 0.0
    %2328 = vmatpush1.msra.mxu0 0.0
    %2329 = vmatprep.subr.mxu0 0.0
    %2330 = vmatpush1.msra.mxu0 0.0
    %2331 = vmatprep.subr.mxu0 0.0
    %2332 = vmatpush1.msra.mxu0 0.0
    %2333 = vmatprep.subr.mxu0 0.0
    %2334 = vmatpush1.msra.mxu0 0.0
    %2335 = vmatprep.subr.mxu0 0.0
    %2336 = vmatpush1.msra.mxu0 0.0
    %2337 = vmatprep.subr.mxu0 0.0
    %2338 = vmatpush1.msra.mxu0 0.0
    %2339 = vmatprep.subr.mxu0 0.0
    %2340 = vmatpush1.msra.mxu0 0.0
    %2341 = vmatprep.subr.mxu0 0.0
    %2342 = vmatpush1.msra.mxu0 0.0
    %2343 = vmatprep.subr.mxu0 0.0
    %2344 = vmatpush1.msra.mxu0 0.0
    %2345 = vmatprep.subr.mxu0 0.0
    %2346 = vmatpush1.msra.mxu0 0.0
    %2347 = vmatprep.subr.mxu0 0.0
    %2348 = vmatpush1.msra.mxu0 0.0
    %2349 = vmatprep.subr.mxu0 0.0
    %2350 = vmatpush1.msra.mxu0 0.0
    %2351 = vmatprep.subr.mxu0 0.0
    %2352 = vmatpush1.msra.mxu0 0.0
    %2353 = vmatprep.mubr.f32.mxu0 0.0
    %2354 = vmatmul.mubr.f32.gmra.mrb[0].mxu0 %v2284
    %v2355 = vpop.f32.mrb[0].mxu0
    %v2356 = vadd.f32 0.0, %v2355
    %v2357 = vpop.f32.mrb[0].mxu0
    %2358 = vmatprep.mubr.f32.mxu0 0.0
    %2359 = vmatmul.mubr.f32.gmra.mrb[0].mxu0 %v2287
    %v2360 = vpop.f32.mrb[0].mxu0
    %v2361 = vadd.f32 0.0, %v2360
    %v2362 = vpop.f32.mrb[0].mxu0
    %2363 = vdwg.mxu0
    %v2365 = vsel %vm1768, %v2095, 0
    %v2368 = vsel %vm1768, %v2096, 0
    %2370 = vmatprep.subr.mxu0 0.0
    %2371 = vmatpush1.msra.mxu0 %v253
    %2372 = vmatprep.subr.mxu0 0.0
    %2373 = vmatpush1.msra.mxu0 %v255
    %2374 = vmatprep.subr.mxu0 0.0
    %2375 = vmatpush1.msra.mxu0 0.0
    %2376 = vmatprep.subr.mxu0 0.0
    %2377 = vmatpush1.msra.mxu0 0.0
    %2378 = vmatprep.subr.mxu0 0.0
    %2379 = vmatpush1.msra.mxu0 0.0
    %2380 = vmatprep.subr.mxu0 0.0
    %2381 = vmatpush1.msra.mxu0 0.0
    %2382 = vmatprep.subr.mxu0 0.0
    %2383 = vmatpush1.msra.mxu0 0.0
    %2384 = vmatprep.subr.mxu0 0.0
    %2385 = vmatpush1.msra.mxu0 0.0
    %2386 = vmatprep.subr.mxu0 0.0
    %2387 = vmatpush1.msra.mxu0 0.0
    %2388 = vmatprep.subr.mxu0 0.0
    %2389 = vmatpush1.msra.mxu0 0.0
    %2390 = vmatprep.subr.mxu0 0.0
    %2391 = vmatpush1.msra.mxu0 0.0
    %2392 = vmatprep.subr.mxu0 0.0
    %2393 = vmatpush1.msra.mxu0 0.0
    %2394 = vmatprep.subr.mxu0 0.0
    %2395 = vmatpush1.msra.mxu0 0.0
    %2396 = vmatprep.subr.mxu0 0.0
    %2397 = vmatpush1.msra.mxu0 0.0
    %2398 = vmatprep.subr.mxu0 0.0
    %2399 = vmatpush1.msra.mxu0 0.0
    %2400 = vmatprep.subr.mxu0 0.0
    %2401 = vmatpush1.msra.mxu0 0.0
    %2402 = vmatprep.subr.mxu0 0.0
    %2403 = vmatpush1.msra.mxu0 0.0
    %2404 = vmatprep.subr.mxu0 0.0
    %2405 = vmatpush1.msra.mxu0 0.0
    %2406 = vmatprep.subr.mxu0 0.0
    %2407 = vmatpush1.msra.mxu0 0.0
    %2408 = vmatprep.subr.mxu0 0.0
    %2409 = vmatpush1.msra.mxu0 0.0
    %2410 = vmatprep.subr.mxu0 0.0
    %2411 = vmatpush1.msra.mxu0 0.0
    %2412 = vmatprep.subr.mxu0 0.0
    %2413 = vmatpush1.msra.mxu0 0.0
    %2414 = vmatprep.subr.mxu0 0.0
    %2415 = vmatpush1.msra.mxu0 0.0
    %2416 = vmatprep.subr.mxu0 0.0
    %2417 = vmatpush1.msra.mxu0 0.0
    %2418 = vmatprep.subr.mxu0 0.0
    %2419 = vmatpush1.msra.mxu0 0.0
    %2420 = vmatprep.subr.mxu0 0.0
    %2421 = vmatpush1.msra.mxu0 0.0
    %2422 = vmatprep.subr.mxu0 0.0
    %2423 = vmatpush1.msra.mxu0 0.0
    %2424 = vmatprep.subr.mxu0 0.0
    %2425 = vmatpush1.msra.mxu0 0.0
    %2426 = vmatprep.subr.mxu0 0.0
    %2427 = vmatpush1.msra.mxu0 0.0
    %2428 = vmatprep.subr.mxu0 0.0
    %2429 = vmatpush1.msra.mxu0 0.0
    %2430 = vmatprep.subr.mxu0 0.0
    %2431 = vmatpush1.msra.mxu0 0.0
    %2432 = vmatprep.subr.mxu0 0.0
    %2433 = vmatpush1.msra.mxu0 0.0
    %2434 = vmatprep.mubr.f32.mxu0 0.0
    %2435 = vmatmul.mubr.f32.gmra.mrb[0].mxu0 %v2365
    %v2436 = vpop.f32.mrb[0].mxu0
    %v2437 = vadd.f32 0.0, %v2436
    %v2438 = vpop.f32.mrb[0].mxu0
    %2439 = vmatprep.mubr.f32.mxu0 0.0
    %2440 = vmatmul.mubr.f32.gmra.mrb[0].mxu0 %v2368
    %v2441 = vpop.f32.mrb[0].mxu0
    %v2442 = vadd.f32 0.0, %v2441
    %v2443 = vpop.f32.mrb[0].mxu0
    %2444 = vdwg.mxu0
    %v2446 = vsel %vm1768, %v2097, 0
    %v2449 = vsel %vm1768, %v2098, 0
    %2451 = vmatprep.subr.mxu0 0.0
    %2452 = vmatpush1.msra.mxu0 %v259
    %2453 = vmatprep.subr.mxu0 0.0
    %2454 = vmatpush1.msra.mxu0 %v261
    %2455 = vmatprep.subr.mxu0 0.0
    %2456 = vmatpush1.msra.mxu0 0.0
    %2457 = vmatprep.subr.mxu0 0.0
    %2458 = vmatpush1.msra.mxu0 0.0
    %2459 = vmatprep.subr.mxu0 0.0
    %2460 = vmatpush1.msra.mxu0 0.0
    %2461 = vmatprep.subr.mxu0 0.0
    %2462 = vmatpush1.msra.mxu0 0.0
    %2463 = vmatprep.subr.mxu0 0.0
    %2464 = vmatpush1.msra.mxu0 0.0
    %2465 = vmatprep.subr.mxu0 0.0
    %2466 = vmatpush1.msra.mxu0 0.0
    %2467 = vmatprep.subr.mxu0 0.0
    %2468 = vmatpush1.msra.mxu0 0.0
    %2469 = vmatprep.subr.mxu0 0.0
    %2470 = vmatpush1.msra.mxu0 0.0
    %2471 = vmatprep.subr.mxu0 0.0
    %2472 = vmatpush1.msra.mxu0 0.0
    %2473 = vmatprep.subr.mxu0 0.0
    %2474 = vmatpush1.msra.mxu0 0.0
    %2475 = vmatprep.subr.mxu0 0.0
    %2476 = vmatpush1.msra.mxu0 0.0
    %2477 = vmatprep.subr.mxu0 0.0
    %2478 = vmatpush1.msra.mxu0 0.0
    %2479 = vmatprep.subr.mxu0 0.0
    %2480 = vmatpush1.msra.mxu0 0.0
    %2481 = vmatprep.subr.mxu0 0.0
    %2482 = vmatpush1.msra.mxu0 0.0
    %2483 = vmatprep.subr.mxu0 0.0
    %2484 = vmatpush1.msra.mxu0 0.0
    %2485 = vmatprep.subr.mxu0 0.0
    %2486 = vmatpush1.msra.mxu0 0.0
    %2487 = vmatprep.subr.mxu0 0.0
    %2488 = vmatpush1.msra.mxu0 0.0
    %2489 = vmatprep.subr.mxu0 0.0
    %2490 = vmatpush1.msra.mxu0 0.0
    %2491 = vmatprep.subr.mxu0 0.0
    %2492 = vmatpush1.msra.mxu0 0.0
    %2493 = vmatprep.subr.mxu0 0.0
    %2494 = vmatpush1.msra.mxu0 0.0
    %2495 = vmatprep.subr.mxu0 0.0
    %2496 = vmatpush1.msra.mxu0 0.0
    %2497 = vmatprep.subr.mxu0 0.0
    %2498 = vmatpush1.msra.mxu0 0.0
    %2499 = vmatprep.subr.mxu0 0.0
    %2500 = vmatpush1.msra.mxu0 0.0
    %2501 = vmatprep.subr.mxu0 0.0
    %2502 = vmatpush1.msra.mxu0 0.0
    %2503 = vmatprep.subr.mxu0 0.0
    %2504 = vmatpush1.msra.mxu0 0.0
    %2505 = vmatprep.subr.mxu0 0.0
    %2506 = vmatpush1.msra.mxu0 0.0
    %2507 = vmatprep.subr.mxu0 0.0
    %2508 = vmatpush1.msra.mxu0 0.0
    %2509 = vmatprep.subr.mxu0 0.0
    %2510 = vmatpush1.msra.mxu0 0.0
    %2511 = vmatprep.subr.mxu0 0.0
    %2512 = vmatpush1.msra.mxu0 0.0
    %2513 = vmatprep.subr.mxu0 0.0
    %2514 = vmatpush1.msra.mxu0 0.0
    %2515 = vmatprep.mubr.f32.mxu0 0.0
    %2516 = vmatmul.mubr.f32.gmra.mrb[0].mxu0 %v2446
    %v2517 = vpop.f32.mrb[0].mxu0
    %v2518 = vadd.f32 0.0, %v2517
    %v2519 = vpop.f32.mrb[0].mxu0
    %2520 = vmatprep.mubr.f32.mxu0 0.0
    %2521 = vmatmul.mubr.f32.gmra.mrb[0].mxu0 %v2449
    %v2522 = vpop.f32.mrb[0].mxu0
    %v2523 = vadd.f32 0.0, %v2522
    %v2524 = vpop.f32.mrb[0].mxu0
    %2525 = vdwg.mxu0
    %v2527 = vsel %vm1768, %v2099, 0
    %v2530 = vsel %vm1768, %v2100, 0
    %2532 = vmatprep.subr.mxu0 0.0
    %2533 = vmatpush1.msra.mxu0 %v265
    %2534 = vmatprep.subr.mxu0 0.0
    %2535 = vmatpush1.msra.mxu0 %v267
    %2536 = vmatprep.subr.mxu0 0.0
    %2537 = vmatpush1.msra.mxu0 0.0
    %2538 = vmatprep.subr.mxu0 0.0
    %2539 = vmatpush1.msra.mxu0 0.0
    %2540 = vmatprep.subr.mxu0 0.0
    %2541 = vmatpush1.msra.mxu0 0.0
    %2542 = vmatprep.subr.mxu0 0.0
    %2543 = vmatpush1.msra.mxu0 0.0
    %2544 = vmatprep.subr.mxu0 0.0
    %2545 = vmatpush1.msra.mxu0 0.0
    %2546 = vmatprep.subr.mxu0 0.0
    %2547 = vmatpush1.msra.mxu0 0.0
    %2548 = vmatprep.subr.mxu0 0.0
    %2549 = vmatpush1.msra.mxu0 0.0
    %2550 = vmatprep.subr.mxu0 0.0
    %2551 = vmatpush1.msra.mxu0 0.0
    %2552 = vmatprep.subr.mxu0 0.0
    %2553 = vmatpush1.msra.mxu0 0.0
    %2554 = vmatprep.subr.mxu0 0.0
    %2555 = vmatpush1.msra.mxu0 0.0
    %2556 = vmatprep.subr.mxu0 0.0
    %2557 = vmatpush1.msra.mxu0 0.0
    %2558 = vmatprep.subr.mxu0 0.0
    %2559 = vmatpush1.msra.mxu0 0.0
    %2560 = vmatprep.subr.mxu0 0.0
    %2561 = vmatpush1.msra.mxu0 0.0
    %2562 = vmatprep.subr.mxu0 0.0
    %2563 = vmatpush1.msra.mxu0 0.0
    %2564 = vmatprep.subr.mxu0 0.0
    %2565 = vmatpush1.msra.mxu0 0.0
    %2566 = vmatprep.subr.mxu0 0.0
    %2567 = vmatpush1.msra.mxu0 0.0
    %2568 = vmatprep.subr.mxu0 0.0
    %2569 = vmatpush1.msra.mxu0 0.0
    %2570 = vmatprep.subr.mxu0 0.0
    %2571 = vmatpush1.msra.mxu0 0.0
    %2572 = vmatprep.subr.mxu0 0.0
    %2573 = vmatpush1.msra.mxu0 0.0
    %2574 = vmatprep.subr.mxu0 0.0
    %2575 = vmatpush1.msra.mxu0 0.0
    %2576 = vmatprep.subr.mxu0 0.0
    %2577 = vmatpush1.msra.mxu0 0.0
    %2578 = vmatprep.subr.mxu0 0.0
    %2579 = vmatpush1.msra.mxu0 0.0
    %2580 = vmatprep.subr.mxu0 0.0
    %2581 = vmatpush1.msra.mxu0 0.0
    %2582 = vmatprep.subr.mxu0 0.0
    %2583 = vmatpush1.msra.mxu0 0.0
    %2584 = vmatprep.subr.mxu0 0.0
    %2585 = vmatpush1.msra.mxu0 0.0
    %2586 = vmatprep.subr.mxu0 0.0
    %2587 = vmatpush1.msra.mxu0 0.0
    %2588 = vmatprep.subr.mxu0 0.0
    %2589 = vmatpush1.msra.mxu0 0.0
    %2590 = vmatprep.subr.mxu0 0.0
    %2591 = vmatpush1.msra.mxu0 0.0
    %2592 = vmatprep.subr.mxu0 0.0
    %2593 = vmatpush1.msra.mxu0 0.0
    %2594 = vmatprep.subr.mxu0 0.0
    %2595 = vmatpush1.msra.mxu0 0.0
    %2596 = vmatprep.mubr.f32.mxu0 0.0
    %2597 = vmatmul.mubr.f32.gmra.mrb[0].mxu0 %v2527
    %v2598 = vpop.f32.mrb[0].mxu0
    %v2599 = vadd.f32 0.0, %v2598
    %v2600 = vpop.f32.mrb[0].mxu0
    %2601 = vmatprep.mubr.f32.mxu0 0.0
    %2602 = vmatmul.mubr.f32.gmra.mrb[0].mxu0 %v2530
    %v2603 = vpop.f32.mrb[0].mxu0
    %v2604 = vadd.f32 0.0, %v2603
    %v2605 = vpop.f32.mrb[0].mxu0
    %2606 = vdwg.mxu0
    %v2608 = vsel %vm1768, %v2101, 0
    %v2611 = vsel %vm1768, %v2102, 0
    %2613 = vmatprep.subr.mxu0 0.0
    %2614 = vmatpush1.msra.mxu0 %v271
    %2615 = vmatprep.subr.mxu0 0.0
    %2616 = vmatpush1.msra.mxu0 %v273
    %2617 = vmatprep.subr.mxu0 0.0
    %2618 = vmatpush1.msra.mxu0 0.0
    %2619 = vmatprep.subr.mxu0 0.0
    %2620 = vmatpush1.msra.mxu0 0.0
    %2621 = vmatprep.subr.mxu0 0.0
    %2622 = vmatpush1.msra.mxu0 0.0
    %2623 = vmatprep.subr.mxu0 0.0
    %2624 = vmatpush1.msra.mxu0 0.0
    %2625 = vmatprep.subr.mxu0 0.0
    %2626 = vmatpush1.msra.mxu0 0.0
    %2627 = vmatprep.subr.mxu0 0.0
    %2628 = vmatpush1.msra.mxu0 0.0
    %2629 = vmatprep.subr.mxu0 0.0
    %2630 = vmatpush1.msra.mxu0 0.0
    %2631 = vmatprep.subr.mxu0 0.0
    %2632 = vmatpush1.msra.mxu0 0.0
    %2633 = vmatprep.subr.mxu0 0.0
    %2634 = vmatpush1.msra.mxu0 0.0
    %2635 = vmatprep.subr.mxu0 0.0
    %2636 = vmatpush1.msra.mxu0 0.0
    %2637 = vmatprep.subr.mxu0 0.0
    %2638 = vmatpush1.msra.mxu0 0.0
    %2639 = vmatprep.subr.mxu0 0.0
    %2640 = vmatpush1.msra.mxu0 0.0
    %2641 = vmatprep.subr.mxu0 0.0
    %2642 = vmatpush1.msra.mxu0 0.0
    %2643 = vmatprep.subr.mxu0 0.0
    %2644 = vmatpush1.msra.mxu0 0.0
    %2645 = vmatprep.subr.mxu0 0.0
    %2646 = vmatpush1.msra.mxu0 0.0
    %2647 = vmatprep.subr.mxu0 0.0
    %2648 = vmatpush1.msra.mxu0 0.0
    %2649 = vmatprep.subr.mxu0 0.0
    %2650 = vmatpush1.msra.mxu0 0.0
    %2651 = vmatprep.subr.mxu0 0.0
    %2652 = vmatpush1.msra.mxu0 0.0
    %2653 = vmatprep.subr.mxu0 0.0
    %2654 = vmatpush1.msra.mxu0 0.0
    %2655 = vmatprep.subr.mxu0 0.0
    %2656 = vmatpush1.msra.mxu0 0.0
    %2657 = vmatprep.subr.mxu0 0.0
    %2658 = vmatpush1.msra.mxu0 0.0
    %2659 = vmatprep.subr.mxu0 0.0
    %2660 = vmatpush1.msra.mxu0 0.0
    %2661 = vmatprep.subr.mxu0 0.0
    %2662 = vmatpush1.msra.mxu0 0.0
    %2663 = vmatprep.subr.mxu0 0.0
    %2664 = vmatpush1.msra.mxu0 0.0
    %2665 = vmatprep.subr.mxu0 0.0
    %2666 = vmatpush1.msra.mxu0 0.0
    %2667 = vmatprep.subr.mxu0 0.0
    %2668 = vmatpush1.msra.mxu0 0.0
    %2669 = vmatprep.subr.mxu0 0.0
    %2670 = vmatpush1.msra.mxu0 0.0
    %2671 = vmatprep.subr.mxu0 0.0
    %2672 = vmatpush1.msra.mxu0 0.0
    %2673 = vmatprep.subr.mxu0 0.0
    %2674 = vmatpush1.msra.mxu0 0.0
    %2675 = vmatprep.subr.mxu0 0.0
    %2676 = vmatpush1.msra.mxu0 0.0
    %2677 = vmatprep.mubr.f32.mxu0 0.0
    %2678 = vmatmul.mubr.f32.gmra.mrb[0].mxu0 %v2608
    %v2679 = vpop.f32.mrb[0].mxu0
    %v2680 = vadd.f32 0.0, %v2679
    %v2681 = vpop.f32.mrb[0].mxu0
    %2682 = vmatprep.mubr.f32.mxu0 0.0
    %2683 = vmatmul.mubr.f32.gmra.mrb[0].mxu0 %v2611
    %v2684 = vpop.f32.mrb[0].mxu0
    %v2685 = vadd.f32 0.0, %v2684
    %v2686 = vpop.f32.mrb[0].mxu0
    %2687 = vdwg.mxu0
    %v2689 = vsel %vm1768, %v2103, 0
    %v2692 = vsel %vm1768, %v2104, 0
    %2694 = vmatprep.subr.mxu0 0.0
    %2695 = vmatpush1.msra.mxu0 %v277
    %2696 = vmatprep.subr.mxu0 0.0
    %2697 = vmatpush1.msra.mxu0 %v279
    %2698 = vmatprep.subr.mxu0 0.0
    %2699 = vmatpush1.msra.mxu0 0.0
    %2700 = vmatprep.subr.mxu0 0.0
    %2701 = vmatpush1.msra.mxu0 0.0
    %2702 = vmatprep.subr.mxu0 0.0
    %2703 = vmatpush1.msra.mxu0 0.0
    %2704 = vmatprep.subr.mxu0 0.0
    %2705 = vmatpush1.msra.mxu0 0.0
    %2706 = vmatprep.subr.mxu0 0.0
    %2707 = vmatpush1.msra.mxu0 0.0
    %2708 = vmatprep.subr.mxu0 0.0
    %2709 = vmatpush1.msra.mxu0 0.0
    %2710 = vmatprep.subr.mxu0 0.0
    %2711 = vmatpush1.msra.mxu0 0.0
    %2712 = vmatprep.subr.mxu0 0.0
    %2713 = vmatpush1.msra.mxu0 0.0
    %2714 = vmatprep.subr.mxu0 0.0
    %2715 = vmatpush1.msra.mxu0 0.0
    %2716 = vmatprep.subr.mxu0 0.0
    %2717 = vmatpush1.msra.mxu0 0.0
    %2718 = vmatprep.subr.mxu0 0.0
    %2719 = vmatpush1.msra.mxu0 0.0
    %2720 = vmatprep.subr.mxu0 0.0
    %2721 = vmatpush1.msra.mxu0 0.0
    %2722 = vmatprep.subr.mxu0 0.0
    %2723 = vmatpush1.msra.mxu0 0.0
    %2724 = vmatprep.subr.mxu0 0.0
    %2725 = vmatpush1.msra.mxu0 0.0
    %2726 = vmatprep.subr.mxu0 0.0
    %2727 = vmatpush1.msra.mxu0 0.0
    %2728 = vmatprep.subr.mxu0 0.0
    %2729 = vmatpush1.msra.mxu0 0.0
    %2730 = vmatprep.subr.mxu0 0.0
    %2731 = vmatpush1.msra.mxu0 0.0
    %2732 = vmatprep.subr.mxu0 0.0
    %2733 = vmatpush1.msra.mxu0 0.0
    %2734 = vmatprep.subr.mxu0 0.0
    %2735 = vmatpush1.msra.mxu0 0.0
    %2736 = vmatprep.subr.mxu0 0.0
    %2737 = vmatpush1.msra.mxu0 0.0
    %2738 = vmatprep.subr.mxu0 0.0
    %2739 = vmatpush1.msra.mxu0 0.0
    %2740 = vmatprep.subr.mxu0 0.0
    %2741 = vmatpush1.msra.mxu0 0.0
    %2742 = vmatprep.subr.mxu0 0.0
    %2743 = vmatpush1.msra.mxu0 0.0
    %2744 = vmatprep.subr.mxu0 0.0
    %2745 = vmatpush1.msra.mxu0 0.0
    %2746 = vmatprep.subr.mxu0 0.0
    %2747 = vmatpush1.msra.mxu0 0.0
    %2748 = vmatprep.subr.mxu0 0.0
    %2749 = vmatpush1.msra.mxu0 0.0
    %2750 = vmatprep.subr.mxu0 0.0
    %2751 = vmatpush1.msra.mxu0 0.0
    %2752 = vmatprep.subr.mxu0 0.0
    %2753 = vmatpush1.msra.mxu0 0.0
    %2754 = vmatprep.subr.mxu0 0.0
    %2755 = vmatpush1.msra.mxu0 0.0
    %2756 = vmatprep.subr.mxu0 0.0
    %2757 = vmatpush1.msra.mxu0 0.0
    %2758 = vmatprep.mubr.f32.mxu0 0.0
    %2759 = vmatmul.mubr.f32.gmra.mrb[0].mxu0 %v2689
    %v2760 = vpop.f32.mrb[0].mxu0
    %v2761 = vadd.f32 0.0, %v2760
    %v2762 = vpop.f32.mrb[0].mxu0
    %2763 = vmatprep.mubr.f32.mxu0 0.0
    %2764 = vmatmul.mubr.f32.gmra.mrb[0].mxu0 %v2692
    %v2765 = vpop.f32.mrb[0].mxu0
    %v2766 = vadd.f32 0.0, %v2765
    %v2767 = vpop.f32.mrb[0].mxu0
    %2768 = vdwg.mxu0
    %v2770 = vsel %vm1768, %v2105, 0
    %v2773 = vsel %vm1768, %v2106, 0
    %2775 = vmatprep.subr.mxu0 0.0
    %2776 = vmatpush1.msra.mxu0 %v283
    %2777 = vmatprep.subr.mxu0 0.0
    %2778 = vmatpush1.msra.mxu0 %v285
    %2779 = vmatprep.subr.mxu0 0.0
    %2780 = vmatpush1.msra.mxu0 0.0
    %2781 = vmatprep.subr.mxu0 0.0
    %2782 = vmatpush1.msra.mxu0 0.0
    %2783 = vmatprep.subr.mxu0 0.0
    %2784 = vmatpush1.msra.mxu0 0.0
    %2785 = vmatprep.subr.mxu0 0.0
    %2786 = vmatpush1.msra.mxu0 0.0
    %2787 = vmatprep.subr.mxu0 0.0
    %2788 = vmatpush1.msra.mxu0 0.0
    %2789 = vmatprep.subr.mxu0 0.0
    %2790 = vmatpush1.msra.mxu0 0.0
    %2791 = vmatprep.subr.mxu0 0.0
    %2792 = vmatpush1.msra.mxu0 0.0
    %2793 = vmatprep.subr.mxu0 0.0
    %2794 = vmatpush1.msra.mxu0 0.0
    %2795 = vmatprep.subr.mxu0 0.0
    %2796 = vmatpush1.msra.mxu0 0.0
    %2797 = vmatprep.subr.mxu0 0.0
    %2798 = vmatpush1.msra.mxu0 0.0
    %2799 = vmatprep.subr.mxu0 0.0
    %2800 = vmatpush1.msra.mxu0 0.0
    %2801 = vmatprep.subr.mxu0 0.0
    %2802 = vmatpush1.msra.mxu0 0.0
    %2803 = vmatprep.subr.mxu0 0.0
    %2804 = vmatpush1.msra.mxu0 0.0
    %2805 = vmatprep.subr.mxu0 0.0
    %2806 = vmatpush1.msra.mxu0 0.0
    %2807 = vmatprep.subr.mxu0 0.0
    %2808 = vmatpush1.msra.mxu0 0.0
    %2809 = vmatprep.subr.mxu0 0.0
    %2810 = vmatpush1.msra.mxu0 0.0
    %2811 = vmatprep.subr.mxu0 0.0
    %2812 = vmatpush1.msra.mxu0 0.0
    %2813 = vmatprep.subr.mxu0 0.0
    %2814 = vmatpush1.msra.mxu0 0.0
    %2815 = vmatprep.subr.mxu0 0.0
    %2816 = vmatpush1.msra.mxu0 0.0
    %2817 = vmatprep.subr.mxu0 0.0
    %2818 = vmatpush1.msra.mxu0 0.0
    %2819 = vmatprep.subr.mxu0 0.0
    %2820 = vmatpush1.msra.mxu0 0.0
    %2821 = vmatprep.subr.mxu0 0.0
    %2822 = vmatpush1.msra.mxu0 0.0
    %2823 = vmatprep.subr.mxu0 0.0
    %2824 = vmatpush1.msra.mxu0 0.0
    %2825 = vmatprep.subr.mxu0 0.0
    %2826 = vmatpush1.msra.mxu0 0.0
    %2827 = vmatprep.subr.mxu0 0.0
    %2828 = vmatpush1.msra.mxu0 0.0
    %2829 = vmatprep.subr.mxu0 0.0
    %2830 = vmatpush1.msra.mxu0 0.0
    %2831 = vmatprep.subr.mxu0 0.0
    %2832 = vmatpush1.msra.mxu0 0.0
    %2833 = vmatprep.subr.mxu0 0.0
    %2834 = vmatpush1.msra.mxu0 0.0
    %2835 = vmatprep.subr.mxu0 0.0
    %2836 = vmatpush1.msra.mxu0 0.0
    %2837 = vmatprep.subr.mxu0 0.0
    %2838 = vmatpush1.msra.mxu0 0.0
    %2839 = vmatprep.mubr.f32.mxu0 0.0
    %2840 = vmatmul.mubr.f32.gmra.mrb[0].mxu0 %v2770
    %v2841 = vpop.f32.mrb[0].mxu0
    %v2842 = vadd.f32 0.0, %v2841
    %v2843 = vpop.f32.mrb[0].mxu0
    %2844 = vmatprep.mubr.f32.mxu0 0.0
    %2845 = vmatmul.mubr.f32.gmra.mrb[0].mxu0 %v2773
    %v2846 = vpop.f32.mrb[0].mxu0
    %v2847 = vadd.f32 0.0, %v2846
    %v2848 = vpop.f32.mrb[0].mxu0
    %2849 = vdwg.mxu0
    %v2851 = vsel %vm1768, %v2107, 0
    %v2854 = vsel %vm1768, %v2108, 0
    %2856 = vmatprep.subr.mxu0 0.0
    %2857 = vmatpush1.msra.mxu0 %v289
    %2858 = vmatprep.subr.mxu0 0.0
    %2859 = vmatpush1.msra.mxu0 %v291
    %2860 = vmatprep.subr.mxu0 0.0
    %2861 = vmatpush1.msra.mxu0 0.0
    %2862 = vmatprep.subr.mxu0 0.0
    %2863 = vmatpush1.msra.mxu0 0.0
    %2864 = vmatprep.subr.mxu0 0.0
    %2865 = vmatpush1.msra.mxu0 0.0
    %2866 = vmatprep.subr.mxu0 0.0
    %2867 = vmatpush1.msra.mxu0 0.0
    %2868 = vmatprep.subr.mxu0 0.0
    %2869 = vmatpush1.msra.mxu0 0.0
    %2870 = vmatprep.subr.mxu0 0.0
    %2871 = vmatpush1.msra.mxu0 0.0
    %2872 = vmatprep.subr.mxu0 0.0
    %2873 = vmatpush1.msra.mxu0 0.0
    %2874 = vmatprep.subr.mxu0 0.0
    %2875 = vmatpush1.msra.mxu0 0.0
    %2876 = vmatprep.subr.mxu0 0.0
    %2877 = vmatpush1.msra.mxu0 0.0
    %2878 = vmatprep.subr.mxu0 0.0
    %2879 = vmatpush1.msra.mxu0 0.0
    %2880 = vmatprep.subr.mxu0 0.0
    %2881 = vmatpush1.msra.mxu0 0.0
    %2882 = vmatprep.subr.mxu0 0.0
    %2883 = vmatpush1.msra.mxu0 0.0
    %2884 = vmatprep.subr.mxu0 0.0
    %2885 = vmatpush1.msra.mxu0 0.0
    %2886 = vmatprep.subr.mxu0 0.0
    %2887 = vmatpush1.msra.mxu0 0.0
    %2888 = vmatprep.subr.mxu0 0.0
    %2889 = vmatpush1.msra.mxu0 0.0
    %2890 = vmatprep.subr.mxu0 0.0
    %2891 = vmatpush1.msra.mxu0 0.0
    %2892 = vmatprep.subr.mxu0 0.0
    %2893 = vmatpush1.msra.mxu0 0.0
    %2894 = vmatprep.subr.mxu0 0.0
    %2895 = vmatpush1.msra.mxu0 0.0
    %2896 = vmatprep.subr.mxu0 0.0
    %2897 = vmatpush1.msra.mxu0 0.0
    %2898 = vmatprep.subr.mxu0 0.0
    %2899 = vmatpush1.msra.mxu0 0.0
    %2900 = vmatprep.subr.mxu0 0.0
    %2901 = vmatpush1.msra.mxu0 0.0
    %2902 = vmatprep.subr.mxu0 0.0
    %2903 = vmatpush1.msra.mxu0 0.0
    %2904 = vmatprep.subr.mxu0 0.0
    %2905 = vmatpush1.msra.mxu0 0.0
    %2906 = vmatprep.subr.mxu0 0.0
    %2907 = vmatpush1.msra.mxu0 0.0
    %2908 = vmatprep.subr.mxu0 0.0
    %2909 = vmatpush1.msra.mxu0 0.0
    %2910 = vmatprep.subr.mxu0 0.0
    %2911 = vmatpush1.msra.mxu0 0.0
    %2912 = vmatprep.subr.mxu0 0.0
    %2913 = vmatpush1.msra.mxu0 0.0
    %2914 = vmatprep.subr.mxu0 0.0
    %2915 = vmatpush1.msra.mxu0 0.0
    %2916 = vmatprep.subr.mxu0 0.0
    %2917 = vmatpush1.msra.mxu0 0.0
    %2918 = vmatprep.subr.mxu0 0.0
    %2919 = vmatpush1.msra.mxu0 0.0
    %2920 = vmatprep.mubr.f32.mxu0 0.0
    %2921 = vmatmul.mubr.f32.gmra.mrb[0].mxu0 %v2851
    %v2922 = vpop.f32.mrb[0].mxu0
    %v2923 = vadd.f32 0.0, %v2922
    %v2924 = vpop.f32.mrb[0].mxu0
    %2925 = vmatprep.mubr.f32.mxu0 0.0
    %2926 = vmatmul.mubr.f32.gmra.mrb[0].mxu0 %v2854
    %v2927 = vpop.f32.mrb[0].mxu0
    %v2928 = vadd.f32 0.0, %v2927
    %v2929 = vpop.f32.mrb[0].mxu0
    %2930 = vdwg.mxu0
    %v2932 = vsel %vm1768, %v2109, 0
    %v2935 = vsel %vm1768, %v2110, 0
    %2937 = vmatprep.subr.mxu0 0.0
    %2938 = vmatpush1.msra.mxu0 %v295
    %2939 = vmatprep.subr.mxu0 0.0
    %2940 = vmatpush1.msra.mxu0 %v297
    %2941 = vmatprep.subr.mxu0 0.0
    %2942 = vmatpush1.msra.mxu0 0.0
    %2943 = vmatprep.subr.mxu0 0.0
    %2944 = vmatpush1.msra.mxu0 0.0
    %2945 = vmatprep.subr.mxu0 0.0
    %2946 = vmatpush1.msra.mxu0 0.0
    %2947 = vmatprep.subr.mxu0 0.0
    %2948 = vmatpush1.msra.mxu0 0.0
    %2949 = vmatprep.subr.mxu0 0.0
    %2950 = vmatpush1.msra.mxu0 0.0
    %2951 = vmatprep.subr.mxu0 0.0
    %2952 = vmatpush1.msra.mxu0 0.0
    %2953 = vmatprep.subr.mxu0 0.0
    %2954 = vmatpush1.msra.mxu0 0.0
    %2955 = vmatprep.subr.mxu0 0.0
    %2956 = vmatpush1.msra.mxu0 0.0
    %2957 = vmatprep.subr.mxu0 0.0
    %2958 = vmatpush1.msra.mxu0 0.0
    %2959 = vmatprep.subr.mxu0 0.0
    %2960 = vmatpush1.msra.mxu0 0.0
    %2961 = vmatprep.subr.mxu0 0.0
    %2962 = vmatpush1.msra.mxu0 0.0
    %2963 = vmatprep.subr.mxu0 0.0
    %2964 = vmatpush1.msra.mxu0 0.0
    %2965 = vmatprep.subr.mxu0 0.0
    %2966 = vmatpush1.msra.mxu0 0.0
    %2967 = vmatprep.subr.mxu0 0.0
    %2968 = vmatpush1.msra.mxu0 0.0
    %2969 = vmatprep.subr.mxu0 0.0
    %2970 = vmatpush1.msra.mxu0 0.0
    %2971 = vmatprep.subr.mxu0 0.0
    %2972 = vmatpush1.msra.mxu0 0.0
    %2973 = vmatprep.subr.mxu0 0.0
    %2974 = vmatpush1.msra.mxu0 0.0
    %2975 = vmatprep.subr.mxu0 0.0
    %2976 = vmatpush1.msra.mxu0 0.0
    %2977 = vmatprep.subr.mxu0 0.0
    %2978 = vmatpush1.msra.mxu0 0.0
    %2979 = vmatprep.subr.mxu0 0.0
    %2980 = vmatpush1.msra.mxu0 0.0
    %2981 = vmatprep.subr.mxu0 0.0
    %2982 = vmatpush1.msra.mxu0 0.0
    %2983 = vmatprep.subr.mxu0 0.0
    %2984 = vmatpush1.msra.mxu0 0.0
    %2985 = vmatprep.subr.mxu0 0.0
    %2986 = vmatpush1.msra.mxu0 0.0
    %2987 = vmatprep.subr.mxu0 0.0
    %2988 = vmatpush1.msra.mxu0 0.0
    %2989 = vmatprep.subr.mxu0 0.0
    %2990 = vmatpush1.msra.mxu0 0.0
    %2991 = vmatprep.subr.mxu0 0.0
    %2992 = vmatpush1.msra.mxu0 0.0
    %2993 = vmatprep.subr.mxu0 0.0
    %2994 = vmatpush1.msra.mxu0 0.0
    %2995 = vmatprep.subr.mxu0 0.0
    %2996 = vmatpush1.msra.mxu0 0.0
    %2997 = vmatprep.subr.mxu0 0.0
    %2998 = vmatpush1.msra.mxu0 0.0
    %2999 = vmatprep.subr.mxu0 0.0
    %3000 = vmatpush1.msra.mxu0 0.0
    %3001 = vmatprep.mubr.f32.mxu0 0.0
    %3002 = vmatmul.mubr.f32.gmra.mrb[0].mxu0 %v2932
    %v3003 = vpop.f32.mrb[0].mxu0
    %v3004 = vadd.f32 0.0, %v3003
    %v3005 = vpop.f32.mrb[0].mxu0
    %3006 = vmatprep.mubr.f32.mxu0 0.0
    %3007 = vmatmul.mubr.f32.gmra.mrb[0].mxu0 %v2935
    %v3008 = vpop.f32.mrb[0].mxu0
    %v3009 = vadd.f32 0.0, %v3008
    %v3010 = vpop.f32.mrb[0].mxu0
    %3011 = vdwg.mxu0
    %v3013 = vsel %vm1768, %v2111, 0
    %v3016 = vsel %vm1768, %v2112, 0
    %3018 = vmatprep.subr.mxu0 0.0
    %3019 = vmatpush1.msra.mxu0 %v301
    %3020 = vmatprep.subr.mxu0 0.0
    %3021 = vmatpush1.msra.mxu0 %v303
    %3022 = vmatprep.subr.mxu0 0.0
    %3023 = vmatpush1.msra.mxu0 0.0
    %3024 = vmatprep.subr.mxu0 0.0
    %3025 = vmatpush1.msra.mxu0 0.0
    %3026 = vmatprep.subr.mxu0 0.0
    %3027 = vmatpush1.msra.mxu0 0.0
    %3028 = vmatprep.subr.mxu0 0.0
    %3029 = vmatpush1.msra.mxu0 0.0
    %3030 = vmatprep.subr.mxu0 0.0
    %3031 = vmatpush1.msra.mxu0 0.0
    %3032 = vmatprep.subr.mxu0 0.0
    %3033 = vmatpush1.msra.mxu0 0.0
    %3034 = vmatprep.subr.mxu0 0.0
    %3035 = vmatpush1.msra.mxu0 0.0
    %3036 = vmatprep.subr.mxu0 0.0
    %3037 = vmatpush1.msra.mxu0 0.0
    %3038 = vmatprep.subr.mxu0 0.0
    %3039 = vmatpush1.msra.mxu0 0.0
    %3040 = vmatprep.subr.mxu0 0.0
    %3041 = vmatpush1.msra.mxu0 0.0
    %3042 = vmatprep.subr.mxu0 0.0
    %3043 = vmatpush1.msra.mxu0 0.0
    %3044 = vmatprep.subr.mxu0 0.0
    %3045 = vmatpush1.msra.mxu0 0.0
    %3046 = vmatprep.subr.mxu0 0.0
    %3047 = vmatpush1.msra.mxu0 0.0
    %3048 = vmatprep.subr.mxu0 0.0
    %3049 = vmatpush1.msra.mxu0 0.0
    %3050 = vmatprep.subr.mxu0 0.0
    %3051 = vmatpush1.msra.mxu0 0.0
    %3052 = vmatprep.subr.mxu0 0.0
    %3053 = vmatpush1.msra.mxu0 0.0
    %3054 = vmatprep.subr.mxu0 0.0
    %3055 = vmatpush1.msra.mxu0 0.0
    %3056 = vmatprep.subr.mxu0 0.0
    %3057 = vmatpush1.msra.mxu0 0.0
    %3058 = vmatprep.subr.mxu0 0.0
    %3059 = vmatpush1.msra.mxu0 0.0
    %3060 = vmatprep.subr.mxu0 0.0
    %3061 = vmatpush1.msra.mxu0 0.0
    %3062 = vmatprep.subr.mxu0 0.0
    %3063 = vmatpush1.msra.mxu0 0.0
    %3064 = vmatprep.subr.mxu0 0.0
    %3065 = vmatpush1.msra.mxu0 0.0
    %3066 = vmatprep.subr.mxu0 0.0
    %3067 = vmatpush1.msra.mxu0 0.0
    %3068 = vmatprep.subr.mxu0 0.0
    %3069 = vmatpush1.msra.mxu0 0.0
    %3070 = vmatprep.subr.mxu0 0.0
    %3071 = vmatpush1.msra.mxu0 0.0
    %3072 = vmatprep.subr.mxu0 0.0
    %3073 = vmatpush1.msra.mxu0 0.0
    %3074 = vmatprep.subr.mxu0 0.0
    %3075 = vmatpush1.msra.mxu0 0.0
    %3076 = vmatprep.subr.mxu0 0.0
    %3077 = vmatpush1.msra.mxu0 0.0
    %3078 = vmatprep.subr.mxu0 0.0
    %3079 = vmatpush1.msra.mxu0 0.0
    %3080 = vmatprep.subr.mxu0 0.0
    %3081 = vmatpush1.msra.mxu0 0.0
    %3082 = vmatprep.mubr.f32.mxu0 0.0
    %3083 = vmatmul.mubr.f32.gmra.mrb[0].mxu0 %v3013
    %v3084 = vpop.f32.mrb[0].mxu0
    %v3085 = vadd.f32 0.0, %v3084
    %v3086 = vpop.f32.mrb[0].mxu0
    %3087 = vmatprep.mubr.f32.mxu0 0.0
    %3088 = vmatmul.mubr.f32.gmra.mrb[0].mxu0 %v3016
    %v3089 = vpop.f32.mrb[0].mxu0
    %v3090 = vadd.f32 0.0, %v3089
    %v3091 = vpop.f32.mrb[0].mxu0
    %3092 = vdwg.mxu0
    %v3094 = vsel %vm1768, %v2113, 0
    %v3097 = vsel %vm1768, %v2114, 0
    %3099 = vmatprep.subr.mxu0 0.0
    %3100 = vmatpush1.msra.mxu0 %v307
    %3101 = vmatprep.subr.mxu0 0.0
    %3102 = vmatpush1.msra.mxu0 %v309
    %3103 = vmatprep.subr.mxu0 0.0
    %3104 = vmatpush1.msra.mxu0 0.0
    %3105 = vmatprep.subr.mxu0 0.0
    %3106 = vmatpush1.msra.mxu0 0.0
    %3107 = vmatprep.subr.mxu0 0.0
    %3108 = vmatpush1.msra.mxu0 0.0
    %3109 = vmatprep.subr.mxu0 0.0
    %3110 = vmatpush1.msra.mxu0 0.0
    %3111 = vmatprep.subr.mxu0 0.0
    %3112 = vmatpush1.msra.mxu0 0.0
    %3113 = vmatprep.subr.mxu0 0.0
    %3114 = vmatpush1.msra.mxu0 0.0
    %3115 = vmatprep.subr.mxu0 0.0
    %3116 = vmatpush1.msra.mxu0 0.0
    %3117 = vmatprep.subr.mxu0 0.0
    %3118 = vmatpush1.msra.mxu0 0.0
    %3119 = vmatprep.subr.mxu0 0.0
    %3120 = vmatpush1.msra.mxu0 0.0
    %3121 = vmatprep.subr.mxu0 0.0
    %3122 = vmatpush1.msra.mxu0 0.0
    %3123 = vmatprep.subr.mxu0 0.0
    %3124 = vmatpush1.msra.mxu0 0.0
    %3125 = vmatprep.subr.mxu0 0.0
    %3126 = vmatpush1.msra.mxu0 0.0
    %3127 = vmatprep.subr.mxu0 0.0
    %3128 = vmatpush1.msra.mxu0 0.0
    %3129 = vmatprep.subr.mxu0 0.0
    %3130 = vmatpush1.msra.mxu0 0.0
    %3131 = vmatprep.subr.mxu0 0.0
    %3132 = vmatpush1.msra.mxu0 0.0
    %3133 = vmatprep.subr.mxu0 0.0
    %3134 = vmatpush1.msra.mxu0 0.0
    %3135 = vmatprep.subr.mxu0 0.0
    %3136 = vmatpush1.msra.mxu0 0.0
    %3137 = vmatprep.subr.mxu0 0.0
    %3138 = vmatpush1.msra.mxu0 0.0
    %3139 = vmatprep.subr.mxu0 0.0
    %3140 = vmatpush1.msra.mxu0 0.0
    %3141 = vmatprep.subr.mxu0 0.0
    %3142 = vmatpush1.msra.mxu0 0.0
    %3143 = vmatprep.subr.mxu0 0.0
    %3144 = vmatpush1.msra.mxu0 0.0
    %3145 = vmatprep.subr.mxu0 0.0
    %3146 = vmatpush1.msra.mxu0 0.0
    %3147 = vmatprep.subr.mxu0 0.0
    %3148 = vmatpush1.msra.mxu0 0.0
    %3149 = vmatprep.subr.mxu0 0.0
    %3150 = vmatpush1.msra.mxu0 0.0
    %3151 = vmatprep.subr.mxu0 0.0
    %3152 = vmatpush1.msra.mxu0 0.0
    %3153 = vmatprep.subr.mxu0 0.0
    %3154 = vmatpush1.msra.mxu0 0.0
    %3155 = vmatprep.subr.mxu0 0.0
    %3156 = vmatpush1.msra.mxu0 0.0
    %3157 = vmatprep.subr.mxu0 0.0
    %3158 = vmatpush1.msra.mxu0 0.0
    %3159 = vmatprep.subr.mxu0 0.0
    %3160 = vmatpush1.msra.mxu0 0.0
    %3161 = vmatprep.subr.mxu0 0.0
    %3162 = vmatpush1.msra.mxu0 0.0
    %3163 = vmatprep.mubr.f32.mxu0 0.0
    %3164 = vmatmul.mubr.f32.gmra.mrb[0].mxu0 %v3094
    %v3165 = vpop.f32.mrb[0].mxu0
    %v3166 = vadd.f32 0.0, %v3165
    %v3167 = vpop.f32.mrb[0].mxu0
    %3168 = vmatprep.mubr.f32.mxu0 0.0
    %3169 = vmatmul.mubr.f32.gmra.mrb[0].mxu0 %v3097
    %v3170 = vpop.f32.mrb[0].mxu0
    %v3171 = vadd.f32 0.0, %v3170
    %v3172 = vpop.f32.mrb[0].mxu0
    %3173 = vdwg.mxu0
    %v3175 = vsel %vm1768, %v2115, 0
    %v3178 = vsel %vm1768, %v2116, 0
    %3180 = vmatprep.subr.mxu0 0.0
    %3181 = vmatpush1.msra.mxu0 %v313
    %3182 = vmatprep.subr.mxu0 0.0
    %3183 = vmatpush1.msra.mxu0 %v315
    %3184 = vmatprep.subr.mxu0 0.0
    %3185 = vmatpush1.msra.mxu0 0.0
    %3186 = vmatprep.subr.mxu0 0.0
    %3187 = vmatpush1.msra.mxu0 0.0
    %3188 = vmatprep.subr.mxu0 0.0
    %3189 = vmatpush1.msra.mxu0 0.0
    %3190 = vmatprep.subr.mxu0 0.0
    %3191 = vmatpush1.msra.mxu0 0.0
    %3192 = vmatprep.subr.mxu0 0.0
    %3193 = vmatpush1.msra.mxu0 0.0
    %3194 = vmatprep.subr.mxu0 0.0
    %3195 = vmatpush1.msra.mxu0 0.0
    %3196 = vmatprep.subr.mxu0 0.0
    %3197 = vmatpush1.msra.mxu0 0.0
    %3198 = vmatprep.subr.mxu0 0.0
    %3199 = vmatpush1.msra.mxu0 0.0
    %3200 = vmatprep.subr.mxu0 0.0
    %3201 = vmatpush1.msra.mxu0 0.0
    %3202 = vmatprep.subr.mxu0 0.0
    %3203 = vmatpush1.msra.mxu0 0.0
    %3204 = vmatprep.subr.mxu0 0.0
    %3205 = vmatpush1.msra.mxu0 0.0
    %3206 = vmatprep.subr.mxu0 0.0
    %3207 = vmatpush1.msra.mxu0 0.0
    %3208 = vmatprep.subr.mxu0 0.0
    %3209 = vmatpush1.msra.mxu0 0.0
    %3210 = vmatprep.subr.mxu0 0.0
    %3211 = vmatpush1.msra.mxu0 0.0
    %3212 = vmatprep.subr.mxu0 0.0
    %3213 = vmatpush1.msra.mxu0 0.0
    %3214 = vmatprep.subr.mxu0 0.0
    %3215 = vmatpush1.msra.mxu0 0.0
    %3216 = vmatprep.subr.mxu0 0.0
    %3217 = vmatpush1.msra.mxu0 0.0
    %3218 = vmatprep.subr.mxu0 0.0
    %3219 = vmatpush1.msra.mxu0 0.0
    %3220 = vmatprep.subr.mxu0 0.0
    %3221 = vmatpush1.msra.mxu0 0.0
    %3222 = vmatprep.subr.mxu0 0.0
    %3223 = vmatpush1.msra.mxu0 0.0
    %3224 = vmatprep.subr.mxu0 0.0
    %3225 = vmatpush1.msra.mxu0 0.0
    %3226 = vmatprep.subr.mxu0 0.0
    %3227 = vmatpush1.msra.mxu0 0.0
    %3228 = vmatprep.subr.mxu0 0.0
    %3229 = vmatpush1.msra.mxu0 0.0
    %3230 = vmatprep.subr.mxu0 0.0
    %3231 = vmatpush1.msra.mxu0 0.0
    %3232 = vmatprep.subr.mxu0 0.0
    %3233 = vmatpush1.msra.mxu0 0.0
    %3234 = vmatprep.subr.mxu0 0.0
    %3235 = vmatpush1.msra.mxu0 0.0
    %3236 = vmatprep.subr.mxu0 0.0
    %3237 = vmatpush1.msra.mxu0 0.0
    %3238 = vmatprep.subr.mxu0 0.0
    %3239 = vmatpush1.msra.mxu0 0.0
    %3240 = vmatprep.subr.mxu0 0.0
    %3241 = vmatpush1.msra.mxu0 0.0
    %3242 = vmatprep.subr.mxu0 0.0
    %3243 = vmatpush1.msra.mxu0 0.0
    %3244 = vmatprep.mubr.f32.mxu0 0.0
    %3245 = vmatmul.mubr.f32.gmra.mrb[0].mxu0 %v3175
    %v3246 = vpop.f32.mrb[0].mxu0
    %v3247 = vadd.f32 0.0, %v3246
    %v3248 = vpop.f32.mrb[0].mxu0
    %3249 = vmatprep.mubr.f32.mxu0 0.0
    %3250 = vmatmul.mubr.f32.gmra.mrb[0].mxu0 %v3178
    %v3251 = vpop.f32.mrb[0].mxu0
    %v3252 = vadd.f32 0.0, %v3251
    %v3253 = vpop.f32.mrb[0].mxu0
    %3254 = vdwg.mxu0
    %v3256 = vsel %vm1768, %v2117, 0
    %v3259 = vsel %vm1768, %v2118, 0
    %3261 = vmatprep.subr.mxu0 0.0
    %3262 = vmatpush1.msra.mxu0 %v319
    %3263 = vmatprep.subr.mxu0 0.0
    %3264 = vmatpush1.msra.mxu0 %v321
    %3265 = vmatprep.subr.mxu0 0.0
    %3266 = vmatpush1.msra.mxu0 0.0
    %3267 = vmatprep.subr.mxu0 0.0
    %3268 = vmatpush1.msra.mxu0 0.0
    %3269 = vmatprep.subr.mxu0 0.0
    %3270 = vmatpush1.msra.mxu0 0.0
    %3271 = vmatprep.subr.mxu0 0.0
    %3272 = vmatpush1.msra.mxu0 0.0
    %3273 = vmatprep.subr.mxu0 0.0
    %3274 = vmatpush1.msra.mxu0 0.0
    %3275 = vmatprep.subr.mxu0 0.0
    %3276 = vmatpush1.msra.mxu0 0.0
    %3277 = vmatprep.subr.mxu0 0.0
    %3278 = vmatpush1.msra.mxu0 0.0
    %3279 = vmatprep.subr.mxu0 0.0
    %3280 = vmatpush1.msra.mxu0 0.0
    %3281 = vmatprep.subr.mxu0 0.0
    %3282 = vmatpush1.msra.mxu0 0.0
    %3283 = vmatprep.subr.mxu0 0.0
    %3284 = vmatpush1.msra.mxu0 0.0
    %3285 = vmatprep.subr.mxu0 0.0
    %3286 = vmatpush1.msra.mxu0 0.0
    %3287 = vmatprep.subr.mxu0 0.0
    %3288 = vmatpush1.msra.mxu0 0.0
    %3289 = vmatprep.subr.mxu0 0.0
    %3290 = vmatpush1.msra.mxu0 0.0
    %3291 = vmatprep.subr.mxu0 0.0
    %3292 = vmatpush1.msra.mxu0 0.0
    %3293 = vmatprep.subr.mxu0 0.0
    %3294 = vmatpush1.msra.mxu0 0.0
    %3295 = vmatprep.subr.mxu0 0.0
    %3296 = vmatpush1.msra.mxu0 0.0
    %3297 = vmatprep.subr.mxu0 0.0
    %3298 = vmatpush1.msra.mxu0 0.0
    %3299 = vmatprep.subr.mxu0 0.0
    %3300 = vmatpush1.msra.mxu0 0.0
    %3301 = vmatprep.subr.mxu0 0.0
    %3302 = vmatpush1.msra.mxu0 0.0
    %3303 = vmatprep.subr.mxu0 0.0
    %3304 = vmatpush1.msra.mxu0 0.0
    %3305 = vmatprep.subr.mxu0 0.0
    %3306 = vmatpush1.msra.mxu0 0.0
    %3307 = vmatprep.subr.mxu0 0.0
    %3308 = vmatpush1.msra.mxu0 0.0
    %3309 = vmatprep.subr.mxu0 0.0
    %3310 = vmatpush1.msra.mxu0 0.0
    %3311 = vmatprep.subr.mxu0 0.0
    %3312 = vmatpush1.msra.mxu0 0.0
    %3313 = vmatprep.subr.mxu0 0.0
    %3314 = vmatpush1.msra.mxu0 0.0
    %3315 = vmatprep.subr.mxu0 0.0
    %3316 = vmatpush1.msra.mxu0 0.0
    %3317 = vmatprep.subr.mxu0 0.0
    %3318 = vmatpush1.msra.mxu0 0.0
    %3319 = vmatprep.subr.mxu0 0.0
    %3320 = vmatpush1.msra.mxu0 0.0
    %3321 = vmatprep.subr.mxu0 0.0
    %3322 = vmatpush1.msra.mxu0 0.0
    %3323 = vmatprep.subr.mxu0 0.0
    %3324 = vmatpush1.msra.mxu0 0.0
    %3325 = vmatprep.mubr.f32.mxu0 0.0
    %3326 = vmatmul.mubr.f32.gmra.mrb[0].mxu0 %v3256
    %v3327 = vpop.f32.mrb[0].mxu0
    %v3328 = vadd.f32 0.0, %v3327
    %v3329 = vpop.f32.mrb[0].mxu0
    %3330 = vmatprep.mubr.f32.mxu0 0.0
    %3331 = vmatmul.mubr.f32.gmra.mrb[0].mxu0 %v3259
    %v3332 = vpop.f32.mrb[0].mxu0
    %v3333 = vadd.f32 0.0, %v3332
    %v3334 = vpop.f32.mrb[0].mxu0
    %3335 = vdwg.mxu0
    %v3337 = vsel %vm1768, %v2119, 0
    %v3340 = vsel %vm1768, %v2120, 0
    %3342 = vmatprep.subr.mxu0 0.0
    %3343 = vmatpush1.msra.mxu0 %v325
    %3344 = vmatprep.subr.mxu0 0.0
    %3345 = vmatpush1.msra.mxu0 %v327
    %3346 = vmatprep.subr.mxu0 0.0
    %3347 = vmatpush1.msra.mxu0 0.0
    %3348 = vmatprep.subr.mxu0 0.0
    %3349 = vmatpush1.msra.mxu0 0.0
    %3350 = vmatprep.subr.mxu0 0.0
    %3351 = vmatpush1.msra.mxu0 0.0
    %3352 = vmatprep.subr.mxu0 0.0
    %3353 = vmatpush1.msra.mxu0 0.0
    %3354 = vmatprep.subr.mxu0 0.0
    %3355 = vmatpush1.msra.mxu0 0.0
    %3356 = vmatprep.subr.mxu0 0.0
    %3357 = vmatpush1.msra.mxu0 0.0
    %3358 = vmatprep.subr.mxu0 0.0
    %3359 = vmatpush1.msra.mxu0 0.0
    %3360 = vmatprep.subr.mxu0 0.0
    %3361 = vmatpush1.msra.mxu0 0.0
    %3362 = vmatprep.subr.mxu0 0.0
    %3363 = vmatpush1.msra.mxu0 0.0
    %3364 = vmatprep.subr.mxu0 0.0
    %3365 = vmatpush1.msra.mxu0 0.0
    %3366 = vmatprep.subr.mxu0 0.0
    %3367 = vmatpush1.msra.mxu0 0.0
    %3368 = vmatprep.subr.mxu0 0.0
    %3369 = vmatpush1.msra.mxu0 0.0
    %3370 = vmatprep.subr.mxu0 0.0
    %3371 = vmatpush1.msra.mxu0 0.0
    %3372 = vmatprep.subr.mxu0 0.0
    %3373 = vmatpush1.msra.mxu0 0.0
    %3374 = vmatprep.subr.mxu0 0.0
    %3375 = vmatpush1.msra.mxu0 0.0
    %3376 = vmatprep.subr.mxu0 0.0
    %3377 = vmatpush1.msra.mxu0 0.0
    %3378 = vmatprep.subr.mxu0 0.0
    %3379 = vmatpush1.msra.mxu0 0.0
    %3380 = vmatprep.subr.mxu0 0.0
    %3381 = vmatpush1.msra.mxu0 0.0
    %3382 = vmatprep.subr.mxu0 0.0
    %3383 = vmatpush1.msra.mxu0 0.0
    %3384 = vmatprep.subr.mxu0 0.0
    %3385 = vmatpush1.msra.mxu0 0.0
    %3386 = vmatprep.subr.mxu0 0.0
    %3387 = vmatpush1.msra.mxu0 0.0
    %3388 = vmatprep.subr.mxu0 0.0
    %3389 = vmatpush1.msra.mxu0 0.0
    %3390 = vmatprep.subr.mxu0 0.0
    %3391 = vmatpush1.msra.mxu0 0.0
    %3392 = vmatprep.subr.mxu0 0.0
    %3393 = vmatpush1.msra.mxu0 0.0
    %3394 = vmatprep.subr.mxu0 0.0
    %3395 = vmatpush1.msra.mxu0 0.0
    %3396 = vmatprep.subr.mxu0 0.0
    %3397 = vmatpush1.msra.mxu0 0.0
    %3398 = vmatprep.subr.mxu0 0.0
    %3399 = vmatpush1.msra.mxu0 0.0
    %3400 = vmatprep.subr.mxu0 0.0
    %3401 = vmatpush1.msra.mxu0 0.0
    %3402 = vmatprep.subr.mxu0 0.0
    %3403 = vmatpush1.msra.mxu0 0.0
    %3404 = vmatprep.subr.mxu0 0.0
    %3405 = vmatpush1.msra.mxu0 0.0
    %3406 = vmatprep.mubr.f32.mxu0 0.0
    %3407 = vmatmul.mubr.f32.gmra.mrb[0].mxu0 %v3337
    %v3408 = vpop.f32.mrb[0].mxu0
    %v3409 = vadd.f32 0.0, %v3408
    %v3410 = vpop.f32.mrb[0].mxu0
    %3411 = vmatprep.mubr.f32.mxu0 0.0
    %3412 = vmatmul.mubr.f32.gmra.mrb[0].mxu0 %v3340
    %v3413 = vpop.f32.mrb[0].mxu0
    %v3414 = vadd.f32 0.0, %v3413
    %v3415 = vpop.f32.mrb[0].mxu0
    %3416 = vdwg.mxu0
    %3419 = vrot.lane.b32.xlu0 %v2275, 4
    %v3420 = vpop.permute.xlu0 %3419
    %3421 = vrot.lane.b32.xlu0 %v2280, 4
    %v3422 = vpop.permute.xlu0 %3421
    %3427 = vrot.lane.b32.xlu0 %v2356, 8
    %v3428 = vpop.permute.xlu0 %3427
    %3429 = vrot.lane.b32.xlu0 %v2361, 8
    %v3430 = vpop.permute.xlu0 %3429
    %3435 = vrot.lane.b32.xlu0 %v2437, 12
    %v3436 = vpop.permute.xlu0 %3435
    %3437 = vrot.lane.b32.xlu0 %v2442, 12
    %v3438 = vpop.permute.xlu0 %3437
    %3443 = vrot.lane.b32.xlu0 %v2518, 16
    %v3444 = vpop.permute.xlu0 %3443
    %3445 = vrot.lane.b32.xlu0 %v2523, 16
    %v3446 = vpop.permute.xlu0 %3445
    %3451 = vrot.lane.b32.xlu0 %v2599, 20
    %v3452 = vpop.permute.xlu0 %3451
    %3453 = vrot.lane.b32.xlu0 %v2604, 20
    %v3454 = vpop.permute.xlu0 %3453
    %3459 = vrot.lane.b32.xlu0 %v2680, 24
    %v3460 = vpop.permute.xlu0 %3459
    %3461 = vrot.lane.b32.xlu0 %v2685, 24
    %v3462 = vpop.permute.xlu0 %3461
    %3467 = vrot.lane.b32.xlu0 %v2761, 28
    %v3468 = vpop.permute.xlu0 %3467
    %3469 = vrot.lane.b32.xlu0 %v2766, 28
    %v3470 = vpop.permute.xlu0 %3469
    %3475 = vrot.lane.b32.xlu0 %v2842, 32
    %v3476 = vpop.permute.xlu0 %3475
    %3477 = vrot.lane.b32.xlu0 %v2847, 32
    %v3478 = vpop.permute.xlu0 %3477
    %3483 = vrot.lane.b32.xlu0 %v2923, 36
    %v3484 = vpop.permute.xlu0 %3483
    %3485 = vrot.lane.b32.xlu0 %v2928, 36
    %v3486 = vpop.permute.xlu0 %3485
    %3491 = vrot.lane.b32.xlu0 %v3004, 40
    %v3492 = vpop.permute.xlu0 %3491
    %3493 = vrot.lane.b32.xlu0 %v3009, 40
    %v3494 = vpop.permute.xlu0 %3493
    %3499 = vrot.lane.b32.xlu0 %v3085, 44
    %v3500 = vpop.permute.xlu0 %3499
    %3501 = vrot.lane.b32.xlu0 %v3090, 44
    %v3502 = vpop.permute.xlu0 %3501
    %3507 = vrot.lane.b32.xlu0 %v3166, 48
    %v3508 = vpop.permute.xlu0 %3507
    %3509 = vrot.lane.b32.xlu0 %v3171, 48
    %v3510 = vpop.permute.xlu0 %3509
    %3515 = vrot.lane.b32.xlu0 %v3247, 52
    %v3516 = vpop.permute.xlu0 %3515
    %3517 = vrot.lane.b32.xlu0 %v3252, 52
    %v3518 = vpop.permute.xlu0 %3517
    %3523 = vrot.lane.b32.xlu0 %v3328, 56
    %v3524 = vpop.permute.xlu0 %3523
    %3525 = vrot.lane.b32.xlu0 %v3333, 56
    %v3526 = vpop.permute.xlu0 %3525
    %3531 = vrot.lane.b32.xlu0 %v3409, 60
    %v3532 = vpop.permute.xlu0 %3531
    %3533 = vrot.lane.b32.xlu0 %v3414, 60
    %v3534 = vpop.permute.xlu0 %3533
    %v3537 = vsel %vm379, %v2194, %v3420
    %v3538 = vsel %vm379, %v2199, %v3422
    %vm3539 = vcmask 64512
    %v3540 = vsel %vm3539, %v3537, %v3428
    %v3541 = vsel %vm3539, %v3538, %v3430
    %vm3542 = vcmask 97280
    %v3543 = vsel %vm3542, %v3540, %v3436
    %v3544 = vsel %vm3542, %v3541, %v3438
    %v3545 = vsel %vm1768, %v3543, %v3444
    %v3546 = vsel %vm1768, %v3544, %v3446
    %vm3547 = vcmask 162816
    %v3548 = vsel %vm3547, %v3545, %v3452
    %v3549 = vsel %vm3547, %v3546, %v3454
    %vm3550 = vcmask 195584
    %v3551 = vsel %vm3550, %v3548, %v3460
    %v3552 = vsel %vm3550, %v3549, %v3462
    %vm3553 = vcmask 228352
    %v3554 = vsel %vm3553, %v3551, %v3468
    %v3555 = vsel %vm3553, %v3552, %v3470
    %vm3556 = vcmask 261120
    %v3557 = vsel %vm3556, %v3554, %v3476
    %v3558 = vsel %vm3556, %v3555, %v3478
    %vm3559 = vcmask 293888
    %v3560 = vsel %vm3559, %v3557, %v3484
    %v3561 = vsel %vm3559, %v3558, %v3486
    %vm3562 = vcmask 326656
    %v3563 = vsel %vm3562, %v3560, %v3492
    %v3564 = vsel %vm3562, %v3561, %v3494
    %vm3565 = vcmask 359424
    %v3566 = vsel %vm3565, %v3563, %v3500
    %v3567 = vsel %vm3565, %v3564, %v3502
    %vm3568 = vcmask 392192
    %v3569 = vsel %vm3568, %v3566, %v3508
    %v3570 = vsel %vm3568, %v3567, %v3510
    %vm3571 = vcmask 424960
    %v3572 = vsel %vm3571, %v3569, %v3516
    %v3573 = vsel %vm3571, %v3570, %v3518
    %vm3574 = vcmask 457728
    %v3575 = vsel %vm3574, %v3572, %v3524
    %v3576 = vsel %vm3574, %v3573, %v3526
    %vm3577 = vcmask 490496
    %v3578 = vsel %vm3577, %v3575, %v3532
    %v3579 = vsel %vm3577, %v3576, %v3534
    %v3580 = vld [vmem:[#allocation7] sm:$0xff]
    %v3581 = vld [vmem:[#allocation7 + $0x8] sm:$0xff]
    %v3582 = vld [vmem:[#allocation7 + $0x10] sm:$0xff]
    %v3583 = vld [vmem:[#allocation7 + $0x18] sm:$0xff]
    %v3584 = vld [vmem:[#allocation7 + $0x20] sm:$0xff]
    %v3585 = vld [vmem:[#allocation7 + $0x28] sm:$0xff]
    %v3586 = vld [vmem:[#allocation7 + $0x30] sm:$0xff]
    %v3587 = vld [vmem:[#allocation7 + $0x38] sm:$0xff]
    %v3588 = vld [vmem:[%s4] sm:$0x1]
    %v3590 = vlaneseq
    %v3591 = vshrl.u32 %v3590, 7
    %v3592 = vsub.s32 0, %v3591
    %v3593 = vrot.slane %v3588, %v3592
    %v3596 = vsel %vm92, %v3578, 0
    %v3599 = vsel %vm92, %v3579, 0
    %3601 = vmatprep.subr.mxu0 0.0
    %3602 = vmatpush1.msra.mxu0 %v3580
    %3603 = vmatprep.subr.mxu0 0.0
    %3604 = vmatpush1.msra.mxu0 %v3581
    %3605 = vmatprep.subr.mxu0 0.0
    %3606 = vmatpush1.msra.mxu0 %v3582
    %3607 = vmatprep.subr.mxu0 0.0
    %3608 = vmatpush1.msra.mxu0 %v3583
    %3609 = vmatprep.subr.mxu0 0.0
    %3610 = vmatpush1.msra.mxu0 %v3584
    %3611 = vmatprep.subr.mxu0 0.0
    %3612 = vmatpush1.msra.mxu0 %v3585
    %3613 = vmatprep.subr.mxu0 0.0
    %3614 = vmatpush1.msra.mxu0 %v3586
    %3615 = vmatprep.subr.mxu0 0.0
    %3616 = vmatpush1.msra.mxu0 %v3587
    %3617 = vmatprep.subr.mxu0 0.0
    %3618 = vmatpush1.msra.mxu0 0.0
    %3619 = vmatprep.subr.mxu0 0.0
    %3620 = vmatpush1.msra.mxu0 0.0
    %3621 = vmatprep.subr.mxu0 0.0
    %3622 = vmatpush1.msra.mxu0 0.0
    %3623 = vmatprep.subr.mxu0 0.0
    %3624 = vmatpush1.msra.mxu0 0.0
    %3625 = vmatprep.subr.mxu0 0.0
    %3626 = vmatpush1.msra.mxu0 0.0
    %3627 = vmatprep.subr.mxu0 0.0
    %3628 = vmatpush1.msra.mxu0 0.0
    %3629 = vmatprep.subr.mxu0 0.0
    %3630 = vmatpush1.msra.mxu0 0.0
    %3631 = vmatprep.subr.mxu0 0.0
    %3632 = vmatpush1.msra.mxu0 0.0
    %3633 = vmatprep.subr.mxu0 0.0
    %3634 = vmatpush1.msra.mxu0 0.0
    %3635 = vmatprep.subr.mxu0 0.0
    %3636 = vmatpush1.msra.mxu0 0.0
    %3637 = vmatprep.subr.mxu0 0.0
    %3638 = vmatpush1.msra.mxu0 0.0
    %3639 = vmatprep.subr.mxu0 0.0
    %3640 = vmatpush1.msra.mxu0 0.0
    %3641 = vmatprep.subr.mxu0 0.0
    %3642 = vmatpush1.msra.mxu0 0.0
    %3643 = vmatprep.subr.mxu0 0.0
    %3644 = vmatpush1.msra.mxu0 0.0
    %3645 = vmatprep.subr.mxu0 0.0
    %3646 = vmatpush1.msra.mxu0 0.0
    %3647 = vmatprep.subr.mxu0 0.0
    %3648 = vmatpush1.msra.mxu0 0.0
    %3649 = vmatprep.subr.mxu0 0.0
    %3650 = vmatpush1.msra.mxu0 0.0
    %3651 = vmatprep.subr.mxu0 0.0
    %3652 = vmatpush1.msra.mxu0 0.0
    %3653 = vmatprep.subr.mxu0 0.0
    %3654 = vmatpush1.msra.mxu0 0.0
    %3655 = vmatprep.subr.mxu0 0.0
    %3656 = vmatpush1.msra.mxu0 0.0
    %3657 = vmatprep.subr.mxu0 0.0
    %3658 = vmatpush1.msra.mxu0 0.0
    %3659 = vmatprep.subr.mxu0 0.0
    %3660 = vmatpush1.msra.mxu0 0.0
    %3661 = vmatprep.subr.mxu0 0.0
    %3662 = vmatpush1.msra.mxu0 0.0
    %3663 = vmatprep.subr.mxu0 0.0
    %3664 = vmatpush1.msra.mxu0 0.0
    %3665 = vmatprep.mubr.f32.mxu0 0.0
    %3666 = vmatmul.mubr.f32.gmra.mrb[0].mxu0 %v3596
    %v3667 = vpop.f32.mrb[0].mxu0
    %v3668 = vadd.f32 %v3593, %v3667
    %v3669 = vpop.f32.mrb[0].mxu0
    %3670 = vmatprep.mubr.f32.mxu0 0.0
    %3671 = vmatmul.mubr.f32.gmra.mrb[0].mxu0 %v3599
    %v3672 = vpop.f32.mrb[0].mxu0
    %v3673 = vadd.f32 %v3593, %v3672
    %v3674 = vpop.f32.mrb[0].mxu0
    %3675 = vdwg.mxu0
    %3676 = vst.msk [vmem:[#allocation8] sm:$0xff] %vm92, %v3668
    %3677 = vst.msk [vmem:[#allocation8 + $0x8] sm:$0xff] %vm92, %v3673
    // Predicated region
    $region34: #{attention_forward.1} parent=1 // pred_check
      _
    $region35: #{attention_forward.1} parent=1 // pred_check_branch
      %3679 = sbr.rel (0) target = $region37
    $region36: #{attention_forward.1} parent=1 // pred_region
      %s3681 = ssub.s32 256, 256
      %3682 = vsyncadd [#allocation4], %s3681
      %s3683 = sshll.u32 [#allocation8], 4
      %s3684 = int_to_ptr.vmem [resolvable:$true] %s3683
      %3689 = dma.vmem_to_hbm [thread:$0]  %s3684, 256, %s5, [#allocation4], 128, 128, 8
    $region37: #{attention_forward.1} parent=1 // pred_fallthru
      _
    // Predicated region
    $region38: #{attention_forward.1} parent=1 // pred_check
      _
    $region39: #{attention_forward.1} parent=1 // pred_check_branch
      %3691 = sbr.rel (0) target = $region41
    $region40: #{attention_forward.1} parent=1 // pred_region
      %3692 = dma.done [#allocation4], 256
    $region41: #{attention_forward.1} parent=1 // pred_fallthru
      _
    %3693 = vsyncpa [#allocation3], 1
    %3694 = vsyncpa [#allocation6], 1
    %3695 = vsyncpa [#allocation4], 1

</llo_original>
